<compile_context>
chip_gen: v7x
topology: tpu7x:2x2x1
jax: 0.10.0
libtpu: 0.0.40
codegen_flags: <defaults>
</compile_context>

<pallas_src>
import functools

import jax
import jax.numpy as jnp
from jax.experimental import pallas as pl
from jax.experimental.pallas import tpu as pltpu


_ATTN_KEYS = ('wq', 'bq', 'wk', 'bk', 'wv', 'bv', 'wo', 'bo')


# ----------------------------- Pallas kernel --------------------------------

def _layernorm_f32(y, g, b):
    mu = jnp.mean(y, axis=-1, keepdims=True)
    var = jnp.mean(jnp.square(y - mu), axis=-1, keepdims=True)
    return (y - mu) * jax.lax.rsqrt(var + 1e-5) * g + b


def _attn_block(xq, qpos, kv, kpos, w, g_ref, b_ref, attn_scr, nhead):
    """LayerNorm(xq + MHA(q=xq+qpos, k=kv+kpos, v=kv)).  All values f32,
    matmul operands bf16 (accumulation f32).  Scale is pre-folded into wq/bq."""
    D = xq.shape[-1]
    Dh = D // nhead

    q_in = (xq if qpos is None else xq + qpos).astype(jnp.bfloat16)
    if kv is xq and kpos is qpos:          # self-attention: reuse q_in for keys
        k_in = q_in
    else:
        k_in = (kv if kpos is None else kv + kpos).astype(jnp.bfloat16)
    v_in = kv.astype(jnp.bfloat16)

    qp = jnp.dot(q_in, w['wq'][...], preferred_element_type=jnp.float32) + w['bq'][...]
    kp = jnp.dot(k_in, w['wk'][...], preferred_element_type=jnp.float32) + w['bk'][...]
    vp = jnp.dot(v_in, w['wv'][...], preferred_element_type=jnp.float32) + w['bv'][...]

    # Per-head attention (nhead is small, statically unrolled).  Each head's PV
    # result is written into the VMEM scratch slab; no concat of lane slices.
    for h in range(nhead):
        sl = slice(h * Dh, (h + 1) * Dh)
        qh = qp[:, sl].astype(jnp.bfloat16)          # (Lq, Dh)
        kh = kp[:, sl].astype(jnp.bfloat16)          # (Lk, Dh)
        vh = vp[:, sl].astype(jnp.bfloat16)          # (Lk, Dh)
        s = jax.lax.dot_general(qh, kh, (((1,), (1,)), ((), ())),
                                preferred_element_type=jnp.float32)   # (Lq, Lk)
        m = jnp.max(s, axis=-1, keepdims=True)
        e = jnp.exp(s - m)                                            # f32
        r = pl.reciprocal(jnp.sum(e, axis=-1, keepdims=True), approx=True)
        pv = jnp.dot(e.astype(jnp.bfloat16), vh,
                     preferred_element_type=jnp.float32)              # (Lq, Dh)
        attn_scr[:, sl] = (pv * r).astype(attn_scr.dtype)

    proj = jnp.dot(attn_scr[...], w['wo'][...],
                   preferred_element_type=jnp.float32) + w['bo'][...]
    return _layernorm_f32(xq + proj, g_ref[...], b_ref[...])


def _decoder_layer_kernel(*refs, nhead, has_qpos, has_mpos, with_final_norm):
    """One batch element, one full decoder layer:
         x = LN1(x + SelfAttn(x+qpos, x+qpos, x))
         x = LN2(x + CrossAttn(x+qpos, mem+mpos, mem))
         x = LN3(x + FFN(x))
       Optionally also emits FinalNorm(x) as a second output."""
    it = iter(refs)
    x_ref = next(it)
    qpos_ref = next(it) if has_qpos else None
    mem_ref = next(it)
    mpos_ref = next(it) if has_mpos else None
    sa = {k: next(it) for k in _ATTN_KEYS}
    ln1_g, ln1_b = next(it), next(it)
    ca = {k: next(it) for k in _ATTN_KEYS}
    ln2_g, ln2_b = next(it), next(it)
    w1, b1, w2, b2 = next(it), next(it), next(it), next(it)
    ln3_g, ln3_b = next(it), next(it)
    fn_g = fn_b = None
    if with_final_norm:
        fn_g, fn_b = next(it), next(it)
    o_ref = next(it)
    onorm_ref = next(it) if with_final_norm else None
    attn_scr = next(it)

    x = x_ref[0].astype(jnp.float32)                                   # (Lq, D)
    qpos = qpos_ref[0].astype(jnp.float32) if has_qpos else None
    mem = mem_ref[0].astype(jnp.float32)                               # (Lk, D)
    mpos = mpos_ref[0].astype(jnp.float32) if has_mpos else None

    # self-attention + residual + LN1
    x = _attn_block(x, qpos, x, qpos, sa, ln1_g, ln1_b, attn_scr, nhead)
    # cross-attention + residual + LN2
    x = _attn_block(x, qpos, mem, mpos, ca, ln2_g, ln2_b, attn_scr, nhead)
    # FFN + residual + LN3
    h = jnp.dot(x.astype(jnp.bfloat16), w1[...],
                preferred_element_type=jnp.float32) + b1[...]
    h = jnp.maximum(h, 0.0)                                            # ReLU
    y = x + jnp.dot(h.astype(jnp.bfloat16), w2[...],
                    preferred_element_type=jnp.float32) + b2[...]
    x3 = _layernorm_f32(y, ln3_g[...], ln3_b[...])

    o_ref[0] = x3.astype(o_ref.dtype)
    if with_final_norm:
        onorm_ref[0] = _layernorm_f32(x3, fn_g[...], fn_b[...]).astype(onorm_ref.dtype)


# --------------------------- pallas_call wrapper -----------------------------

def decoder_layer_pallas(x, qpos, mem, mpos, lp, final_norm, nhead):
    """x/qpos: (B, Lq, D); mem/mpos: (B, Lk, D).  Returns (x_new, x_normed|None)."""
    B, Lq, D = x.shape
    Lk = mem.shape[1]
    has_qpos = qpos is not None
    has_mpos = mpos is not None
    with_final_norm = final_norm is not None

    kernel = functools.partial(_decoder_layer_kernel, nhead=nhead,
                               has_qpos=has_qpos, has_mpos=has_mpos,
                               with_final_norm=with_final_norm)

    def act_spec(L):
        return pl.BlockSpec((1, L, D), lambda b: (b, 0, 0))

    def w_spec(arr):
        nd = arr.ndim
        return pl.BlockSpec(arr.shape, lambda b, _nd=nd: (0,) * _nd)

    inputs, in_specs = [x], [act_spec(Lq)]
    if has_qpos:
        inputs.append(qpos)
        in_specs.append(act_spec(Lq))
    inputs.append(mem)
    in_specs.append(act_spec(Lk))
    if has_mpos:
        inputs.append(mpos)
        in_specs.append(act_spec(Lk))

    def add(arrs):
        for a in arrs:
            inputs.append(a)
            in_specs.append(w_spec(a))

    add([lp['self_attn'][k] for k in _ATTN_KEYS])
    add([lp['ln1_g'], lp['ln1_b']])
    add([lp['cross_attn'][k] for k in _ATTN_KEYS])
    add([lp['ln2_g'], lp['ln2_b']])
    add([lp['w1'], lp['b1'], lp['w2'], lp['b2'], lp['ln3_g'], lp['ln3_b']])
    if with_final_norm:
        add([final_norm['g'], final_norm['b']])

    out_shapes = [jax.ShapeDtypeStruct((B, Lq, D), x.dtype)]
    out_specs = [act_spec(Lq)]
    if with_final_norm:
        out_shapes.append(jax.ShapeDtypeStruct((B, Lq, D), x.dtype))
        out_specs.append(act_spec(Lq))

    outs = pl.pallas_call(
        kernel,
        out_shape=tuple(out_shapes),
        grid=(B,),
        in_specs=in_specs,
        out_specs=tuple(out_specs),
        scratch_shapes=[pltpu.VMEM((Lq, D), jnp.bfloat16)],   # per-head PV slab
        compiler_params=pltpu.CompilerParams(
            dimension_semantics=("parallel",),
            # above v5e's 16 MiB default scoped limit, safe on v7x's 64 MiB VMEM
            vmem_limit_bytes=32 * 1024 * 1024),
    )(*inputs)

    x_new = outs[0]
    x_norm = outs[1] if with_final_norm else None
    return x_new, x_norm


# ---------------------------- decoder assembly -------------------------------

@functools.partial(jax.jit, static_argnames=('nhead', 'return_intermediate'))
def transformer_decoder_forward(layers, norm, tgt, memory, pos=None,
                                query_pos=None, *, nhead,
                                return_intermediate=False):
    """TransformerDecoder.forward (forward_post layers, dropout=identity)."""
    # (L, B, D) -> (B, L, D) once; every kernel runs batch-major.
    x = jnp.transpose(tgt, (1, 0, 2))
    mem = jnp.transpose(memory, (1, 0, 2))
    qpos = None if query_pos is None else jnp.transpose(query_pos, (1, 0, 2))
    mpos = None if pos is None else jnp.transpose(pos, (1, 0, 2))

    num_layers = len(layers)
    intermediate = []
    out_final = None
    for li, lp in enumerate(layers):
        # fuse the shared final norm into the layer kernel whenever it is needed
        need_norm = (norm is not None) and (return_intermediate or li == num_layers - 1)
        x, x_norm = decoder_layer_pallas(x, qpos, mem, mpos, lp,
                                         norm if need_norm else None, nhead)
        if return_intermediate:
            # (if norm is None torch would crash here; we append the raw output)
            intermediate.append(x_norm if x_norm is not None else x)
        if li == num_layers - 1:
            out_final = x_norm if x_norm is not None else x

    if return_intermediate:
        intermediate[-1] = out_final           # torch: pop() then append(norm(out))
        stacked = jnp.stack(intermediate)      # (N, B, L, D)
        return jnp.transpose(stacked, (0, 2, 1, 3))   # (N, L, B, D)
    return jnp.transpose(out_final, (1, 0, 2))[None]  # (1, L, B, D)


# ----------------------------- parameter prep --------------------------------

def make_layer_params(key, d_model, nhead, dim_feedforward):
    """torch-style parameters for one decoder layer."""
    ks = jax.random.split(key, 18)
    s = 0.05

    def attn_params(kw1, kw2, kb1, kb2):
        return {
            'in_w': s * jax.random.normal(kw1, (3 * d_model, d_model), jnp.float32),
            'in_b': s * jax.random.normal(kb1, (3 * d_model,), jnp.float32),
            'out_w': s * jax.random.normal(kw2, (d_model, d_model), jnp.float32),
            'out_b': s * jax.random.normal(kb2, (d_model,), jnp.float32),
        }

    return {
        'self_attn': attn_params(ks[0], ks[1], ks[2], ks[3]),
        'cross_attn': attn_params(ks[4], ks[5], ks[6], ks[7]),
        'ff_w1': s * jax.random.normal(ks[8], (dim_feedforward, d_model), jnp.float32),
        'ff_b1': s * jax.random.normal(ks[9], (dim_feedforward,), jnp.float32),
        'ff_w2': s * jax.random.normal(ks[10], (d_model, dim_feedforward), jnp.float32),
        'ff_b2': s * jax.random.normal(ks[11], (d_model,), jnp.float32),
        'ln1_g': 1.0 + 0.1 * jax.random.normal(ks[12], (d_model,), jnp.float32),
        'ln1_b': 0.1 * jax.random.normal(ks[13], (d_model,), jnp.float32),
        'ln2_g': 1.0 + 0.1 * jax.random.normal(ks[14], (d_model,), jnp.float32),
        'ln2_b': 0.1 * jax.random.normal(ks[15], (d_model,), jnp.float32),
        'ln3_g': 1.0 + 0.1 * jax.random.normal(ks[16], (d_model,), jnp.float32),
        'ln3_b': 0.1 * jax.random.normal(ks[17], (d_model,), jnp.float32),
    }


def prepare_layer_params(p, nhead):
    """Pre-transpose weights, cast matmul weights to bf16 (MXU-native rate),
    fold the attention scale into the Q projection, reshape biases / LN params
    to (1, N) f32 so kernels never transpose or rescale per call."""
    D = p['ln1_g'].shape[0]
    F_ = p['ff_b1'].shape[0]
    Dh = D // nhead
    scale = float(Dh) ** -0.5

    def prep_attn(a):
        in_w, in_b = a['in_w'], a['in_b']
        wq, wk, wv = in_w[:D], in_w[D:2 * D], in_w[2 * D:]
        bq, bk, bv = in_b[:D], in_b[D:2 * D], in_b[2 * D:]
        return {
            'wq': (scale * wq.T).astype(jnp.bfloat16),      # scale pre-folded
            'bq': (scale * bq).reshape(1, D).astype(jnp.float32),
            'wk': wk.T.astype(jnp.bfloat16),
            'bk': bk.reshape(1, D).astype(jnp.float32),
            'wv': wv.T.astype(jnp.bfloat16),
            'bv': bv.reshape(1, D).astype(jnp.float32),
            'wo': a['out_w'].T.astype(jnp.bfloat16),        # (D, D)
            'bo': a['out_b'].reshape(1, D).astype(jnp.float32),
        }

    return {
        'self_attn': prep_attn(p['self_attn']),
        'cross_attn': prep_attn(p['cross_attn']),
        'w1': p['ff_w1'].T.astype(jnp.bfloat16),            # (D, F)
        'b1': p['ff_b1'].reshape(1, F_).astype(jnp.float32),
        'w2': p['ff_w2'].T.astype(jnp.bfloat16),            # (F, D)
        'b2': p['ff_b2'].reshape(1, D).astype(jnp.float32),
        'ln1_g': p['ln1_g'].reshape(1, D), 'ln1_b': p['ln1_b'].reshape(1, D),
        'ln2_g': p['ln2_g'].reshape(1, D), 'ln2_b': p['ln2_b'].reshape(1, D),
        'ln3_g': p['ln3_g'].reshape(1, D), 'ln3_b': p['ln3_b'].reshape(1, D),
    }


# --------------------------- pure-JAX reference -------------------------------

def _mha_ref(query, key, value, p, nhead):
    Lq, B, D = query.shape
    Lk = key.shape[0]
    Dh = D // nhead
    scale = float(Dh) ** -0.5
    wq, wk, wv = p['in_w'][:D], p['in_w'][D:2 * D], p['in_w'][2 * D:]
    bq, bk, bv = p['in_b'][:D], p['in_b'][D:2 * D], p['in_b'][2 * D:]
    qp = query @ wq.T + bq
    kp = key @ wk.T + bk
    vp = value @ wv.T + bv
    qh = qp.reshape(Lq, B, nhead, Dh).transpose(1, 2, 0, 3)
    kh = kp.reshape(Lk, B, nhead, Dh).transpose(1, 2, 0, 3)
    vh = vp.reshape(Lk, B, nhead, Dh).transpose(1, 2, 0, 3)
    s = jnp.einsum('bhqd,bhkd->bhqk', qh * scale, kh)
    a = jax.nn.softmax(s, axis=-1)
    oh = jnp.einsum('bhqk,bhkd->bhqd', a, vh)
    o = oh.transpose(2, 0, 1, 3).reshape(Lq, B, D)
    return o @ p['out_w'].T + p['out_b']


def _ln_ref(y, g, b):
    mu = jnp.mean(y, axis=-1, keepdims=True)
    var = jnp.mean(jnp.square(y - mu), axis=-1, keepdims=True)
    return (y - mu) * jax.lax.rsqrt(var + 1e-5) * g + b


def decoder_layer_ref(p, tgt, memory, pos, query_pos, nhead):
    qk = tgt if query_pos is None else tgt + query_pos
    t2 = _mha_ref(qk, qk, tgt, p['self_attn'], nhead)
    x = _ln_ref(tgt + t2, p['ln1_g'], p['ln1_b'])
    q = x if query_pos is None else x + query_pos
    k = memory if pos is None else memory + pos
    t2 = _mha_ref(q, k, memory, p['cross_attn'], nhead)
    x2 = _ln_ref(x + t2, p['ln2_g'], p['ln2_b'])
    h = jnp.maximum(x2 @ p['ff_w1'].T + p['ff_b1'], 0.0)
    t2 = h @ p['ff_w2'].T + p['ff_b2']
    return _ln_ref(x2 + t2, p['ln3_g'], p['ln3_b'])


def transformer_decoder_ref(layers, norm_g, norm_b, tgt, memory, pos=None,
                            query_pos=None, *, nhead, return_intermediate=False):
    output = tgt
    inter = []
    for p in layers:
        output = decoder_layer_ref(p, output, memory, pos, query_pos, nhead)
        if return_intermediate:
            inter.append(_ln_ref(output, norm_g, norm_b))
    if norm_g is not None:
        output = _ln_ref(output, norm_g, norm_b)
        if return_intermediate:
            inter.pop()
            inter.append(output)
    if return_intermediate:
        return jnp.stack(inter)
    return output[None]


# ---------------------------------- main --------------------------------------

if __name__ == "__main__":
    d_model, nhead, dim_feedforward = 32, 4, 64
    num_layers = 2
    L_tgt, L_mem, B = 8, 12, 2

    root = jax.random.PRNGKey(0)
    kparams, kng, knb, k1, k2, k3, k4 = jax.random.split(root, 7)
    layer_keys = jax.random.split(kparams, num_layers)

    torch_layers = tuple(make_layer_params(k, d_model, nhead, dim_feedforward)
                         for k in layer_keys)
    norm_g = 1.0 + 0.1 * jax.random.normal(kng, (d_model,), jnp.float32)
    norm_b = 0.1 * jax.random.normal(knb, (d_model,), jnp.float32)

    kernel_layers = tuple(prepare_layer_params(p, nhead) for p in torch_layers)
    kernel_norm = {'g': norm_g.reshape(1, d_model), 'b': norm_b.reshape(1, d_model)}

    tgt = jax.random.normal(k1, (L_tgt, B, d_model), jnp.float32)
    memory = jax.random.normal(k2, (L_mem, B, d_model), jnp.float32)
    query_pos = jax.random.normal(k3, (L_tgt, B, d_model), jnp.float32)
    pos = jax.random.normal(k4, (L_mem, B, d_model), jnp.float32)

    # return_intermediate=True path (exercises the fused final-norm output)
    out = transformer_decoder_forward(kernel_layers, kernel_norm, tgt, memory,
                                      pos=pos, query_pos=query_pos,
                                      nhead=nhead, return_intermediate=True)
    out = jax.block_until_ready(out)
    ref = transformer_decoder_ref(torch_layers, norm_g, norm_b, tgt, memory,
                                  pos=pos, query_pos=query_pos,
                                  nhead=nhead, return_intermediate=True)
    assert out.shape == (num_layers, L_tgt, B, d_model), out.shape
    max_err = float(jnp.max(jnp.abs(out - ref)))
    # bf16 MXU operands + approx reciprocal -> looser tolerance than pure f32
    assert jnp.allclose(out, ref, atol=5e-2, rtol=5e-2), \
        f"Pallas output mismatch vs reference (max abs err {max_err})"

    # return_intermediate=False path (single-output kernel variant)
    out2 = transformer_decoder_forward(kernel_layers, kernel_norm, tgt, memory,
                                       pos=pos, query_pos=query_pos,
                                       nhead=nhead, return_intermediate=False)
    out2 = jax.block_until_ready(out2)
    ref2 = transformer_decoder_ref(torch_layers, norm_g, norm_b, tgt, memory,
                                   pos=pos, query_pos=query_pos,
                                   nhead=nhead, return_intermediate=False)
    assert out2.shape == (1, L_tgt, B, d_model), out2.shape
    assert jnp.allclose(out2, ref2, atol=5e-2, rtol=5e-2), \
        f"Pallas output mismatch vs reference (max abs err {float(jnp.max(jnp.abs(out2 - ref2)))})"

    print("KERNEL_OK")
</pallas_src>

<mosaic_0001>
module attributes {stable_mosaic.version = 11 : i64} {
  func.func @_decoder_layer_kernel(%arg0: i32, %arg1: memref<1x8x32xf32, #tpu.memory_space<vmem>>, %arg2: memref<1x8x32xf32, #tpu.memory_space<vmem>>, %arg3: memref<1x12x32xf32, #tpu.memory_space<vmem>>, %arg4: memref<1x12x32xf32, #tpu.memory_space<vmem>>, %arg5: memref<32x32xbf16, #tpu.memory_space<vmem>>, %arg6: memref<1x32xf32, #tpu.memory_space<vmem>>, %arg7: memref<32x32xbf16, #tpu.memory_space<vmem>>, %arg8: memref<1x32xf32, #tpu.memory_space<vmem>>, %arg9: memref<32x32xbf16, #tpu.memory_space<vmem>>, %arg10: memref<1x32xf32, #tpu.memory_space<vmem>>, %arg11: memref<32x32xbf16, #tpu.memory_space<vmem>>, %arg12: memref<1x32xf32, #tpu.memory_space<vmem>>, %arg13: memref<1x32xf32, #tpu.memory_space<vmem>>, %arg14: memref<1x32xf32, #tpu.memory_space<vmem>>, %arg15: memref<32x32xbf16, #tpu.memory_space<vmem>>, %arg16: memref<1x32xf32, #tpu.memory_space<vmem>>, %arg17: memref<32x32xbf16, #tpu.memory_space<vmem>>, %arg18: memref<1x32xf32, #tpu.memory_space<vmem>>, %arg19: memref<32x32xbf16, #tpu.memory_space<vmem>>, %arg20: memref<1x32xf32, #tpu.memory_space<vmem>>, %arg21: memref<32x32xbf16, #tpu.memory_space<vmem>>, %arg22: memref<1x32xf32, #tpu.memory_space<vmem>>, %arg23: memref<1x32xf32, #tpu.memory_space<vmem>>, %arg24: memref<1x32xf32, #tpu.memory_space<vmem>>, %arg25: memref<32x64xbf16, #tpu.memory_space<vmem>>, %arg26: memref<1x64xf32, #tpu.memory_space<vmem>>, %arg27: memref<64x32xbf16, #tpu.memory_space<vmem>>, %arg28: memref<1x32xf32, #tpu.memory_space<vmem>>, %arg29: memref<1x32xf32, #tpu.memory_space<vmem>>, %arg30: memref<1x32xf32, #tpu.memory_space<vmem>>, %arg31: memref<1x32xf32, #tpu.memory_space<vmem>>, %arg32: memref<1x32xf32, #tpu.memory_space<vmem>>, %arg33: memref<1x8x32xf32, #tpu.memory_space<vmem>>, %arg34: memref<1x8x32xf32, #tpu.memory_space<vmem>>, %arg35: memref<8x32xbf16, #tpu.memory_space<vmem>>) attributes {dimension_semantics = [#tpu.dimension_semantics<parallel>], iteration_bounds = array<i64: 2>, scalar_prefetch = 0 : i64, scratch_operands = 1 : i64, tpu.core_type = #tpu.core_type<tc>, window_params = [{transform_indices = @transform_0, window_bounds = array<i64: 1, 8, 32>}, {transform_indices = @transform_1, window_bounds = array<i64: 1, 8, 32>}, {transform_indices = @transform_2, window_bounds = array<i64: 1, 12, 32>}, {transform_indices = @transform_3, window_bounds = array<i64: 1, 12, 32>}, {pipeline_mode = #tpu.pipeline_mode<synchronous>, transform_indices = @transform_4, window_bounds = array<i64: 32, 32>}, {pipeline_mode = #tpu.pipeline_mode<synchronous>, transform_indices = @transform_5, window_bounds = array<i64: 1, 32>}, {pipeline_mode = #tpu.pipeline_mode<synchronous>, transform_indices = @transform_6, window_bounds = array<i64: 32, 32>}, {pipeline_mode = #tpu.pipeline_mode<synchronous>, transform_indices = @transform_7, window_bounds = array<i64: 1, 32>}, {pipeline_mode = #tpu.pipeline_mode<synchronous>, transform_indices = @transform_8, window_bounds = array<i64: 32, 32>}, {pipeline_mode = #tpu.pipeline_mode<synchronous>, transform_indices = @transform_9, window_bounds = array<i64: 1, 32>}, {pipeline_mode = #tpu.pipeline_mode<synchronous>, transform_indices = @transform_10, window_bounds = array<i64: 32, 32>}, {pipeline_mode = #tpu.pipeline_mode<synchronous>, transform_indices = @transform_11, window_bounds = array<i64: 1, 32>}, {pipeline_mode = #tpu.pipeline_mode<synchronous>, transform_indices = @transform_12, window_bounds = array<i64: 1, 32>}, {pipeline_mode = #tpu.pipeline_mode<synchronous>, transform_indices = @transform_13, window_bounds = array<i64: 1, 32>}, {pipeline_mode = #tpu.pipeline_mode<synchronous>, transform_indices = @transform_14, window_bounds = array<i64: 32, 32>}, {pipeline_mode = #tpu.pipeline_mode<synchronous>, transform_indices = @transform_15, window_bounds = array<i64: 1, 32>}, {pipeline_mode = #tpu.pipeline_mode<synchronous>, transform_indices = @transform_16, window_bounds = array<i64: 32, 32>}, {pipeline_mode = #tpu.pipeline_mode<synchronous>, transform_indices = @transform_17, window_bounds = array<i64: 1, 32>}, {pipeline_mode = #tpu.pipeline_mode<synchronous>, transform_indices = @transform_18, window_bounds = array<i64: 32, 32>}, {pipeline_mode = #tpu.pipeline_mode<synchronous>, transform_indices = @transform_19, window_bounds = array<i64: 1, 32>}, {pipeline_mode = #tpu.pipeline_mode<synchronous>, transform_indices = @transform_20, window_bounds = array<i64: 32, 32>}, {pipeline_mode = #tpu.pipeline_mode<synchronous>, transform_indices = @transform_21, window_bounds = array<i64: 1, 32>}, {pipeline_mode = #tpu.pipeline_mode<synchronous>, transform_indices = @transform_22, window_bounds = array<i64: 1, 32>}, {pipeline_mode = #tpu.pipeline_mode<synchronous>, transform_indices = @transform_23, window_bounds = array<i64: 1, 32>}, {pipeline_mode = #tpu.pipeline_mode<synchronous>, transform_indices = @transform_24, window_bounds = array<i64: 32, 64>}, {pipeline_mode = #tpu.pipeline_mode<synchronous>, transform_indices = @transform_25, window_bounds = array<i64: 1, 64>}, {pipeline_mode = #tpu.pipeline_mode<synchronous>, transform_indices = @transform_26, window_bounds = array<i64: 64, 32>}, {pipeline_mode = #tpu.pipeline_mode<synchronous>, transform_indices = @transform_27, window_bounds = array<i64: 1, 32>}, {pipeline_mode = #tpu.pipeline_mode<synchronous>, transform_indices = @transform_28, window_bounds = array<i64: 1, 32>}, {pipeline_mode = #tpu.pipeline_mode<synchronous>, transform_indices = @transform_29, window_bounds = array<i64: 1, 32>}, {pipeline_mode = #tpu.pipeline_mode<synchronous>, transform_indices = @transform_30, window_bounds = array<i64: 1, 32>}, {pipeline_mode = #tpu.pipeline_mode<synchronous>, transform_indices = @transform_31, window_bounds = array<i64: 1, 32>}, {transform_indices = @transform_32, window_bounds = array<i64: 1, 8, 32>}, {transform_indices = @transform_33, window_bounds = array<i64: 1, 8, 32>}]} {
    %c0 = arith.constant 0 : index
    %c0_0 = arith.constant 0 : index
    %c0_1 = arith.constant 0 : index
    %0 = vector.load %arg1[%c0, %c0_0, %c0_1] : memref<1x8x32xf32, #tpu.memory_space<vmem>>, vector<1x8x32xf32>
    %1 = vector.shape_cast %0 : vector<1x8x32xf32> to vector<8x32xf32>
    %c0_2 = arith.constant 0 : index
    %c0_3 = arith.constant 0 : index
    %c0_4 = arith.constant 0 : index
    %2 = vector.load %arg2[%c0_2, %c0_3, %c0_4] : memref<1x8x32xf32, #tpu.memory_space<vmem>>, vector<1x8x32xf32>
    %3 = vector.shape_cast %2 : vector<1x8x32xf32> to vector<8x32xf32>
    %c0_5 = arith.constant 0 : index
    %c0_6 = arith.constant 0 : index
    %c0_7 = arith.constant 0 : index
    %4 = vector.load %arg3[%c0_5, %c0_6, %c0_7] : memref<1x12x32xf32, #tpu.memory_space<vmem>>, vector<1x12x32xf32>
    %5 = vector.shape_cast %4 : vector<1x12x32xf32> to vector<12x32xf32>
    %c0_8 = arith.constant 0 : index
    %c0_9 = arith.constant 0 : index
    %c0_10 = arith.constant 0 : index
    %6 = vector.load %arg4[%c0_8, %c0_9, %c0_10] : memref<1x12x32xf32, #tpu.memory_space<vmem>>, vector<1x12x32xf32>
    %7 = vector.shape_cast %6 : vector<1x12x32xf32> to vector<12x32xf32>
    %8 = arith.addf %1, %3 : vector<8x32xf32>
    %9 = arith.truncf %8 : vector<8x32xf32> to vector<8x32xbf16>
    %10 = arith.truncf %1 : vector<8x32xf32> to vector<8x32xbf16>
    %c0_11 = arith.constant 0 : index
    %c0_12 = arith.constant 0 : index
    %11 = vector.load %arg5[%c0_11, %c0_12] : memref<32x32xbf16, #tpu.memory_space<vmem>>, vector<32x32xbf16>
    %cst = arith.constant dense<0.000000e+00> : vector<8x32xf32>
    %12 = tpu.matmul %9, %11, %cst {dimension_numbers = #tpu.dot_dimension_numbers<[1], [0], [0], [1], [0, 0, 1, 1], [], []>} : vector<8x32xbf16>, vector<32x32xbf16>, vector<8x32xf32> -> vector<8x32xf32>
    %c0_13 = arith.constant 0 : index
    %c0_14 = arith.constant 0 : index
    %13 = vector.load %arg6[%c0_13, %c0_14] : memref<1x32xf32, #tpu.memory_space<vmem>>, vector<1x32xf32>
    %14 = vector.broadcast %13 : vector<1x32xf32> to vector<8x32xf32>
    %15 = arith.addf %12, %14 : vector<8x32xf32>
    %c0_15 = arith.constant 0 : index
    %c0_16 = arith.constant 0 : index
    %16 = vector.load %arg7[%c0_15, %c0_16] : memref<32x32xbf16, #tpu.memory_space<vmem>>, vector<32x32xbf16>
    %cst_17 = arith.constant dense<0.000000e+00> : vector<8x32xf32>
    %17 = tpu.matmul %9, %16, %cst_17 {dimension_numbers = #tpu.dot_dimension_numbers<[1], [0], [0], [1], [0, 0, 1, 1], [], []>} : vector<8x32xbf16>, vector<32x32xbf16>, vector<8x32xf32> -> vector<8x32xf32>
    %c0_18 = arith.constant 0 : index
    %c0_19 = arith.constant 0 : index
    %18 = vector.load %arg8[%c0_18, %c0_19] : memref<1x32xf32, #tpu.memory_space<vmem>>, vector<1x32xf32>
    %19 = vector.broadcast %18 : vector<1x32xf32> to vector<8x32xf32>
    %20 = arith.addf %17, %19 : vector<8x32xf32>
    %c0_20 = arith.constant 0 : index
    %c0_21 = arith.constant 0 : index
    %21 = vector.load %arg9[%c0_20, %c0_21] : memref<32x32xbf16, #tpu.memory_space<vmem>>, vector<32x32xbf16>
    %cst_22 = arith.constant dense<0.000000e+00> : vector<8x32xf32>
    %22 = tpu.matmul %10, %21, %cst_22 {dimension_numbers = #tpu.dot_dimension_numbers<[1], [0], [0], [1], [0, 0, 1, 1], [], []>} : vector<8x32xbf16>, vector<32x32xbf16>, vector<8x32xf32> -> vector<8x32xf32>
    %c0_23 = arith.constant 0 : index
    %c0_24 = arith.constant 0 : index
    %23 = vector.load %arg10[%c0_23, %c0_24] : memref<1x32xf32, #tpu.memory_space<vmem>>, vector<1x32xf32>
    %24 = vector.broadcast %23 : vector<1x32xf32> to vector<8x32xf32>
    %25 = arith.addf %22, %24 : vector<8x32xf32>
    %26 = vector.extract_strided_slice %15 {offsets = [0, 0], sizes = [8, 8], strides = [1, 1]} : vector<8x32xf32> to vector<8x8xf32>
    %27 = arith.truncf %26 : vector<8x8xf32> to vector<8x8xbf16>
    %28 = vector.extract_strided_slice %20 {offsets = [0, 0], sizes = [8, 8], strides = [1, 1]} : vector<8x32xf32> to vector<8x8xf32>
    %29 = arith.truncf %28 : vector<8x8xf32> to vector<8x8xbf16>
    %30 = vector.extract_strided_slice %25 {offsets = [0, 0], sizes = [8, 8], strides = [1, 1]} : vector<8x32xf32> to vector<8x8xf32>
    %31 = arith.truncf %30 : vector<8x8xf32> to vector<8x8xbf16>
    %cst_25 = arith.constant dense<0.000000e+00> : vector<8x8xf32>
    %32 = tpu.matmul %27, %29, %cst_25 {dimension_numbers = #tpu.dot_dimension_numbers<[1], [1], [0], [0], [0, 0, 1, 0], [], []>} : vector<8x8xbf16>, vector<8x8xbf16>, vector<8x8xf32> -> vector<8x8xf32>
    %cst_26 = arith.constant dense<0xFF800000> : vector<8xf32>
    %33 = vector.multi_reduction <maximumf>, %32, %cst_26 [1] : vector<8x8xf32> to vector<8xf32>
    %34 = vector.shape_cast %33 : vector<8xf32> to vector<8x1xf32>
    %35 = vector.broadcast %34 : vector<8x1xf32> to vector<8x8xf32>
    %36 = arith.subf %32, %35 : vector<8x8xf32>
    %37 = math.exp %36 : vector<8x8xf32>
    %cst_27 = arith.constant dense<0.000000e+00> : vector<8xf32>
    %38 = vector.multi_reduction <add>, %37, %cst_27 [1] : vector<8x8xf32> to vector<8xf32>
    %39 = vector.shape_cast %38 : vector<8xf32> to vector<8x1xf32>
    %40 = tpu.reciprocal %39 {approx = true} : vector<8x1xf32> -> vector<8x1xf32>
    %41 = arith.truncf %37 : vector<8x8xf32> to vector<8x8xbf16>
    %cst_28 = arith.constant dense<0.000000e+00> : vector<8x8xf32>
    %42 = tpu.matmul %41, %31, %cst_28 {dimension_numbers = #tpu.dot_dimension_numbers<[1], [0], [0], [1], [0, 0, 1, 1], [], []>} : vector<8x8xbf16>, vector<8x8xbf16>, vector<8x8xf32> -> vector<8x8xf32>
    %43 = vector.broadcast %40 : vector<8x1xf32> to vector<8x8xf32>
    %44 = arith.mulf %42, %43 : vector<8x8xf32>
    %45 = arith.truncf %44 : vector<8x8xf32> to vector<8x8xbf16>
    %c0_29 = arith.constant 0 : index
    %c0_30 = arith.constant 0 : index
    %46 = vector.load %arg35[%c0_29, %c0_30] : memref<8x32xbf16, #tpu.memory_space<vmem>>, vector<8x8xbf16>
    tpu.vector_store %arg35[%c0_29, %c0_30], %45 {strides = array<i32>} : memref<8x32xbf16, #tpu.memory_space<vmem>>, vector<8x8xbf16>,
    %47 = vector.extract_strided_slice %15 {offsets = [0, 8], sizes = [8, 8], strides = [1, 1]} : vector<8x32xf32> to vector<8x8xf32>
    %48 = arith.truncf %47 : vector<8x8xf32> to vector<8x8xbf16>
    %49 = vector.extract_strided_slice %20 {offsets = [0, 8], sizes = [8, 8], strides = [1, 1]} : vector<8x32xf32> to vector<8x8xf32>
    %50 = arith.truncf %49 : vector<8x8xf32> to vector<8x8xbf16>
    %51 = vector.extract_strided_slice %25 {offsets = [0, 8], sizes = [8, 8], strides = [1, 1]} : vector<8x32xf32> to vector<8x8xf32>
    %52 = arith.truncf %51 : vector<8x8xf32> to vector<8x8xbf16>
    %cst_31 = arith.constant dense<0.000000e+00> : vector<8x8xf32>
    %53 = tpu.matmul %48, %50, %cst_31 {dimension_numbers = #tpu.dot_dimension_numbers<[1], [1], [0], [0], [0, 0, 1, 0], [], []>} : vector<8x8xbf16>, vector<8x8xbf16>, vector<8x8xf32> -> vector<8x8xf32>
    %cst_32 = arith.constant dense<0xFF800000> : vector<8xf32>
    %54 = vector.multi_reduction <maximumf>, %53, %cst_32 [1] : vector<8x8xf32> to vector<8xf32>
    %55 = vector.shape_cast %54 : vector<8xf32> to vector<8x1xf32>
    %56 = vector.broadcast %55 : vector<8x1xf32> to vector<8x8xf32>
    %57 = arith.subf %53, %56 : vector<8x8xf32>
    %58 = math.exp %57 : vector<8x8xf32>
    %cst_33 = arith.constant dense<0.000000e+00> : vector<8xf32>
    %59 = vector.multi_reduction <add>, %58, %cst_33 [1] : vector<8x8xf32> to vector<8xf32>
    %60 = vector.shape_cast %59 : vector<8xf32> to vector<8x1xf32>
    %61 = tpu.reciprocal %60 {approx = true} : vector<8x1xf32> -> vector<8x1xf32>
    %62 = arith.truncf %58 : vector<8x8xf32> to vector<8x8xbf16>
    %cst_34 = arith.constant dense<0.000000e+00> : vector<8x8xf32>
    %63 = tpu.matmul %62, %52, %cst_34 {dimension_numbers = #tpu.dot_dimension_numbers<[1], [0], [0], [1], [0, 0, 1, 1], [], []>} : vector<8x8xbf16>, vector<8x8xbf16>, vector<8x8xf32> -> vector<8x8xf32>
    %64 = vector.broadcast %61 : vector<8x1xf32> to vector<8x8xf32>
    %65 = arith.mulf %63, %64 : vector<8x8xf32>
    %66 = arith.truncf %65 : vector<8x8xf32> to vector<8x8xbf16>
    %c0_35 = arith.constant 0 : index
    %c8 = arith.constant 8 : index
    %67 = vector.load %arg35[%c0_35, %c8] : memref<8x32xbf16, #tpu.memory_space<vmem>>, vector<8x8xbf16>
    tpu.vector_store %arg35[%c0_35, %c8], %66 {strides = array<i32>} : memref<8x32xbf16, #tpu.memory_space<vmem>>, vector<8x8xbf16>,
    %68 = vector.extract_strided_slice %15 {offsets = [0, 16], sizes = [8, 8], strides = [1, 1]} : vector<8x32xf32> to vector<8x8xf32>
    %69 = arith.truncf %68 : vector<8x8xf32> to vector<8x8xbf16>
    %70 = vector.extract_strided_slice %20 {offsets = [0, 16], sizes = [8, 8], strides = [1, 1]} : vector<8x32xf32> to vector<8x8xf32>
    %71 = arith.truncf %70 : vector<8x8xf32> to vector<8x8xbf16>
    %72 = vector.extract_strided_slice %25 {offsets = [0, 16], sizes = [8, 8], strides = [1, 1]} : vector<8x32xf32> to vector<8x8xf32>
    %73 = arith.truncf %72 : vector<8x8xf32> to vector<8x8xbf16>
    %cst_36 = arith.constant dense<0.000000e+00> : vector<8x8xf32>
    %74 = tpu.matmul %69, %71, %cst_36 {dimension_numbers = #tpu.dot_dimension_numbers<[1], [1], [0], [0], [0, 0, 1, 0], [], []>} : vector<8x8xbf16>, vector<8x8xbf16>, vector<8x8xf32> -> vector<8x8xf32>
    %cst_37 = arith.constant dense<0xFF800000> : vector<8xf32>
    %75 = vector.multi_reduction <maximumf>, %74, %cst_37 [1] : vector<8x8xf32> to vector<8xf32>
    %76 = vector.shape_cast %75 : vector<8xf32> to vector<8x1xf32>
    %77 = vector.broadcast %76 : vector<8x1xf32> to vector<8x8xf32>
    %78 = arith.subf %74, %77 : vector<8x8xf32>
    %79 = math.exp %78 : vector<8x8xf32>
    %cst_38 = arith.constant dense<0.000000e+00> : vector<8xf32>
    %80 = vector.multi_reduction <add>, %79, %cst_38 [1] : vector<8x8xf32> to vector<8xf32>
    %81 = vector.shape_cast %80 : vector<8xf32> to vector<8x1xf32>
    %82 = tpu.reciprocal %81 {approx = true} : vector<8x1xf32> -> vector<8x1xf32>
    %83 = arith.truncf %79 : vector<8x8xf32> to vector<8x8xbf16>
    %cst_39 = arith.constant dense<0.000000e+00> : vector<8x8xf32>
    %84 = tpu.matmul %83, %73, %cst_39 {dimension_numbers = #tpu.dot_dimension_numbers<[1], [0], [0], [1], [0, 0, 1, 1], [], []>} : vector<8x8xbf16>, vector<8x8xbf16>, vector<8x8xf32> -> vector<8x8xf32>
    %85 = vector.broadcast %82 : vector<8x1xf32> to vector<8x8xf32>
    %86 = arith.mulf %84, %85 : vector<8x8xf32>
    %87 = arith.truncf %86 : vector<8x8xf32> to vector<8x8xbf16>
    %c0_40 = arith.constant 0 : index
    %c16 = arith.constant 16 : index
    %88 = vector.load %arg35[%c0_40, %c16] : memref<8x32xbf16, #tpu.memory_space<vmem>>, vector<8x8xbf16>
    tpu.vector_store %arg35[%c0_40, %c16], %87 {strides = array<i32>} : memref<8x32xbf16, #tpu.memory_space<vmem>>, vector<8x8xbf16>,
    %89 = vector.extract_strided_slice %15 {offsets = [0, 24], sizes = [8, 8], strides = [1, 1]} : vector<8x32xf32> to vector<8x8xf32>
    %90 = arith.truncf %89 : vector<8x8xf32> to vector<8x8xbf16>
    %91 = vector.extract_strided_slice %20 {offsets = [0, 24], sizes = [8, 8], strides = [1, 1]} : vector<8x32xf32> to vector<8x8xf32>
    %92 = arith.truncf %91 : vector<8x8xf32> to vector<8x8xbf16>
    %93 = vector.extract_strided_slice %25 {offsets = [0, 24], sizes = [8, 8], strides = [1, 1]} : vector<8x32xf32> to vector<8x8xf32>
    %94 = arith.truncf %93 : vector<8x8xf32> to vector<8x8xbf16>
    %cst_41 = arith.constant dense<0.000000e+00> : vector<8x8xf32>
    %95 = tpu.matmul %90, %92, %cst_41 {dimension_numbers = #tpu.dot_dimension_numbers<[1], [1], [0], [0], [0, 0, 1, 0], [], []>} : vector<8x8xbf16>, vector<8x8xbf16>, vector<8x8xf32> -> vector<8x8xf32>
    %cst_42 = arith.constant dense<0xFF800000> : vector<8xf32>
    %96 = vector.multi_reduction <maximumf>, %95, %cst_42 [1] : vector<8x8xf32> to vector<8xf32>
    %97 = vector.shape_cast %96 : vector<8xf32> to vector<8x1xf32>
    %98 = vector.broadcast %97 : vector<8x1xf32> to vector<8x8xf32>
    %99 = arith.subf %95, %98 : vector<8x8xf32>
    %100 = math.exp %99 : vector<8x8xf32>
    %cst_43 = arith.constant dense<0.000000e+00> : vector<8xf32>
    %101 = vector.multi_reduction <add>, %100, %cst_43 [1] : vector<8x8xf32> to vector<8xf32>
    %102 = vector.shape_cast %101 : vector<8xf32> to vector<8x1xf32>
    %103 = tpu.reciprocal %102 {approx = true} : vector<8x1xf32> -> vector<8x1xf32>
    %104 = arith.truncf %100 : vector<8x8xf32> to vector<8x8xbf16>
    %cst_44 = arith.constant dense<0.000000e+00> : vector<8x8xf32>
    %105 = tpu.matmul %104, %94, %cst_44 {dimension_numbers = #tpu.dot_dimension_numbers<[1], [0], [0], [1], [0, 0, 1, 1], [], []>} : vector<8x8xbf16>, vector<8x8xbf16>, vector<8x8xf32> -> vector<8x8xf32>
    %106 = vector.broadcast %103 : vector<8x1xf32> to vector<8x8xf32>
    %107 = arith.mulf %105, %106 : vector<8x8xf32>
    %108 = arith.truncf %107 : vector<8x8xf32> to vector<8x8xbf16>
    %c0_45 = arith.constant 0 : index
    %c24 = arith.constant 24 : index
    %109 = vector.load %arg35[%c0_45, %c24] : memref<8x32xbf16, #tpu.memory_space<vmem>>, vector<8x8xbf16>
    tpu.vector_store %arg35[%c0_45, %c24], %108 {strides = array<i32>} : memref<8x32xbf16, #tpu.memory_space<vmem>>, vector<8x8xbf16>,
    %c0_46 = arith.constant 0 : index
    %c0_47 = arith.constant 0 : index
    %110 = vector.load %arg35[%c0_46, %c0_47] : memref<8x32xbf16, #tpu.memory_space<vmem>>, vector<8x32xbf16>
    %c0_48 = arith.constant 0 : index
    %c0_49 = arith.constant 0 : index
    %111 = vector.load %arg11[%c0_48, %c0_49] : memref<32x32xbf16, #tpu.memory_space<vmem>>, vector<32x32xbf16>
    %cst_50 = arith.constant dense<0.000000e+00> : vector<8x32xf32>
    %112 = tpu.matmul %110, %111, %cst_50 {dimension_numbers = #tpu.dot_dimension_numbers<[1], [0], [0], [1], [0, 0, 1, 1], [], []>} : vector<8x32xbf16>, vector<32x32xbf16>, vector<8x32xf32> -> vector<8x32xf32>
    %c0_51 = arith.constant 0 : index
    %c0_52 = arith.constant 0 : index
    %113 = vector.load %arg12[%c0_51, %c0_52] : memref<1x32xf32, #tpu.memory_space<vmem>>, vector<1x32xf32>
    %114 = vector.broadcast %113 : vector<1x32xf32> to vector<8x32xf32>
    %115 = arith.addf %112, %114 : vector<8x32xf32>
    %116 = arith.addf %1, %115 : vector<8x32xf32>
    %c0_53 = arith.constant 0 : index
    %c0_54 = arith.constant 0 : index
    %117 = vector.load %arg13[%c0_53, %c0_54] : memref<1x32xf32, #tpu.memory_space<vmem>>, vector<1x32xf32>
    %c0_55 = arith.constant 0 : index
    %c0_56 = arith.constant 0 : index
    %118 = vector.load %arg14[%c0_55, %c0_56] : memref<1x32xf32, #tpu.memory_space<vmem>>, vector<1x32xf32>
    %cst_57 = arith.constant dense<0.000000e+00> : vector<8xf32>
    %119 = vector.multi_reduction <add>, %116, %cst_57 [1] : vector<8x32xf32> to vector<8xf32>
    %120 = vector.shape_cast %119 : vector<8xf32> to vector<8x1xf32>
    %cst_58 = arith.constant 3.200000e+01 : f32
    %121 = vector.broadcast %cst_58 : f32 to vector<8x1xf32>
    %122 = arith.divf %120, %121 : vector<8x1xf32>
    %123 = vector.broadcast %122 : vector<8x1xf32> to vector<8x32xf32>
    %124 = arith.subf %116, %123 : vector<8x32xf32>
    %125 = arith.mulf %124, %124 : vector<8x32xf32>
    %cst_59 = arith.constant dense<0.000000e+00> : vector<8xf32>
    %126 = vector.multi_reduction <add>, %125, %cst_59 [1] : vector<8x32xf32> to vector<8xf32>
    %127 = vector.shape_cast %126 : vector<8xf32> to vector<8x1xf32>
    %cst_60 = arith.constant 3.200000e+01 : f32
    %128 = vector.broadcast %cst_60 : f32 to vector<8x1xf32>
    %129 = arith.divf %127, %128 : vector<8x1xf32>
    %130 = vector.broadcast %122 : vector<8x1xf32> to vector<8x32xf32>
    %131 = arith.subf %116, %130 : vector<8x32xf32>
    %cst_61 = arith.constant 9.99999974E-6 : f32
    %132 = vector.broadcast %cst_61 : f32 to vector<8x1xf32>
    %133 = arith.addf %129, %132 : vector<8x1xf32>
    %134 = math.rsqrt %133 : vector<8x1xf32>
    %135 = vector.broadcast %134 : vector<8x1xf32> to vector<8x32xf32>
    %136 = arith.mulf %131, %135 : vector<8x32xf32>
    %137 = vector.broadcast %117 : vector<1x32xf32> to vector<8x32xf32>
    %138 = arith.mulf %136, %137 : vector<8x32xf32>
    %139 = vector.broadcast %118 : vector<1x32xf32> to vector<8x32xf32>
    %140 = arith.addf %138, %139 : vector<8x32xf32>
    %141 = arith.addf %140, %3 : vector<8x32xf32>
    %142 = arith.truncf %141 : vector<8x32xf32> to vector<8x32xbf16>
    %143 = arith.addf %5, %7 : vector<12x32xf32>
    %144 = arith.truncf %143 : vector<12x32xf32> to vector<12x32xbf16>
    %145 = arith.truncf %5 : vector<12x32xf32> to vector<12x32xbf16>
    %c0_62 = arith.constant 0 : index
    %c0_63 = arith.constant 0 : index
    %146 = vector.load %arg15[%c0_62, %c0_63] : memref<32x32xbf16, #tpu.memory_space<vmem>>, vector<32x32xbf16>
    %cst_64 = arith.constant dense<0.000000e+00> : vector<8x32xf32>
    %147 = tpu.matmul %142, %146, %cst_64 {dimension_numbers = #tpu.dot_dimension_numbers<[1], [0], [0], [1], [0, 0, 1, 1], [], []>} : vector<8x32xbf16>, vector<32x32xbf16>, vector<8x32xf32> -> vector<8x32xf32>
    %c0_65 = arith.constant 0 : index
    %c0_66 = arith.constant 0 : index
    %148 = vector.load %arg16[%c0_65, %c0_66] : memref<1x32xf32, #tpu.memory_space<vmem>>, vector<1x32xf32>
    %149 = vector.broadcast %148 : vector<1x32xf32> to vector<8x32xf32>
    %150 = arith.addf %147, %149 : vector<8x32xf32>
    %c0_67 = arith.constant 0 : index
    %c0_68 = arith.constant 0 : index
    %151 = vector.load %arg17[%c0_67, %c0_68] : memref<32x32xbf16, #tpu.memory_space<vmem>>, vector<32x32xbf16>
    %cst_69 = arith.constant dense<0.000000e+00> : vector<12x32xf32>
    %152 = tpu.matmul %144, %151, %cst_69 {dimension_numbers = #tpu.dot_dimension_numbers<[1], [0], [0], [1], [0, 0, 1, 1], [], []>} : vector<12x32xbf16>, vector<32x32xbf16>, vector<12x32xf32> -> vector<12x32xf32>
    %c0_70 = arith.constant 0 : index
    %c0_71 = arith.constant 0 : index
    %153 = vector.load %arg18[%c0_70, %c0_71] : memref<1x32xf32, #tpu.memory_space<vmem>>, vector<1x32xf32>
    %154 = vector.broadcast %153 : vector<1x32xf32> to vector<12x32xf32>
    %155 = arith.addf %152, %154 : vector<12x32xf32>
    %c0_72 = arith.constant 0 : index
    %c0_73 = arith.constant 0 : index
    %156 = vector.load %arg19[%c0_72, %c0_73] : memref<32x32xbf16, #tpu.memory_space<vmem>>, vector<32x32xbf16>
    %cst_74 = arith.constant dense<0.000000e+00> : vector<12x32xf32>
    %157 = tpu.matmul %145, %156, %cst_74 {dimension_numbers = #tpu.dot_dimension_numbers<[1], [0], [0], [1], [0, 0, 1, 1], [], []>} : vector<12x32xbf16>, vector<32x32xbf16>, vector<12x32xf32> -> vector<12x32xf32>
    %c0_75 = arith.constant 0 : index
    %c0_76 = arith.constant 0 : index
    %158 = vector.load %arg20[%c0_75, %c0_76] : memref<1x32xf32, #tpu.memory_space<vmem>>, vector<1x32xf32>
    %159 = vector.broadcast %158 : vector<1x32xf32> to vector<12x32xf32>
    %160 = arith.addf %157, %159 : vector<12x32xf32>
    %161 = vector.extract_strided_slice %150 {offsets = [0, 0], sizes = [8, 8], strides = [1, 1]} : vector<8x32xf32> to vector<8x8xf32>
    %162 = arith.truncf %161 : vector<8x8xf32> to vector<8x8xbf16>
    %163 = vector.extract_strided_slice %155 {offsets = [0, 0], sizes = [12, 8], strides = [1, 1]} : vector<12x32xf32> to vector<12x8xf32>
    %164 = arith.truncf %163 : vector<12x8xf32> to vector<12x8xbf16>
    %165 = vector.extract_strided_slice %160 {offsets = [0, 0], sizes = [12, 8], strides = [1, 1]} : vector<12x32xf32> to vector<12x8xf32>
    %166 = arith.truncf %165 : vector<12x8xf32> to vector<12x8xbf16>
    %cst_77 = arith.constant dense<0.000000e+00> : vector<8x12xf32>
    %167 = tpu.matmul %162, %164, %cst_77 {dimension_numbers = #tpu.dot_dimension_numbers<[1], [1], [0], [0], [0, 0, 1, 0], [], []>} : vector<8x8xbf16>, vector<12x8xbf16>, vector<8x12xf32> -> vector<8x12xf32>
    %cst_78 = arith.constant dense<0xFF800000> : vector<8xf32>
    %168 = vector.multi_reduction <maximumf>, %167, %cst_78 [1] : vector<8x12xf32> to vector<8xf32>
    %169 = vector.shape_cast %168 : vector<8xf32> to vector<8x1xf32>
    %170 = vector.broadcast %169 : vector<8x1xf32> to vector<8x12xf32>
    %171 = arith.subf %167, %170 : vector<8x12xf32>
    %172 = math.exp %171 : vector<8x12xf32>
    %cst_79 = arith.constant dense<0.000000e+00> : vector<8xf32>
    %173 = vector.multi_reduction <add>, %172, %cst_79 [1] : vector<8x12xf32> to vector<8xf32>
    %174 = vector.shape_cast %173 : vector<8xf32> to vector<8x1xf32>
    %175 = tpu.reciprocal %174 {approx = true} : vector<8x1xf32> -> vector<8x1xf32>
    %176 = arith.truncf %172 : vector<8x12xf32> to vector<8x12xbf16>
    %cst_80 = arith.constant dense<0.000000e+00> : vector<8x8xf32>
    %177 = tpu.matmul %176, %166, %cst_80 {dimension_numbers = #tpu.dot_dimension_numbers<[1], [0], [0], [1], [0, 0, 1, 1], [], []>} : vector<8x12xbf16>, vector<12x8xbf16>, vector<8x8xf32> -> vector<8x8xf32>
    %178 = vector.broadcast %175 : vector<8x1xf32> to vector<8x8xf32>
    %179 = arith.mulf %177, %178 : vector<8x8xf32>
    %180 = arith.truncf %179 : vector<8x8xf32> to vector<8x8xbf16>
    %c0_81 = arith.constant 0 : index
    %c0_82 = arith.constant 0 : index
    %181 = vector.load %arg35[%c0_81, %c0_82] : memref<8x32xbf16, #tpu.memory_space<vmem>>, vector<8x8xbf16>
    tpu.vector_store %arg35[%c0_81, %c0_82], %180 {strides = array<i32>} : memref<8x32xbf16, #tpu.memory_space<vmem>>, vector<8x8xbf16>,
    %182 = vector.extract_strided_slice %150 {offsets = [0, 8], sizes = [8, 8], strides = [1, 1]} : vector<8x32xf32> to vector<8x8xf32>
    %183 = arith.truncf %182 : vector<8x8xf32> to vector<8x8xbf16>
    %184 = vector.extract_strided_slice %155 {offsets = [0, 8], sizes = [12, 8], strides = [1, 1]} : vector<12x32xf32> to vector<12x8xf32>
    %185 = arith.truncf %184 : vector<12x8xf32> to vector<12x8xbf16>
    %186 = vector.extract_strided_slice %160 {offsets = [0, 8], sizes = [12, 8], strides = [1, 1]} : vector<12x32xf32> to vector<12x8xf32>
    %187 = arith.truncf %186 : vector<12x8xf32> to vector<12x8xbf16>
    %cst_83 = arith.constant dense<0.000000e+00> : vector<8x12xf32>
    %188 = tpu.matmul %183, %185, %cst_83 {dimension_numbers = #tpu.dot_dimension_numbers<[1], [1], [0], [0], [0, 0, 1, 0], [], []>} : vector<8x8xbf16>, vector<12x8xbf16>, vector<8x12xf32> -> vector<8x12xf32>
    %cst_84 = arith.constant dense<0xFF800000> : vector<8xf32>
    %189 = vector.multi_reduction <maximumf>, %188, %cst_84 [1] : vector<8x12xf32> to vector<8xf32>
    %190 = vector.shape_cast %189 : vector<8xf32> to vector<8x1xf32>
    %191 = vector.broadcast %190 : vector<8x1xf32> to vector<8x12xf32>
    %192 = arith.subf %188, %191 : vector<8x12xf32>
    %193 = math.exp %192 : vector<8x12xf32>
    %cst_85 = arith.constant dense<0.000000e+00> : vector<8xf32>
    %194 = vector.multi_reduction <add>, %193, %cst_85 [1] : vector<8x12xf32> to vector<8xf32>
    %195 = vector.shape_cast %194 : vector<8xf32> to vector<8x1xf32>
    %196 = tpu.reciprocal %195 {approx = true} : vector<8x1xf32> -> vector<8x1xf32>
    %197 = arith.truncf %193 : vector<8x12xf32> to vector<8x12xbf16>
    %cst_86 = arith.constant dense<0.000000e+00> : vector<8x8xf32>
    %198 = tpu.matmul %197, %187, %cst_86 {dimension_numbers = #tpu.dot_dimension_numbers<[1], [0], [0], [1], [0, 0, 1, 1], [], []>} : vector<8x12xbf16>, vector<12x8xbf16>, vector<8x8xf32> -> vector<8x8xf32>
    %199 = vector.broadcast %196 : vector<8x1xf32> to vector<8x8xf32>
    %200 = arith.mulf %198, %199 : vector<8x8xf32>
    %201 = arith.truncf %200 : vector<8x8xf32> to vector<8x8xbf16>
    %c0_87 = arith.constant 0 : index
    %c8_88 = arith.constant 8 : index
    %202 = vector.load %arg35[%c0_87, %c8_88] : memref<8x32xbf16, #tpu.memory_space<vmem>>, vector<8x8xbf16>
    tpu.vector_store %arg35[%c0_87, %c8_88], %201 {strides = array<i32>} : memref<8x32xbf16, #tpu.memory_space<vmem>>, vector<8x8xbf16>,
    %203 = vector.extract_strided_slice %150 {offsets = [0, 16], sizes = [8, 8], strides = [1, 1]} : vector<8x32xf32> to vector<8x8xf32>
    %204 = arith.truncf %203 : vector<8x8xf32> to vector<8x8xbf16>
    %205 = vector.extract_strided_slice %155 {offsets = [0, 16], sizes = [12, 8], strides = [1, 1]} : vector<12x32xf32> to vector<12x8xf32>
    %206 = arith.truncf %205 : vector<12x8xf32> to vector<12x8xbf16>
    %207 = vector.extract_strided_slice %160 {offsets = [0, 16], sizes = [12, 8], strides = [1, 1]} : vector<12x32xf32> to vector<12x8xf32>
    %208 = arith.truncf %207 : vector<12x8xf32> to vector<12x8xbf16>
    %cst_89 = arith.constant dense<0.000000e+00> : vector<8x12xf32>
    %209 = tpu.matmul %204, %206, %cst_89 {dimension_numbers = #tpu.dot_dimension_numbers<[1], [1], [0], [0], [0, 0, 1, 0], [], []>} : vector<8x8xbf16>, vector<12x8xbf16>, vector<8x12xf32> -> vector<8x12xf32>
    %cst_90 = arith.constant dense<0xFF800000> : vector<8xf32>
    %210 = vector.multi_reduction <maximumf>, %209, %cst_90 [1] : vector<8x12xf32> to vector<8xf32>
    %211 = vector.shape_cast %210 : vector<8xf32> to vector<8x1xf32>
    %212 = vector.broadcast %211 : vector<8x1xf32> to vector<8x12xf32>
    %213 = arith.subf %209, %212 : vector<8x12xf32>
    %214 = math.exp %213 : vector<8x12xf32>
    %cst_91 = arith.constant dense<0.000000e+00> : vector<8xf32>
    %215 = vector.multi_reduction <add>, %214, %cst_91 [1] : vector<8x12xf32> to vector<8xf32>
    %216 = vector.shape_cast %215 : vector<8xf32> to vector<8x1xf32>
    %217 = tpu.reciprocal %216 {approx = true} : vector<8x1xf32> -> vector<8x1xf32>
    %218 = arith.truncf %214 : vector<8x12xf32> to vector<8x12xbf16>
    %cst_92 = arith.constant dense<0.000000e+00> : vector<8x8xf32>
    %219 = tpu.matmul %218, %208, %cst_92 {dimension_numbers = #tpu.dot_dimension_numbers<[1], [0], [0], [1], [0, 0, 1, 1], [], []>} : vector<8x12xbf16>, vector<12x8xbf16>, vector<8x8xf32> -> vector<8x8xf32>
    %220 = vector.broadcast %217 : vector<8x1xf32> to vector<8x8xf32>
    %221 = arith.mulf %219, %220 : vector<8x8xf32>
    %222 = arith.truncf %221 : vector<8x8xf32> to vector<8x8xbf16>
    %c0_93 = arith.constant 0 : index
    %c16_94 = arith.constant 16 : index
    %223 = vector.load %arg35[%c0_93, %c16_94] : memref<8x32xbf16, #tpu.memory_space<vmem>>, vector<8x8xbf16>
    tpu.vector_store %arg35[%c0_93, %c16_94], %222 {strides = array<i32>} : memref<8x32xbf16, #tpu.memory_space<vmem>>, vector<8x8xbf16>,
    %224 = vector.extract_strided_slice %150 {offsets = [0, 24], sizes = [8, 8], strides = [1, 1]} : vector<8x32xf32> to vector<8x8xf32>
    %225 = arith.truncf %224 : vector<8x8xf32> to vector<8x8xbf16>
    %226 = vector.extract_strided_slice %155 {offsets = [0, 24], sizes = [12, 8], strides = [1, 1]} : vector<12x32xf32> to vector<12x8xf32>
    %227 = arith.truncf %226 : vector<12x8xf32> to vector<12x8xbf16>
    %228 = vector.extract_strided_slice %160 {offsets = [0, 24], sizes = [12, 8], strides = [1, 1]} : vector<12x32xf32> to vector<12x8xf32>
    %229 = arith.truncf %228 : vector<12x8xf32> to vector<12x8xbf16>
    %cst_95 = arith.constant dense<0.000000e+00> : vector<8x12xf32>
    %230 = tpu.matmul %225, %227, %cst_95 {dimension_numbers = #tpu.dot_dimension_numbers<[1], [1], [0], [0], [0, 0, 1, 0], [], []>} : vector<8x8xbf16>, vector<12x8xbf16>, vector<8x12xf32> -> vector<8x12xf32>
    %cst_96 = arith.constant dense<0xFF800000> : vector<8xf32>
    %231 = vector.multi_reduction <maximumf>, %230, %cst_96 [1] : vector<8x12xf32> to vector<8xf32>
    %232 = vector.shape_cast %231 : vector<8xf32> to vector<8x1xf32>
    %233 = vector.broadcast %232 : vector<8x1xf32> to vector<8x12xf32>
    %234 = arith.subf %230, %233 : vector<8x12xf32>
    %235 = math.exp %234 : vector<8x12xf32>
    %cst_97 = arith.constant dense<0.000000e+00> : vector<8xf32>
    %236 = vector.multi_reduction <add>, %235, %cst_97 [1] : vector<8x12xf32> to vector<8xf32>
    %237 = vector.shape_cast %236 : vector<8xf32> to vector<8x1xf32>
    %238 = tpu.reciprocal %237 {approx = true} : vector<8x1xf32> -> vector<8x1xf32>
    %239 = arith.truncf %235 : vector<8x12xf32> to vector<8x12xbf16>
    %cst_98 = arith.constant dense<0.000000e+00> : vector<8x8xf32>
    %240 = tpu.matmul %239, %229, %cst_98 {dimension_numbers = #tpu.dot_dimension_numbers<[1], [0], [0], [1], [0, 0, 1, 1], [], []>} : vector<8x12xbf16>, vector<12x8xbf16>, vector<8x8xf32> -> vector<8x8xf32>
    %241 = vector.broadcast %238 : vector<8x1xf32> to vector<8x8xf32>
    %242 = arith.mulf %240, %241 : vector<8x8xf32>
    %243 = arith.truncf %242 : vector<8x8xf32> to vector<8x8xbf16>
    %c0_99 = arith.constant 0 : index
    %c24_100 = arith.constant 24 : index
    %244 = vector.load %arg35[%c0_99, %c24_100] : memref<8x32xbf16, #tpu.memory_space<vmem>>, vector<8x8xbf16>
    tpu.vector_store %arg35[%c0_99, %c24_100], %243 {strides = array<i32>} : memref<8x32xbf16, #tpu.memory_space<vmem>>, vector<8x8xbf16>,
    %c0_101 = arith.constant 0 : index
    %c0_102 = arith.constant 0 : index
    %245 = vector.load %arg35[%c0_101, %c0_102] : memref<8x32xbf16, #tpu.memory_space<vmem>>, vector<8x32xbf16>
    %c0_103 = arith.constant 0 : index
    %c0_104 = arith.constant 0 : index
    %246 = vector.load %arg21[%c0_103, %c0_104] : memref<32x32xbf16, #tpu.memory_space<vmem>>, vector<32x32xbf16>
    %cst_105 = arith.constant dense<0.000000e+00> : vector<8x32xf32>
    %247 = tpu.matmul %245, %246, %cst_105 {dimension_numbers = #tpu.dot_dimension_numbers<[1], [0], [0], [1], [0, 0, 1, 1], [], []>} : vector<8x32xbf16>, vector<32x32xbf16>, vector<8x32xf32> -> vector<8x32xf32>
    %c0_106 = arith.constant 0 : index
    %c0_107 = arith.constant 0 : index
    %248 = vector.load %arg22[%c0_106, %c0_107] : memref<1x32xf32, #tpu.memory_space<vmem>>, vector<1x32xf32>
    %249 = vector.broadcast %248 : vector<1x32xf32> to vector<8x32xf32>
    %250 = arith.addf %247, %249 : vector<8x32xf32>
    %251 = arith.addf %140, %250 : vector<8x32xf32>
    %c0_108 = arith.constant 0 : index
    %c0_109 = arith.constant 0 : index
    %252 = vector.load %arg23[%c0_108, %c0_109] : memref<1x32xf32, #tpu.memory_space<vmem>>, vector<1x32xf32>
    %c0_110 = arith.constant 0 : index
    %c0_111 = arith.constant 0 : index
    %253 = vector.load %arg24[%c0_110, %c0_111] : memref<1x32xf32, #tpu.memory_space<vmem>>, vector<1x32xf32>
    %cst_112 = arith.constant dense<0.000000e+00> : vector<8xf32>
    %254 = vector.multi_reduction <add>, %251, %cst_112 [1] : vector<8x32xf32> to vector<8xf32>
    %255 = vector.shape_cast %254 : vector<8xf32> to vector<8x1xf32>
    %cst_113 = arith.constant 3.200000e+01 : f32
    %256 = vector.broadcast %cst_113 : f32 to vector<8x1xf32>
    %257 = arith.divf %255, %256 : vector<8x1xf32>
    %258 = vector.broadcast %257 : vector<8x1xf32> to vector<8x32xf32>
    %259 = arith.subf %251, %258 : vector<8x32xf32>
    %260 = arith.mulf %259, %259 : vector<8x32xf32>
    %cst_114 = arith.constant dense<0.000000e+00> : vector<8xf32>
    %261 = vector.multi_reduction <add>, %260, %cst_114 [1] : vector<8x32xf32> to vector<8xf32>
    %262 = vector.shape_cast %261 : vector<8xf32> to vector<8x1xf32>
    %cst_115 = arith.constant 3.200000e+01 : f32
    %263 = vector.broadcast %cst_115 : f32 to vector<8x1xf32>
    %264 = arith.divf %262, %263 : vector<8x1xf32>
    %265 = vector.broadcast %257 : vector<8x1xf32> to vector<8x32xf32>
    %266 = arith.subf %251, %265 : vector<8x32xf32>
    %cst_116 = arith.constant 9.99999974E-6 : f32
    %267 = vector.broadcast %cst_116 : f32 to vector<8x1xf32>
    %268 = arith.addf %264, %267 : vector<8x1xf32>
    %269 = math.rsqrt %268 : vector<8x1xf32>
    %270 = vector.broadcast %269 : vector<8x1xf32> to vector<8x32xf32>
    %271 = arith.mulf %266, %270 : vector<8x32xf32>
    %272 = vector.broadcast %252 : vector<1x32xf32> to vector<8x32xf32>
    %273 = arith.mulf %271, %272 : vector<8x32xf32>
    %274 = vector.broadcast %253 : vector<1x32xf32> to vector<8x32xf32>
    %275 = arith.addf %273, %274 : vector<8x32xf32>
    %276 = arith.truncf %275 : vector<8x32xf32> to vector<8x32xbf16>
    %c0_117 = arith.constant 0 : index
    %c0_118 = arith.constant 0 : index
    %277 = vector.load %arg25[%c0_117, %c0_118] : memref<32x64xbf16, #tpu.memory_space<vmem>>, vector<32x64xbf16>
    %cst_119 = arith.constant dense<0.000000e+00> : vector<8x64xf32>
    %278 = tpu.matmul %276, %277, %cst_119 {dimension_numbers = #tpu.dot_dimension_numbers<[1], [0], [0], [1], [0, 0, 1, 1], [], []>} : vector<8x32xbf16>, vector<32x64xbf16>, vector<8x64xf32> -> vector<8x64xf32>
    %c0_120 = arith.constant 0 : index
    %c0_121 = arith.constant 0 : index
    %279 = vector.load %arg26[%c0_120, %c0_121] : memref<1x64xf32, #tpu.memory_space<vmem>>, vector<1x64xf32>
    %280 = vector.broadcast %279 : vector<1x64xf32> to vector<8x64xf32>
    %281 = arith.addf %278, %280 : vector<8x64xf32>
    %cst_122 = arith.constant 0.000000e+00 : f32
    %282 = vector.broadcast %cst_122 : f32 to vector<8x64xf32>
    %283 = arith.maximumf %281, %282 : vector<8x64xf32>
    %284 = arith.truncf %283 : vector<8x64xf32> to vector<8x64xbf16>
    %c0_123 = arith.constant 0 : index
    %c0_124 = arith.constant 0 : index
    %285 = vector.load %arg27[%c0_123, %c0_124] : memref<64x32xbf16, #tpu.memory_space<vmem>>, vector<64x32xbf16>
    %cst_125 = arith.constant dense<0.000000e+00> : vector<8x32xf32>
    %286 = tpu.matmul %284, %285, %cst_125 {dimension_numbers = #tpu.dot_dimension_numbers<[1], [0], [0], [1], [0, 0, 1, 1], [], []>} : vector<8x64xbf16>, vector<64x32xbf16>, vector<8x32xf32> -> vector<8x32xf32>
    %287 = arith.addf %275, %286 : vector<8x32xf32>
    %c0_126 = arith.constant 0 : index
    %c0_127 = arith.constant 0 : index
    %288 = vector.load %arg28[%c0_126, %c0_127] : memref<1x32xf32, #tpu.memory_space<vmem>>, vector<1x32xf32>
    %289 = vector.broadcast %288 : vector<1x32xf32> to vector<8x32xf32>
    %290 = arith.addf %287, %289 : vector<8x32xf32>
    %c0_128 = arith.constant 0 : index
    %c0_129 = arith.constant 0 : index
    %291 = vector.load %arg29[%c0_128, %c0_129] : memref<1x32xf32, #tpu.memory_space<vmem>>, vector<1x32xf32>
    %c0_130 = arith.constant 0 : index
    %c0_131 = arith.constant 0 : index
    %292 = vector.load %arg30[%c0_130, %c0_131] : memref<1x32xf32, #tpu.memory_space<vmem>>, vector<1x32xf32>
    %cst_132 = arith.constant dense<0.000000e+00> : vector<8xf32>
    %293 = vector.multi_reduction <add>, %290, %cst_132 [1] : vector<8x32xf32> to vector<8xf32>
    %294 = vector.shape_cast %293 : vector<8xf32> to vector<8x1xf32>
    %cst_133 = arith.constant 3.200000e+01 : f32
    %295 = vector.broadcast %cst_133 : f32 to vector<8x1xf32>
    %296 = arith.divf %294, %295 : vector<8x1xf32>
    %297 = vector.broadcast %296 : vector<8x1xf32> to vector<8x32xf32>
    %298 = arith.subf %290, %297 : vector<8x32xf32>
    %299 = arith.mulf %298, %298 : vector<8x32xf32>
    %cst_134 = arith.constant dense<0.000000e+00> : vector<8xf32>
    %300 = vector.multi_reduction <add>, %299, %cst_134 [1] : vector<8x32xf32> to vector<8xf32>
    %301 = vector.shape_cast %300 : vector<8xf32> to vector<8x1xf32>
    %cst_135 = arith.constant 3.200000e+01 : f32
    %302 = vector.broadcast %cst_135 : f32 to vector<8x1xf32>
    %303 = arith.divf %301, %302 : vector<8x1xf32>
    %304 = vector.broadcast %296 : vector<8x1xf32> to vector<8x32xf32>
    %305 = arith.subf %290, %304 : vector<8x32xf32>
    %cst_136 = arith.constant 9.99999974E-6 : f32
    %306 = vector.broadcast %cst_136 : f32 to vector<8x1xf32>
    %307 = arith.addf %303, %306 : vector<8x1xf32>
    %308 = math.rsqrt %307 : vector<8x1xf32>
    %309 = vector.broadcast %308 : vector<8x1xf32> to vector<8x32xf32>
    %310 = arith.mulf %305, %309 : vector<8x32xf32>
    %311 = vector.broadcast %291 : vector<1x32xf32> to vector<8x32xf32>
    %312 = arith.mulf %310, %311 : vector<8x32xf32>
    %313 = vector.broadcast %292 : vector<1x32xf32> to vector<8x32xf32>
    %314 = arith.addf %312, %313 : vector<8x32xf32>
    %c0_137 = arith.constant 0 : index
    %c0_138 = arith.constant 0 : index
    %c0_139 = arith.constant 0 : index
    %315 = vector.load %arg33[%c0_137, %c0_138, %c0_139] : memref<1x8x32xf32, #tpu.memory_space<vmem>>, vector<1x8x32xf32>
    %316 = vector.shape_cast %315 : vector<1x8x32xf32> to vector<8x32xf32>
    %317 = vector.shape_cast %314 : vector<8x32xf32> to vector<1x8x32xf32>
    tpu.vector_store %arg33[%c0_137, %c0_138, %c0_139], %317 {strides = array<i32>} : memref<1x8x32xf32, #tpu.memory_space<vmem>>, vector<1x8x32xf32>,
    %c0_140 = arith.constant 0 : index
    %c0_141 = arith.constant 0 : index
    %318 = vector.load %arg31[%c0_140, %c0_141] : memref<1x32xf32, #tpu.memory_space<vmem>>, vector<1x32xf32>
    %c0_142 = arith.constant 0 : index
    %c0_143 = arith.constant 0 : index
    %319 = vector.load %arg32[%c0_142, %c0_143] : memref<1x32xf32, #tpu.memory_space<vmem>>, vector<1x32xf32>
    %cst_144 = arith.constant dense<0.000000e+00> : vector<8xf32>
    %320 = vector.multi_reduction <add>, %314, %cst_144 [1] : vector<8x32xf32> to vector<8xf32>
    %321 = vector.shape_cast %320 : vector<8xf32> to vector<8x1xf32>
    %cst_145 = arith.constant 3.200000e+01 : f32
    %322 = vector.broadcast %cst_145 : f32 to vector<8x1xf32>
    %323 = arith.divf %321, %322 : vector<8x1xf32>
    %324 = vector.broadcast %323 : vector<8x1xf32> to vector<8x32xf32>
    %325 = arith.subf %314, %324 : vector<8x32xf32>
    %326 = arith.mulf %325, %325 : vector<8x32xf32>
    %cst_146 = arith.constant dense<0.000000e+00> : vector<8xf32>
    %327 = vector.multi_reduction <add>, %326, %cst_146 [1] : vector<8x32xf32> to vector<8xf32>
    %328 = vector.shape_cast %327 : vector<8xf32> to vector<8x1xf32>
    %cst_147 = arith.constant 3.200000e+01 : f32
    %329 = vector.broadcast %cst_147 : f32 to vector<8x1xf32>
    %330 = arith.divf %328, %329 : vector<8x1xf32>
    %331 = vector.broadcast %323 : vector<8x1xf32> to vector<8x32xf32>
    %332 = arith.subf %314, %331 : vector<8x32xf32>
    %cst_148 = arith.constant 9.99999974E-6 : f32
    %333 = vector.broadcast %cst_148 : f32 to vector<8x1xf32>
    %334 = arith.addf %330, %333 : vector<8x1xf32>
    %335 = math.rsqrt %334 : vector<8x1xf32>
    %336 = vector.broadcast %335 : vector<8x1xf32> to vector<8x32xf32>
    %337 = arith.mulf %332, %336 : vector<8x32xf32>
    %338 = vector.broadcast %318 : vector<1x32xf32> to vector<8x32xf32>
    %339 = arith.mulf %337, %338 : vector<8x32xf32>
    %340 = vector.broadcast %319 : vector<1x32xf32> to vector<8x32xf32>
    %341 = arith.addf %339, %340 : vector<8x32xf32>
    %c0_149 = arith.constant 0 : index
    %c0_150 = arith.constant 0 : index
    %c0_151 = arith.constant 0 : index
    %342 = vector.load %arg34[%c0_149, %c0_150, %c0_151] : memref<1x8x32xf32, #tpu.memory_space<vmem>>, vector<1x8x32xf32>
    %343 = vector.shape_cast %342 : vector<1x8x32xf32> to vector<8x32xf32>
    %344 = vector.shape_cast %341 : vector<8x32xf32> to vector<1x8x32xf32>
    tpu.vector_store %arg34[%c0_149, %c0_150, %c0_151], %344 {strides = array<i32>} : memref<1x8x32xf32, #tpu.memory_space<vmem>>, vector<1x8x32xf32>,
    return
  }
  func.func @transform_0(%arg0: i32) -> (i32, i32, i32) {
    %c0_i32 = arith.constant 0 : i32
    %c0_i32_0 = arith.constant 0 : i32
    %c0_i32_1 = arith.constant 0 : i32
    return %arg0, %c0_i32, %c0_i32_0 : i32, i32, i32
  }
  func.func @transform_1(%arg0: i32) -> (i32, i32, i32) {
    %c0_i32 = arith.constant 0 : i32
    %c0_i32_0 = arith.constant 0 : i32
    %c0_i32_1 = arith.constant 0 : i32
    return %arg0, %c0_i32, %c0_i32_0 : i32, i32, i32
  }
  func.func @transform_2(%arg0: i32) -> (i32, i32, i32) {
    %c0_i32 = arith.constant 0 : i32
    %c0_i32_0 = arith.constant 0 : i32
    %c0_i32_1 = arith.constant 0 : i32
    return %arg0, %c0_i32, %c0_i32_0 : i32, i32, i32
  }
  func.func @transform_3(%arg0: i32) -> (i32, i32, i32) {
    %c0_i32 = arith.constant 0 : i32
    %c0_i32_0 = arith.constant 0 : i32
    %c0_i32_1 = arith.constant 0 : i32
    return %arg0, %c0_i32, %c0_i32_0 : i32, i32, i32
  }
  func.func @transform_4(%arg0: i32) -> (i32, i32) {
    %c0_i32 = arith.constant 0 : i32
    %c0_i32_0 = arith.constant 0 : i32
    %c0_i32_1 = arith.constant 0 : i32
    return %c0_i32, %c0_i32_0 : i32, i32
  }
  func.func @transform_5(%arg0: i32) -> (i32, i32) {
    %c0_i32 = arith.constant 0 : i32
    %c0_i32_0 = arith.constant 0 : i32
    %c0_i32_1 = arith.constant 0 : i32
    return %c0_i32, %c0_i32_0 : i32, i32
  }
  func.func @transform_6(%arg0: i32) -> (i32, i32) {
    %c0_i32 = arith.constant 0 : i32
    %c0_i32_0 = arith.constant 0 : i32
    %c0_i32_1 = arith.constant 0 : i32
    return %c0_i32, %c0_i32_0 : i32, i32
  }
  func.func @transform_7(%arg0: i32) -> (i32, i32) {
    %c0_i32 = arith.constant 0 : i32
    %c0_i32_0 = arith.constant 0 : i32
    %c0_i32_1 = arith.constant 0 : i32
    return %c0_i32, %c0_i32_0 : i32, i32
  }
  func.func @transform_8(%arg0: i32) -> (i32, i32) {
    %c0_i32 = arith.constant 0 : i32
    %c0_i32_0 = arith.constant 0 : i32
    %c0_i32_1 = arith.constant 0 : i32
    return %c0_i32, %c0_i32_0 : i32, i32
  }
  func.func @transform_9(%arg0: i32) -> (i32, i32) {
    %c0_i32 = arith.constant 0 : i32
    %c0_i32_0 = arith.constant 0 : i32
    %c0_i32_1 = arith.constant 0 : i32
    return %c0_i32, %c0_i32_0 : i32, i32
  }
  func.func @transform_10(%arg0: i32) -> (i32, i32) {
    %c0_i32 = arith.constant 0 : i32
    %c0_i32_0 = arith.constant 0 : i32
    %c0_i32_1 = arith.constant 0 : i32
    return %c0_i32, %c0_i32_0 : i32, i32
  }
  func.func @transform_11(%arg0: i32) -> (i32, i32) {
    %c0_i32 = arith.constant 0 : i32
    %c0_i32_0 = arith.constant 0 : i32
    %c0_i32_1 = arith.constant 0 : i32
    return %c0_i32, %c0_i32_0 : i32, i32
  }
  func.func @transform_12(%arg0: i32) -> (i32, i32) {
    %c0_i32 = arith.constant 0 : i32
    %c0_i32_0 = arith.constant 0 : i32
    %c0_i32_1 = arith.constant 0 : i32
    return %c0_i32, %c0_i32_0 : i32, i32
  }
  func.func @transform_13(%arg0: i32) -> (i32, i32) {
    %c0_i32 = arith.constant 0 : i32
    %c0_i32_0 = arith.constant 0 : i32
    %c0_i32_1 = arith.constant 0 : i32
    return %c0_i32, %c0_i32_0 : i32, i32
  }
  func.func @transform_14(%arg0: i32) -> (i32, i32) {
    %c0_i32 = arith.constant 0 : i32
    %c0_i32_0 = arith.constant 0 : i32
    %c0_i32_1 = arith.constant 0 : i32
    return %c0_i32, %c0_i32_0 : i32, i32
  }
  func.func @transform_15(%arg0: i32) -> (i32, i32) {
    %c0_i32 = arith.constant 0 : i32
    %c0_i32_0 = arith.constant 0 : i32
    %c0_i32_1 = arith.constant 0 : i32
    return %c0_i32, %c0_i32_0 : i32, i32
  }
  func.func @transform_16(%arg0: i32) -> (i32, i32) {
    %c0_i32 = arith.constant 0 : i32
    %c0_i32_0 = arith.constant 0 : i32
    %c0_i32_1 = arith.constant 0 : i32
    return %c0_i32, %c0_i32_0 : i32, i32
  }
  func.func @transform_17(%arg0: i32) -> (i32, i32) {
    %c0_i32 = arith.constant 0 : i32
    %c0_i32_0 = arith.constant 0 : i32
    %c0_i32_1 = arith.constant 0 : i32
    return %c0_i32, %c0_i32_0 : i32, i32
  }
  func.func @transform_18(%arg0: i32) -> (i32, i32) {
    %c0_i32 = arith.constant 0 : i32
    %c0_i32_0 = arith.constant 0 : i32
    %c0_i32_1 = arith.constant 0 : i32
    return %c0_i32, %c0_i32_0 : i32, i32
  }
  func.func @transform_19(%arg0: i32) -> (i32, i32) {
    %c0_i32 = arith.constant 0 : i32
    %c0_i32_0 = arith.constant 0 : i32
    %c0_i32_1 = arith.constant 0 : i32
    return %c0_i32, %c0_i32_0 : i32, i32
  }
  func.func @transform_20(%arg0: i32) -> (i32, i32) {
    %c0_i32 = arith.constant 0 : i32
    %c0_i32_0 = arith.constant 0 : i32
    %c0_i32_1 = arith.constant 0 : i32
    return %c0_i32, %c0_i32_0 : i32, i32
  }
  func.func @transform_21(%arg0: i32) -> (i32, i32) {
    %c0_i32 = arith.constant 0 : i32
    %c0_i32_0 = arith.constant 0 : i32
    %c0_i32_1 = arith.constant 0 : i32
    return %c0_i32, %c0_i32_0 : i32, i32
  }
  func.func @transform_22(%arg0: i32) -> (i32, i32) {
    %c0_i32 = arith.constant 0 : i32
    %c0_i32_0 = arith.constant 0 : i32
    %c0_i32_1 = arith.constant 0 : i32
    return %c0_i32, %c0_i32_0 : i32, i32
  }
  func.func @transform_23(%arg0: i32) -> (i32, i32) {
    %c0_i32 = arith.constant 0 : i32
    %c0_i32_0 = arith.constant 0 : i32
    %c0_i32_1 = arith.constant 0 : i32
    return %c0_i32, %c0_i32_0 : i32, i32
  }
  func.func @transform_24(%arg0: i32) -> (i32, i32) {
    %c0_i32 = arith.constant 0 : i32
    %c0_i32_0 = arith.constant 0 : i32
    %c0_i32_1 = arith.constant 0 : i32
    return %c0_i32, %c0_i32_0 : i32, i32
  }
  func.func @transform_25(%arg0: i32) -> (i32, i32) {
    %c0_i32 = arith.constant 0 : i32
    %c0_i32_0 = arith.constant 0 : i32
    %c0_i32_1 = arith.constant 0 : i32
    return %c0_i32, %c0_i32_0 : i32, i32
  }
  func.func @transform_26(%arg0: i32) -> (i32, i32) {
    %c0_i32 = arith.constant 0 : i32
    %c0_i32_0 = arith.constant 0 : i32
    %c0_i32_1 = arith.constant 0 : i32
    return %c0_i32, %c0_i32_0 : i32, i32
  }
  func.func @transform_27(%arg0: i32) -> (i32, i32) {
    %c0_i32 = arith.constant 0 : i32
    %c0_i32_0 = arith.constant 0 : i32
    %c0_i32_1 = arith.constant 0 : i32
    return %c0_i32, %c0_i32_0 : i32, i32
  }
  func.func @transform_28(%arg0: i32) -> (i32, i32) {
    %c0_i32 = arith.constant 0 : i32
    %c0_i32_0 = arith.constant 0 : i32
    %c0_i32_1 = arith.constant 0 : i32
    return %c0_i32, %c0_i32_0 : i32, i32
  }
  func.func @transform_29(%arg0: i32) -> (i32, i32) {
    %c0_i32 = arith.constant 0 : i32
    %c0_i32_0 = arith.constant 0 : i32
    %c0_i32_1 = arith.constant 0 : i32
    return %c0_i32, %c0_i32_0 : i32, i32
  }
  func.func @transform_30(%arg0: i32) -> (i32, i32) {
    %c0_i32 = arith.constant 0 : i32
    %c0_i32_0 = arith.constant 0 : i32
    %c0_i32_1 = arith.constant 0 : i32
    return %c0_i32, %c0_i32_0 : i32, i32
  }
  func.func @transform_31(%arg0: i32) -> (i32, i32) {
    %c0_i32 = arith.constant 0 : i32
    %c0_i32_0 = arith.constant 0 : i32
    %c0_i32_1 = arith.constant 0 : i32
    return %c0_i32, %c0_i32_0 : i32, i32
  }
  func.func @transform_32(%arg0: i32) -> (i32, i32, i32) {
    %c0_i32 = arith.constant 0 : i32
    %c0_i32_0 = arith.constant 0 : i32
    %c0_i32_1 = arith.constant 0 : i32
    return %arg0, %c0_i32, %c0_i32_0 : i32, i32, i32
  }
  func.func @transform_33(%arg0: i32) -> (i32, i32, i32) {
    %c0_i32 = arith.constant 0 : i32
    %c0_i32_0 = arith.constant 0 : i32
    %c0_i32_1 = arith.constant 0 : i32
    return %arg0, %c0_i32, %c0_i32_0 : i32, i32, i32
  }
}

module attributes {stable_mosaic.version = 11 : i64} {
  func.func @_decoder_layer_kernel(%arg0: i32, %arg1: memref<1x8x32xf32, #tpu.memory_space<vmem>>, %arg2: memref<1x8x32xf32, #tpu.memory_space<vmem>>, %arg3: memref<1x12x32xf32, #tpu.memory_space<vmem>>, %arg4: memref<1x12x32xf32, #tpu.memory_space<vmem>>, %arg5: memref<32x32xbf16, #tpu.memory_space<vmem>>, %arg6: memref<1x32xf32, #tpu.memory_space<vmem>>, %arg7: memref<32x32xbf16, #tpu.memory_space<vmem>>, %arg8: memref<1x32xf32, #tpu.memory_space<vmem>>, %arg9: memref<32x32xbf16, #tpu.memory_space<vmem>>, %arg10: memref<1x32xf32, #tpu.memory_space<vmem>>, %arg11: memref<32x32xbf16, #tpu.memory_space<vmem>>, %arg12: memref<1x32xf32, #tpu.memory_space<vmem>>, %arg13: memref<1x32xf32, #tpu.memory_space<vmem>>, %arg14: memref<1x32xf32, #tpu.memory_space<vmem>>, %arg15: memref<32x32xbf16, #tpu.memory_space<vmem>>, %arg16: memref<1x32xf32, #tpu.memory_space<vmem>>, %arg17: memref<32x32xbf16, #tpu.memory_space<vmem>>, %arg18: memref<1x32xf32, #tpu.memory_space<vmem>>, %arg19: memref<32x32xbf16, #tpu.memory_space<vmem>>, %arg20: memref<1x32xf32, #tpu.memory_space<vmem>>, %arg21: memref<32x32xbf16, #tpu.memory_space<vmem>>, %arg22: memref<1x32xf32, #tpu.memory_space<vmem>>, %arg23: memref<1x32xf32, #tpu.memory_space<vmem>>, %arg24: memref<1x32xf32, #tpu.memory_space<vmem>>, %arg25: memref<32x64xbf16, #tpu.memory_space<vmem>>, %arg26: memref<1x64xf32, #tpu.memory_space<vmem>>, %arg27: memref<64x32xbf16, #tpu.memory_space<vmem>>, %arg28: memref<1x32xf32, #tpu.memory_space<vmem>>, %arg29: memref<1x32xf32, #tpu.memory_space<vmem>>, %arg30: memref<1x32xf32, #tpu.memory_space<vmem>>, %arg31: memref<1x32xf32, #tpu.memory_space<vmem>>, %arg32: memref<1x32xf32, #tpu.memory_space<vmem>>, %arg33: memref<1x8x32xf32, #tpu.memory_space<vmem>>, %arg34: memref<1x8x32xf32, #tpu.memory_space<vmem>>, %arg35: memref<8x32xbf16, #tpu.memory_space<vmem>>) attributes {dimension_semantics = [#tpu.dimension_semantics<parallel>], iteration_bounds = array<i64: 2>, scalar_prefetch = 0 : i64, scratch_operands = 1 : i64, tpu.core_type = #tpu.core_type<tc>, window_params = [{transform_indices = @transform_0, window_bounds = array<i64: 1, 8, 32>}, {transform_indices = @transform_1, window_bounds = array<i64: 1, 8, 32>}, {transform_indices = @transform_2, window_bounds = array<i64: 1, 12, 32>}, {transform_indices = @transform_3, window_bounds = array<i64: 1, 12, 32>}, {pipeline_mode = #tpu.pipeline_mode<synchronous>, transform_indices = @transform_4, window_bounds = array<i64: 32, 32>}, {pipeline_mode = #tpu.pipeline_mode<synchronous>, transform_indices = @transform_5, window_bounds = array<i64: 1, 32>}, {pipeline_mode = #tpu.pipeline_mode<synchronous>, transform_indices = @transform_6, window_bounds = array<i64: 32, 32>}, {pipeline_mode = #tpu.pipeline_mode<synchronous>, transform_indices = @transform_7, window_bounds = array<i64: 1, 32>}, {pipeline_mode = #tpu.pipeline_mode<synchronous>, transform_indices = @transform_8, window_bounds = array<i64: 32, 32>}, {pipeline_mode = #tpu.pipeline_mode<synchronous>, transform_indices = @transform_9, window_bounds = array<i64: 1, 32>}, {pipeline_mode = #tpu.pipeline_mode<synchronous>, transform_indices = @transform_10, window_bounds = array<i64: 32, 32>}, {pipeline_mode = #tpu.pipeline_mode<synchronous>, transform_indices = @transform_11, window_bounds = array<i64: 1, 32>}, {pipeline_mode = #tpu.pipeline_mode<synchronous>, transform_indices = @transform_12, window_bounds = array<i64: 1, 32>}, {pipeline_mode = #tpu.pipeline_mode<synchronous>, transform_indices = @transform_13, window_bounds = array<i64: 1, 32>}, {pipeline_mode = #tpu.pipeline_mode<synchronous>, transform_indices = @transform_14, window_bounds = array<i64: 32, 32>}, {pipeline_mode = #tpu.pipeline_mode<synchronous>, transform_indices = @transform_15, window_bounds = array<i64: 1, 32>}, {pipeline_mode = #tpu.pipeline_mode<synchronous>, transform_indices = @transform_16, window_bounds = array<i64: 32, 32>}, {pipeline_mode = #tpu.pipeline_mode<synchronous>, transform_indices = @transform_17, window_bounds = array<i64: 1, 32>}, {pipeline_mode = #tpu.pipeline_mode<synchronous>, transform_indices = @transform_18, window_bounds = array<i64: 32, 32>}, {pipeline_mode = #tpu.pipeline_mode<synchronous>, transform_indices = @transform_19, window_bounds = array<i64: 1, 32>}, {pipeline_mode = #tpu.pipeline_mode<synchronous>, transform_indices = @transform_20, window_bounds = array<i64: 32, 32>}, {pipeline_mode = #tpu.pipeline_mode<synchronous>, transform_indices = @transform_21, window_bounds = array<i64: 1, 32>}, {pipeline_mode = #tpu.pipeline_mode<synchronous>, transform_indices = @transform_22, window_bounds = array<i64: 1, 32>}, {pipeline_mode = #tpu.pipeline_mode<synchronous>, transform_indices = @transform_23, window_bounds = array<i64: 1, 32>}, {pipeline_mode = #tpu.pipeline_mode<synchronous>, transform_indices = @transform_24, window_bounds = array<i64: 32, 64>}, {pipeline_mode = #tpu.pipeline_mode<synchronous>, transform_indices = @transform_25, window_bounds = array<i64: 1, 64>}, {pipeline_mode = #tpu.pipeline_mode<synchronous>, transform_indices = @transform_26, window_bounds = array<i64: 64, 32>}, {pipeline_mode = #tpu.pipeline_mode<synchronous>, transform_indices = @transform_27, window_bounds = array<i64: 1, 32>}, {pipeline_mode = #tpu.pipeline_mode<synchronous>, transform_indices = @transform_28, window_bounds = array<i64: 1, 32>}, {pipeline_mode = #tpu.pipeline_mode<synchronous>, transform_indices = @transform_29, window_bounds = array<i64: 1, 32>}, {pipeline_mode = #tpu.pipeline_mode<synchronous>, transform_indices = @transform_30, window_bounds = array<i64: 1, 32>}, {pipeline_mode = #tpu.pipeline_mode<synchronous>, transform_indices = @transform_31, window_bounds = array<i64: 1, 32>}, {transform_indices = @transform_32, window_bounds = array<i64: 1, 8, 32>}, {transform_indices = @transform_33, window_bounds = array<i64: 1, 8, 32>}]} {
    %c0 = arith.constant 0 : index
    %c0_0 = arith.constant 0 : index
    %c0_1 = arith.constant 0 : index
    %0 = vector.load %arg1[%c0, %c0_0, %c0_1] : memref<1x8x32xf32, #tpu.memory_space<vmem>>, vector<1x8x32xf32>
    %1 = vector.shape_cast %0 : vector<1x8x32xf32> to vector<8x32xf32>
    %c0_2 = arith.constant 0 : index
    %c0_3 = arith.constant 0 : index
    %c0_4 = arith.constant 0 : index
    %2 = vector.load %arg2[%c0_2, %c0_3, %c0_4] : memref<1x8x32xf32, #tpu.memory_space<vmem>>, vector<1x8x32xf32>
    %3 = vector.shape_cast %2 : vector<1x8x32xf32> to vector<8x32xf32>
    %c0_5 = arith.constant 0 : index
    %c0_6 = arith.constant 0 : index
    %c0_7 = arith.constant 0 : index
    %4 = vector.load %arg3[%c0_5, %c0_6, %c0_7] : memref<1x12x32xf32, #tpu.memory_space<vmem>>, vector<1x12x32xf32>
    %5 = vector.shape_cast %4 : vector<1x12x32xf32> to vector<12x32xf32>
    %c0_8 = arith.constant 0 : index
    %c0_9 = arith.constant 0 : index
    %c0_10 = arith.constant 0 : index
    %6 = vector.load %arg4[%c0_8, %c0_9, %c0_10] : memref<1x12x32xf32, #tpu.memory_space<vmem>>, vector<1x12x32xf32>
    %7 = vector.shape_cast %6 : vector<1x12x32xf32> to vector<12x32xf32>
    %8 = arith.addf %1, %3 : vector<8x32xf32>
    %9 = arith.truncf %8 : vector<8x32xf32> to vector<8x32xbf16>
    %10 = arith.truncf %1 : vector<8x32xf32> to vector<8x32xbf16>
    %c0_11 = arith.constant 0 : index
    %c0_12 = arith.constant 0 : index
    %11 = vector.load %arg5[%c0_11, %c0_12] : memref<32x32xbf16, #tpu.memory_space<vmem>>, vector<32x32xbf16>
    %cst = arith.constant dense<0.000000e+00> : vector<8x32xf32>
    %12 = tpu.matmul %9, %11, %cst {dimension_numbers = #tpu.dot_dimension_numbers<[1], [0], [0], [1], [0, 0, 1, 1], [], []>} : vector<8x32xbf16>, vector<32x32xbf16>, vector<8x32xf32> -> vector<8x32xf32>
    %c0_13 = arith.constant 0 : index
    %c0_14 = arith.constant 0 : index
    %13 = vector.load %arg6[%c0_13, %c0_14] : memref<1x32xf32, #tpu.memory_space<vmem>>, vector<1x32xf32>
    %14 = vector.broadcast %13 : vector<1x32xf32> to vector<8x32xf32>
    %15 = arith.addf %12, %14 : vector<8x32xf32>
    %c0_15 = arith.constant 0 : index
    %c0_16 = arith.constant 0 : index
    %16 = vector.load %arg7[%c0_15, %c0_16] : memref<32x32xbf16, #tpu.memory_space<vmem>>, vector<32x32xbf16>
    %cst_17 = arith.constant dense<0.000000e+00> : vector<8x32xf32>
    %17 = tpu.matmul %9, %16, %cst_17 {dimension_numbers = #tpu.dot_dimension_numbers<[1], [0], [0], [1], [0, 0, 1, 1], [], []>} : vector<8x32xbf16>, vector<32x32xbf16>, vector<8x32xf32> -> vector<8x32xf32>
    %c0_18 = arith.constant 0 : index
    %c0_19 = arith.constant 0 : index
    %18 = vector.load %arg8[%c0_18, %c0_19] : memref<1x32xf32, #tpu.memory_space<vmem>>, vector<1x32xf32>
    %19 = vector.broadcast %18 : vector<1x32xf32> to vector<8x32xf32>
    %20 = arith.addf %17, %19 : vector<8x32xf32>
    %c0_20 = arith.constant 0 : index
    %c0_21 = arith.constant 0 : index
    %21 = vector.load %arg9[%c0_20, %c0_21] : memref<32x32xbf16, #tpu.memory_space<vmem>>, vector<32x32xbf16>
    %cst_22 = arith.constant dense<0.000000e+00> : vector<8x32xf32>
    %22 = tpu.matmul %10, %21, %cst_22 {dimension_numbers = #tpu.dot_dimension_numbers<[1], [0], [0], [1], [0, 0, 1, 1], [], []>} : vector<8x32xbf16>, vector<32x32xbf16>, vector<8x32xf32> -> vector<8x32xf32>
    %c0_23 = arith.constant 0 : index
    %c0_24 = arith.constant 0 : index
    %23 = vector.load %arg10[%c0_23, %c0_24] : memref<1x32xf32, #tpu.memory_space<vmem>>, vector<1x32xf32>
    %24 = vector.broadcast %23 : vector<1x32xf32> to vector<8x32xf32>
    %25 = arith.addf %22, %24 : vector<8x32xf32>
    %26 = vector.extract_strided_slice %15 {offsets = [0, 0], sizes = [8, 8], strides = [1, 1]} : vector<8x32xf32> to vector<8x8xf32>
    %27 = arith.truncf %26 : vector<8x8xf32> to vector<8x8xbf16>
    %28 = vector.extract_strided_slice %20 {offsets = [0, 0], sizes = [8, 8], strides = [1, 1]} : vector<8x32xf32> to vector<8x8xf32>
    %29 = arith.truncf %28 : vector<8x8xf32> to vector<8x8xbf16>
    %30 = vector.extract_strided_slice %25 {offsets = [0, 0], sizes = [8, 8], strides = [1, 1]} : vector<8x32xf32> to vector<8x8xf32>
    %31 = arith.truncf %30 : vector<8x8xf32> to vector<8x8xbf16>
    %cst_25 = arith.constant dense<0.000000e+00> : vector<8x8xf32>
    %32 = tpu.matmul %27, %29, %cst_25 {dimension_numbers = #tpu.dot_dimension_numbers<[1], [1], [0], [0], [0, 0, 1, 0], [], []>} : vector<8x8xbf16>, vector<8x8xbf16>, vector<8x8xf32> -> vector<8x8xf32>
    %cst_26 = arith.constant dense<0xFF800000> : vector<8xf32>
    %33 = vector.multi_reduction <maximumf>, %32, %cst_26 [1] : vector<8x8xf32> to vector<8xf32>
    %34 = vector.shape_cast %33 : vector<8xf32> to vector<8x1xf32>
    %35 = vector.broadcast %34 : vector<8x1xf32> to vector<8x8xf32>
    %36 = arith.subf %32, %35 : vector<8x8xf32>
    %37 = math.exp %36 : vector<8x8xf32>
    %cst_27 = arith.constant dense<0.000000e+00> : vector<8xf32>
    %38 = vector.multi_reduction <add>, %37, %cst_27 [1] : vector<8x8xf32> to vector<8xf32>
    %39 = vector.shape_cast %38 : vector<8xf32> to vector<8x1xf32>
    %40 = tpu.reciprocal %39 {approx = true} : vector<8x1xf32> -> vector<8x1xf32>
    %41 = arith.truncf %37 : vector<8x8xf32> to vector<8x8xbf16>
    %cst_28 = arith.constant dense<0.000000e+00> : vector<8x8xf32>
    %42 = tpu.matmul %41, %31, %cst_28 {dimension_numbers = #tpu.dot_dimension_numbers<[1], [0], [0], [1], [0, 0, 1, 1], [], []>} : vector<8x8xbf16>, vector<8x8xbf16>, vector<8x8xf32> -> vector<8x8xf32>
    %43 = vector.broadcast %40 : vector<8x1xf32> to vector<8x8xf32>
    %44 = arith.mulf %42, %43 : vector<8x8xf32>
    %45 = arith.truncf %44 : vector<8x8xf32> to vector<8x8xbf16>
    %c0_29 = arith.constant 0 : index
    %c0_30 = arith.constant 0 : index
    %46 = vector.load %arg35[%c0_29, %c0_30] : memref<8x32xbf16, #tpu.memory_space<vmem>>, vector<8x8xbf16>
    tpu.vector_store %arg35[%c0_29, %c0_30], %45 {strides = array<i32>} : memref<8x32xbf16, #tpu.memory_space<vmem>>, vector<8x8xbf16>,
    %47 = vector.extract_strided_slice %15 {offsets = [0, 8], sizes = [8, 8], strides = [1, 1]} : vector<8x32xf32> to vector<8x8xf32>
    %48 = arith.truncf %47 : vector<8x8xf32> to vector<8x8xbf16>
    %49 = vector.extract_strided_slice %20 {offsets = [0, 8], sizes = [8, 8], strides = [1, 1]} : vector<8x32xf32> to vector<8x8xf32>
    %50 = arith.truncf %49 : vector<8x8xf32> to vector<8x8xbf16>
    %51 = vector.extract_strided_slice %25 {offsets = [0, 8], sizes = [8, 8], strides = [1, 1]} : vector<8x32xf32> to vector<8x8xf32>
    %52 = arith.truncf %51 : vector<8x8xf32> to vector<8x8xbf16>
    %cst_31 = arith.constant dense<0.000000e+00> : vector<8x8xf32>
    %53 = tpu.matmul %48, %50, %cst_31 {dimension_numbers = #tpu.dot_dimension_numbers<[1], [1], [0], [0], [0, 0, 1, 0], [], []>} : vector<8x8xbf16>, vector<8x8xbf16>, vector<8x8xf32> -> vector<8x8xf32>
    %cst_32 = arith.constant dense<0xFF800000> : vector<8xf32>
    %54 = vector.multi_reduction <maximumf>, %53, %cst_32 [1] : vector<8x8xf32> to vector<8xf32>
    %55 = vector.shape_cast %54 : vector<8xf32> to vector<8x1xf32>
    %56 = vector.broadcast %55 : vector<8x1xf32> to vector<8x8xf32>
    %57 = arith.subf %53, %56 : vector<8x8xf32>
    %58 = math.exp %57 : vector<8x8xf32>
    %cst_33 = arith.constant dense<0.000000e+00> : vector<8xf32>
    %59 = vector.multi_reduction <add>, %58, %cst_33 [1] : vector<8x8xf32> to vector<8xf32>
    %60 = vector.shape_cast %59 : vector<8xf32> to vector<8x1xf32>
    %61 = tpu.reciprocal %60 {approx = true} : vector<8x1xf32> -> vector<8x1xf32>
    %62 = arith.truncf %58 : vector<8x8xf32> to vector<8x8xbf16>
    %cst_34 = arith.constant dense<0.000000e+00> : vector<8x8xf32>
    %63 = tpu.matmul %62, %52, %cst_34 {dimension_numbers = #tpu.dot_dimension_numbers<[1], [0], [0], [1], [0, 0, 1, 1], [], []>} : vector<8x8xbf16>, vector<8x8xbf16>, vector<8x8xf32> -> vector<8x8xf32>
    %64 = vector.broadcast %61 : vector<8x1xf32> to vector<8x8xf32>
    %65 = arith.mulf %63, %64 : vector<8x8xf32>
    %66 = arith.truncf %65 : vector<8x8xf32> to vector<8x8xbf16>
    %c0_35 = arith.constant 0 : index
    %c8 = arith.constant 8 : index
    %67 = vector.load %arg35[%c0_35, %c8] : memref<8x32xbf16, #tpu.memory_space<vmem>>, vector<8x8xbf16>
    tpu.vector_store %arg35[%c0_35, %c8], %66 {strides = array<i32>} : memref<8x32xbf16, #tpu.memory_space<vmem>>, vector<8x8xbf16>,
    %68 = vector.extract_strided_slice %15 {offsets = [0, 16], sizes = [8, 8], strides = [1, 1]} : vector<8x32xf32> to vector<8x8xf32>
    %69 = arith.truncf %68 : vector<8x8xf32> to vector<8x8xbf16>
    %70 = vector.extract_strided_slice %20 {offsets = [0, 16], sizes = [8, 8], strides = [1, 1]} : vector<8x32xf32> to vector<8x8xf32>
    %71 = arith.truncf %70 : vector<8x8xf32> to vector<8x8xbf16>
    %72 = vector.extract_strided_slice %25 {offsets = [0, 16], sizes = [8, 8], strides = [1, 1]} : vector<8x32xf32> to vector<8x8xf32>
    %73 = arith.truncf %72 : vector<8x8xf32> to vector<8x8xbf16>
    %cst_36 = arith.constant dense<0.000000e+00> : vector<8x8xf32>
    %74 = tpu.matmul %69, %71, %cst_36 {dimension_numbers = #tpu.dot_dimension_numbers<[1], [1], [0], [0], [0, 0, 1, 0], [], []>} : vector<8x8xbf16>, vector<8x8xbf16>, vector<8x8xf32> -> vector<8x8xf32>
    %cst_37 = arith.constant dense<0xFF800000> : vector<8xf32>
    %75 = vector.multi_reduction <maximumf>, %74, %cst_37 [1] : vector<8x8xf32> to vector<8xf32>
    %76 = vector.shape_cast %75 : vector<8xf32> to vector<8x1xf32>
    %77 = vector.broadcast %76 : vector<8x1xf32> to vector<8x8xf32>
    %78 = arith.subf %74, %77 : vector<8x8xf32>
    %79 = math.exp %78 : vector<8x8xf32>
    %cst_38 = arith.constant dense<0.000000e+00> : vector<8xf32>
    %80 = vector.multi_reduction <add>, %79, %cst_38 [1] : vector<8x8xf32> to vector<8xf32>
    %81 = vector.shape_cast %80 : vector<8xf32> to vector<8x1xf32>
    %82 = tpu.reciprocal %81 {approx = true} : vector<8x1xf32> -> vector<8x1xf32>
    %83 = arith.truncf %79 : vector<8x8xf32> to vector<8x8xbf16>
    %cst_39 = arith.constant dense<0.000000e+00> : vector<8x8xf32>
    %84 = tpu.matmul %83, %73, %cst_39 {dimension_numbers = #tpu.dot_dimension_numbers<[1], [0], [0], [1], [0, 0, 1, 1], [], []>} : vector<8x8xbf16>, vector<8x8xbf16>, vector<8x8xf32> -> vector<8x8xf32>
    %85 = vector.broadcast %82 : vector<8x1xf32> to vector<8x8xf32>
    %86 = arith.mulf %84, %85 : vector<8x8xf32>
    %87 = arith.truncf %86 : vector<8x8xf32> to vector<8x8xbf16>
    %c0_40 = arith.constant 0 : index
    %c16 = arith.constant 16 : index
    %88 = vector.load %arg35[%c0_40, %c16] : memref<8x32xbf16, #tpu.memory_space<vmem>>, vector<8x8xbf16>
    tpu.vector_store %arg35[%c0_40, %c16], %87 {strides = array<i32>} : memref<8x32xbf16, #tpu.memory_space<vmem>>, vector<8x8xbf16>,
    %89 = vector.extract_strided_slice %15 {offsets = [0, 24], sizes = [8, 8], strides = [1, 1]} : vector<8x32xf32> to vector<8x8xf32>
    %90 = arith.truncf %89 : vector<8x8xf32> to vector<8x8xbf16>
    %91 = vector.extract_strided_slice %20 {offsets = [0, 24], sizes = [8, 8], strides = [1, 1]} : vector<8x32xf32> to vector<8x8xf32>
    %92 = arith.truncf %91 : vector<8x8xf32> to vector<8x8xbf16>
    %93 = vector.extract_strided_slice %25 {offsets = [0, 24], sizes = [8, 8], strides = [1, 1]} : vector<8x32xf32> to vector<8x8xf32>
    %94 = arith.truncf %93 : vector<8x8xf32> to vector<8x8xbf16>
    %cst_41 = arith.constant dense<0.000000e+00> : vector<8x8xf32>
    %95 = tpu.matmul %90, %92, %cst_41 {dimension_numbers = #tpu.dot_dimension_numbers<[1], [1], [0], [0], [0, 0, 1, 0], [], []>} : vector<8x8xbf16>, vector<8x8xbf16>, vector<8x8xf32> -> vector<8x8xf32>
    %cst_42 = arith.constant dense<0xFF800000> : vector<8xf32>
    %96 = vector.multi_reduction <maximumf>, %95, %cst_42 [1] : vector<8x8xf32> to vector<8xf32>
    %97 = vector.shape_cast %96 : vector<8xf32> to vector<8x1xf32>
    %98 = vector.broadcast %97 : vector<8x1xf32> to vector<8x8xf32>
    %99 = arith.subf %95, %98 : vector<8x8xf32>
    %100 = math.exp %99 : vector<8x8xf32>
    %cst_43 = arith.constant dense<0.000000e+00> : vector<8xf32>
    %101 = vector.multi_reduction <add>, %100, %cst_43 [1] : vector<8x8xf32> to vector<8xf32>
    %102 = vector.shape_cast %101 : vector<8xf32> to vector<8x1xf32>
    %103 = tpu.reciprocal %102 {approx = true} : vector<8x1xf32> -> vector<8x1xf32>
    %104 = arith.truncf %100 : vector<8x8xf32> to vector<8x8xbf16>
    %cst_44 = arith.constant dense<0.000000e+00> : vector<8x8xf32>
    %105 = tpu.matmul %104, %94, %cst_44 {dimension_numbers = #tpu.dot_dimension_numbers<[1], [0], [0], [1], [0, 0, 1, 1], [], []>} : vector<8x8xbf16>, vector<8x8xbf16>, vector<8x8xf32> -> vector<8x8xf32>
    %106 = vector.broadcast %103 : vector<8x1xf32> to vector<8x8xf32>
    %107 = arith.mulf %105, %106 : vector<8x8xf32>
    %108 = arith.truncf %107 : vector<8x8xf32> to vector<8x8xbf16>
    %c0_45 = arith.constant 0 : index
    %c24 = arith.constant 24 : index
    %109 = vector.load %arg35[%c0_45, %c24] : memref<8x32xbf16, #tpu.memory_space<vmem>>, vector<8x8xbf16>
    tpu.vector_store %arg35[%c0_45, %c24], %108 {strides = array<i32>} : memref<8x32xbf16, #tpu.memory_space<vmem>>, vector<8x8xbf16>,
    %c0_46 = arith.constant 0 : index
    %c0_47 = arith.constant 0 : index
    %110 = vector.load %arg35[%c0_46, %c0_47] : memref<8x32xbf16, #tpu.memory_space<vmem>>, vector<8x32xbf16>
    %c0_48 = arith.constant 0 : index
    %c0_49 = arith.constant 0 : index
    %111 = vector.load %arg11[%c0_48, %c0_49] : memref<32x32xbf16, #tpu.memory_space<vmem>>, vector<32x32xbf16>
    %cst_50 = arith.constant dense<0.000000e+00> : vector<8x32xf32>
    %112 = tpu.matmul %110, %111, %cst_50 {dimension_numbers = #tpu.dot_dimension_numbers<[1], [0], [0], [1], [0, 0, 1, 1], [], []>} : vector<8x32xbf16>, vector<32x32xbf16>, vector<8x32xf32> -> vector<8x32xf32>
    %c0_51 = arith.constant 0 : index
    %c0_52 = arith.constant 0 : index
    %113 = vector.load %arg12[%c0_51, %c0_52] : memref<1x32xf32, #tpu.memory_space<vmem>>, vector<1x32xf32>
    %114 = vector.broadcast %113 : vector<1x32xf32> to vector<8x32xf32>
    %115 = arith.addf %112, %114 : vector<8x32xf32>
    %116 = arith.addf %1, %115 : vector<8x32xf32>
    %c0_53 = arith.constant 0 : index
    %c0_54 = arith.constant 0 : index
    %117 = vector.load %arg13[%c0_53, %c0_54] : memref<1x32xf32, #tpu.memory_space<vmem>>, vector<1x32xf32>
    %c0_55 = arith.constant 0 : index
    %c0_56 = arith.constant 0 : index
    %118 = vector.load %arg14[%c0_55, %c0_56] : memref<1x32xf32, #tpu.memory_space<vmem>>, vector<1x32xf32>
    %cst_57 = arith.constant dense<0.000000e+00> : vector<8xf32>
    %119 = vector.multi_reduction <add>, %116, %cst_57 [1] : vector<8x32xf32> to vector<8xf32>
    %120 = vector.shape_cast %119 : vector<8xf32> to vector<8x1xf32>
    %cst_58 = arith.constant 3.200000e+01 : f32
    %121 = vector.broadcast %cst_58 : f32 to vector<8x1xf32>
    %122 = arith.divf %120, %121 : vector<8x1xf32>
    %123 = vector.broadcast %122 : vector<8x1xf32> to vector<8x32xf32>
    %124 = arith.subf %116, %123 : vector<8x32xf32>
    %125 = arith.mulf %124, %124 : vector<8x32xf32>
    %cst_59 = arith.constant dense<0.000000e+00> : vector<8xf32>
    %126 = vector.multi_reduction <add>, %125, %cst_59 [1] : vector<8x32xf32> to vector<8xf32>
    %127 = vector.shape_cast %126 : vector<8xf32> to vector<8x1xf32>
    %cst_60 = arith.constant 3.200000e+01 : f32
    %128 = vector.broadcast %cst_60 : f32 to vector<8x1xf32>
    %129 = arith.divf %127, %128 : vector<8x1xf32>
    %130 = vector.broadcast %122 : vector<8x1xf32> to vector<8x32xf32>
    %131 = arith.subf %116, %130 : vector<8x32xf32>
    %cst_61 = arith.constant 9.99999974E-6 : f32
    %132 = vector.broadcast %cst_61 : f32 to vector<8x1xf32>
    %133 = arith.addf %129, %132 : vector<8x1xf32>
    %134 = math.rsqrt %133 : vector<8x1xf32>
    %135 = vector.broadcast %134 : vector<8x1xf32> to vector<8x32xf32>
    %136 = arith.mulf %131, %135 : vector<8x32xf32>
    %137 = vector.broadcast %117 : vector<1x32xf32> to vector<8x32xf32>
    %138 = arith.mulf %136, %137 : vector<8x32xf32>
    %139 = vector.broadcast %118 : vector<1x32xf32> to vector<8x32xf32>
    %140 = arith.addf %138, %139 : vector<8x32xf32>
    %141 = arith.addf %140, %3 : vector<8x32xf32>
    %142 = arith.truncf %141 : vector<8x32xf32> to vector<8x32xbf16>
    %143 = arith.addf %5, %7 : vector<12x32xf32>
    %144 = arith.truncf %143 : vector<12x32xf32> to vector<12x32xbf16>
    %145 = arith.truncf %5 : vector<12x32xf32> to vector<12x32xbf16>
    %c0_62 = arith.constant 0 : index
    %c0_63 = arith.constant 0 : index
    %146 = vector.load %arg15[%c0_62, %c0_63] : memref<32x32xbf16, #tpu.memory_space<vmem>>, vector<32x32xbf16>
    %cst_64 = arith.constant dense<0.000000e+00> : vector<8x32xf32>
    %147 = tpu.matmul %142, %146, %cst_64 {dimension_numbers = #tpu.dot_dimension_numbers<[1], [0], [0], [1], [0, 0, 1, 1], [], []>} : vector<8x32xbf16>, vector<32x32xbf16>, vector<8x32xf32> -> vector<8x32xf32>
    %c0_65 = arith.constant 0 : index
    %c0_66 = arith.constant 0 : index
    %148 = vector.load %arg16[%c0_65, %c0_66] : memref<1x32xf32, #tpu.memory_space<vmem>>, vector<1x32xf32>
    %149 = vector.broadcast %148 : vector<1x32xf32> to vector<8x32xf32>
    %150 = arith.addf %147, %149 : vector<8x32xf32>
    %c0_67 = arith.constant 0 : index
    %c0_68 = arith.constant 0 : index
    %151 = vector.load %arg17[%c0_67, %c0_68] : memref<32x32xbf16, #tpu.memory_space<vmem>>, vector<32x32xbf16>
    %cst_69 = arith.constant dense<0.000000e+00> : vector<12x32xf32>
    %152 = tpu.matmul %144, %151, %cst_69 {dimension_numbers = #tpu.dot_dimension_numbers<[1], [0], [0], [1], [0, 0, 1, 1], [], []>} : vector<12x32xbf16>, vector<32x32xbf16>, vector<12x32xf32> -> vector<12x32xf32>
    %c0_70 = arith.constant 0 : index
    %c0_71 = arith.constant 0 : index
    %153 = vector.load %arg18[%c0_70, %c0_71] : memref<1x32xf32, #tpu.memory_space<vmem>>, vector<1x32xf32>
    %154 = vector.broadcast %153 : vector<1x32xf32> to vector<12x32xf32>
    %155 = arith.addf %152, %154 : vector<12x32xf32>
    %c0_72 = arith.constant 0 : index
    %c0_73 = arith.constant 0 : index
    %156 = vector.load %arg19[%c0_72, %c0_73] : memref<32x32xbf16, #tpu.memory_space<vmem>>, vector<32x32xbf16>
    %cst_74 = arith.constant dense<0.000000e+00> : vector<12x32xf32>
    %157 = tpu.matmul %145, %156, %cst_74 {dimension_numbers = #tpu.dot_dimension_numbers<[1], [0], [0], [1], [0, 0, 1, 1], [], []>} : vector<12x32xbf16>, vector<32x32xbf16>, vector<12x32xf32> -> vector<12x32xf32>
    %c0_75 = arith.constant 0 : index
    %c0_76 = arith.constant 0 : index
    %158 = vector.load %arg20[%c0_75, %c0_76] : memref<1x32xf32, #tpu.memory_space<vmem>>, vector<1x32xf32>
    %159 = vector.broadcast %158 : vector<1x32xf32> to vector<12x32xf32>
    %160 = arith.addf %157, %159 : vector<12x32xf32>
    %161 = vector.extract_strided_slice %150 {offsets = [0, 0], sizes = [8, 8], strides = [1, 1]} : vector<8x32xf32> to vector<8x8xf32>
    %162 = arith.truncf %161 : vector<8x8xf32> to vector<8x8xbf16>
    %163 = vector.extract_strided_slice %155 {offsets = [0, 0], sizes = [12, 8], strides = [1, 1]} : vector<12x32xf32> to vector<12x8xf32>
    %164 = arith.truncf %163 : vector<12x8xf32> to vector<12x8xbf16>
    %165 = vector.extract_strided_slice %160 {offsets = [0, 0], sizes = [12, 8], strides = [1, 1]} : vector<12x32xf32> to vector<12x8xf32>
    %166 = arith.truncf %165 : vector<12x8xf32> to vector<12x8xbf16>
    %cst_77 = arith.constant dense<0.000000e+00> : vector<8x12xf32>
    %167 = tpu.matmul %162, %164, %cst_77 {dimension_numbers = #tpu.dot_dimension_numbers<[1], [1], [0], [0], [0, 0, 1, 0], [], []>} : vector<8x8xbf16>, vector<12x8xbf16>, vector<8x12xf32> -> vector<8x12xf32>
    %cst_78 = arith.constant dense<0xFF800000> : vector<8xf32>
    %168 = vector.multi_reduction <maximumf>, %167, %cst_78 [1] : vector<8x12xf32> to vector<8xf32>
    %169 = vector.shape_cast %168 : vector<8xf32> to vector<8x1xf32>
    %170 = vector.broadcast %169 : vector<8x1xf32> to vector<8x12xf32>
    %171 = arith.subf %167, %170 : vector<8x12xf32>
    %172 = math.exp %171 : vector<8x12xf32>
    %cst_79 = arith.constant dense<0.000000e+00> : vector<8xf32>
    %173 = vector.multi_reduction <add>, %172, %cst_79 [1] : vector<8x12xf32> to vector<8xf32>
    %174 = vector.shape_cast %173 : vector<8xf32> to vector<8x1xf32>
    %175 = tpu.reciprocal %174 {approx = true} : vector<8x1xf32> -> vector<8x1xf32>
    %176 = arith.truncf %172 : vector<8x12xf32> to vector<8x12xbf16>
    %cst_80 = arith.constant dense<0.000000e+00> : vector<8x8xf32>
    %177 = tpu.matmul %176, %166, %cst_80 {dimension_numbers = #tpu.dot_dimension_numbers<[1], [0], [0], [1], [0, 0, 1, 1], [], []>} : vector<8x12xbf16>, vector<12x8xbf16>, vector<8x8xf32> -> vector<8x8xf32>
    %178 = vector.broadcast %175 : vector<8x1xf32> to vector<8x8xf32>
    %179 = arith.mulf %177, %178 : vector<8x8xf32>
    %180 = arith.truncf %179 : vector<8x8xf32> to vector<8x8xbf16>
    %c0_81 = arith.constant 0 : index
    %c0_82 = arith.constant 0 : index
    %181 = vector.load %arg35[%c0_81, %c0_82] : memref<8x32xbf16, #tpu.memory_space<vmem>>, vector<8x8xbf16>
    tpu.vector_store %arg35[%c0_81, %c0_82], %180 {strides = array<i32>} : memref<8x32xbf16, #tpu.memory_space<vmem>>, vector<8x8xbf16>,
    %182 = vector.extract_strided_slice %150 {offsets = [0, 8], sizes = [8, 8], strides = [1, 1]} : vector<8x32xf32> to vector<8x8xf32>
    %183 = arith.truncf %182 : vector<8x8xf32> to vector<8x8xbf16>
    %184 = vector.extract_strided_slice %155 {offsets = [0, 8], sizes = [12, 8], strides = [1, 1]} : vector<12x32xf32> to vector<12x8xf32>
    %185 = arith.truncf %184 : vector<12x8xf32> to vector<12x8xbf16>
    %186 = vector.extract_strided_slice %160 {offsets = [0, 8], sizes = [12, 8], strides = [1, 1]} : vector<12x32xf32> to vector<12x8xf32>
    %187 = arith.truncf %186 : vector<12x8xf32> to vector<12x8xbf16>
    %cst_83 = arith.constant dense<0.000000e+00> : vector<8x12xf32>
    %188 = tpu.matmul %183, %185, %cst_83 {dimension_numbers = #tpu.dot_dimension_numbers<[1], [1], [0], [0], [0, 0, 1, 0], [], []>} : vector<8x8xbf16>, vector<12x8xbf16>, vector<8x12xf32> -> vector<8x12xf32>
    %cst_84 = arith.constant dense<0xFF800000> : vector<8xf32>
    %189 = vector.multi_reduction <maximumf>, %188, %cst_84 [1] : vector<8x12xf32> to vector<8xf32>
    %190 = vector.shape_cast %189 : vector<8xf32> to vector<8x1xf32>
    %191 = vector.broadcast %190 : vector<8x1xf32> to vector<8x12xf32>
    %192 = arith.subf %188, %191 : vector<8x12xf32>
    %193 = math.exp %192 : vector<8x12xf32>
    %cst_85 = arith.constant dense<0.000000e+00> : vector<8xf32>
    %194 = vector.multi_reduction <add>, %193, %cst_85 [1] : vector<8x12xf32> to vector<8xf32>
    %195 = vector.shape_cast %194 : vector<8xf32> to vector<8x1xf32>
    %196 = tpu.reciprocal %195 {approx = true} : vector<8x1xf32> -> vector<8x1xf32>
    %197 = arith.truncf %193 : vector<8x12xf32> to vector<8x12xbf16>
    %cst_86 = arith.constant dense<0.000000e+00> : vector<8x8xf32>
    %198 = tpu.matmul %197, %187, %cst_86 {dimension_numbers = #tpu.dot_dimension_numbers<[1], [0], [0], [1], [0, 0, 1, 1], [], []>} : vector<8x12xbf16>, vector<12x8xbf16>, vector<8x8xf32> -> vector<8x8xf32>
    %199 = vector.broadcast %196 : vector<8x1xf32> to vector<8x8xf32>
    %200 = arith.mulf %198, %199 : vector<8x8xf32>
    %201 = arith.truncf %200 : vector<8x8xf32> to vector<8x8xbf16>
    %c0_87 = arith.constant 0 : index
    %c8_88 = arith.constant 8 : index
    %202 = vector.load %arg35[%c0_87, %c8_88] : memref<8x32xbf16, #tpu.memory_space<vmem>>, vector<8x8xbf16>
    tpu.vector_store %arg35[%c0_87, %c8_88], %201 {strides = array<i32>} : memref<8x32xbf16, #tpu.memory_space<vmem>>, vector<8x8xbf16>,
    %203 = vector.extract_strided_slice %150 {offsets = [0, 16], sizes = [8, 8], strides = [1, 1]} : vector<8x32xf32> to vector<8x8xf32>
    %204 = arith.truncf %203 : vector<8x8xf32> to vector<8x8xbf16>
    %205 = vector.extract_strided_slice %155 {offsets = [0, 16], sizes = [12, 8], strides = [1, 1]} : vector<12x32xf32> to vector<12x8xf32>
    %206 = arith.truncf %205 : vector<12x8xf32> to vector<12x8xbf16>
    %207 = vector.extract_strided_slice %160 {offsets = [0, 16], sizes = [12, 8], strides = [1, 1]} : vector<12x32xf32> to vector<12x8xf32>
    %208 = arith.truncf %207 : vector<12x8xf32> to vector<12x8xbf16>
    %cst_89 = arith.constant dense<0.000000e+00> : vector<8x12xf32>
    %209 = tpu.matmul %204, %206, %cst_89 {dimension_numbers = #tpu.dot_dimension_numbers<[1], [1], [0], [0], [0, 0, 1, 0], [], []>} : vector<8x8xbf16>, vector<12x8xbf16>, vector<8x12xf32> -> vector<8x12xf32>
    %cst_90 = arith.constant dense<0xFF800000> : vector<8xf32>
    %210 = vector.multi_reduction <maximumf>, %209, %cst_90 [1] : vector<8x12xf32> to vector<8xf32>
    %211 = vector.shape_cast %210 : vector<8xf32> to vector<8x1xf32>
    %212 = vector.broadcast %211 : vector<8x1xf32> to vector<8x12xf32>
    %213 = arith.subf %209, %212 : vector<8x12xf32>
    %214 = math.exp %213 : vector<8x12xf32>
    %cst_91 = arith.constant dense<0.000000e+00> : vector<8xf32>
    %215 = vector.multi_reduction <add>, %214, %cst_91 [1] : vector<8x12xf32> to vector<8xf32>
    %216 = vector.shape_cast %215 : vector<8xf32> to vector<8x1xf32>
    %217 = tpu.reciprocal %216 {approx = true} : vector<8x1xf32> -> vector<8x1xf32>
    %218 = arith.truncf %214 : vector<8x12xf32> to vector<8x12xbf16>
    %cst_92 = arith.constant dense<0.000000e+00> : vector<8x8xf32>
    %219 = tpu.matmul %218, %208, %cst_92 {dimension_numbers = #tpu.dot_dimension_numbers<[1], [0], [0], [1], [0, 0, 1, 1], [], []>} : vector<8x12xbf16>, vector<12x8xbf16>, vector<8x8xf32> -> vector<8x8xf32>
    %220 = vector.broadcast %217 : vector<8x1xf32> to vector<8x8xf32>
    %221 = arith.mulf %219, %220 : vector<8x8xf32>
    %222 = arith.truncf %221 : vector<8x8xf32> to vector<8x8xbf16>
    %c0_93 = arith.constant 0 : index
    %c16_94 = arith.constant 16 : index
    %223 = vector.load %arg35[%c0_93, %c16_94] : memref<8x32xbf16, #tpu.memory_space<vmem>>, vector<8x8xbf16>
    tpu.vector_store %arg35[%c0_93, %c16_94], %222 {strides = array<i32>} : memref<8x32xbf16, #tpu.memory_space<vmem>>, vector<8x8xbf16>,
    %224 = vector.extract_strided_slice %150 {offsets = [0, 24], sizes = [8, 8], strides = [1, 1]} : vector<8x32xf32> to vector<8x8xf32>
    %225 = arith.truncf %224 : vector<8x8xf32> to vector<8x8xbf16>
    %226 = vector.extract_strided_slice %155 {offsets = [0, 24], sizes = [12, 8], strides = [1, 1]} : vector<12x32xf32> to vector<12x8xf32>
    %227 = arith.truncf %226 : vector<12x8xf32> to vector<12x8xbf16>
    %228 = vector.extract_strided_slice %160 {offsets = [0, 24], sizes = [12, 8], strides = [1, 1]} : vector<12x32xf32> to vector<12x8xf32>
    %229 = arith.truncf %228 : vector<12x8xf32> to vector<12x8xbf16>
    %cst_95 = arith.constant dense<0.000000e+00> : vector<8x12xf32>
    %230 = tpu.matmul %225, %227, %cst_95 {dimension_numbers = #tpu.dot_dimension_numbers<[1], [1], [0], [0], [0, 0, 1, 0], [], []>} : vector<8x8xbf16>, vector<12x8xbf16>, vector<8x12xf32> -> vector<8x12xf32>
    %cst_96 = arith.constant dense<0xFF800000> : vector<8xf32>
    %231 = vector.multi_reduction <maximumf>, %230, %cst_96 [1] : vector<8x12xf32> to vector<8xf32>
    %232 = vector.shape_cast %231 : vector<8xf32> to vector<8x1xf32>
    %233 = vector.broadcast %232 : vector<8x1xf32> to vector<8x12xf32>
    %234 = arith.subf %230, %233 : vector<8x12xf32>
    %235 = math.exp %234 : vector<8x12xf32>
    %cst_97 = arith.constant dense<0.000000e+00> : vector<8xf32>
    %236 = vector.multi_reduction <add>, %235, %cst_97 [1] : vector<8x12xf32> to vector<8xf32>
    %237 = vector.shape_cast %236 : vector<8xf32> to vector<8x1xf32>
    %238 = tpu.reciprocal %237 {approx = true} : vector<8x1xf32> -> vector<8x1xf32>
    %239 = arith.truncf %235 : vector<8x12xf32> to vector<8x12xbf16>
    %cst_98 = arith.constant dense<0.000000e+00> : vector<8x8xf32>
    %240 = tpu.matmul %239, %229, %cst_98 {dimension_numbers = #tpu.dot_dimension_numbers<[1], [0], [0], [1], [0, 0, 1, 1], [], []>} : vector<8x12xbf16>, vector<12x8xbf16>, vector<8x8xf32> -> vector<8x8xf32>
    %241 = vector.broadcast %238 : vector<8x1xf32> to vector<8x8xf32>
    %242 = arith.mulf %240, %241 : vector<8x8xf32>
    %243 = arith.truncf %242 : vector<8x8xf32> to vector<8x8xbf16>
    %c0_99 = arith.constant 0 : index
    %c24_100 = arith.constant 24 : index
    %244 = vector.load %arg35[%c0_99, %c24_100] : memref<8x32xbf16, #tpu.memory_space<vmem>>, vector<8x8xbf16>
    tpu.vector_store %arg35[%c0_99, %c24_100], %243 {strides = array<i32>} : memref<8x32xbf16, #tpu.memory_space<vmem>>, vector<8x8xbf16>,
    %c0_101 = arith.constant 0 : index
    %c0_102 = arith.constant 0 : index
    %245 = vector.load %arg35[%c0_101, %c0_102] : memref<8x32xbf16, #tpu.memory_space<vmem>>, vector<8x32xbf16>
    %c0_103 = arith.constant 0 : index
    %c0_104 = arith.constant 0 : index
    %246 = vector.load %arg21[%c0_103, %c0_104] : memref<32x32xbf16, #tpu.memory_space<vmem>>, vector<32x32xbf16>
    %cst_105 = arith.constant dense<0.000000e+00> : vector<8x32xf32>
    %247 = tpu.matmul %245, %246, %cst_105 {dimension_numbers = #tpu.dot_dimension_numbers<[1], [0], [0], [1], [0, 0, 1, 1], [], []>} : vector<8x32xbf16>, vector<32x32xbf16>, vector<8x32xf32> -> vector<8x32xf32>
    %c0_106 = arith.constant 0 : index
    %c0_107 = arith.constant 0 : index
    %248 = vector.load %arg22[%c0_106, %c0_107] : memref<1x32xf32, #tpu.memory_space<vmem>>, vector<1x32xf32>
    %249 = vector.broadcast %248 : vector<1x32xf32> to vector<8x32xf32>
    %250 = arith.addf %247, %249 : vector<8x32xf32>
    %251 = arith.addf %140, %250 : vector<8x32xf32>
    %c0_108 = arith.constant 0 : index
    %c0_109 = arith.constant 0 : index
    %252 = vector.load %arg23[%c0_108, %c0_109] : memref<1x32xf32, #tpu.memory_space<vmem>>, vector<1x32xf32>
    %c0_110 = arith.constant 0 : index
    %c0_111 = arith.constant 0 : index
    %253 = vector.load %arg24[%c0_110, %c0_111] : memref<1x32xf32, #tpu.memory_space<vmem>>, vector<1x32xf32>
    %cst_112 = arith.constant dense<0.000000e+00> : vector<8xf32>
    %254 = vector.multi_reduction <add>, %251, %cst_112 [1] : vector<8x32xf32> to vector<8xf32>
    %255 = vector.shape_cast %254 : vector<8xf32> to vector<8x1xf32>
    %cst_113 = arith.constant 3.200000e+01 : f32
    %256 = vector.broadcast %cst_113 : f32 to vector<8x1xf32>
    %257 = arith.divf %255, %256 : vector<8x1xf32>
    %258 = vector.broadcast %257 : vector<8x1xf32> to vector<8x32xf32>
    %259 = arith.subf %251, %258 : vector<8x32xf32>
    %260 = arith.mulf %259, %259 : vector<8x32xf32>
    %cst_114 = arith.constant dense<0.000000e+00> : vector<8xf32>
    %261 = vector.multi_reduction <add>, %260, %cst_114 [1] : vector<8x32xf32> to vector<8xf32>
    %262 = vector.shape_cast %261 : vector<8xf32> to vector<8x1xf32>
    %cst_115 = arith.constant 3.200000e+01 : f32
    %263 = vector.broadcast %cst_115 : f32 to vector<8x1xf32>
    %264 = arith.divf %262, %263 : vector<8x1xf32>
    %265 = vector.broadcast %257 : vector<8x1xf32> to vector<8x32xf32>
    %266 = arith.subf %251, %265 : vector<8x32xf32>
    %cst_116 = arith.constant 9.99999974E-6 : f32
    %267 = vector.broadcast %cst_116 : f32 to vector<8x1xf32>
    %268 = arith.addf %264, %267 : vector<8x1xf32>
    %269 = math.rsqrt %268 : vector<8x1xf32>
    %270 = vector.broadcast %269 : vector<8x1xf32> to vector<8x32xf32>
    %271 = arith.mulf %266, %270 : vector<8x32xf32>
    %272 = vector.broadcast %252 : vector<1x32xf32> to vector<8x32xf32>
    %273 = arith.mulf %271, %272 : vector<8x32xf32>
    %274 = vector.broadcast %253 : vector<1x32xf32> to vector<8x32xf32>
    %275 = arith.addf %273, %274 : vector<8x32xf32>
    %276 = arith.truncf %275 : vector<8x32xf32> to vector<8x32xbf16>
    %c0_117 = arith.constant 0 : index
    %c0_118 = arith.constant 0 : index
    %277 = vector.load %arg25[%c0_117, %c0_118] : memref<32x64xbf16, #tpu.memory_space<vmem>>, vector<32x64xbf16>
    %cst_119 = arith.constant dense<0.000000e+00> : vector<8x64xf32>
    %278 = tpu.matmul %276, %277, %cst_119 {dimension_numbers = #tpu.dot_dimension_numbers<[1], [0], [0], [1], [0, 0, 1, 1], [], []>} : vector<8x32xbf16>, vector<32x64xbf16>, vector<8x64xf32> -> vector<8x64xf32>
    %c0_120 = arith.constant 0 : index
    %c0_121 = arith.constant 0 : index
    %279 = vector.load %arg26[%c0_120, %c0_121] : memref<1x64xf32, #tpu.memory_space<vmem>>, vector<1x64xf32>
    %280 = vector.broadcast %279 : vector<1x64xf32> to vector<8x64xf32>
    %281 = arith.addf %278, %280 : vector<8x64xf32>
    %cst_122 = arith.constant 0.000000e+00 : f32
    %282 = vector.broadcast %cst_122 : f32 to vector<8x64xf32>
    %283 = arith.maximumf %281, %282 : vector<8x64xf32>
    %284 = arith.truncf %283 : vector<8x64xf32> to vector<8x64xbf16>
    %c0_123 = arith.constant 0 : index
    %c0_124 = arith.constant 0 : index
    %285 = vector.load %arg27[%c0_123, %c0_124] : memref<64x32xbf16, #tpu.memory_space<vmem>>, vector<64x32xbf16>
    %cst_125 = arith.constant dense<0.000000e+00> : vector<8x32xf32>
    %286 = tpu.matmul %284, %285, %cst_125 {dimension_numbers = #tpu.dot_dimension_numbers<[1], [0], [0], [1], [0, 0, 1, 1], [], []>} : vector<8x64xbf16>, vector<64x32xbf16>, vector<8x32xf32> -> vector<8x32xf32>
    %287 = arith.addf %275, %286 : vector<8x32xf32>
    %c0_126 = arith.constant 0 : index
    %c0_127 = arith.constant 0 : index
    %288 = vector.load %arg28[%c0_126, %c0_127] : memref<1x32xf32, #tpu.memory_space<vmem>>, vector<1x32xf32>
    %289 = vector.broadcast %288 : vector<1x32xf32> to vector<8x32xf32>
    %290 = arith.addf %287, %289 : vector<8x32xf32>
    %c0_128 = arith.constant 0 : index
    %c0_129 = arith.constant 0 : index
    %291 = vector.load %arg29[%c0_128, %c0_129] : memref<1x32xf32, #tpu.memory_space<vmem>>, vector<1x32xf32>
    %c0_130 = arith.constant 0 : index
    %c0_131 = arith.constant 0 : index
    %292 = vector.load %arg30[%c0_130, %c0_131] : memref<1x32xf32, #tpu.memory_space<vmem>>, vector<1x32xf32>
    %cst_132 = arith.constant dense<0.000000e+00> : vector<8xf32>
    %293 = vector.multi_reduction <add>, %290, %cst_132 [1] : vector<8x32xf32> to vector<8xf32>
    %294 = vector.shape_cast %293 : vector<8xf32> to vector<8x1xf32>
    %cst_133 = arith.constant 3.200000e+01 : f32
    %295 = vector.broadcast %cst_133 : f32 to vector<8x1xf32>
    %296 = arith.divf %294, %295 : vector<8x1xf32>
    %297 = vector.broadcast %296 : vector<8x1xf32> to vector<8x32xf32>
    %298 = arith.subf %290, %297 : vector<8x32xf32>
    %299 = arith.mulf %298, %298 : vector<8x32xf32>
    %cst_134 = arith.constant dense<0.000000e+00> : vector<8xf32>
    %300 = vector.multi_reduction <add>, %299, %cst_134 [1] : vector<8x32xf32> to vector<8xf32>
    %301 = vector.shape_cast %300 : vector<8xf32> to vector<8x1xf32>
    %cst_135 = arith.constant 3.200000e+01 : f32
    %302 = vector.broadcast %cst_135 : f32 to vector<8x1xf32>
    %303 = arith.divf %301, %302 : vector<8x1xf32>
    %304 = vector.broadcast %296 : vector<8x1xf32> to vector<8x32xf32>
    %305 = arith.subf %290, %304 : vector<8x32xf32>
    %cst_136 = arith.constant 9.99999974E-6 : f32
    %306 = vector.broadcast %cst_136 : f32 to vector<8x1xf32>
    %307 = arith.addf %303, %306 : vector<8x1xf32>
    %308 = math.rsqrt %307 : vector<8x1xf32>
    %309 = vector.broadcast %308 : vector<8x1xf32> to vector<8x32xf32>
    %310 = arith.mulf %305, %309 : vector<8x32xf32>
    %311 = vector.broadcast %291 : vector<1x32xf32> to vector<8x32xf32>
    %312 = arith.mulf %310, %311 : vector<8x32xf32>
    %313 = vector.broadcast %292 : vector<1x32xf32> to vector<8x32xf32>
    %314 = arith.addf %312, %313 : vector<8x32xf32>
    %c0_137 = arith.constant 0 : index
    %c0_138 = arith.constant 0 : index
    %c0_139 = arith.constant 0 : index
    %315 = vector.load %arg33[%c0_137, %c0_138, %c0_139] : memref<1x8x32xf32, #tpu.memory_space<vmem>>, vector<1x8x32xf32>
    %316 = vector.shape_cast %315 : vector<1x8x32xf32> to vector<8x32xf32>
    %317 = vector.shape_cast %314 : vector<8x32xf32> to vector<1x8x32xf32>
    tpu.vector_store %arg33[%c0_137, %c0_138, %c0_139], %317 {strides = array<i32>} : memref<1x8x32xf32, #tpu.memory_space<vmem>>, vector<1x8x32xf32>,
    %c0_140 = arith.constant 0 : index
    %c0_141 = arith.constant 0 : index
    %318 = vector.load %arg31[%c0_140, %c0_141] : memref<1x32xf32, #tpu.memory_space<vmem>>, vector<1x32xf32>
    %c0_142 = arith.constant 0 : index
    %c0_143 = arith.constant 0 : index
    %319 = vector.load %arg32[%c0_142, %c0_143] : memref<1x32xf32, #tpu.memory_space<vmem>>, vector<1x32xf32>
    %cst_144 = arith.constant dense<0.000000e+00> : vector<8xf32>
    %320 = vector.multi_reduction <add>, %314, %cst_144 [1] : vector<8x32xf32> to vector<8xf32>
    %321 = vector.shape_cast %320 : vector<8xf32> to vector<8x1xf32>
    %cst_145 = arith.constant 3.200000e+01 : f32
    %322 = vector.broadcast %cst_145 : f32 to vector<8x1xf32>
    %323 = arith.divf %321, %322 : vector<8x1xf32>
    %324 = vector.broadcast %323 : vector<8x1xf32> to vector<8x32xf32>
    %325 = arith.subf %314, %324 : vector<8x32xf32>
    %326 = arith.mulf %325, %325 : vector<8x32xf32>
    %cst_146 = arith.constant dense<0.000000e+00> : vector<8xf32>
    %327 = vector.multi_reduction <add>, %326, %cst_146 [1] : vector<8x32xf32> to vector<8xf32>
    %328 = vector.shape_cast %327 : vector<8xf32> to vector<8x1xf32>
    %cst_147 = arith.constant 3.200000e+01 : f32
    %329 = vector.broadcast %cst_147 : f32 to vector<8x1xf32>
    %330 = arith.divf %328, %329 : vector<8x1xf32>
    %331 = vector.broadcast %323 : vector<8x1xf32> to vector<8x32xf32>
    %332 = arith.subf %314, %331 : vector<8x32xf32>
    %cst_148 = arith.constant 9.99999974E-6 : f32
    %333 = vector.broadcast %cst_148 : f32 to vector<8x1xf32>
    %334 = arith.addf %330, %333 : vector<8x1xf32>
    %335 = math.rsqrt %334 : vector<8x1xf32>
    %336 = vector.broadcast %335 : vector<8x1xf32> to vector<8x32xf32>
    %337 = arith.mulf %332, %336 : vector<8x32xf32>
    %338 = vector.broadcast %318 : vector<1x32xf32> to vector<8x32xf32>
    %339 = arith.mulf %337, %338 : vector<8x32xf32>
    %340 = vector.broadcast %319 : vector<1x32xf32> to vector<8x32xf32>
    %341 = arith.addf %339, %340 : vector<8x32xf32>
    %c0_149 = arith.constant 0 : index
    %c0_150 = arith.constant 0 : index
    %c0_151 = arith.constant 0 : index
    %342 = vector.load %arg34[%c0_149, %c0_150, %c0_151] : memref<1x8x32xf32, #tpu.memory_space<vmem>>, vector<1x8x32xf32>
    %343 = vector.shape_cast %342 : vector<1x8x32xf32> to vector<8x32xf32>
    %344 = vector.shape_cast %341 : vector<8x32xf32> to vector<1x8x32xf32>
    tpu.vector_store %arg34[%c0_149, %c0_150, %c0_151], %344 {strides = array<i32>} : memref<1x8x32xf32, #tpu.memory_space<vmem>>, vector<1x8x32xf32>,
    return
  }
  func.func @transform_0(%arg0: i32) -> (i32, i32, i32) {
    %c0_i32 = arith.constant 0 : i32
    %c0_i32_0 = arith.constant 0 : i32
    %c0_i32_1 = arith.constant 0 : i32
    return %arg0, %c0_i32, %c0_i32_0 : i32, i32, i32
  }
  func.func @transform_1(%arg0: i32) -> (i32, i32, i32) {
    %c0_i32 = arith.constant 0 : i32
    %c0_i32_0 = arith.constant 0 : i32
    %c0_i32_1 = arith.constant 0 : i32
    return %arg0, %c0_i32, %c0_i32_0 : i32, i32, i32
  }
  func.func @transform_2(%arg0: i32) -> (i32, i32, i32) {
    %c0_i32 = arith.constant 0 : i32
    %c0_i32_0 = arith.constant 0 : i32
    %c0_i32_1 = arith.constant 0 : i32
    return %arg0, %c0_i32, %c0_i32_0 : i32, i32, i32
  }
  func.func @transform_3(%arg0: i32) -> (i32, i32, i32) {
    %c0_i32 = arith.constant 0 : i32
    %c0_i32_0 = arith.constant 0 : i32
    %c0_i32_1 = arith.constant 0 : i32
    return %arg0, %c0_i32, %c0_i32_0 : i32, i32, i32
  }
  func.func @transform_4(%arg0: i32) -> (i32, i32) {
    %c0_i32 = arith.constant 0 : i32
    %c0_i32_0 = arith.constant 0 : i32
    %c0_i32_1 = arith.constant 0 : i32
    return %c0_i32, %c0_i32_0 : i32, i32
  }
  func.func @transform_5(%arg0: i32) -> (i32, i32) {
    %c0_i32 = arith.constant 0 : i32
    %c0_i32_0 = arith.constant 0 : i32
    %c0_i32_1 = arith.constant 0 : i32
    return %c0_i32, %c0_i32_0 : i32, i32
  }
  func.func @transform_6(%arg0: i32) -> (i32, i32) {
    %c0_i32 = arith.constant 0 : i32
    %c0_i32_0 = arith.constant 0 : i32
    %c0_i32_1 = arith.constant 0 : i32
    return %c0_i32, %c0_i32_0 : i32, i32
  }
  func.func @transform_7(%arg0: i32) -> (i32, i32) {
    %c0_i32 = arith.constant 0 : i32
    %c0_i32_0 = arith.constant 0 : i32
    %c0_i32_1 = arith.constant 0 : i32
    return %c0_i32, %c0_i32_0 : i32, i32
  }
  func.func @transform_8(%arg0: i32) -> (i32, i32) {
    %c0_i32 = arith.constant 0 : i32
    %c0_i32_0 = arith.constant 0 : i32
    %c0_i32_1 = arith.constant 0 : i32
    return %c0_i32, %c0_i32_0 : i32, i32
  }
  func.func @transform_9(%arg0: i32) -> (i32, i32) {
    %c0_i32 = arith.constant 0 : i32
    %c0_i32_0 = arith.constant 0 : i32
    %c0_i32_1 = arith.constant 0 : i32
    return %c0_i32, %c0_i32_0 : i32, i32
  }
  func.func @transform_10(%arg0: i32) -> (i32, i32) {
    %c0_i32 = arith.constant 0 : i32
    %c0_i32_0 = arith.constant 0 : i32
    %c0_i32_1 = arith.constant 0 : i32
    return %c0_i32, %c0_i32_0 : i32, i32
  }
  func.func @transform_11(%arg0: i32) -> (i32, i32) {
    %c0_i32 = arith.constant 0 : i32
    %c0_i32_0 = arith.constant 0 : i32
    %c0_i32_1 = arith.constant 0 : i32
    return %c0_i32, %c0_i32_0 : i32, i32
  }
  func.func @transform_12(%arg0: i32) -> (i32, i32) {
    %c0_i32 = arith.constant 0 : i32
    %c0_i32_0 = arith.constant 0 : i32
    %c0_i32_1 = arith.constant 0 : i32
    return %c0_i32, %c0_i32_0 : i32, i32
  }
  func.func @transform_13(%arg0: i32) -> (i32, i32) {
    %c0_i32 = arith.constant 0 : i32
    %c0_i32_0 = arith.constant 0 : i32
    %c0_i32_1 = arith.constant 0 : i32
    return %c0_i32, %c0_i32_0 : i32, i32
  }
  func.func @transform_14(%arg0: i32) -> (i32, i32) {
    %c0_i32 = arith.constant 0 : i32
    %c0_i32_0 = arith.constant 0 : i32
    %c0_i32_1 = arith.constant 0 : i32
    return %c0_i32, %c0_i32_0 : i32, i32
  }
  func.func @transform_15(%arg0: i32) -> (i32, i32) {
    %c0_i32 = arith.constant 0 : i32
    %c0_i32_0 = arith.constant 0 : i32
    %c0_i32_1 = arith.constant 0 : i32
    return %c0_i32, %c0_i32_0 : i32, i32
  }
  func.func @transform_16(%arg0: i32) -> (i32, i32) {
    %c0_i32 = arith.constant 0 : i32
    %c0_i32_0 = arith.constant 0 : i32
    %c0_i32_1 = arith.constant 0 : i32
    return %c0_i32, %c0_i32_0 : i32, i32
  }
  func.func @transform_17(%arg0: i32) -> (i32, i32) {
    %c0_i32 = arith.constant 0 : i32
    %c0_i32_0 = arith.constant 0 : i32
    %c0_i32_1 = arith.constant 0 : i32
    return %c0_i32, %c0_i32_0 : i32, i32
  }
  func.func @transform_18(%arg0: i32) -> (i32, i32) {
    %c0_i32 = arith.constant 0 : i32
    %c0_i32_0 = arith.constant 0 : i32
    %c0_i32_1 = arith.constant 0 : i32
    return %c0_i32, %c0_i32_0 : i32, i32
  }
  func.func @transform_19(%arg0: i32) -> (i32, i32) {
    %c0_i32 = arith.constant 0 : i32
    %c0_i32_0 = arith.constant 0 : i32
    %c0_i32_1 = arith.constant 0 : i32
    return %c0_i32, %c0_i32_0 : i32, i32
  }
  func.func @transform_20(%arg0: i32) -> (i32, i32) {
    %c0_i32 = arith.constant 0 : i32
    %c0_i32_0 = arith.constant 0 : i32
    %c0_i32_1 = arith.constant 0 : i32
    return %c0_i32, %c0_i32_0 : i32, i32
  }
  func.func @transform_21(%arg0: i32) -> (i32, i32) {
    %c0_i32 = arith.constant 0 : i32
    %c0_i32_0 = arith.constant 0 : i32
    %c0_i32_1 = arith.constant 0 : i32
    return %c0_i32, %c0_i32_0 : i32, i32
  }
  func.func @transform_22(%arg0: i32) -> (i32, i32) {
    %c0_i32 = arith.constant 0 : i32
    %c0_i32_0 = arith.constant 0 : i32
    %c0_i32_1 = arith.constant 0 : i32
    return %c0_i32, %c0_i32_0 : i32, i32
  }
  func.func @transform_23(%arg0: i32) -> (i32, i32) {
    %c0_i32 = arith.constant 0 : i32
    %c0_i32_0 = arith.constant 0 : i32
    %c0_i32_1 = arith.constant 0 : i32
    return %c0_i32, %c0_i32_0 : i32, i32
  }
  func.func @transform_24(%arg0: i32) -> (i32, i32) {
    %c0_i32 = arith.constant 0 : i32
    %c0_i32_0 = arith.constant 0 : i32
    %c0_i32_1 = arith.constant 0 : i32
    return %c0_i32, %c0_i32_0 : i32, i32
  }
  func.func @transform_25(%arg0: i32) -> (i32, i32) {
    %c0_i32 = arith.constant 0 : i32
    %c0_i32_0 = arith.constant 0 : i32
    %c0_i32_1 = arith.constant 0 : i32
    return %c0_i32, %c0_i32_0 : i32, i32
  }
  func.func @transform_26(%arg0: i32) -> (i32, i32) {
    %c0_i32 = arith.constant 0 : i32
    %c0_i32_0 = arith.constant 0 : i32
    %c0_i32_1 = arith.constant 0 : i32
    return %c0_i32, %c0_i32_0 : i32, i32
  }
  func.func @transform_27(%arg0: i32) -> (i32, i32) {
    %c0_i32 = arith.constant 0 : i32
    %c0_i32_0 = arith.constant 0 : i32
    %c0_i32_1 = arith.constant 0 : i32
    return %c0_i32, %c0_i32_0 : i32, i32
  }
  func.func @transform_28(%arg0: i32) -> (i32, i32) {
    %c0_i32 = arith.constant 0 : i32
    %c0_i32_0 = arith.constant 0 : i32
    %c0_i32_1 = arith.constant 0 : i32
    return %c0_i32, %c0_i32_0 : i32, i32
  }
  func.func @transform_29(%arg0: i32) -> (i32, i32) {
    %c0_i32 = arith.constant 0 : i32
    %c0_i32_0 = arith.constant 0 : i32
    %c0_i32_1 = arith.constant 0 : i32
    return %c0_i32, %c0_i32_0 : i32, i32
  }
  func.func @transform_30(%arg0: i32) -> (i32, i32) {
    %c0_i32 = arith.constant 0 : i32
    %c0_i32_0 = arith.constant 0 : i32
    %c0_i32_1 = arith.constant 0 : i32
    return %c0_i32, %c0_i32_0 : i32, i32
  }
  func.func @transform_31(%arg0: i32) -> (i32, i32) {
    %c0_i32 = arith.constant 0 : i32
    %c0_i32_0 = arith.constant 0 : i32
    %c0_i32_1 = arith.constant 0 : i32
    return %c0_i32, %c0_i32_0 : i32, i32
  }
  func.func @transform_32(%arg0: i32) -> (i32, i32, i32) {
    %c0_i32 = arith.constant 0 : i32
    %c0_i32_0 = arith.constant 0 : i32
    %c0_i32_1 = arith.constant 0 : i32
    return %arg0, %c0_i32, %c0_i32_0 : i32, i32, i32
  }
  func.func @transform_33(%arg0: i32) -> (i32, i32, i32) {
    %c0_i32 = arith.constant 0 : i32
    %c0_i32_0 = arith.constant 0 : i32
    %c0_i32_1 = arith.constant 0 : i32
    return %arg0, %c0_i32, %c0_i32_0 : i32, i32, i32
  }
}

</mosaic_0001>

<llo_original>
// kernel: transformer_decoder_forward.2
$region0: #{transformer_decoder_forward.2}
  #allocation0 [shape = 'u32[]', space=smem, size = 0x4, offset = 0x4, fixed_abs, tag = 'smem constant byte address 0x4 - core index']
  #allocation1 [shape = 'u32[144,128]{1,0:T(1,128)}', space=vmem, size = 0x12000, scoped, tag = 'internal scratch']
  #allocation2 [shape = 'bf16[8,32]{1,0:T(8,128)(2,1)}', space=vmem, size = 0x800, scoped, tag = 'scratch operand']
  %s0 = inlined_call_operand.smem [shape: u32[34], index: -1, kind: input, shape index: {}]
  %s1 = sld [smem:[%s0]]
  %s2 = scalar_lea.smem %s0, 1
  %s3 = sld [smem:[%s2]]
  %s4 = scalar_lea.smem %s0, 2
  %s5 = sld [smem:[%s4]]
  %s6 = scalar_lea.smem %s0, 3
  %s7 = sld [smem:[%s6]]
  %s8 = scalar_lea.smem %s0, 4
  %s9 = sld [smem:[%s8]]
  %s10 = scalar_lea.smem %s0, 5
  %s11 = sld [smem:[%s10]]
  %s12 = scalar_lea.smem %s0, 6
  %s13 = sld [smem:[%s12]]
  %s14 = scalar_lea.smem %s0, 7
  %s15 = sld [smem:[%s14]]
  %s16 = scalar_lea.smem %s0, 8
  %s17 = sld [smem:[%s16]]
  %s18 = scalar_lea.smem %s0, 9
  %s19 = sld [smem:[%s18]]
  %s20 = scalar_lea.smem %s0, 10
  %s21 = sld [smem:[%s20]]
  %s22 = scalar_lea.smem %s0, 11
  %s23 = sld [smem:[%s22]]
  %s24 = scalar_lea.smem %s0, 12
  %s25 = sld [smem:[%s24]]
  %s26 = scalar_lea.smem %s0, 13
  %s27 = sld [smem:[%s26]]
  %s28 = scalar_lea.smem %s0, 14
  %s29 = sld [smem:[%s28]]
  %s30 = scalar_lea.smem %s0, 15
  %s31 = sld [smem:[%s30]]
  %s32 = scalar_lea.smem %s0, 16
  %s33 = sld [smem:[%s32]]
  %s34 = scalar_lea.smem %s0, 17
  %s35 = sld [smem:[%s34]]
  %s36 = scalar_lea.smem %s0, 18
  %s37 = sld [smem:[%s36]]
  %s38 = scalar_lea.smem %s0, 19
  %s39 = sld [smem:[%s38]]
  %s40 = scalar_lea.smem %s0, 20
  %s41 = sld [smem:[%s40]]
  %s42 = scalar_lea.smem %s0, 21
  %s43 = sld [smem:[%s42]]
  %s44 = scalar_lea.smem %s0, 22
  %s45 = sld [smem:[%s44]]
  %s46 = scalar_lea.smem %s0, 23
  %s47 = sld [smem:[%s46]]
  %s48 = scalar_lea.smem %s0, 24
  %s49 = sld [smem:[%s48]]
  %s50 = scalar_lea.smem %s0, 25
  %s51 = sld [smem:[%s50]]
  %s52 = scalar_lea.smem %s0, 26
  %s53 = sld [smem:[%s52]]
  %s54 = scalar_lea.smem %s0, 27
  %s55 = sld [smem:[%s54]]
  %s56 = scalar_lea.smem %s0, 28
  %s57 = sld [smem:[%s56]]
  %s58 = scalar_lea.smem %s0, 29
  %s59 = sld [smem:[%s58]]
  %s60 = scalar_lea.smem %s0, 30
  %s61 = sld [smem:[%s60]]
  %s62 = scalar_lea.smem %s0, 31
  %s63 = sld [smem:[%s62]]
  %s64 = scalar_lea.smem %s0, 32
  %s65 = sld [smem:[%s64]]
  %s66 = scalar_lea.smem %s0, 33
  %s67 = sld [smem:[%s66]]
  %68 = xla_tuple %s65, %s67
  %s69 = sld [smem:[#allocation0]]
  $region169: #{transformer_decoder_forward.2} parent=0
    _
  %s71 = ssub.s32 1, %s69
  %s72 = scalar_select 0, %s71, %s69
  loop: start=0, step=1, limit=4
  $region2: #{transformer_decoder_forward.2} parent=0 // loop_pre_header
    _
  $region3: #{transformer_decoder_forward.2} parent=0 // loop_header
    %s74 = sphi 0, %s78
    %p75 = scmp.ge.s32.totalorder %s74, 4
    %s84 = sphi 0, %s86
    %s87 = sphi 0, %s84
    %s88 = sphi 0, %s87
    %s104 = sphi 0, %s88
    %s110 = sphi 0, %s112
    %s113 = sphi 0, %s110
    %s114 = sphi 0, %s113
    %s130 = sphi 0, %s114
    %s136 = sphi 0, %s138
    %s139 = sphi 0, %s136
    %s140 = sphi 0, %s139
    %s156 = sphi 0, %s140
    %s162 = sphi 0, %s164
    %s165 = sphi 0, %s162
    %s166 = sphi 0, %s165
    %s182 = sphi 0, %s166
    %s186 = sphi 0, %s186
    %s188 = sphi 0, %s186
    %s189 = sphi 0, %s188
    %s203 = sphi 0, %s189
    %s207 = sphi 0, %s207
    %s209 = sphi 0, %s207
    %s210 = sphi 0, %s209
    %s224 = sphi 0, %s210
    %s228 = sphi 0, %s228
    %s230 = sphi 0, %s228
    %s231 = sphi 0, %s230
    %s245 = sphi 0, %s231
    %s249 = sphi 0, %s249
    %s251 = sphi 0, %s249
    %s252 = sphi 0, %s251
    %s266 = sphi 0, %s252
    %s270 = sphi 0, %s270
    %s272 = sphi 0, %s270
    %s273 = sphi 0, %s272
    %s287 = sphi 0, %s273
    %s291 = sphi 0, %s291
    %s293 = sphi 0, %s291
    %s294 = sphi 0, %s293
    %s308 = sphi 0, %s294
    %s312 = sphi 0, %s312
    %s314 = sphi 0, %s312
    %s315 = sphi 0, %s314
    %s329 = sphi 0, %s315
    %s333 = sphi 0, %s333
    %s335 = sphi 0, %s333
    %s336 = sphi 0, %s335
    %s350 = sphi 0, %s336
    %s354 = sphi 0, %s354
    %s356 = sphi 0, %s354
    %s357 = sphi 0, %s356
    %s371 = sphi 0, %s357
    %s375 = sphi 0, %s375
    %s377 = sphi 0, %s375
    %s378 = sphi 0, %s377
    %s392 = sphi 0, %s378
    %s396 = sphi 0, %s396
    %s398 = sphi 0, %s396
    %s399 = sphi 0, %s398
    %s413 = sphi 0, %s399
    %s417 = sphi 0, %s417
    %s419 = sphi 0, %s417
    %s420 = sphi 0, %s419
    %s434 = sphi 0, %s420
    %s438 = sphi 0, %s438
    %s440 = sphi 0, %s438
    %s441 = sphi 0, %s440
    %s455 = sphi 0, %s441
    %s459 = sphi 0, %s459
    %s461 = sphi 0, %s459
    %s462 = sphi 0, %s461
    %s476 = sphi 0, %s462
    %s480 = sphi 0, %s480
    %s482 = sphi 0, %s480
    %s483 = sphi 0, %s482
    %s497 = sphi 0, %s483
    %s501 = sphi 0, %s501
    %s503 = sphi 0, %s501
    %s504 = sphi 0, %s503
    %s518 = sphi 0, %s504
    %s522 = sphi 0, %s522
    %s524 = sphi 0, %s522
    %s525 = sphi 0, %s524
    %s539 = sphi 0, %s525
    %s543 = sphi 0, %s543
    %s545 = sphi 0, %s543
    %s546 = sphi 0, %s545
    %s560 = sphi 0, %s546
    %s564 = sphi 0, %s564
    %s566 = sphi 0, %s564
    %s567 = sphi 0, %s566
    %s581 = sphi 0, %s567
    %s585 = sphi 0, %s585
    %s587 = sphi 0, %s585
    %s588 = sphi 0, %s587
    %s602 = sphi 0, %s588
    %s606 = sphi 0, %s606
    %s608 = sphi 0, %s606
    %s609 = sphi 0, %s608
    %s623 = sphi 0, %s609
    %s627 = sphi 0, %s627
    %s629 = sphi 0, %s627
    %s630 = sphi 0, %s629
    %s644 = sphi 0, %s630
    %s648 = sphi 0, %s648
    %s650 = sphi 0, %s648
    %s651 = sphi 0, %s650
    %s665 = sphi 0, %s651
    %s669 = sphi 0, %s669
    %s671 = sphi 0, %s669
    %s672 = sphi 0, %s671
    %s686 = sphi 0, %s672
    %s690 = sphi 0, %s690
    %s692 = sphi 0, %s690
    %s693 = sphi 0, %s692
    %s707 = sphi 0, %s693
    %s711 = sphi 0, %s711
    %s713 = sphi 0, %s711
    %s714 = sphi 0, %s713
    %s728 = sphi 0, %s714
    %s732 = sphi 0, %s732
    %s734 = sphi 0, %s732
    %s735 = sphi 0, %s734
    %s749 = sphi 0, %s735
    %s753 = sphi 0, %s753
    %s755 = sphi 0, %s753
    %s756 = sphi 0, %s755
    %s770 = sphi 0, %s756
    %s776 = sphi 0, %s778
    %s779 = sphi 0, %s776
    %s780 = sphi 0, %s779
    %s796 = sphi 0, %s780
    %s802 = sphi 0, %s804
    %s805 = sphi 0, %s802
    %s806 = sphi 0, %s805
    %s822 = sphi 0, %s806
  $region4: #{transformer_decoder_forward.2} parent=0 // loop_header_branch
    %77 = sbr.rel (%p75) target = $region8
  $region5: #{transformer_decoder_forward.2} parent=0 // loop_body
    %s79 = ssub.s32 %s74, 1
    %s80 = ssub.s32 %s74, 2
    %s81 = sadd.s32 %s74, 1
    %s82 = ssub.s32 %s74, %s81
    %p83 = scmp.eq.s32.totalorder %s82, 0
    %s85 = sadd.s32 %s84, 1
    %s86 = scalar_select %p83, %s84, %s85
    %p89 = pneg %p83
    %p90 = scmp.eq.s32.totalorder %s74, 1
    %p91 = por %p89, %p90
    %p92 = scmp.ne.s32.totalorder %s84, %s87
    %p93 = scmp.eq.s32.totalorder %s74, 0
    %p94 = por %p92, %p93
    %p95 = scmp.ne.s32.totalorder %s84, %s87
    %p96 = scmp.eq.s32.totalorder %s79, 1
    %p97 = por %p95, %p96
    %p98 = scmp.ne.s32.totalorder %s87, %s88
    %p99 = scmp.eq.s32.totalorder %s79, 0
    %p100 = por %p98, %p99
    %p101 = scmp.ne.s32.totalorder %s87, %s88
    %p102 = scmp.eq.s32.totalorder %s80, 1
    %p103 = por %p101, %p102
    %p105 = scmp.ne.s32.totalorder %s88, %s104
    %p106 = scmp.eq.s32.totalorder %s80, 0
    %p107 = por %p105, %p106
    %s108 = ssub.s32 %s74, %s81
    %p109 = scmp.eq.s32.totalorder %s108, 0
    %s111 = sadd.s32 %s110, 1
    %s112 = scalar_select %p109, %s110, %s111
    %p115 = pneg %p109
    %p116 = scmp.eq.s32.totalorder %s74, 1
    %p117 = por %p115, %p116
    %p118 = scmp.ne.s32.totalorder %s110, %s113
    %p119 = scmp.eq.s32.totalorder %s74, 0
    %p120 = por %p118, %p119
    %p121 = scmp.ne.s32.totalorder %s110, %s113
    %p122 = scmp.eq.s32.totalorder %s79, 1
    %p123 = por %p121, %p122
    %p124 = scmp.ne.s32.totalorder %s113, %s114
    %p125 = scmp.eq.s32.totalorder %s79, 0
    %p126 = por %p124, %p125
    %p127 = scmp.ne.s32.totalorder %s113, %s114
    %p128 = scmp.eq.s32.totalorder %s80, 1
    %p129 = por %p127, %p128
    %p131 = scmp.ne.s32.totalorder %s114, %s130
    %p132 = scmp.eq.s32.totalorder %s80, 0
    %p133 = por %p131, %p132
    %s134 = ssub.s32 %s74, %s81
    %p135 = scmp.eq.s32.totalorder %s134, 0
    %s137 = sadd.s32 %s136, 1
    %s138 = scalar_select %p135, %s136, %s137
    %p141 = pneg %p135
    %p142 = scmp.eq.s32.totalorder %s74, 1
    %p143 = por %p141, %p142
    %p144 = scmp.ne.s32.totalorder %s136, %s139
    %p145 = scmp.eq.s32.totalorder %s74, 0
    %p146 = por %p144, %p145
    %p147 = scmp.ne.s32.totalorder %s136, %s139
    %p148 = scmp.eq.s32.totalorder %s79, 1
    %p149 = por %p147, %p148
    %p150 = scmp.ne.s32.totalorder %s139, %s140
    %p151 = scmp.eq.s32.totalorder %s79, 0
    %p152 = por %p150, %p151
    %p153 = scmp.ne.s32.totalorder %s139, %s140
    %p154 = scmp.eq.s32.totalorder %s80, 1
    %p155 = por %p153, %p154
    %p157 = scmp.ne.s32.totalorder %s140, %s156
    %p158 = scmp.eq.s32.totalorder %s80, 0
    %p159 = por %p157, %p158
    %s160 = ssub.s32 %s74, %s81
    %p161 = scmp.eq.s32.totalorder %s160, 0
    %s163 = sadd.s32 %s162, 1
    %s164 = scalar_select %p161, %s162, %s163
    %p167 = pneg %p161
    %p168 = scmp.eq.s32.totalorder %s74, 1
    %p169 = por %p167, %p168
    %p170 = scmp.ne.s32.totalorder %s162, %s165
    %p171 = scmp.eq.s32.totalorder %s74, 0
    %p172 = por %p170, %p171
    %p173 = scmp.ne.s32.totalorder %s162, %s165
    %p174 = scmp.eq.s32.totalorder %s79, 1
    %p175 = por %p173, %p174
    %p176 = scmp.ne.s32.totalorder %s165, %s166
    %p177 = scmp.eq.s32.totalorder %s79, 0
    %p178 = por %p176, %p177
    %p179 = scmp.ne.s32.totalorder %s165, %s166
    %p180 = scmp.eq.s32.totalorder %s80, 1
    %p181 = por %p179, %p180
    %p183 = scmp.ne.s32.totalorder %s166, %s182
    %p184 = scmp.eq.s32.totalorder %s80, 0
    %p185 = por %p183, %p184
    %s187 = sadd.s32 %s186, 1
    %p190 = scmp.eq.s32.totalorder %s74, 1
    %p191 = scmp.ne.s32.totalorder %s186, %s188
    %p192 = scmp.eq.s32.totalorder %s74, 0
    %p193 = por %p191, %p192
    %p194 = scmp.ne.s32.totalorder %s186, %s188
    %p195 = scmp.eq.s32.totalorder %s79, 1
    %p196 = por %p194, %p195
    %p197 = scmp.ne.s32.totalorder %s188, %s189
    %p198 = scmp.eq.s32.totalorder %s79, 0
    %p199 = por %p197, %p198
    %p200 = scmp.ne.s32.totalorder %s188, %s189
    %p201 = scmp.eq.s32.totalorder %s80, 1
    %p202 = por %p200, %p201
    %p204 = scmp.ne.s32.totalorder %s189, %s203
    %p205 = scmp.eq.s32.totalorder %s80, 0
    %p206 = por %p204, %p205
    %s208 = sadd.s32 %s207, 1
    %p211 = scmp.eq.s32.totalorder %s74, 1
    %p212 = scmp.ne.s32.totalorder %s207, %s209
    %p213 = scmp.eq.s32.totalorder %s74, 0
    %p214 = por %p212, %p213
    %p215 = scmp.ne.s32.totalorder %s207, %s209
    %p216 = scmp.eq.s32.totalorder %s79, 1
    %p217 = por %p215, %p216
    %p218 = scmp.ne.s32.totalorder %s209, %s210
    %p219 = scmp.eq.s32.totalorder %s79, 0
    %p220 = por %p218, %p219
    %p221 = scmp.ne.s32.totalorder %s209, %s210
    %p222 = scmp.eq.s32.totalorder %s80, 1
    %p223 = por %p221, %p222
    %p225 = scmp.ne.s32.totalorder %s210, %s224
    %p226 = scmp.eq.s32.totalorder %s80, 0
    %p227 = por %p225, %p226
    %s229 = sadd.s32 %s228, 1
    %p232 = scmp.eq.s32.totalorder %s74, 1
    %p233 = scmp.ne.s32.totalorder %s228, %s230
    %p234 = scmp.eq.s32.totalorder %s74, 0
    %p235 = por %p233, %p234
    %p236 = scmp.ne.s32.totalorder %s228, %s230
    %p237 = scmp.eq.s32.totalorder %s79, 1
    %p238 = por %p236, %p237
    %p239 = scmp.ne.s32.totalorder %s230, %s231
    %p240 = scmp.eq.s32.totalorder %s79, 0
    %p241 = por %p239, %p240
    %p242 = scmp.ne.s32.totalorder %s230, %s231
    %p243 = scmp.eq.s32.totalorder %s80, 1
    %p244 = por %p242, %p243
    %p246 = scmp.ne.s32.totalorder %s231, %s245
    %p247 = scmp.eq.s32.totalorder %s80, 0
    %p248 = por %p246, %p247
    %s250 = sadd.s32 %s249, 1
    %p253 = scmp.eq.s32.totalorder %s74, 1
    %p254 = scmp.ne.s32.totalorder %s249, %s251
    %p255 = scmp.eq.s32.totalorder %s74, 0
    %p256 = por %p254, %p255
    %p257 = scmp.ne.s32.totalorder %s249, %s251
    %p258 = scmp.eq.s32.totalorder %s79, 1
    %p259 = por %p257, %p258
    %p260 = scmp.ne.s32.totalorder %s251, %s252
    %p261 = scmp.eq.s32.totalorder %s79, 0
    %p262 = por %p260, %p261
    %p263 = scmp.ne.s32.totalorder %s251, %s252
    %p264 = scmp.eq.s32.totalorder %s80, 1
    %p265 = por %p263, %p264
    %p267 = scmp.ne.s32.totalorder %s252, %s266
    %p268 = scmp.eq.s32.totalorder %s80, 0
    %p269 = por %p267, %p268
    %s271 = sadd.s32 %s270, 1
    %p274 = scmp.eq.s32.totalorder %s74, 1
    %p275 = scmp.ne.s32.totalorder %s270, %s272
    %p276 = scmp.eq.s32.totalorder %s74, 0
    %p277 = por %p275, %p276
    %p278 = scmp.ne.s32.totalorder %s270, %s272
    %p279 = scmp.eq.s32.totalorder %s79, 1
    %p280 = por %p278, %p279
    %p281 = scmp.ne.s32.totalorder %s272, %s273
    %p282 = scmp.eq.s32.totalorder %s79, 0
    %p283 = por %p281, %p282
    %p284 = scmp.ne.s32.totalorder %s272, %s273
    %p285 = scmp.eq.s32.totalorder %s80, 1
    %p286 = por %p284, %p285
    %p288 = scmp.ne.s32.totalorder %s273, %s287
    %p289 = scmp.eq.s32.totalorder %s80, 0
    %p290 = por %p288, %p289
    %s292 = sadd.s32 %s291, 1
    %p295 = scmp.eq.s32.totalorder %s74, 1
    %p296 = scmp.ne.s32.totalorder %s291, %s293
    %p297 = scmp.eq.s32.totalorder %s74, 0
    %p298 = por %p296, %p297
    %p299 = scmp.ne.s32.totalorder %s291, %s293
    %p300 = scmp.eq.s32.totalorder %s79, 1
    %p301 = por %p299, %p300
    %p302 = scmp.ne.s32.totalorder %s293, %s294
    %p303 = scmp.eq.s32.totalorder %s79, 0
    %p304 = por %p302, %p303
    %p305 = scmp.ne.s32.totalorder %s293, %s294
    %p306 = scmp.eq.s32.totalorder %s80, 1
    %p307 = por %p305, %p306
    %p309 = scmp.ne.s32.totalorder %s294, %s308
    %p310 = scmp.eq.s32.totalorder %s80, 0
    %p311 = por %p309, %p310
    %s313 = sadd.s32 %s312, 1
    %p316 = scmp.eq.s32.totalorder %s74, 1
    %p317 = scmp.ne.s32.totalorder %s312, %s314
    %p318 = scmp.eq.s32.totalorder %s74, 0
    %p319 = por %p317, %p318
    %p320 = scmp.ne.s32.totalorder %s312, %s314
    %p321 = scmp.eq.s32.totalorder %s79, 1
    %p322 = por %p320, %p321
    %p323 = scmp.ne.s32.totalorder %s314, %s315
    %p324 = scmp.eq.s32.totalorder %s79, 0
    %p325 = por %p323, %p324
    %p326 = scmp.ne.s32.totalorder %s314, %s315
    %p327 = scmp.eq.s32.totalorder %s80, 1
    %p328 = por %p326, %p327
    %p330 = scmp.ne.s32.totalorder %s315, %s329
    %p331 = scmp.eq.s32.totalorder %s80, 0
    %p332 = por %p330, %p331
    %s334 = sadd.s32 %s333, 1
    %p337 = scmp.eq.s32.totalorder %s74, 1
    %p338 = scmp.ne.s32.totalorder %s333, %s335
    %p339 = scmp.eq.s32.totalorder %s74, 0
    %p340 = por %p338, %p339
    %p341 = scmp.ne.s32.totalorder %s333, %s335
    %p342 = scmp.eq.s32.totalorder %s79, 1
    %p343 = por %p341, %p342
    %p344 = scmp.ne.s32.totalorder %s335, %s336
    %p345 = scmp.eq.s32.totalorder %s79, 0
    %p346 = por %p344, %p345
    %p347 = scmp.ne.s32.totalorder %s335, %s336
    %p348 = scmp.eq.s32.totalorder %s80, 1
    %p349 = por %p347, %p348
    %p351 = scmp.ne.s32.totalorder %s336, %s350
    %p352 = scmp.eq.s32.totalorder %s80, 0
    %p353 = por %p351, %p352
    %s355 = sadd.s32 %s354, 1
    %p358 = scmp.eq.s32.totalorder %s74, 1
    %p359 = scmp.ne.s32.totalorder %s354, %s356
    %p360 = scmp.eq.s32.totalorder %s74, 0
    %p361 = por %p359, %p360
    %p362 = scmp.ne.s32.totalorder %s354, %s356
    %p363 = scmp.eq.s32.totalorder %s79, 1
    %p364 = por %p362, %p363
    %p365 = scmp.ne.s32.totalorder %s356, %s357
    %p366 = scmp.eq.s32.totalorder %s79, 0
    %p367 = por %p365, %p366
    %p368 = scmp.ne.s32.totalorder %s356, %s357
    %p369 = scmp.eq.s32.totalorder %s80, 1
    %p370 = por %p368, %p369
    %p372 = scmp.ne.s32.totalorder %s357, %s371
    %p373 = scmp.eq.s32.totalorder %s80, 0
    %p374 = por %p372, %p373
    %s376 = sadd.s32 %s375, 1
    %p379 = scmp.eq.s32.totalorder %s74, 1
    %p380 = scmp.ne.s32.totalorder %s375, %s377
    %p381 = scmp.eq.s32.totalorder %s74, 0
    %p382 = por %p380, %p381
    %p383 = scmp.ne.s32.totalorder %s375, %s377
    %p384 = scmp.eq.s32.totalorder %s79, 1
    %p385 = por %p383, %p384
    %p386 = scmp.ne.s32.totalorder %s377, %s378
    %p387 = scmp.eq.s32.totalorder %s79, 0
    %p388 = por %p386, %p387
    %p389 = scmp.ne.s32.totalorder %s377, %s378
    %p390 = scmp.eq.s32.totalorder %s80, 1
    %p391 = por %p389, %p390
    %p393 = scmp.ne.s32.totalorder %s378, %s392
    %p394 = scmp.eq.s32.totalorder %s80, 0
    %p395 = por %p393, %p394
    %s397 = sadd.s32 %s396, 1
    %p400 = scmp.eq.s32.totalorder %s74, 1
    %p401 = scmp.ne.s32.totalorder %s396, %s398
    %p402 = scmp.eq.s32.totalorder %s74, 0
    %p403 = por %p401, %p402
    %p404 = scmp.ne.s32.totalorder %s396, %s398
    %p405 = scmp.eq.s32.totalorder %s79, 1
    %p406 = por %p404, %p405
    %p407 = scmp.ne.s32.totalorder %s398, %s399
    %p408 = scmp.eq.s32.totalorder %s79, 0
    %p409 = por %p407, %p408
    %p410 = scmp.ne.s32.totalorder %s398, %s399
    %p411 = scmp.eq.s32.totalorder %s80, 1
    %p412 = por %p410, %p411
    %p414 = scmp.ne.s32.totalorder %s399, %s413
    %p415 = scmp.eq.s32.totalorder %s80, 0
    %p416 = por %p414, %p415
    %s418 = sadd.s32 %s417, 1
    %p421 = scmp.eq.s32.totalorder %s74, 1
    %p422 = scmp.ne.s32.totalorder %s417, %s419
    %p423 = scmp.eq.s32.totalorder %s74, 0
    %p424 = por %p422, %p423
    %p425 = scmp.ne.s32.totalorder %s417, %s419
    %p426 = scmp.eq.s32.totalorder %s79, 1
    %p427 = por %p425, %p426
    %p428 = scmp.ne.s32.totalorder %s419, %s420
    %p429 = scmp.eq.s32.totalorder %s79, 0
    %p430 = por %p428, %p429
    %p431 = scmp.ne.s32.totalorder %s419, %s420
    %p432 = scmp.eq.s32.totalorder %s80, 1
    %p433 = por %p431, %p432
    %p435 = scmp.ne.s32.totalorder %s420, %s434
    %p436 = scmp.eq.s32.totalorder %s80, 0
    %p437 = por %p435, %p436
    %s439 = sadd.s32 %s438, 1
    %p442 = scmp.eq.s32.totalorder %s74, 1
    %p443 = scmp.ne.s32.totalorder %s438, %s440
    %p444 = scmp.eq.s32.totalorder %s74, 0
    %p445 = por %p443, %p444
    %p446 = scmp.ne.s32.totalorder %s438, %s440
    %p447 = scmp.eq.s32.totalorder %s79, 1
    %p448 = por %p446, %p447
    %p449 = scmp.ne.s32.totalorder %s440, %s441
    %p450 = scmp.eq.s32.totalorder %s79, 0
    %p451 = por %p449, %p450
    %p452 = scmp.ne.s32.totalorder %s440, %s441
    %p453 = scmp.eq.s32.totalorder %s80, 1
    %p454 = por %p452, %p453
    %p456 = scmp.ne.s32.totalorder %s441, %s455
    %p457 = scmp.eq.s32.totalorder %s80, 0
    %p458 = por %p456, %p457
    %s460 = sadd.s32 %s459, 1
    %p463 = scmp.eq.s32.totalorder %s74, 1
    %p464 = scmp.ne.s32.totalorder %s459, %s461
    %p465 = scmp.eq.s32.totalorder %s74, 0
    %p466 = por %p464, %p465
    %p467 = scmp.ne.s32.totalorder %s459, %s461
    %p468 = scmp.eq.s32.totalorder %s79, 1
    %p469 = por %p467, %p468
    %p470 = scmp.ne.s32.totalorder %s461, %s462
    %p471 = scmp.eq.s32.totalorder %s79, 0
    %p472 = por %p470, %p471
    %p473 = scmp.ne.s32.totalorder %s461, %s462
    %p474 = scmp.eq.s32.totalorder %s80, 1
    %p475 = por %p473, %p474
    %p477 = scmp.ne.s32.totalorder %s462, %s476
    %p478 = scmp.eq.s32.totalorder %s80, 0
    %p479 = por %p477, %p478
    %s481 = sadd.s32 %s480, 1
    %p484 = scmp.eq.s32.totalorder %s74, 1
    %p485 = scmp.ne.s32.totalorder %s480, %s482
    %p486 = scmp.eq.s32.totalorder %s74, 0
    %p487 = por %p485, %p486
    %p488 = scmp.ne.s32.totalorder %s480, %s482
    %p489 = scmp.eq.s32.totalorder %s79, 1
    %p490 = por %p488, %p489
    %p491 = scmp.ne.s32.totalorder %s482, %s483
    %p492 = scmp.eq.s32.totalorder %s79, 0
    %p493 = por %p491, %p492
    %p494 = scmp.ne.s32.totalorder %s482, %s483
    %p495 = scmp.eq.s32.totalorder %s80, 1
    %p496 = por %p494, %p495
    %p498 = scmp.ne.s32.totalorder %s483, %s497
    %p499 = scmp.eq.s32.totalorder %s80, 0
    %p500 = por %p498, %p499
    %s502 = sadd.s32 %s501, 1
    %p505 = scmp.eq.s32.totalorder %s74, 1
    %p506 = scmp.ne.s32.totalorder %s501, %s503
    %p507 = scmp.eq.s32.totalorder %s74, 0
    %p508 = por %p506, %p507
    %p509 = scmp.ne.s32.totalorder %s501, %s503
    %p510 = scmp.eq.s32.totalorder %s79, 1
    %p511 = por %p509, %p510
    %p512 = scmp.ne.s32.totalorder %s503, %s504
    %p513 = scmp.eq.s32.totalorder %s79, 0
    %p514 = por %p512, %p513
    %p515 = scmp.ne.s32.totalorder %s503, %s504
    %p516 = scmp.eq.s32.totalorder %s80, 1
    %p517 = por %p515, %p516
    %p519 = scmp.ne.s32.totalorder %s504, %s518
    %p520 = scmp.eq.s32.totalorder %s80, 0
    %p521 = por %p519, %p520
    %s523 = sadd.s32 %s522, 1
    %p526 = scmp.eq.s32.totalorder %s74, 1
    %p527 = scmp.ne.s32.totalorder %s522, %s524
    %p528 = scmp.eq.s32.totalorder %s74, 0
    %p529 = por %p527, %p528
    %p530 = scmp.ne.s32.totalorder %s522, %s524
    %p531 = scmp.eq.s32.totalorder %s79, 1
    %p532 = por %p530, %p531
    %p533 = scmp.ne.s32.totalorder %s524, %s525
    %p534 = scmp.eq.s32.totalorder %s79, 0
    %p535 = por %p533, %p534
    %p536 = scmp.ne.s32.totalorder %s524, %s525
    %p537 = scmp.eq.s32.totalorder %s80, 1
    %p538 = por %p536, %p537
    %p540 = scmp.ne.s32.totalorder %s525, %s539
    %p541 = scmp.eq.s32.totalorder %s80, 0
    %p542 = por %p540, %p541
    %s544 = sadd.s32 %s543, 1
    %p547 = scmp.eq.s32.totalorder %s74, 1
    %p548 = scmp.ne.s32.totalorder %s543, %s545
    %p549 = scmp.eq.s32.totalorder %s74, 0
    %p550 = por %p548, %p549
    %p551 = scmp.ne.s32.totalorder %s543, %s545
    %p552 = scmp.eq.s32.totalorder %s79, 1
    %p553 = por %p551, %p552
    %p554 = scmp.ne.s32.totalorder %s545, %s546
    %p555 = scmp.eq.s32.totalorder %s79, 0
    %p556 = por %p554, %p555
    %p557 = scmp.ne.s32.totalorder %s545, %s546
    %p558 = scmp.eq.s32.totalorder %s80, 1
    %p559 = por %p557, %p558
    %p561 = scmp.ne.s32.totalorder %s546, %s560
    %p562 = scmp.eq.s32.totalorder %s80, 0
    %p563 = por %p561, %p562
    %s565 = sadd.s32 %s564, 1
    %p568 = scmp.eq.s32.totalorder %s74, 1
    %p569 = scmp.ne.s32.totalorder %s564, %s566
    %p570 = scmp.eq.s32.totalorder %s74, 0
    %p571 = por %p569, %p570
    %p572 = scmp.ne.s32.totalorder %s564, %s566
    %p573 = scmp.eq.s32.totalorder %s79, 1
    %p574 = por %p572, %p573
    %p575 = scmp.ne.s32.totalorder %s566, %s567
    %p576 = scmp.eq.s32.totalorder %s79, 0
    %p577 = por %p575, %p576
    %p578 = scmp.ne.s32.totalorder %s566, %s567
    %p579 = scmp.eq.s32.totalorder %s80, 1
    %p580 = por %p578, %p579
    %p582 = scmp.ne.s32.totalorder %s567, %s581
    %p583 = scmp.eq.s32.totalorder %s80, 0
    %p584 = por %p582, %p583
    %s586 = sadd.s32 %s585, 1
    %p589 = scmp.eq.s32.totalorder %s74, 1
    %p590 = scmp.ne.s32.totalorder %s585, %s587
    %p591 = scmp.eq.s32.totalorder %s74, 0
    %p592 = por %p590, %p591
    %p593 = scmp.ne.s32.totalorder %s585, %s587
    %p594 = scmp.eq.s32.totalorder %s79, 1
    %p595 = por %p593, %p594
    %p596 = scmp.ne.s32.totalorder %s587, %s588
    %p597 = scmp.eq.s32.totalorder %s79, 0
    %p598 = por %p596, %p597
    %p599 = scmp.ne.s32.totalorder %s587, %s588
    %p600 = scmp.eq.s32.totalorder %s80, 1
    %p601 = por %p599, %p600
    %p603 = scmp.ne.s32.totalorder %s588, %s602
    %p604 = scmp.eq.s32.totalorder %s80, 0
    %p605 = por %p603, %p604
    %s607 = sadd.s32 %s606, 1
    %p610 = scmp.eq.s32.totalorder %s74, 1
    %p611 = scmp.ne.s32.totalorder %s606, %s608
    %p612 = scmp.eq.s32.totalorder %s74, 0
    %p613 = por %p611, %p612
    %p614 = scmp.ne.s32.totalorder %s606, %s608
    %p615 = scmp.eq.s32.totalorder %s79, 1
    %p616 = por %p614, %p615
    %p617 = scmp.ne.s32.totalorder %s608, %s609
    %p618 = scmp.eq.s32.totalorder %s79, 0
    %p619 = por %p617, %p618
    %p620 = scmp.ne.s32.totalorder %s608, %s609
    %p621 = scmp.eq.s32.totalorder %s80, 1
    %p622 = por %p620, %p621
    %p624 = scmp.ne.s32.totalorder %s609, %s623
    %p625 = scmp.eq.s32.totalorder %s80, 0
    %p626 = por %p624, %p625
    %s628 = sadd.s32 %s627, 1
    %p631 = scmp.eq.s32.totalorder %s74, 1
    %p632 = scmp.ne.s32.totalorder %s627, %s629
    %p633 = scmp.eq.s32.totalorder %s74, 0
    %p634 = por %p632, %p633
    %p635 = scmp.ne.s32.totalorder %s627, %s629
    %p636 = scmp.eq.s32.totalorder %s79, 1
    %p637 = por %p635, %p636
    %p638 = scmp.ne.s32.totalorder %s629, %s630
    %p639 = scmp.eq.s32.totalorder %s79, 0
    %p640 = por %p638, %p639
    %p641 = scmp.ne.s32.totalorder %s629, %s630
    %p642 = scmp.eq.s32.totalorder %s80, 1
    %p643 = por %p641, %p642
    %p645 = scmp.ne.s32.totalorder %s630, %s644
    %p646 = scmp.eq.s32.totalorder %s80, 0
    %p647 = por %p645, %p646
    %s649 = sadd.s32 %s648, 1
    %p652 = scmp.eq.s32.totalorder %s74, 1
    %p653 = scmp.ne.s32.totalorder %s648, %s650
    %p654 = scmp.eq.s32.totalorder %s74, 0
    %p655 = por %p653, %p654
    %p656 = scmp.ne.s32.totalorder %s648, %s650
    %p657 = scmp.eq.s32.totalorder %s79, 1
    %p658 = por %p656, %p657
    %p659 = scmp.ne.s32.totalorder %s650, %s651
    %p660 = scmp.eq.s32.totalorder %s79, 0
    %p661 = por %p659, %p660
    %p662 = scmp.ne.s32.totalorder %s650, %s651
    %p663 = scmp.eq.s32.totalorder %s80, 1
    %p664 = por %p662, %p663
    %p666 = scmp.ne.s32.totalorder %s651, %s665
    %p667 = scmp.eq.s32.totalorder %s80, 0
    %p668 = por %p666, %p667
    %s670 = sadd.s32 %s669, 1
    %p673 = scmp.eq.s32.totalorder %s74, 1
    %p674 = scmp.ne.s32.totalorder %s669, %s671
    %p675 = scmp.eq.s32.totalorder %s74, 0
    %p676 = por %p674, %p675
    %p677 = scmp.ne.s32.totalorder %s669, %s671
    %p678 = scmp.eq.s32.totalorder %s79, 1
    %p679 = por %p677, %p678
    %p680 = scmp.ne.s32.totalorder %s671, %s672
    %p681 = scmp.eq.s32.totalorder %s79, 0
    %p682 = por %p680, %p681
    %p683 = scmp.ne.s32.totalorder %s671, %s672
    %p684 = scmp.eq.s32.totalorder %s80, 1
    %p685 = por %p683, %p684
    %p687 = scmp.ne.s32.totalorder %s672, %s686
    %p688 = scmp.eq.s32.totalorder %s80, 0
    %p689 = por %p687, %p688
    %s691 = sadd.s32 %s690, 1
    %p694 = scmp.eq.s32.totalorder %s74, 1
    %p695 = scmp.ne.s32.totalorder %s690, %s692
    %p696 = scmp.eq.s32.totalorder %s74, 0
    %p697 = por %p695, %p696
    %p698 = scmp.ne.s32.totalorder %s690, %s692
    %p699 = scmp.eq.s32.totalorder %s79, 1
    %p700 = por %p698, %p699
    %p701 = scmp.ne.s32.totalorder %s692, %s693
    %p702 = scmp.eq.s32.totalorder %s79, 0
    %p703 = por %p701, %p702
    %p704 = scmp.ne.s32.totalorder %s692, %s693
    %p705 = scmp.eq.s32.totalorder %s80, 1
    %p706 = por %p704, %p705
    %p708 = scmp.ne.s32.totalorder %s693, %s707
    %p709 = scmp.eq.s32.totalorder %s80, 0
    %p710 = por %p708, %p709
    %s712 = sadd.s32 %s711, 1
    %p715 = scmp.eq.s32.totalorder %s74, 1
    %p716 = scmp.ne.s32.totalorder %s711, %s713
    %p717 = scmp.eq.s32.totalorder %s74, 0
    %p718 = por %p716, %p717
    %p719 = scmp.ne.s32.totalorder %s711, %s713
    %p720 = scmp.eq.s32.totalorder %s79, 1
    %p721 = por %p719, %p720
    %p722 = scmp.ne.s32.totalorder %s713, %s714
    %p723 = scmp.eq.s32.totalorder %s79, 0
    %p724 = por %p722, %p723
    %p725 = scmp.ne.s32.totalorder %s713, %s714
    %p726 = scmp.eq.s32.totalorder %s80, 1
    %p727 = por %p725, %p726
    %p729 = scmp.ne.s32.totalorder %s714, %s728
    %p730 = scmp.eq.s32.totalorder %s80, 0
    %p731 = por %p729, %p730
    %s733 = sadd.s32 %s732, 1
    %p736 = scmp.eq.s32.totalorder %s74, 1
    %p737 = scmp.ne.s32.totalorder %s732, %s734
    %p738 = scmp.eq.s32.totalorder %s74, 0
    %p739 = por %p737, %p738
    %p740 = scmp.ne.s32.totalorder %s732, %s734
    %p741 = scmp.eq.s32.totalorder %s79, 1
    %p742 = por %p740, %p741
    %p743 = scmp.ne.s32.totalorder %s734, %s735
    %p744 = scmp.eq.s32.totalorder %s79, 0
    %p745 = por %p743, %p744
    %p746 = scmp.ne.s32.totalorder %s734, %s735
    %p747 = scmp.eq.s32.totalorder %s80, 1
    %p748 = por %p746, %p747
    %p750 = scmp.ne.s32.totalorder %s735, %s749
    %p751 = scmp.eq.s32.totalorder %s80, 0
    %p752 = por %p750, %p751
    %s754 = sadd.s32 %s753, 1
    %p757 = scmp.eq.s32.totalorder %s74, 1
    %p758 = scmp.ne.s32.totalorder %s753, %s755
    %p759 = scmp.eq.s32.totalorder %s74, 0
    %p760 = por %p758, %p759
    %p761 = scmp.ne.s32.totalorder %s753, %s755
    %p762 = scmp.eq.s32.totalorder %s79, 1
    %p763 = por %p761, %p762
    %p764 = scmp.ne.s32.totalorder %s755, %s756
    %p765 = scmp.eq.s32.totalorder %s79, 0
    %p766 = por %p764, %p765
    %p767 = scmp.ne.s32.totalorder %s755, %s756
    %p768 = scmp.eq.s32.totalorder %s80, 1
    %p769 = por %p767, %p768
    %p771 = scmp.ne.s32.totalorder %s756, %s770
    %p772 = scmp.eq.s32.totalorder %s80, 0
    %p773 = por %p771, %p772
    %s774 = ssub.s32 %s74, %s81
    %p775 = scmp.eq.s32.totalorder %s774, 0
    %s777 = sadd.s32 %s776, 1
    %s778 = scalar_select %p775, %s776, %s777
    %p781 = pneg %p775
    %p782 = scmp.eq.s32.totalorder %s74, 1
    %p783 = por %p781, %p782
    %p784 = scmp.ne.s32.totalorder %s776, %s779
    %p785 = scmp.eq.s32.totalorder %s74, 0
    %p786 = por %p784, %p785
    %p787 = scmp.ne.s32.totalorder %s776, %s779
    %p788 = scmp.eq.s32.totalorder %s79, 1
    %p789 = por %p787, %p788
    %p790 = scmp.ne.s32.totalorder %s779, %s780
    %p791 = scmp.eq.s32.totalorder %s79, 0
    %p792 = por %p790, %p791
    %p793 = scmp.ne.s32.totalorder %s779, %s780
    %p794 = scmp.eq.s32.totalorder %s80, 1
    %p795 = por %p793, %p794
    %p797 = scmp.ne.s32.totalorder %s780, %s796
    %p798 = scmp.eq.s32.totalorder %s80, 0
    %p799 = por %p797, %p798
    %s800 = ssub.s32 %s74, %s81
    %p801 = scmp.eq.s32.totalorder %s800, 0
    %s803 = sadd.s32 %s802, 1
    %s804 = scalar_select %p801, %s802, %s803
    %p807 = pneg %p801
    %p808 = scmp.eq.s32.totalorder %s74, 1
    %p809 = por %p807, %p808
    %p810 = scmp.ne.s32.totalorder %s802, %s805
    %p811 = scmp.eq.s32.totalorder %s74, 0
    %p812 = por %p810, %p811
    %p813 = scmp.ne.s32.totalorder %s802, %s805
    %p814 = scmp.eq.s32.totalorder %s79, 1
    %p815 = por %p813, %p814
    %p816 = scmp.ne.s32.totalorder %s805, %s806
    %p817 = scmp.eq.s32.totalorder %s79, 0
    %p818 = por %p816, %p817
    %p819 = scmp.ne.s32.totalorder %s805, %s806
    %p820 = scmp.eq.s32.totalorder %s80, 1
    %p821 = por %p819, %p820
    %p823 = scmp.ne.s32.totalorder %s806, %s822
    %p824 = scmp.eq.s32.totalorder %s80, 0
    %p825 = por %p823, %p824
    %p826 = scmp.le.s32.totalorder 1, %s74
    %p827 = scmp.lt.s32.totalorder %s74, 3
    %p828 = pnand %p826, %p827
    %p829 = pneg %p828
    // Predicated region
    $region9: #{transformer_decoder_forward.2} parent=5 // pred_check
      _
    $region10: #{transformer_decoder_forward.2} parent=5 // pred_check_branch
      %831 = sbr.rel (%p828) target = $region12
    $region11: #{transformer_decoder_forward.2} parent=5 // pred_region
      %s832 = ssub.s32 %s74, 1
      // Predicated region
      $region13: #{transformer_decoder_forward.2} parent=11 // pred_check
        %p833 = pneg %p199
      $region14: #{transformer_decoder_forward.2} parent=11 // pred_check_branch
        %835 = sbr.rel (%p833) target = $region16
      $region15: #{transformer_decoder_forward.2} parent=11 // pred_region
        _
      $region16: #{transformer_decoder_forward.2} parent=11 // pred_fallthru
        _
      // Predicated region
      $region17: #{transformer_decoder_forward.2} parent=11 // pred_check
        %p836 = pneg %p220
      $region18: #{transformer_decoder_forward.2} parent=11 // pred_check_branch
        %838 = sbr.rel (%p836) target = $region20
      $region19: #{transformer_decoder_forward.2} parent=11 // pred_region
        _
      $region20: #{transformer_decoder_forward.2} parent=11 // pred_fallthru
        _
      // Predicated region
      $region21: #{transformer_decoder_forward.2} parent=11 // pred_check
        %p839 = pneg %p241
      $region22: #{transformer_decoder_forward.2} parent=11 // pred_check_branch
        %841 = sbr.rel (%p839) target = $region24
      $region23: #{transformer_decoder_forward.2} parent=11 // pred_region
        _
      $region24: #{transformer_decoder_forward.2} parent=11 // pred_fallthru
        _
      // Predicated region
      $region25: #{transformer_decoder_forward.2} parent=11 // pred_check
        %p842 = pneg %p262
      $region26: #{transformer_decoder_forward.2} parent=11 // pred_check_branch
        %844 = sbr.rel (%p842) target = $region28
      $region27: #{transformer_decoder_forward.2} parent=11 // pred_region
        _
      $region28: #{transformer_decoder_forward.2} parent=11 // pred_fallthru
        _
      // Predicated region
      $region29: #{transformer_decoder_forward.2} parent=11 // pred_check
        %p845 = pneg %p283
      $region30: #{transformer_decoder_forward.2} parent=11 // pred_check_branch
        %847 = sbr.rel (%p845) target = $region32
      $region31: #{transformer_decoder_forward.2} parent=11 // pred_region
        _
      $region32: #{transformer_decoder_forward.2} parent=11 // pred_fallthru
        _
      // Predicated region
      $region33: #{transformer_decoder_forward.2} parent=11 // pred_check
        %p848 = pneg %p304
      $region34: #{transformer_decoder_forward.2} parent=11 // pred_check_branch
        %850 = sbr.rel (%p848) target = $region36
      $region35: #{transformer_decoder_forward.2} parent=11 // pred_region
        _
      $region36: #{transformer_decoder_forward.2} parent=11 // pred_fallthru
        _
      // Predicated region
      $region37: #{transformer_decoder_forward.2} parent=11 // pred_check
        %p851 = pneg %p325
      $region38: #{transformer_decoder_forward.2} parent=11 // pred_check_branch
        %853 = sbr.rel (%p851) target = $region40
      $region39: #{transformer_decoder_forward.2} parent=11 // pred_region
        _
      $region40: #{transformer_decoder_forward.2} parent=11 // pred_fallthru
        _
      // Predicated region
      $region41: #{transformer_decoder_forward.2} parent=11 // pred_check
        %p854 = pneg %p346
      $region42: #{transformer_decoder_forward.2} parent=11 // pred_check_branch
        %856 = sbr.rel (%p854) target = $region44
      $region43: #{transformer_decoder_forward.2} parent=11 // pred_region
        _
      $region44: #{transformer_decoder_forward.2} parent=11 // pred_fallthru
        _
      // Predicated region
      $region45: #{transformer_decoder_forward.2} parent=11 // pred_check
        %p857 = pneg %p367
      $region46: #{transformer_decoder_forward.2} parent=11 // pred_check_branch
        %859 = sbr.rel (%p857) target = $region48
      $region47: #{transformer_decoder_forward.2} parent=11 // pred_region
        _
      $region48: #{transformer_decoder_forward.2} parent=11 // pred_fallthru
        _
      // Predicated region
      $region49: #{transformer_decoder_forward.2} parent=11 // pred_check
        %p860 = pneg %p388
      $region50: #{transformer_decoder_forward.2} parent=11 // pred_check_branch
        %862 = sbr.rel (%p860) target = $region52
      $region51: #{transformer_decoder_forward.2} parent=11 // pred_region
        _
      $region52: #{transformer_decoder_forward.2} parent=11 // pred_fallthru
        _
      // Predicated region
      $region53: #{transformer_decoder_forward.2} parent=11 // pred_check
        %p863 = pneg %p409
      $region54: #{transformer_decoder_forward.2} parent=11 // pred_check_branch
        %865 = sbr.rel (%p863) target = $region56
      $region55: #{transformer_decoder_forward.2} parent=11 // pred_region
        _
      $region56: #{transformer_decoder_forward.2} parent=11 // pred_fallthru
        _
      // Predicated region
      $region57: #{transformer_decoder_forward.2} parent=11 // pred_check
        %p866 = pneg %p430
      $region58: #{transformer_decoder_forward.2} parent=11 // pred_check_branch
        %868 = sbr.rel (%p866) target = $region60
      $region59: #{transformer_decoder_forward.2} parent=11 // pred_region
        _
      $region60: #{transformer_decoder_forward.2} parent=11 // pred_fallthru
        _
      // Predicated region
      $region61: #{transformer_decoder_forward.2} parent=11 // pred_check
        %p869 = pneg %p451
      $region62: #{transformer_decoder_forward.2} parent=11 // pred_check_branch
        %871 = sbr.rel (%p869) target = $region64
      $region63: #{transformer_decoder_forward.2} parent=11 // pred_region
        _
      $region64: #{transformer_decoder_forward.2} parent=11 // pred_fallthru
        _
      // Predicated region
      $region65: #{transformer_decoder_forward.2} parent=11 // pred_check
        %p872 = pneg %p472
      $region66: #{transformer_decoder_forward.2} parent=11 // pred_check_branch
        %874 = sbr.rel (%p872) target = $region68
      $region67: #{transformer_decoder_forward.2} parent=11 // pred_region
        _
      $region68: #{transformer_decoder_forward.2} parent=11 // pred_fallthru
        _
      // Predicated region
      $region69: #{transformer_decoder_forward.2} parent=11 // pred_check
        %p875 = pneg %p493
      $region70: #{transformer_decoder_forward.2} parent=11 // pred_check_branch
        %877 = sbr.rel (%p875) target = $region72
      $region71: #{transformer_decoder_forward.2} parent=11 // pred_region
        _
      $region72: #{transformer_decoder_forward.2} parent=11 // pred_fallthru
        _
      // Predicated region
      $region73: #{transformer_decoder_forward.2} parent=11 // pred_check
        %p878 = pneg %p514
      $region74: #{transformer_decoder_forward.2} parent=11 // pred_check_branch
        %880 = sbr.rel (%p878) target = $region76
      $region75: #{transformer_decoder_forward.2} parent=11 // pred_region
        _
      $region76: #{transformer_decoder_forward.2} parent=11 // pred_fallthru
        _
      // Predicated region
      $region77: #{transformer_decoder_forward.2} parent=11 // pred_check
        %p881 = pneg %p535
      $region78: #{transformer_decoder_forward.2} parent=11 // pred_check_branch
        %883 = sbr.rel (%p881) target = $region80
      $region79: #{transformer_decoder_forward.2} parent=11 // pred_region
        _
      $region80: #{transformer_decoder_forward.2} parent=11 // pred_fallthru
        _
      // Predicated region
      $region81: #{transformer_decoder_forward.2} parent=11 // pred_check
        %p884 = pneg %p556
      $region82: #{transformer_decoder_forward.2} parent=11 // pred_check_branch
        %886 = sbr.rel (%p884) target = $region84
      $region83: #{transformer_decoder_forward.2} parent=11 // pred_region
        _
      $region84: #{transformer_decoder_forward.2} parent=11 // pred_fallthru
        _
      // Predicated region
      $region85: #{transformer_decoder_forward.2} parent=11 // pred_check
        %p887 = pneg %p577
      $region86: #{transformer_decoder_forward.2} parent=11 // pred_check_branch
        %889 = sbr.rel (%p887) target = $region88
      $region87: #{transformer_decoder_forward.2} parent=11 // pred_region
        _
      $region88: #{transformer_decoder_forward.2} parent=11 // pred_fallthru
        _
      // Predicated region
      $region89: #{transformer_decoder_forward.2} parent=11 // pred_check
        %p890 = pneg %p598
      $region90: #{transformer_decoder_forward.2} parent=11 // pred_check_branch
        %892 = sbr.rel (%p890) target = $region92
      $region91: #{transformer_decoder_forward.2} parent=11 // pred_region
        _
      $region92: #{transformer_decoder_forward.2} parent=11 // pred_fallthru
        _
      // Predicated region
      $region93: #{transformer_decoder_forward.2} parent=11 // pred_check
        %p893 = pneg %p619
      $region94: #{transformer_decoder_forward.2} parent=11 // pred_check_branch
        %895 = sbr.rel (%p893) target = $region96
      $region95: #{transformer_decoder_forward.2} parent=11 // pred_region
        _
      $region96: #{transformer_decoder_forward.2} parent=11 // pred_fallthru
        _
      // Predicated region
      $region97: #{transformer_decoder_forward.2} parent=11 // pred_check
        %p896 = pneg %p640
      $region98: #{transformer_decoder_forward.2} parent=11 // pred_check_branch
        %898 = sbr.rel (%p896) target = $region100
      $region99: #{transformer_decoder_forward.2} parent=11 // pred_region
        _
      $region100: #{transformer_decoder_forward.2} parent=11 // pred_fallthru
        _
      // Predicated region
      $region101: #{transformer_decoder_forward.2} parent=11 // pred_check
        %p899 = pneg %p661
      $region102: #{transformer_decoder_forward.2} parent=11 // pred_check_branch
        %901 = sbr.rel (%p899) target = $region104
      $region103: #{transformer_decoder_forward.2} parent=11 // pred_region
        _
      $region104: #{transformer_decoder_forward.2} parent=11 // pred_fallthru
        _
      // Predicated region
      $region105: #{transformer_decoder_forward.2} parent=11 // pred_check
        %p902 = pneg %p682
      $region106: #{transformer_decoder_forward.2} parent=11 // pred_check_branch
        %904 = sbr.rel (%p902) target = $region108
      $region107: #{transformer_decoder_forward.2} parent=11 // pred_region
        _
      $region108: #{transformer_decoder_forward.2} parent=11 // pred_fallthru
        _
      // Predicated region
      $region109: #{transformer_decoder_forward.2} parent=11 // pred_check
        %p905 = pneg %p703
      $region110: #{transformer_decoder_forward.2} parent=11 // pred_check_branch
        %907 = sbr.rel (%p905) target = $region112
      $region111: #{transformer_decoder_forward.2} parent=11 // pred_region
        _
      $region112: #{transformer_decoder_forward.2} parent=11 // pred_fallthru
        _
      // Predicated region
      $region113: #{transformer_decoder_forward.2} parent=11 // pred_check
        %p908 = pneg %p724
      $region114: #{transformer_decoder_forward.2} parent=11 // pred_check_branch
        %910 = sbr.rel (%p908) target = $region116
      $region115: #{transformer_decoder_forward.2} parent=11 // pred_region
        _
      $region116: #{transformer_decoder_forward.2} parent=11 // pred_fallthru
        _
      // Predicated region
      $region117: #{transformer_decoder_forward.2} parent=11 // pred_check
        %p911 = pneg %p745
      $region118: #{transformer_decoder_forward.2} parent=11 // pred_check_branch
        %913 = sbr.rel (%p911) target = $region120
      $region119: #{transformer_decoder_forward.2} parent=11 // pred_region
        _
      $region120: #{transformer_decoder_forward.2} parent=11 // pred_fallthru
        _
      // Predicated region
      $region121: #{transformer_decoder_forward.2} parent=11 // pred_check
        %p914 = pneg %p766
      $region122: #{transformer_decoder_forward.2} parent=11 // pred_check_branch
        %916 = sbr.rel (%p914) target = $region124
      $region123: #{transformer_decoder_forward.2} parent=11 // pred_region
        _
      $region124: #{transformer_decoder_forward.2} parent=11 // pred_fallthru
        _
    $region12: #{transformer_decoder_forward.2} parent=5 // pred_fallthru
      _
    %p917 = scmp.lt.s32.totalorder %s74, 2
    // Predicated region
    $region125: #{transformer_decoder_forward.2} parent=5 // pred_check
      %p918 = pneg %p917
    $region126: #{transformer_decoder_forward.2} parent=5 // pred_check_branch
      %920 = sbr.rel (%p918) target = $region128
    $region127: #{transformer_decoder_forward.2} parent=5 // pred_region
      // Predicated region
      $region129: #{transformer_decoder_forward.2} parent=127 // pred_check
        %p921 = pneg %p94
      $region130: #{transformer_decoder_forward.2} parent=127 // pred_check_branch
        %923 = sbr.rel (%p921) target = $region132
      $region131: #{transformer_decoder_forward.2} parent=127 // pred_region
        %p924 = scmp.lt.s32.totalorder %s74, 1
        %s925 = scalar_select %p924, %s74, 1
        %s926 = smul.addr %s925, 8
        %s927 = scalar_lea.vmem %s1, %s926
      $region132: #{transformer_decoder_forward.2} parent=127 // pred_fallthru
        _
      // Predicated region
      $region133: #{transformer_decoder_forward.2} parent=127 // pred_check
        %p928 = pneg %p120
      $region134: #{transformer_decoder_forward.2} parent=127 // pred_check_branch
        %930 = sbr.rel (%p928) target = $region136
      $region135: #{transformer_decoder_forward.2} parent=127 // pred_region
        %p931 = scmp.lt.s32.totalorder %s74, 1
        %s932 = scalar_select %p931, %s74, 1
        %s933 = smul.addr %s932, 8
        %s934 = scalar_lea.vmem %s3, %s933
      $region136: #{transformer_decoder_forward.2} parent=127 // pred_fallthru
        _
      // Predicated region
      $region137: #{transformer_decoder_forward.2} parent=127 // pred_check
        %p935 = pneg %p146
      $region138: #{transformer_decoder_forward.2} parent=127 // pred_check_branch
        %937 = sbr.rel (%p935) target = $region140
      $region139: #{transformer_decoder_forward.2} parent=127 // pred_region
        %p938 = scmp.lt.s32.totalorder %s74, 1
        %s939 = scalar_select %p938, %s74, 1
        %s940 = smul.addr %s939, 2
        %s941 = smul.addr %s940, 8
        %s942 = scalar_lea.vmem %s5, %s941
      $region140: #{transformer_decoder_forward.2} parent=127 // pred_fallthru
        _
      // Predicated region
      $region141: #{transformer_decoder_forward.2} parent=127 // pred_check
        %p943 = pneg %p172
      $region142: #{transformer_decoder_forward.2} parent=127 // pred_check_branch
        %945 = sbr.rel (%p943) target = $region144
      $region143: #{transformer_decoder_forward.2} parent=127 // pred_region
        %p946 = scmp.lt.s32.totalorder %s74, 1
        %s947 = scalar_select %p946, %s74, 1
        %s948 = smul.addr %s947, 2
        %s949 = smul.addr %s948, 8
        %s950 = scalar_lea.vmem %s7, %s949
      $region144: #{transformer_decoder_forward.2} parent=127 // pred_fallthru
        _
    $region128: #{transformer_decoder_forward.2} parent=5 // pred_fallthru
      _
    %p951 = scmp.le.s32.totalorder 1, %s74
    %p952 = scmp.lt.s32.totalorder %s74, 3
    %p953 = pnand %p951, %p952
    %p954 = pneg %p953
    // Predicated region
    $region145: #{transformer_decoder_forward.2} parent=5 // pred_check
      _
    $region146: #{transformer_decoder_forward.2} parent=5 // pred_check_branch
      %956 = sbr.rel (%p953) target = $region148
    $region147: #{transformer_decoder_forward.2} parent=5 // pred_region
      %s957 = ssub.s32 %s74, 1
      %p958 = scmp.lt.s32.totalorder %s79, 1
      %s959 = scalar_select %p958, %s79, 1
      %s960 = smul.addr %s959, 8
      %s961 = scalar_lea.vmem %s1, %s960
      %p962 = pneg %p100
      %p963 = pneg %p97
      %p964 = scmp.lt.s32.totalorder %s79, 1
      %s965 = scalar_select %p964, %s79, 1
      %s966 = smul.addr %s965, 8
      %s967 = scalar_lea.vmem %s3, %s966
      %p968 = pneg %p126
      %p969 = pneg %p123
      %p970 = scmp.lt.s32.totalorder %s79, 1
      %s971 = scalar_select %p970, %s79, 1
      %s972 = smul.addr %s971, 2
      %s973 = smul.addr %s972, 8
      %s974 = scalar_lea.vmem %s5, %s973
      %p975 = pneg %p152
      %p976 = pneg %p149
      %p977 = scmp.lt.s32.totalorder %s79, 1
      %s978 = scalar_select %p977, %s79, 1
      %s979 = smul.addr %s978, 2
      %s980 = smul.addr %s979, 8
      %s981 = scalar_lea.vmem %s7, %s980
      %p982 = pneg %p178
      %p983 = pneg %p175
      %p984 = pneg %p199
      %p985 = pneg %p196
      %p986 = pneg %p220
      %p987 = pneg %p217
      %p988 = pneg %p241
      %p989 = pneg %p238
      %p990 = pneg %p262
      %p991 = pneg %p259
      %p992 = pneg %p283
      %p993 = pneg %p280
      %p994 = pneg %p304
      %p995 = pneg %p301
      %p996 = pneg %p325
      %p997 = pneg %p322
      %p998 = pneg %p346
      %p999 = pneg %p343
      %p1000 = pneg %p367
      %p1001 = pneg %p364
      %p1002 = pneg %p388
      %p1003 = pneg %p385
      %p1004 = pneg %p409
      %p1005 = pneg %p406
      %p1006 = pneg %p430
      %p1007 = pneg %p427
      %p1008 = pneg %p451
      %p1009 = pneg %p448
      %p1010 = pneg %p472
      %p1011 = pneg %p469
      %p1012 = pneg %p493
      %p1013 = pneg %p490
      %p1014 = pneg %p514
      %p1015 = pneg %p511
      %p1016 = pneg %p535
      %p1017 = pneg %p532
      %p1018 = pneg %p556
      %p1019 = pneg %p553
      %p1020 = pneg %p577
      %p1021 = pneg %p574
      %p1022 = pneg %p598
      %p1023 = pneg %p595
      %p1024 = pneg %p619
      %p1025 = pneg %p616
      %p1026 = pneg %p640
      %p1027 = pneg %p637
      %p1028 = pneg %p661
      %p1029 = pneg %p658
      %p1030 = pneg %p682
      %p1031 = pneg %p679
      %p1032 = pneg %p703
      %p1033 = pneg %p700
      %p1034 = pneg %p724
      %p1035 = pneg %p721
      %p1036 = pneg %p745
      %p1037 = pneg %p742
      %p1038 = pneg %p766
      %p1039 = pneg %p763
      %p1040 = pneg %p792
      %p1041 = pneg %p789
      %p1042 = scmp.lt.s32.totalorder %s79, 1
      %s1043 = scalar_select %p1042, %s79, 1
      %s1044 = smul.addr %s1043, 8
      %s1045 = scalar_lea.vmem %s65, %s1044
      %p1046 = pneg %p818
      %p1047 = pneg %p815
      %p1048 = scmp.lt.s32.totalorder %s79, 1
      %s1049 = scalar_select %p1048, %s79, 1
      %s1050 = smul.addr %s1049, 8
      %s1051 = scalar_lea.vmem %s67, %s1050
      %p1052 = scmp.lt.s32.totalorder %s79, 1
      %s1053 = scalar_select %p1052, %s79, 1
      %s1054 = smul.addr %s1053, 8
      %s1055 = scalar_lea.vmem %s1, %s1054
      %p1056 = scmp.lt.s32.totalorder %s79, 1
      %s1057 = scalar_select %p1056, %s79, 1
      %s1058 = smul.addr %s1057, 8
      %s1059 = scalar_lea.vmem %s3, %s1058
      %p1060 = scmp.lt.s32.totalorder %s79, 1
      %s1061 = scalar_select %p1060, %s79, 1
      %s1062 = smul.addr %s1061, 2
      %s1063 = smul.addr %s1062, 8
      %s1064 = scalar_lea.vmem %s5, %s1063
      %p1065 = scmp.lt.s32.totalorder %s79, 1
      %s1066 = scalar_select %p1065, %s79, 1
      %s1067 = smul.addr %s1066, 2
      %s1068 = smul.addr %s1067, 8
      %s1069 = scalar_lea.vmem %s7, %s1068
      %p1070 = scmp.lt.s32.totalorder %s79, 1
      %s1071 = scalar_select %p1070, %s79, 1
      %s1072 = smul.addr %s1071, 8
      %s1073 = scalar_lea.vmem %s65, %s1072
      %p1074 = scmp.lt.s32.totalorder %s79, 1
      %s1075 = scalar_select %p1074, %s79, 1
      %s1076 = smul.addr %s1075, 8
      %s1077 = scalar_lea.vmem %s67, %s1076
      %v1079 = vld [vmem:[%s1055] sm:$0xff]
      %v1080 = vld [vmem:[%s1059] sm:$0xff]
      %v1081 = vld [vmem:[%s1064] sm:$0xff]
      %v1082 = vld [vmem:[%s1064 + $0x8] sm:$0xf]
      %v1083 = vld [vmem:[%s1069] sm:$0xff]
      %v1084 = vld [vmem:[%s1069 + $0x8] sm:$0xf]
      %v1085 = vadd.f32 %v1079, %v1080
      %v1086 = vpack.c.bf16 %v1085, %v1085
      %v1087 = vpack.c.bf16 %v1079, %v1079
      %v1088 = vld [vmem:[%s9] sm:$0xf]
      %v1089 = vld [vmem:[%s9 + $0x4] sm:$0xf]
      %v1090 = vld [vmem:[%s9 + $0x8] sm:$0xf]
      %v1091 = vld [vmem:[%s9 + $0xc] sm:$0xf]
      %v1092 = vld [vmem:[%s11] sm:$0x1]
      %v1094 = vlaneseq
      %v1095 = vshrl.u32 %v1094, 7
      %v1096 = vsub.s32 0, %v1095
      %v1097 = vrot.slane %v1092, %v1096
      %v1103 = vunpack.c.l.b16 %v1088
      %v1104 = vunpack.c.l.b16 %v1089
      %v1105 = vunpack.c.l.b16 %v1090
      %v1106 = vunpack.c.l.b16 %v1091
      %v1107 = vpack.c.b16 %v1104, %v1103
      %v1108 = vpack.c.b16 %v1106, %v1105
      %vm1111 = vcmask 261120
      %v1113 = vsel %vm1111, %v1086, 0
      %1115 = vmatprep.subr.bf16.mxu0 0
      %1116 = vmatpush1.bf16.msra.mxu0 %v1107
      %1117 = vmatprep.subr.bf16.mxu0 0
      %1118 = vmatpush1.bf16.msra.mxu0 %v1108
      %1119 = vmatprep.subr.bf16.mxu0 0
      %1120 = vmatpush1.bf16.msra.mxu0 0
      %1121 = vmatprep.subr.bf16.mxu0 0
      %1122 = vmatpush1.bf16.msra.mxu0 0
      %1123 = vmatprep.subr.bf16.mxu0 0
      %1124 = vmatpush1.bf16.msra.mxu0 0
      %1125 = vmatprep.subr.bf16.mxu0 0
      %1126 = vmatpush1.bf16.msra.mxu0 0
      %1127 = vmatprep.subr.bf16.mxu0 0
      %1128 = vmatpush1.bf16.msra.mxu0 0
      %1129 = vmatprep.subr.bf16.mxu0 0
      %1130 = vmatpush1.bf16.msra.mxu0 0
      %1131 = vmatprep.subr.bf16.mxu0 0
      %1132 = vmatpush1.bf16.msra.mxu0 0
      %1133 = vmatprep.subr.bf16.mxu0 0
      %1134 = vmatpush1.bf16.msra.mxu0 0
      %1135 = vmatprep.subr.bf16.mxu0 0
      %1136 = vmatpush1.bf16.msra.mxu0 0
      %1137 = vmatprep.subr.bf16.mxu0 0
      %1138 = vmatpush1.bf16.msra.mxu0 0
      %1139 = vmatprep.subr.bf16.mxu0 0
      %1140 = vmatpush1.bf16.msra.mxu0 0
      %1141 = vmatprep.subr.bf16.mxu0 0
      %1142 = vmatpush1.bf16.msra.mxu0 0
      %1143 = vmatprep.subr.bf16.mxu0 0
      %1144 = vmatpush1.bf16.msra.mxu0 0
      %1145 = vmatprep.subr.bf16.mxu0 0
      %1146 = vmatpush1.bf16.msra.mxu0 0
      %1147 = vmatprep.mubr.bf16.mxu0 0
      %1148 = vmatmul.mubr.bf16.gmra.mrb[0].mxu0 %v1113
      %v1149 = vpop.f32.mrb[0].mxu0
      %v1150 = vadd.f32 %v1097, %v1149
      %v1151 = vpop.f32.mrb[0].mxu0
      %v1152 = vpop.f32.mrb[0].mxu0
      %v1153 = vpop.f32.mrb[0].mxu0
      %1154 = vdwg.mxu0
      %v1155 = vld [vmem:[%s13] sm:$0xf]
      %v1156 = vld [vmem:[%s13 + $0x4] sm:$0xf]
      %v1157 = vld [vmem:[%s13 + $0x8] sm:$0xf]
      %v1158 = vld [vmem:[%s13 + $0xc] sm:$0xf]
      %v1159 = vld [vmem:[%s15] sm:$0x1]
      %v1161 = vlaneseq
      %v1162 = vshrl.u32 %v1161, 7
      %v1163 = vsub.s32 0, %v1162
      %v1164 = vrot.slane %v1159, %v1163
      %v1170 = vunpack.c.l.b16 %v1155
      %v1171 = vunpack.c.l.b16 %v1156
      %v1172 = vunpack.c.l.b16 %v1157
      %v1173 = vunpack.c.l.b16 %v1158
      %v1174 = vpack.c.b16 %v1171, %v1170
      %v1175 = vpack.c.b16 %v1173, %v1172
      %1178 = vmatprep.subr.bf16.mxu0 0
      %1179 = vmatpush1.bf16.msra.mxu0 %v1174
      %1180 = vmatprep.subr.bf16.mxu0 0
      %1181 = vmatpush1.bf16.msra.mxu0 %v1175
      %1182 = vmatprep.subr.bf16.mxu0 0
      %1183 = vmatpush1.bf16.msra.mxu0 0
      %1184 = vmatprep.subr.bf16.mxu0 0
      %1185 = vmatpush1.bf16.msra.mxu0 0
      %1186 = vmatprep.subr.bf16.mxu0 0
      %1187 = vmatpush1.bf16.msra.mxu0 0
      %1188 = vmatprep.subr.bf16.mxu0 0
      %1189 = vmatpush1.bf16.msra.mxu0 0
      %1190 = vmatprep.subr.bf16.mxu0 0
      %1191 = vmatpush1.bf16.msra.mxu0 0
      %1192 = vmatprep.subr.bf16.mxu0 0
      %1193 = vmatpush1.bf16.msra.mxu0 0
      %1194 = vmatprep.subr.bf16.mxu0 0
      %1195 = vmatpush1.bf16.msra.mxu0 0
      %1196 = vmatprep.subr.bf16.mxu0 0
      %1197 = vmatpush1.bf16.msra.mxu0 0
      %1198 = vmatprep.subr.bf16.mxu0 0
      %1199 = vmatpush1.bf16.msra.mxu0 0
      %1200 = vmatprep.subr.bf16.mxu0 0
      %1201 = vmatpush1.bf16.msra.mxu0 0
      %1202 = vmatprep.subr.bf16.mxu0 0
      %1203 = vmatpush1.bf16.msra.mxu0 0
      %1204 = vmatprep.subr.bf16.mxu0 0
      %1205 = vmatpush1.bf16.msra.mxu0 0
      %1206 = vmatprep.subr.bf16.mxu0 0
      %1207 = vmatpush1.bf16.msra.mxu0 0
      %1208 = vmatprep.subr.bf16.mxu0 0
      %1209 = vmatpush1.bf16.msra.mxu0 0
      %1210 = vmatprep.mubr.bf16.mxu0 0
      %1211 = vmatmul.mubr.bf16.gmra.mrb[0].mxu0 %v1113
      %v1212 = vpop.f32.mrb[0].mxu0
      %v1213 = vadd.f32 %v1164, %v1212
      %v1214 = vpop.f32.mrb[0].mxu0
      %v1215 = vpop.f32.mrb[0].mxu0
      %v1216 = vpop.f32.mrb[0].mxu0
      %1217 = vdwg.mxu0
      %v1218 = vld [vmem:[%s17] sm:$0xf]
      %v1219 = vld [vmem:[%s17 + $0x4] sm:$0xf]
      %v1220 = vld [vmem:[%s17 + $0x8] sm:$0xf]
      %v1221 = vld [vmem:[%s17 + $0xc] sm:$0xf]
      %v1222 = vld [vmem:[%s19] sm:$0x1]
      %v1224 = vlaneseq
      %v1225 = vshrl.u32 %v1224, 7
      %v1226 = vsub.s32 0, %v1225
      %v1227 = vrot.slane %v1222, %v1226
      %v1233 = vunpack.c.l.b16 %v1218
      %v1234 = vunpack.c.l.b16 %v1219
      %v1235 = vunpack.c.l.b16 %v1220
      %v1236 = vunpack.c.l.b16 %v1221
      %v1237 = vpack.c.b16 %v1234, %v1233
      %v1238 = vpack.c.b16 %v1236, %v1235
      %v1242 = vsel %vm1111, %v1087, 0
      %1244 = vmatprep.subr.bf16.mxu0 0
      %1245 = vmatpush1.bf16.msra.mxu0 %v1237
      %1246 = vmatprep.subr.bf16.mxu0 0
      %1247 = vmatpush1.bf16.msra.mxu0 %v1238
      %1248 = vmatprep.subr.bf16.mxu0 0
      %1249 = vmatpush1.bf16.msra.mxu0 0
      %1250 = vmatprep.subr.bf16.mxu0 0
      %1251 = vmatpush1.bf16.msra.mxu0 0
      %1252 = vmatprep.subr.bf16.mxu0 0
      %1253 = vmatpush1.bf16.msra.mxu0 0
      %1254 = vmatprep.subr.bf16.mxu0 0
      %1255 = vmatpush1.bf16.msra.mxu0 0
      %1256 = vmatprep.subr.bf16.mxu0 0
      %1257 = vmatpush1.bf16.msra.mxu0 0
      %1258 = vmatprep.subr.bf16.mxu0 0
      %1259 = vmatpush1.bf16.msra.mxu0 0
      %1260 = vmatprep.subr.bf16.mxu0 0
      %1261 = vmatpush1.bf16.msra.mxu0 0
      %1262 = vmatprep.subr.bf16.mxu0 0
      %1263 = vmatpush1.bf16.msra.mxu0 0
      %1264 = vmatprep.subr.bf16.mxu0 0
      %1265 = vmatpush1.bf16.msra.mxu0 0
      %1266 = vmatprep.subr.bf16.mxu0 0
      %1267 = vmatpush1.bf16.msra.mxu0 0
      %1268 = vmatprep.subr.bf16.mxu0 0
      %1269 = vmatpush1.bf16.msra.mxu0 0
      %1270 = vmatprep.subr.bf16.mxu0 0
      %1271 = vmatpush1.bf16.msra.mxu0 0
      %1272 = vmatprep.subr.bf16.mxu0 0
      %1273 = vmatpush1.bf16.msra.mxu0 0
      %1274 = vmatprep.subr.bf16.mxu0 0
      %1275 = vmatpush1.bf16.msra.mxu0 0
      %1276 = vmatprep.mubr.bf16.mxu0 0
      %1277 = vmatmul.mubr.bf16.gmra.mrb[0].mxu0 %v1242
      %v1278 = vpop.f32.mrb[0].mxu0
      %v1279 = vadd.f32 %v1227, %v1278
      %v1280 = vpop.f32.mrb[0].mxu0
      %v1281 = vpop.f32.mrb[0].mxu0
      %v1282 = vpop.f32.mrb[0].mxu0
      %1283 = vdwg.mxu0
      %v1284 = vpack.c.bf16 %v1150, %v1150
      %v1285 = vpack.c.bf16 %v1213, %v1213
      %v1286 = vpack.c.bf16 %v1279, %v1279
      %vm1287 = vcmask 64512
      %v1289 = vsel %vm1287, %v1284, 0
      %v1292 = vsel %vm1287, %v1285, 0
      %1294 = vmatprep.subr.bf16.mxu0 0
      %1295 = vmatpush1.bf16.xpose.msra.mxu0 %v1292
      %1296 = vmatprep.subr.bf16.mxu0 0
      %1297 = vmatpush1.bf16.xpose.msra.mxu0 0
      %1298 = vmatprep.subr.bf16.mxu0 0
      %1299 = vmatpush1.bf16.xpose.msra.mxu0 0
      %1300 = vmatprep.subr.bf16.mxu0 0
      %1301 = vmatpush1.bf16.xpose.msra.mxu0 0
      %1302 = vmatprep.subr.bf16.mxu0 0
      %1303 = vmatpush1.bf16.xpose.msra.mxu0 0
      %1304 = vmatprep.subr.bf16.mxu0 0
      %1305 = vmatpush1.bf16.xpose.msra.mxu0 0
      %1306 = vmatprep.subr.bf16.mxu0 0
      %1307 = vmatpush1.bf16.xpose.msra.mxu0 0
      %1308 = vmatprep.subr.bf16.mxu0 0
      %1309 = vmatpush1.bf16.xpose.msra.mxu0 0
      %1310 = vmatprep.subr.bf16.mxu0 0
      %1311 = vmatpush1.bf16.xpose.msra.mxu0 0
      %1312 = vmatprep.subr.bf16.mxu0 0
      %1313 = vmatpush1.bf16.xpose.msra.mxu0 0
      %1314 = vmatprep.subr.bf16.mxu0 0
      %1315 = vmatpush1.bf16.xpose.msra.mxu0 0
      %1316 = vmatprep.subr.bf16.mxu0 0
      %1317 = vmatpush1.bf16.xpose.msra.mxu0 0
      %1318 = vmatprep.subr.bf16.mxu0 0
      %1319 = vmatpush1.bf16.xpose.msra.mxu0 0
      %1320 = vmatprep.subr.bf16.mxu0 0
      %1321 = vmatpush1.bf16.xpose.msra.mxu0 0
      %1322 = vmatprep.subr.bf16.mxu0 0
      %1323 = vmatpush1.bf16.xpose.msra.mxu0 0
      %1324 = vmatprep.subr.bf16.mxu0 0
      %1325 = vmatpush1.bf16.xpose.msra.mxu0 0
      %1326 = vmatprep.mubr.bf16.mxu0 0
      %1327 = vmatmul.mubr.bf16.gmra.mrb[0].mxu0 %v1289
      %v1328 = vpop.f32.mrb[0].mxu0
      %v1329 = vadd.f32 0.0, %v1328
      %v1330 = vpop.f32.mrb[0].mxu0
      %v1331 = vpop.f32.mrb[0].mxu0
      %v1332 = vpop.f32.mrb[0].mxu0
      %1333 = vdwg.mxu0
      %v1334 = vsel %vm1287, %v1329, -inf
      %1335 = vmax.xlane.f32.xlu0 %v1334
      %v1336 = vpop.xlane.xlu0 %1335
      %v1337 = vsub.f32 %v1329, %v1336
      %v1338 = vmul.f32 %v1337, 1.442695
      %v1339 = vpow.pop %v1338
      %v1340 = vsel %vm1287, %v1339, 0.0
      %1341 = vadd.xlane.f32.xlu0 %v1340
      %v1342 = vpop.xlane.xlu0 %1341
      %v1343 = vrcp.pop %v1342
      %v1344 = vpack.c.bf16 %v1339, %v1339
      %v1346 = vsel %vm1287, %v1344, 0
      %vm1348 = vcmask 1043456
      %v1350 = vsel %vm1348, %v1286, 0
      %1352 = vmatprep.subr.bf16.mxu0 0
      %1353 = vmatpush1.bf16.msra.mxu0 %v1350
      %1354 = vmatprep.subr.bf16.mxu0 0
      %1355 = vmatpush1.bf16.msra.mxu0 0
      %1356 = vmatprep.subr.bf16.mxu0 0
      %1357 = vmatpush1.bf16.msra.mxu0 0
      %1358 = vmatprep.subr.bf16.mxu0 0
      %1359 = vmatpush1.bf16.msra.mxu0 0
      %1360 = vmatprep.subr.bf16.mxu0 0
      %1361 = vmatpush1.bf16.msra.mxu0 0
      %1362 = vmatprep.subr.bf16.mxu0 0
      %1363 = vmatpush1.bf16.msra.mxu0 0
      %1364 = vmatprep.subr.bf16.mxu0 0
      %1365 = vmatpush1.bf16.msra.mxu0 0
      %1366 = vmatprep.subr.bf16.mxu0 0
      %1367 = vmatpush1.bf16.msra.mxu0 0
      %1368 = vmatprep.subr.bf16.mxu0 0
      %1369 = vmatpush1.bf16.msra.mxu0 0
      %1370 = vmatprep.subr.bf16.mxu0 0
      %1371 = vmatpush1.bf16.msra.mxu0 0
      %1372 = vmatprep.subr.bf16.mxu0 0
      %1373 = vmatpush1.bf16.msra.mxu0 0
      %1374 = vmatprep.subr.bf16.mxu0 0
      %1375 = vmatpush1.bf16.msra.mxu0 0
      %1376 = vmatprep.subr.bf16.mxu0 0
      %1377 = vmatpush1.bf16.msra.mxu0 0
      %1378 = vmatprep.subr.bf16.mxu0 0
      %1379 = vmatpush1.bf16.msra.mxu0 0
      %1380 = vmatprep.subr.bf16.mxu0 0
      %1381 = vmatpush1.bf16.msra.mxu0 0
      %1382 = vmatprep.subr.bf16.mxu0 0
      %1383 = vmatpush1.bf16.msra.mxu0 0
      %1384 = vmatprep.mubr.bf16.mxu0 0
      %1385 = vmatmul.mubr.bf16.gmra.mrb[0].mxu0 %v1346
      %v1386 = vpop.f32.mrb[0].mxu0
      %v1387 = vadd.f32 0.0, %v1386
      %v1388 = vpop.f32.mrb[0].mxu0
      %v1389 = vpop.f32.mrb[0].mxu0
      %v1390 = vpop.f32.mrb[0].mxu0
      %1391 = vdwg.mxu0
      %v1392 = vmul.f32 %v1387, %v1343
      %v1393 = vpack.c.bf16 %v1392, %v1392
      %vm1394 = vcmask 60416
      %1395 = vst.msk [vmem:[#allocation2] sm:$0xf] %vm1394, %v1393
      %1397 = vrot.lane.b32.xlu0 %v1284, 120
      %v1398 = vpop.permute.xlu0 %1397
      %1400 = vrot.lane.b32.xlu0 %v1285, 120
      %v1401 = vpop.permute.xlu0 %1400
      %v1403 = vsel %vm1287, %v1398, 0
      %v1406 = vsel %vm1287, %v1401, 0
      %1408 = vmatprep.subr.bf16.mxu0 0
      %1409 = vmatpush1.bf16.xpose.msra.mxu0 %v1406
      %1410 = vmatprep.subr.bf16.mxu0 0
      %1411 = vmatpush1.bf16.xpose.msra.mxu0 0
      %1412 = vmatprep.subr.bf16.mxu0 0
      %1413 = vmatpush1.bf16.xpose.msra.mxu0 0
      %1414 = vmatprep.subr.bf16.mxu0 0
      %1415 = vmatpush1.bf16.xpose.msra.mxu0 0
      %1416 = vmatprep.subr.bf16.mxu0 0
      %1417 = vmatpush1.bf16.xpose.msra.mxu0 0
      %1418 = vmatprep.subr.bf16.mxu0 0
      %1419 = vmatpush1.bf16.xpose.msra.mxu0 0
      %1420 = vmatprep.subr.bf16.mxu0 0
      %1421 = vmatpush1.bf16.xpose.msra.mxu0 0
      %1422 = vmatprep.subr.bf16.mxu0 0
      %1423 = vmatpush1.bf16.xpose.msra.mxu0 0
      %1424 = vmatprep.subr.bf16.mxu0 0
      %1425 = vmatpush1.bf16.xpose.msra.mxu0 0
      %1426 = vmatprep.subr.bf16.mxu0 0
      %1427 = vmatpush1.bf16.xpose.msra.mxu0 0
      %1428 = vmatprep.subr.bf16.mxu0 0
      %1429 = vmatpush1.bf16.xpose.msra.mxu0 0
      %1430 = vmatprep.subr.bf16.mxu0 0
      %1431 = vmatpush1.bf16.xpose.msra.mxu0 0
      %1432 = vmatprep.subr.bf16.mxu0 0
      %1433 = vmatpush1.bf16.xpose.msra.mxu0 0
      %1434 = vmatprep.subr.bf16.mxu0 0
      %1435 = vmatpush1.bf16.xpose.msra.mxu0 0
      %1436 = vmatprep.subr.bf16.mxu0 0
      %1437 = vmatpush1.bf16.xpose.msra.mxu0 0
      %1438 = vmatprep.subr.bf16.mxu0 0
      %1439 = vmatpush1.bf16.xpose.msra.mxu0 0
      %1440 = vmatprep.mubr.bf16.mxu0 0
      %1441 = vmatmul.mubr.bf16.gmra.mrb[0].mxu0 %v1403
      %v1442 = vpop.f32.mrb[0].mxu0
      %v1443 = vadd.f32 0.0, %v1442
      %v1444 = vpop.f32.mrb[0].mxu0
      %v1445 = vpop.f32.mrb[0].mxu0
      %v1446 = vpop.f32.mrb[0].mxu0
      %1447 = vdwg.mxu0
      %v1448 = vsel %vm1287, %v1443, -inf
      %1449 = vmax.xlane.f32.xlu0 %v1448
      %v1450 = vpop.xlane.xlu0 %1449
      %v1451 = vsub.f32 %v1443, %v1450
      %v1452 = vmul.f32 %v1451, 1.442695
      %v1453 = vpow.pop %v1452
      %v1454 = vsel %vm1287, %v1453, 0.0
      %1455 = vadd.xlane.f32.xlu0 %v1454
      %v1456 = vpop.xlane.xlu0 %1455
      %v1457 = vrcp.pop %v1456
      %v1458 = vpack.c.bf16 %v1453, %v1453
      %1460 = vrot.lane.b32.xlu0 %v1286, 120
      %v1461 = vpop.permute.xlu0 %1460
      %v1463 = vsel %vm1287, %v1458, 0
      %v1466 = vsel %vm1348, %v1461, 0
      %1468 = vmatprep.subr.bf16.mxu0 0
      %1469 = vmatpush1.bf16.msra.mxu0 %v1466
      %1470 = vmatprep.subr.bf16.mxu0 0
      %1471 = vmatpush1.bf16.msra.mxu0 0
      %1472 = vmatprep.subr.bf16.mxu0 0
      %1473 = vmatpush1.bf16.msra.mxu0 0
      %1474 = vmatprep.subr.bf16.mxu0 0
      %1475 = vmatpush1.bf16.msra.mxu0 0
      %1476 = vmatprep.subr.bf16.mxu0 0
      %1477 = vmatpush1.bf16.msra.mxu0 0
      %1478 = vmatprep.subr.bf16.mxu0 0
      %1479 = vmatpush1.bf16.msra.mxu0 0
      %1480 = vmatprep.subr.bf16.mxu0 0
      %1481 = vmatpush1.bf16.msra.mxu0 0
      %1482 = vmatprep.subr.bf16.mxu0 0
      %1483 = vmatpush1.bf16.msra.mxu0 0
      %1484 = vmatprep.subr.bf16.mxu0 0
      %1485 = vmatpush1.bf16.msra.mxu0 0
      %1486 = vmatprep.subr.bf16.mxu0 0
      %1487 = vmatpush1.bf16.msra.mxu0 0
      %1488 = vmatprep.subr.bf16.mxu0 0
      %1489 = vmatpush1.bf16.msra.mxu0 0
      %1490 = vmatprep.subr.bf16.mxu0 0
      %1491 = vmatpush1.bf16.msra.mxu0 0
      %1492 = vmatprep.subr.bf16.mxu0 0
      %1493 = vmatpush1.bf16.msra.mxu0 0
      %1494 = vmatprep.subr.bf16.mxu0 0
      %1495 = vmatpush1.bf16.msra.mxu0 0
      %1496 = vmatprep.subr.bf16.mxu0 0
      %1497 = vmatpush1.bf16.msra.mxu0 0
      %1498 = vmatprep.subr.bf16.mxu0 0
      %1499 = vmatpush1.bf16.msra.mxu0 0
      %1500 = vmatprep.mubr.bf16.mxu0 0
      %1501 = vmatmul.mubr.bf16.gmra.mrb[0].mxu0 %v1463
      %v1502 = vpop.f32.mrb[0].mxu0
      %v1503 = vadd.f32 0.0, %v1502
      %v1504 = vpop.f32.mrb[0].mxu0
      %v1505 = vpop.f32.mrb[0].mxu0
      %v1506 = vpop.f32.mrb[0].mxu0
      %1507 = vdwg.mxu0
      %v1508 = vmul.f32 %v1503, %v1457
      %v1509 = vpack.c.bf16 %v1508, %v1508
      %v1511 = vunpack.c.l.b16 %v1509
      %v1512 = vpack.c.b16 %v1511, %v1511
      %1513 = vrot.lane.b32.xlu0 %v1512, 8
      %v1514 = vpop.permute.xlu0 %1513
      %vm1516 = vcmask 126016
      %1517 = vst.msk [vmem:[#allocation2] sm:$0xf] %vm1516, %v1514
      %1518 = vrot.lane.b32.xlu0 %v1284, 112
      %v1519 = vpop.permute.xlu0 %1518
      %1520 = vrot.lane.b32.xlu0 %v1285, 112
      %v1521 = vpop.permute.xlu0 %1520
      %v1523 = vsel %vm1287, %v1519, 0
      %v1526 = vsel %vm1287, %v1521, 0
      %1528 = vmatprep.subr.bf16.mxu0 0
      %1529 = vmatpush1.bf16.xpose.msra.mxu0 %v1526
      %1530 = vmatprep.subr.bf16.mxu0 0
      %1531 = vmatpush1.bf16.xpose.msra.mxu0 0
      %1532 = vmatprep.subr.bf16.mxu0 0
      %1533 = vmatpush1.bf16.xpose.msra.mxu0 0
      %1534 = vmatprep.subr.bf16.mxu0 0
      %1535 = vmatpush1.bf16.xpose.msra.mxu0 0
      %1536 = vmatprep.subr.bf16.mxu0 0
      %1537 = vmatpush1.bf16.xpose.msra.mxu0 0
      %1538 = vmatprep.subr.bf16.mxu0 0
      %1539 = vmatpush1.bf16.xpose.msra.mxu0 0
      %1540 = vmatprep.subr.bf16.mxu0 0
      %1541 = vmatpush1.bf16.xpose.msra.mxu0 0
      %1542 = vmatprep.subr.bf16.mxu0 0
      %1543 = vmatpush1.bf16.xpose.msra.mxu0 0
      %1544 = vmatprep.subr.bf16.mxu0 0
      %1545 = vmatpush1.bf16.xpose.msra.mxu0 0
      %1546 = vmatprep.subr.bf16.mxu0 0
      %1547 = vmatpush1.bf16.xpose.msra.mxu0 0
      %1548 = vmatprep.subr.bf16.mxu0 0
      %1549 = vmatpush1.bf16.xpose.msra.mxu0 0
      %1550 = vmatprep.subr.bf16.mxu0 0
      %1551 = vmatpush1.bf16.xpose.msra.mxu0 0
      %1552 = vmatprep.subr.bf16.mxu0 0
      %1553 = vmatpush1.bf16.xpose.msra.mxu0 0
      %1554 = vmatprep.subr.bf16.mxu0 0
      %1555 = vmatpush1.bf16.xpose.msra.mxu0 0
      %1556 = vmatprep.subr.bf16.mxu0 0
      %1557 = vmatpush1.bf16.xpose.msra.mxu0 0
      %1558 = vmatprep.subr.bf16.mxu0 0
      %1559 = vmatpush1.bf16.xpose.msra.mxu0 0
      %1560 = vmatprep.mubr.bf16.mxu0 0
      %1561 = vmatmul.mubr.bf16.gmra.mrb[0].mxu0 %v1523
      %v1562 = vpop.f32.mrb[0].mxu0
      %v1563 = vadd.f32 0.0, %v1562
      %v1564 = vpop.f32.mrb[0].mxu0
      %v1565 = vpop.f32.mrb[0].mxu0
      %v1566 = vpop.f32.mrb[0].mxu0
      %1567 = vdwg.mxu0
      %v1568 = vsel %vm1287, %v1563, -inf
      %1569 = vmax.xlane.f32.xlu0 %v1568
      %v1570 = vpop.xlane.xlu0 %1569
      %v1571 = vsub.f32 %v1563, %v1570
      %v1572 = vmul.f32 %v1571, 1.442695
      %v1573 = vpow.pop %v1572
      %v1574 = vsel %vm1287, %v1573, 0.0
      %1575 = vadd.xlane.f32.xlu0 %v1574
      %v1576 = vpop.xlane.xlu0 %1575
      %v1577 = vrcp.pop %v1576
      %v1578 = vpack.c.bf16 %v1573, %v1573
      %1579 = vrot.lane.b32.xlu0 %v1286, 112
      %v1580 = vpop.permute.xlu0 %1579
      %v1582 = vsel %vm1287, %v1578, 0
      %v1585 = vsel %vm1348, %v1580, 0
      %1587 = vmatprep.subr.bf16.mxu0 0
      %1588 = vmatpush1.bf16.msra.mxu0 %v1585
      %1589 = vmatprep.subr.bf16.mxu0 0
      %1590 = vmatpush1.bf16.msra.mxu0 0
      %1591 = vmatprep.subr.bf16.mxu0 0
      %1592 = vmatpush1.bf16.msra.mxu0 0
      %1593 = vmatprep.subr.bf16.mxu0 0
      %1594 = vmatpush1.bf16.msra.mxu0 0
      %1595 = vmatprep.subr.bf16.mxu0 0
      %1596 = vmatpush1.bf16.msra.mxu0 0
      %1597 = vmatprep.subr.bf16.mxu0 0
      %1598 = vmatpush1.bf16.msra.mxu0 0
      %1599 = vmatprep.subr.bf16.mxu0 0
      %1600 = vmatpush1.bf16.msra.mxu0 0
      %1601 = vmatprep.subr.bf16.mxu0 0
      %1602 = vmatpush1.bf16.msra.mxu0 0
      %1603 = vmatprep.subr.bf16.mxu0 0
      %1604 = vmatpush1.bf16.msra.mxu0 0
      %1605 = vmatprep.subr.bf16.mxu0 0
      %1606 = vmatpush1.bf16.msra.mxu0 0
      %1607 = vmatprep.subr.bf16.mxu0 0
      %1608 = vmatpush1.bf16.msra.mxu0 0
      %1609 = vmatprep.subr.bf16.mxu0 0
      %1610 = vmatpush1.bf16.msra.mxu0 0
      %1611 = vmatprep.subr.bf16.mxu0 0
      %1612 = vmatpush1.bf16.msra.mxu0 0
      %1613 = vmatprep.subr.bf16.mxu0 0
      %1614 = vmatpush1.bf16.msra.mxu0 0
      %1615 = vmatprep.subr.bf16.mxu0 0
      %1616 = vmatpush1.bf16.msra.mxu0 0
      %1617 = vmatprep.subr.bf16.mxu0 0
      %1618 = vmatpush1.bf16.msra.mxu0 0
      %1619 = vmatprep.mubr.bf16.mxu0 0
      %1620 = vmatmul.mubr.bf16.gmra.mrb[0].mxu0 %v1582
      %v1621 = vpop.f32.mrb[0].mxu0
      %v1622 = vadd.f32 0.0, %v1621
      %v1623 = vpop.f32.mrb[0].mxu0
      %v1624 = vpop.f32.mrb[0].mxu0
      %v1625 = vpop.f32.mrb[0].mxu0
      %1626 = vdwg.mxu0
      %v1627 = vmul.f32 %v1622, %v1577
      %v1628 = vpack.c.bf16 %v1627, %v1627
      %v1630 = vunpack.c.l.b16 %v1628
      %v1631 = vpack.c.b16 %v1630, %v1630
      %1632 = vrot.lane.b32.xlu0 %v1631, 16
      %v1633 = vpop.permute.xlu0 %1632
      %vm1635 = vcmask 191616
      %1636 = vst.msk [vmem:[#allocation2] sm:$0xf] %vm1635, %v1633
      %1637 = vrot.lane.b32.xlu0 %v1284, 104
      %v1638 = vpop.permute.xlu0 %1637
      %1639 = vrot.lane.b32.xlu0 %v1285, 104
      %v1640 = vpop.permute.xlu0 %1639
      %v1642 = vsel %vm1287, %v1638, 0
      %v1645 = vsel %vm1287, %v1640, 0
      %1647 = vmatprep.subr.bf16.mxu0 0
      %1648 = vmatpush1.bf16.xpose.msra.mxu0 %v1645
      %1649 = vmatprep.subr.bf16.mxu0 0
      %1650 = vmatpush1.bf16.xpose.msra.mxu0 0
      %1651 = vmatprep.subr.bf16.mxu0 0
      %1652 = vmatpush1.bf16.xpose.msra.mxu0 0
      %1653 = vmatprep.subr.bf16.mxu0 0
      %1654 = vmatpush1.bf16.xpose.msra.mxu0 0
      %1655 = vmatprep.subr.bf16.mxu0 0
      %1656 = vmatpush1.bf16.xpose.msra.mxu0 0
      %1657 = vmatprep.subr.bf16.mxu0 0
      %1658 = vmatpush1.bf16.xpose.msra.mxu0 0
      %1659 = vmatprep.subr.bf16.mxu0 0
      %1660 = vmatpush1.bf16.xpose.msra.mxu0 0
      %1661 = vmatprep.subr.bf16.mxu0 0
      %1662 = vmatpush1.bf16.xpose.msra.mxu0 0
      %1663 = vmatprep.subr.bf16.mxu0 0
      %1664 = vmatpush1.bf16.xpose.msra.mxu0 0
      %1665 = vmatprep.subr.bf16.mxu0 0
      %1666 = vmatpush1.bf16.xpose.msra.mxu0 0
      %1667 = vmatprep.subr.bf16.mxu0 0
      %1668 = vmatpush1.bf16.xpose.msra.mxu0 0
      %1669 = vmatprep.subr.bf16.mxu0 0
      %1670 = vmatpush1.bf16.xpose.msra.mxu0 0
      %1671 = vmatprep.subr.bf16.mxu0 0
      %1672 = vmatpush1.bf16.xpose.msra.mxu0 0
      %1673 = vmatprep.subr.bf16.mxu0 0
      %1674 = vmatpush1.bf16.xpose.msra.mxu0 0
      %1675 = vmatprep.subr.bf16.mxu0 0
      %1676 = vmatpush1.bf16.xpose.msra.mxu0 0
      %1677 = vmatprep.subr.bf16.mxu0 0
      %1678 = vmatpush1.bf16.xpose.msra.mxu0 0
      %1679 = vmatprep.mubr.bf16.mxu0 0
      %1680 = vmatmul.mubr.bf16.gmra.mrb[0].mxu0 %v1642
      %v1681 = vpop.f32.mrb[0].mxu0
      %v1682 = vadd.f32 0.0, %v1681
      %v1683 = vpop.f32.mrb[0].mxu0
      %v1684 = vpop.f32.mrb[0].mxu0
      %v1685 = vpop.f32.mrb[0].mxu0
      %1686 = vdwg.mxu0
      %v1687 = vsel %vm1287, %v1682, -inf
      %1688 = vmax.xlane.f32.xlu0 %v1687
      %v1689 = vpop.xlane.xlu0 %1688
      %v1690 = vsub.f32 %v1682, %v1689
      %v1691 = vmul.f32 %v1690, 1.442695
      %v1692 = vpow.pop %v1691
      %v1693 = vsel %vm1287, %v1692, 0.0
      %1694 = vadd.xlane.f32.xlu0 %v1693
      %v1695 = vpop.xlane.xlu0 %1694
      %v1696 = vrcp.pop %v1695
      %v1697 = vpack.c.bf16 %v1692, %v1692
      %1698 = vrot.lane.b32.xlu0 %v1286, 104
      %v1699 = vpop.permute.xlu0 %1698
      %v1701 = vsel %vm1287, %v1697, 0
      %v1704 = vsel %vm1348, %v1699, 0
      %1706 = vmatprep.subr.bf16.mxu0 0
      %1707 = vmatpush1.bf16.msra.mxu0 %v1704
      %1708 = vmatprep.subr.bf16.mxu0 0
      %1709 = vmatpush1.bf16.msra.mxu0 0
      %1710 = vmatprep.subr.bf16.mxu0 0
      %1711 = vmatpush1.bf16.msra.mxu0 0
      %1712 = vmatprep.subr.bf16.mxu0 0
      %1713 = vmatpush1.bf16.msra.mxu0 0
      %1714 = vmatprep.subr.bf16.mxu0 0
      %1715 = vmatpush1.bf16.msra.mxu0 0
      %1716 = vmatprep.subr.bf16.mxu0 0
      %1717 = vmatpush1.bf16.msra.mxu0 0
      %1718 = vmatprep.subr.bf16.mxu0 0
      %1719 = vmatpush1.bf16.msra.mxu0 0
      %1720 = vmatprep.subr.bf16.mxu0 0
      %1721 = vmatpush1.bf16.msra.mxu0 0
      %1722 = vmatprep.subr.bf16.mxu0 0
      %1723 = vmatpush1.bf16.msra.mxu0 0
      %1724 = vmatprep.subr.bf16.mxu0 0
      %1725 = vmatpush1.bf16.msra.mxu0 0
      %1726 = vmatprep.subr.bf16.mxu0 0
      %1727 = vmatpush1.bf16.msra.mxu0 0
      %1728 = vmatprep.subr.bf16.mxu0 0
      %1729 = vmatpush1.bf16.msra.mxu0 0
      %1730 = vmatprep.subr.bf16.mxu0 0
      %1731 = vmatpush1.bf16.msra.mxu0 0
      %1732 = vmatprep.subr.bf16.mxu0 0
      %1733 = vmatpush1.bf16.msra.mxu0 0
      %1734 = vmatprep.subr.bf16.mxu0 0
      %1735 = vmatpush1.bf16.msra.mxu0 0
      %1736 = vmatprep.subr.bf16.mxu0 0
      %1737 = vmatpush1.bf16.msra.mxu0 0
      %1738 = vmatprep.mubr.bf16.mxu0 0
      %1739 = vmatmul.mubr.bf16.gmra.mrb[0].mxu0 %v1701
      %v1740 = vpop.f32.mrb[0].mxu0
      %v1741 = vadd.f32 0.0, %v1740
      %v1742 = vpop.f32.mrb[0].mxu0
      %v1743 = vpop.f32.mrb[0].mxu0
      %v1744 = vpop.f32.mrb[0].mxu0
      %1745 = vdwg.mxu0
      %v1746 = vmul.f32 %v1741, %v1696
      %v1747 = vpack.c.bf16 %v1746, %v1746
      %v1749 = vunpack.c.l.b16 %v1747
      %v1750 = vpack.c.b16 %v1749, %v1749
      %1751 = vrot.lane.b32.xlu0 %v1750, 24
      %v1752 = vpop.permute.xlu0 %1751
      %vm1754 = vcmask 257216
      %1755 = vst.msk [vmem:[#allocation2] sm:$0xf] %vm1754, %v1752
      %v1756 = vld [vmem:[#allocation2] sm:$0xf]
      %v1757 = vld [vmem:[%s21] sm:$0xf]
      %v1758 = vld [vmem:[%s21 + $0x4] sm:$0xf]
      %v1759 = vld [vmem:[%s21 + $0x8] sm:$0xf]
      %v1760 = vld [vmem:[%s21 + $0xc] sm:$0xf]
      %v1761 = vld [vmem:[%s23] sm:$0x1]
      %v1763 = vlaneseq
      %v1764 = vshrl.u32 %v1763, 7
      %v1765 = vsub.s32 0, %v1764
      %v1766 = vrot.slane %v1761, %v1765
      %v1772 = vunpack.c.l.b16 %v1757
      %v1773 = vunpack.c.l.b16 %v1758
      %v1774 = vunpack.c.l.b16 %v1759
      %v1775 = vunpack.c.l.b16 %v1760
      %v1776 = vpack.c.b16 %v1773, %v1772
      %v1777 = vpack.c.b16 %v1775, %v1774
      %v1781 = vsel %vm1111, %v1756, 0
      %1783 = vmatprep.subr.bf16.mxu0 0
      %1784 = vmatpush1.bf16.msra.mxu0 %v1776
      %1785 = vmatprep.subr.bf16.mxu0 0
      %1786 = vmatpush1.bf16.msra.mxu0 %v1777
      %1787 = vmatprep.subr.bf16.mxu0 0
      %1788 = vmatpush1.bf16.msra.mxu0 0
      %1789 = vmatprep.subr.bf16.mxu0 0
      %1790 = vmatpush1.bf16.msra.mxu0 0
      %1791 = vmatprep.subr.bf16.mxu0 0
      %1792 = vmatpush1.bf16.msra.mxu0 0
      %1793 = vmatprep.subr.bf16.mxu0 0
      %1794 = vmatpush1.bf16.msra.mxu0 0
      %1795 = vmatprep.subr.bf16.mxu0 0
      %1796 = vmatpush1.bf16.msra.mxu0 0
      %1797 = vmatprep.subr.bf16.mxu0 0
      %1798 = vmatpush1.bf16.msra.mxu0 0
      %1799 = vmatprep.subr.bf16.mxu0 0
      %1800 = vmatpush1.bf16.msra.mxu0 0
      %1801 = vmatprep.subr.bf16.mxu0 0
      %1802 = vmatpush1.bf16.msra.mxu0 0
      %1803 = vmatprep.subr.bf16.mxu0 0
      %1804 = vmatpush1.bf16.msra.mxu0 0
      %1805 = vmatprep.subr.bf16.mxu0 0
      %1806 = vmatpush1.bf16.msra.mxu0 0
      %1807 = vmatprep.subr.bf16.mxu0 0
      %1808 = vmatpush1.bf16.msra.mxu0 0
      %1809 = vmatprep.subr.bf16.mxu0 0
      %1810 = vmatpush1.bf16.msra.mxu0 0
      %1811 = vmatprep.subr.bf16.mxu0 0
      %1812 = vmatpush1.bf16.msra.mxu0 0
      %1813 = vmatprep.subr.bf16.mxu0 0
      %1814 = vmatpush1.bf16.msra.mxu0 0
      %1815 = vmatprep.mubr.bf16.mxu0 0
      %1816 = vmatmul.mubr.bf16.gmra.mrb[0].mxu0 %v1781
      %v1817 = vpop.f32.mrb[0].mxu0
      %v1818 = vadd.f32 %v1766, %v1817
      %v1819 = vpop.f32.mrb[0].mxu0
      %v1820 = vpop.f32.mrb[0].mxu0
      %v1821 = vpop.f32.mrb[0].mxu0
      %1822 = vdwg.mxu0
      %v1823 = vadd.f32 %v1079, %v1818
      %v1824 = vld [vmem:[%s25] sm:$0x1]
      %v1825 = vld [vmem:[%s27] sm:$0x1]
      %v1826 = vsel %vm1111, %v1823, 0.0
      %1827 = vadd.xlane.f32.xlu0 %v1826
      %v1828 = vpop.xlane.xlu0 %1827
      %v1829 = vrcp.pop 32.0
      %v1830 = vmul.f32 %v1828, %v1829
      %v1831 = vsub.f32 %v1823, %v1830
      %v1832 = vmul.f32 %v1831, %v1831
      %v1833 = vsel %vm1111, %v1832, 0.0
      %1834 = vadd.xlane.f32.xlu0 %v1833
      %v1835 = vpop.xlane.xlu0 %1834
      %v1836 = vmul.f32 %v1835, %v1829
      %v1837 = vadd.f32 %v1836, 1e-05
      %v1838 = vrsqrt.pop %v1837
      %v1839 = vmul.f32 %v1831, %v1838
      %v1841 = vlaneseq
      %v1842 = vshrl.u32 %v1841, 7
      %v1843 = vsub.s32 0, %v1842
      %v1844 = vrot.slane %v1824, %v1843
      %v1846 = vmul.f32 %v1839, %v1844
      %v1848 = vlaneseq
      %v1849 = vshrl.u32 %v1848, 7
      %v1850 = vsub.s32 0, %v1849
      %v1851 = vrot.slane %v1825, %v1850
      %v1853 = vadd.f32 %v1846, %v1851
      %v1854 = vadd.f32 %v1853, %v1080
      %v1855 = vpack.c.bf16 %v1854, %v1854
      %v1856 = vadd.f32 %v1081, %v1083
      %v1857 = vadd.f32 %v1082, %v1084
      %v1858 = vpack.c.bf16 %v1857, %v1856
      %v1859 = vpack.c.bf16 %v1082, %v1081
      %v1860 = vld [vmem:[%s29] sm:$0xf]
      %v1861 = vld [vmem:[%s29 + $0x4] sm:$0xf]
      %v1862 = vld [vmem:[%s29 + $0x8] sm:$0xf]
      %v1863 = vld [vmem:[%s29 + $0xc] sm:$0xf]
      %v1864 = vld [vmem:[%s31] sm:$0x1]
      %v1866 = vlaneseq
      %v1867 = vshrl.u32 %v1866, 7
      %v1868 = vsub.s32 0, %v1867
      %v1869 = vrot.slane %v1864, %v1868
      %v1875 = vunpack.c.l.b16 %v1860
      %v1876 = vunpack.c.l.b16 %v1861
      %v1877 = vunpack.c.l.b16 %v1862
      %v1878 = vunpack.c.l.b16 %v1863
      %v1879 = vpack.c.b16 %v1876, %v1875
      %v1880 = vpack.c.b16 %v1878, %v1877
      %v1884 = vsel %vm1111, %v1855, 0
      %1886 = vmatprep.subr.bf16.mxu0 0
      %1887 = vmatpush1.bf16.msra.mxu0 %v1879
      %1888 = vmatprep.subr.bf16.mxu0 0
      %1889 = vmatpush1.bf16.msra.mxu0 %v1880
      %1890 = vmatprep.subr.bf16.mxu0 0
      %1891 = vmatpush1.bf16.msra.mxu0 0
      %1892 = vmatprep.subr.bf16.mxu0 0
      %1893 = vmatpush1.bf16.msra.mxu0 0
      %1894 = vmatprep.subr.bf16.mxu0 0
      %1895 = vmatpush1.bf16.msra.mxu0 0
      %1896 = vmatprep.subr.bf16.mxu0 0
      %1897 = vmatpush1.bf16.msra.mxu0 0
      %1898 = vmatprep.subr.bf16.mxu0 0
      %1899 = vmatpush1.bf16.msra.mxu0 0
      %1900 = vmatprep.subr.bf16.mxu0 0
      %1901 = vmatpush1.bf16.msra.mxu0 0
      %1902 = vmatprep.subr.bf16.mxu0 0
      %1903 = vmatpush1.bf16.msra.mxu0 0
      %1904 = vmatprep.subr.bf16.mxu0 0
      %1905 = vmatpush1.bf16.msra.mxu0 0
      %1906 = vmatprep.subr.bf16.mxu0 0
      %1907 = vmatpush1.bf16.msra.mxu0 0
      %1908 = vmatprep.subr.bf16.mxu0 0
      %1909 = vmatpush1.bf16.msra.mxu0 0
      %1910 = vmatprep.subr.bf16.mxu0 0
      %1911 = vmatpush1.bf16.msra.mxu0 0
      %1912 = vmatprep.subr.bf16.mxu0 0
      %1913 = vmatpush1.bf16.msra.mxu0 0
      %1914 = vmatprep.subr.bf16.mxu0 0
      %1915 = vmatpush1.bf16.msra.mxu0 0
      %1916 = vmatprep.subr.bf16.mxu0 0
      %1917 = vmatpush1.bf16.msra.mxu0 0
      %1918 = vmatprep.mubr.bf16.mxu0 0
      %1919 = vmatmul.mubr.bf16.gmra.mrb[0].mxu0 %v1884
      %v1920 = vpop.f32.mrb[0].mxu0
      %v1921 = vadd.f32 %v1869, %v1920
      %v1922 = vpop.f32.mrb[0].mxu0
      %v1923 = vpop.f32.mrb[0].mxu0
      %v1924 = vpop.f32.mrb[0].mxu0
      %1925 = vdwg.mxu0
      %v1926 = vld [vmem:[%s33] sm:$0xf]
      %v1927 = vld [vmem:[%s33 + $0x4] sm:$0xf]
      %v1928 = vld [vmem:[%s33 + $0x8] sm:$0xf]
      %v1929 = vld [vmem:[%s33 + $0xc] sm:$0xf]
      %v1930 = vld [vmem:[%s35] sm:$0x1]
      %v1932 = vlaneseq
      %v1933 = vshrl.u32 %v1932, 7
      %v1934 = vsub.s32 0, %v1933
      %v1935 = vrot.slane %v1930, %v1934
      %v1941 = vunpack.c.l.b16 %v1926
      %v1942 = vunpack.c.l.b16 %v1927
      %v1943 = vunpack.c.l.b16 %v1928
      %v1944 = vunpack.c.l.b16 %v1929
      %v1945 = vpack.c.b16 %v1942, %v1941
      %v1946 = vpack.c.b16 %v1944, %v1943
      %v1950 = vsel %vm1111, %v1858, 0
      %1952 = vmatprep.subr.bf16.mxu0 0
      %1953 = vmatpush1.bf16.msra.mxu0 %v1945
      %1954 = vmatprep.subr.bf16.mxu0 0
      %1955 = vmatpush1.bf16.msra.mxu0 %v1946
      %1956 = vmatprep.subr.bf16.mxu0 0
      %1957 = vmatpush1.bf16.msra.mxu0 0
      %1958 = vmatprep.subr.bf16.mxu0 0
      %1959 = vmatpush1.bf16.msra.mxu0 0
      %1960 = vmatprep.subr.bf16.mxu0 0
      %1961 = vmatpush1.bf16.msra.mxu0 0
      %1962 = vmatprep.subr.bf16.mxu0 0
      %1963 = vmatpush1.bf16.msra.mxu0 0
      %1964 = vmatprep.subr.bf16.mxu0 0
      %1965 = vmatpush1.bf16.msra.mxu0 0
      %1966 = vmatprep.subr.bf16.mxu0 0
      %1967 = vmatpush1.bf16.msra.mxu0 0
      %1968 = vmatprep.subr.bf16.mxu0 0
      %1969 = vmatpush1.bf16.msra.mxu0 0
      %1970 = vmatprep.subr.bf16.mxu0 0
      %1971 = vmatpush1.bf16.msra.mxu0 0
      %1972 = vmatprep.subr.bf16.mxu0 0
      %1973 = vmatpush1.bf16.msra.mxu0 0
      %1974 = vmatprep.subr.bf16.mxu0 0
      %1975 = vmatpush1.bf16.msra.mxu0 0
      %1976 = vmatprep.subr.bf16.mxu0 0
      %1977 = vmatpush1.bf16.msra.mxu0 0
      %1978 = vmatprep.subr.bf16.mxu0 0
      %1979 = vmatpush1.bf16.msra.mxu0 0
      %1980 = vmatprep.subr.bf16.mxu0 0
      %1981 = vmatpush1.bf16.msra.mxu0 0
      %1982 = vmatprep.subr.bf16.mxu0 0
      %1983 = vmatpush1.bf16.msra.mxu0 0
      %1984 = vmatprep.mubr.bf16.mxu0 0
      %1985 = vmatmul.mubr.bf16.gmra.mrb[0].mxu0 %v1950
      %v1986 = vpop.f32.mrb[0].mxu0
      %v1987 = vadd.f32 %v1935, %v1986
      %v1988 = vpop.f32.mrb[0].mxu0
      %v1989 = vpop.f32.mrb[0].mxu0
      %v1990 = vadd.f32 %v1935, %v1989
      %v1991 = vpop.f32.mrb[0].mxu0
      %1992 = vdwg.mxu0
      %v1993 = vld [vmem:[%s37] sm:$0xf]
      %v1994 = vld [vmem:[%s37 + $0x4] sm:$0xf]
      %v1995 = vld [vmem:[%s37 + $0x8] sm:$0xf]
      %v1996 = vld [vmem:[%s37 + $0xc] sm:$0xf]
      %v1997 = vld [vmem:[%s39] sm:$0x1]
      %v1999 = vlaneseq
      %v2000 = vshrl.u32 %v1999, 7
      %v2001 = vsub.s32 0, %v2000
      %v2002 = vrot.slane %v1997, %v2001
      %v2008 = vunpack.c.l.b16 %v1993
      %v2009 = vunpack.c.l.b16 %v1994
      %v2010 = vunpack.c.l.b16 %v1995
      %v2011 = vunpack.c.l.b16 %v1996
      %v2012 = vpack.c.b16 %v2009, %v2008
      %v2013 = vpack.c.b16 %v2011, %v2010
      %v2017 = vsel %vm1111, %v1859, 0
      %2019 = vmatprep.subr.bf16.mxu0 0
      %2020 = vmatpush1.bf16.msra.mxu0 %v2012
      %2021 = vmatprep.subr.bf16.mxu0 0
      %2022 = vmatpush1.bf16.msra.mxu0 %v2013
      %2023 = vmatprep.subr.bf16.mxu0 0
      %2024 = vmatpush1.bf16.msra.mxu0 0
      %2025 = vmatprep.subr.bf16.mxu0 0
      %2026 = vmatpush1.bf16.msra.mxu0 0
      %2027 = vmatprep.subr.bf16.mxu0 0
      %2028 = vmatpush1.bf16.msra.mxu0 0
      %2029 = vmatprep.subr.bf16.mxu0 0
      %2030 = vmatpush1.bf16.msra.mxu0 0
      %2031 = vmatprep.subr.bf16.mxu0 0
      %2032 = vmatpush1.bf16.msra.mxu0 0
      %2033 = vmatprep.subr.bf16.mxu0 0
      %2034 = vmatpush1.bf16.msra.mxu0 0
      %2035 = vmatprep.subr.bf16.mxu0 0
      %2036 = vmatpush1.bf16.msra.mxu0 0
      %2037 = vmatprep.subr.bf16.mxu0 0
      %2038 = vmatpush1.bf16.msra.mxu0 0
      %2039 = vmatprep.subr.bf16.mxu0 0
      %2040 = vmatpush1.bf16.msra.mxu0 0
      %2041 = vmatprep.subr.bf16.mxu0 0
      %2042 = vmatpush1.bf16.msra.mxu0 0
      %2043 = vmatprep.subr.bf16.mxu0 0
      %2044 = vmatpush1.bf16.msra.mxu0 0
      %2045 = vmatprep.subr.bf16.mxu0 0
      %2046 = vmatpush1.bf16.msra.mxu0 0
      %2047 = vmatprep.subr.bf16.mxu0 0
      %2048 = vmatpush1.bf16.msra.mxu0 0
      %2049 = vmatprep.subr.bf16.mxu0 0
      %2050 = vmatpush1.bf16.msra.mxu0 0
      %2051 = vmatprep.mubr.bf16.mxu0 0
      %2052 = vmatmul.mubr.bf16.gmra.mrb[0].mxu0 %v2017
      %v2053 = vpop.f32.mrb[0].mxu0
      %v2054 = vadd.f32 %v2002, %v2053
      %v2055 = vpop.f32.mrb[0].mxu0
      %v2056 = vpop.f32.mrb[0].mxu0
      %v2057 = vadd.f32 %v2002, %v2056
      %v2058 = vpop.f32.mrb[0].mxu0
      %2059 = vdwg.mxu0
      %v2060 = vpack.c.bf16 %v1921, %v1921
      %v2061 = vpack.c.bf16 %v1990, %v1987
      %v2062 = vpack.c.bf16 %v2057, %v2054
      %v2064 = vsel %vm1287, %v2060, 0
      %v2067 = vsel %vm1287, %v2061, 0
      %2069 = vmatprep.subr.bf16.mxu0 0
      %2070 = vmatpush1.bf16.xpose.msra.mxu0 %v2067
      %2071 = vmatprep.subr.bf16.mxu0 0
      %2072 = vmatpush1.bf16.xpose.msra.mxu0 0
      %2073 = vmatprep.subr.bf16.mxu0 0
      %2074 = vmatpush1.bf16.xpose.msra.mxu0 0
      %2075 = vmatprep.subr.bf16.mxu0 0
      %2076 = vmatpush1.bf16.xpose.msra.mxu0 0
      %2077 = vmatprep.subr.bf16.mxu0 0
      %2078 = vmatpush1.bf16.xpose.msra.mxu0 0
      %2079 = vmatprep.subr.bf16.mxu0 0
      %2080 = vmatpush1.bf16.xpose.msra.mxu0 0
      %2081 = vmatprep.subr.bf16.mxu0 0
      %2082 = vmatpush1.bf16.xpose.msra.mxu0 0
      %2083 = vmatprep.subr.bf16.mxu0 0
      %2084 = vmatpush1.bf16.xpose.msra.mxu0 0
      %2085 = vmatprep.subr.bf16.mxu0 0
      %2086 = vmatpush1.bf16.xpose.msra.mxu0 0
      %2087 = vmatprep.subr.bf16.mxu0 0
      %2088 = vmatpush1.bf16.xpose.msra.mxu0 0
      %2089 = vmatprep.subr.bf16.mxu0 0
      %2090 = vmatpush1.bf16.xpose.msra.mxu0 0
      %2091 = vmatprep.subr.bf16.mxu0 0
      %2092 = vmatpush1.bf16.xpose.msra.mxu0 0
      %2093 = vmatprep.subr.bf16.mxu0 0
      %2094 = vmatpush1.bf16.xpose.msra.mxu0 0
      %2095 = vmatprep.subr.bf16.mxu0 0
      %2096 = vmatpush1.bf16.xpose.msra.mxu0 0
      %2097 = vmatprep.subr.bf16.mxu0 0
      %2098 = vmatpush1.bf16.xpose.msra.mxu0 0
      %2099 = vmatprep.subr.bf16.mxu0 0
      %2100 = vmatpush1.bf16.xpose.msra.mxu0 0
      %2101 = vmatprep.mubr.bf16.mxu0 0
      %2102 = vmatmul.mubr.bf16.gmra.mrb[0].mxu0 %v2064
      %v2103 = vpop.f32.mrb[0].mxu0
      %v2104 = vadd.f32 0.0, %v2103
      %v2105 = vpop.f32.mrb[0].mxu0
      %v2106 = vpop.f32.mrb[0].mxu0
      %v2107 = vpop.f32.mrb[0].mxu0
      %2108 = vdwg.mxu0
      %vm2109 = vcmask 97280
      %v2110 = vsel %vm2109, %v2104, -inf
      %2111 = vmax.xlane.f32.xlu0 %v2110
      %v2112 = vpop.xlane.xlu0 %2111
      %v2113 = vsub.f32 %v2104, %v2112
      %v2114 = vmul.f32 %v2113, 1.442695
      %v2115 = vpow.pop %v2114
      %v2116 = vsel %vm2109, %v2115, 0.0
      %2117 = vadd.xlane.f32.xlu0 %v2116
      %v2118 = vpop.xlane.xlu0 %2117
      %v2119 = vrcp.pop %v2118
      %v2120 = vpack.c.bf16 %v2115, %v2115
      %v2122 = vsel %vm2109, %v2120, 0
      %vm2124 = vcmask 1045504
      %v2126 = vsel %vm2124, %v2062, 0
      %2128 = vmatprep.subr.bf16.mxu0 0
      %2129 = vmatpush1.bf16.msra.mxu0 %v2126
      %2130 = vmatprep.subr.bf16.mxu0 0
      %2131 = vmatpush1.bf16.msra.mxu0 0
      %2132 = vmatprep.subr.bf16.mxu0 0
      %2133 = vmatpush1.bf16.msra.mxu0 0
      %2134 = vmatprep.subr.bf16.mxu0 0
      %2135 = vmatpush1.bf16.msra.mxu0 0
      %2136 = vmatprep.subr.bf16.mxu0 0
      %2137 = vmatpush1.bf16.msra.mxu0 0
      %2138 = vmatprep.subr.bf16.mxu0 0
      %2139 = vmatpush1.bf16.msra.mxu0 0
      %2140 = vmatprep.subr.bf16.mxu0 0
      %2141 = vmatpush1.bf16.msra.mxu0 0
      %2142 = vmatprep.subr.bf16.mxu0 0
      %2143 = vmatpush1.bf16.msra.mxu0 0
      %2144 = vmatprep.subr.bf16.mxu0 0
      %2145 = vmatpush1.bf16.msra.mxu0 0
      %2146 = vmatprep.subr.bf16.mxu0 0
      %2147 = vmatpush1.bf16.msra.mxu0 0
      %2148 = vmatprep.subr.bf16.mxu0 0
      %2149 = vmatpush1.bf16.msra.mxu0 0
      %2150 = vmatprep.subr.bf16.mxu0 0
      %2151 = vmatpush1.bf16.msra.mxu0 0
      %2152 = vmatprep.subr.bf16.mxu0 0
      %2153 = vmatpush1.bf16.msra.mxu0 0
      %2154 = vmatprep.subr.bf16.mxu0 0
      %2155 = vmatpush1.bf16.msra.mxu0 0
      %2156 = vmatprep.subr.bf16.mxu0 0
      %2157 = vmatpush1.bf16.msra.mxu0 0
      %2158 = vmatprep.subr.bf16.mxu0 0
      %2159 = vmatpush1.bf16.msra.mxu0 0
      %2160 = vmatprep.mubr.bf16.mxu0 0
      %2161 = vmatmul.mubr.bf16.gmra.mrb[0].mxu0 %v2122
      %v2162 = vpop.f32.mrb[0].mxu0
      %v2163 = vadd.f32 0.0, %v2162
      %v2164 = vpop.f32.mrb[0].mxu0
      %v2165 = vpop.f32.mrb[0].mxu0
      %v2166 = vpop.f32.mrb[0].mxu0
      %2167 = vdwg.mxu0
      %v2168 = vmul.f32 %v2163, %v2119
      %v2169 = vpack.c.bf16 %v2168, %v2168
      %2170 = vst.msk [vmem:[#allocation2] sm:$0xf] %vm1394, %v2169
      %2172 = vrot.lane.b32.xlu0 %v2060, 120
      %v2173 = vpop.permute.xlu0 %2172
      %2175 = vrot.lane.b32.xlu0 %v2061, 120
      %v2176 = vpop.permute.xlu0 %2175
      %v2178 = vsel %vm1287, %v2173, 0
      %v2181 = vsel %vm1287, %v2176, 0
      %2183 = vmatprep.subr.bf16.mxu0 0
      %2184 = vmatpush1.bf16.xpose.msra.mxu0 %v2181
      %2185 = vmatprep.subr.bf16.mxu0 0
      %2186 = vmatpush1.bf16.xpose.msra.mxu0 0
      %2187 = vmatprep.subr.bf16.mxu0 0
      %2188 = vmatpush1.bf16.xpose.msra.mxu0 0
      %2189 = vmatprep.subr.bf16.mxu0 0
      %2190 = vmatpush1.bf16.xpose.msra.mxu0 0
      %2191 = vmatprep.subr.bf16.mxu0 0
      %2192 = vmatpush1.bf16.xpose.msra.mxu0 0
      %2193 = vmatprep.subr.bf16.mxu0 0
      %2194 = vmatpush1.bf16.xpose.msra.mxu0 0
      %2195 = vmatprep.subr.bf16.mxu0 0
      %2196 = vmatpush1.bf16.xpose.msra.mxu0 0
      %2197 = vmatprep.subr.bf16.mxu0 0
      %2198 = vmatpush1.bf16.xpose.msra.mxu0 0
      %2199 = vmatprep.subr.bf16.mxu0 0
      %2200 = vmatpush1.bf16.xpose.msra.mxu0 0
      %2201 = vmatprep.subr.bf16.mxu0 0
      %2202 = vmatpush1.bf16.xpose.msra.mxu0 0
      %2203 = vmatprep.subr.bf16.mxu0 0
      %2204 = vmatpush1.bf16.xpose.msra.mxu0 0
      %2205 = vmatprep.subr.bf16.mxu0 0
      %2206 = vmatpush1.bf16.xpose.msra.mxu0 0
      %2207 = vmatprep.subr.bf16.mxu0 0
      %2208 = vmatpush1.bf16.xpose.msra.mxu0 0
      %2209 = vmatprep.subr.bf16.mxu0 0
      %2210 = vmatpush1.bf16.xpose.msra.mxu0 0
      %2211 = vmatprep.subr.bf16.mxu0 0
      %2212 = vmatpush1.bf16.xpose.msra.mxu0 0
      %2213 = vmatprep.subr.bf16.mxu0 0
      %2214 = vmatpush1.bf16.xpose.msra.mxu0 0
      %2215 = vmatprep.mubr.bf16.mxu0 0
      %2216 = vmatmul.mubr.bf16.gmra.mrb[0].mxu0 %v2178
      %v2217 = vpop.f32.mrb[0].mxu0
      %v2218 = vadd.f32 0.0, %v2217
      %v2219 = vpop.f32.mrb[0].mxu0
      %v2220 = vpop.f32.mrb[0].mxu0
      %v2221 = vpop.f32.mrb[0].mxu0
      %2222 = vdwg.mxu0
      %v2223 = vsel %vm2109, %v2218, -inf
      %2224 = vmax.xlane.f32.xlu0 %v2223
      %v2225 = vpop.xlane.xlu0 %2224
      %v2226 = vsub.f32 %v2218, %v2225
      %v2227 = vmul.f32 %v2226, 1.442695
      %v2228 = vpow.pop %v2227
      %v2229 = vsel %vm2109, %v2228, 0.0
      %2230 = vadd.xlane.f32.xlu0 %v2229
      %v2231 = vpop.xlane.xlu0 %2230
      %v2232 = vrcp.pop %v2231
      %v2233 = vpack.c.bf16 %v2228, %v2228
      %2235 = vrot.lane.b32.xlu0 %v2062, 120
      %v2236 = vpop.permute.xlu0 %2235
      %v2238 = vsel %vm2109, %v2233, 0
      %v2241 = vsel %vm2124, %v2236, 0
      %2243 = vmatprep.subr.bf16.mxu0 0
      %2244 = vmatpush1.bf16.msra.mxu0 %v2241
      %2245 = vmatprep.subr.bf16.mxu0 0
      %2246 = vmatpush1.bf16.msra.mxu0 0
      %2247 = vmatprep.subr.bf16.mxu0 0
      %2248 = vmatpush1.bf16.msra.mxu0 0
      %2249 = vmatprep.subr.bf16.mxu0 0
      %2250 = vmatpush1.bf16.msra.mxu0 0
      %2251 = vmatprep.subr.bf16.mxu0 0
      %2252 = vmatpush1.bf16.msra.mxu0 0
      %2253 = vmatprep.subr.bf16.mxu0 0
      %2254 = vmatpush1.bf16.msra.mxu0 0
      %2255 = vmatprep.subr.bf16.mxu0 0
      %2256 = vmatpush1.bf16.msra.mxu0 0
      %2257 = vmatprep.subr.bf16.mxu0 0
      %2258 = vmatpush1.bf16.msra.mxu0 0
      %2259 = vmatprep.subr.bf16.mxu0 0
      %2260 = vmatpush1.bf16.msra.mxu0 0
      %2261 = vmatprep.subr.bf16.mxu0 0
      %2262 = vmatpush1.bf16.msra.mxu0 0
      %2263 = vmatprep.subr.bf16.mxu0 0
      %2264 = vmatpush1.bf16.msra.mxu0 0
      %2265 = vmatprep.subr.bf16.mxu0 0
      %2266 = vmatpush1.bf16.msra.mxu0 0
      %2267 = vmatprep.subr.bf16.mxu0 0
      %2268 = vmatpush1.bf16.msra.mxu0 0
      %2269 = vmatprep.subr.bf16.mxu0 0
      %2270 = vmatpush1.bf16.msra.mxu0 0
      %2271 = vmatprep.subr.bf16.mxu0 0
      %2272 = vmatpush1.bf16.msra.mxu0 0
      %2273 = vmatprep.subr.bf16.mxu0 0
      %2274 = vmatpush1.bf16.msra.mxu0 0
      %2275 = vmatprep.mubr.bf16.mxu0 0
      %2276 = vmatmul.mubr.bf16.gmra.mrb[0].mxu0 %v2238
      %v2277 = vpop.f32.mrb[0].mxu0
      %v2278 = vadd.f32 0.0, %v2277
      %v2279 = vpop.f32.mrb[0].mxu0
      %v2280 = vpop.f32.mrb[0].mxu0
      %v2281 = vpop.f32.mrb[0].mxu0
      %2282 = vdwg.mxu0
      %v2283 = vmul.f32 %v2278, %v2232
      %v2284 = vpack.c.bf16 %v2283, %v2283
      %v2286 = vunpack.c.l.b16 %v2284
      %v2287 = vpack.c.b16 %v2286, %v2286
      %2288 = vrot.lane.b32.xlu0 %v2287, 8
      %v2289 = vpop.permute.xlu0 %2288
      %2291 = vst.msk [vmem:[#allocation2] sm:$0xf] %vm1516, %v2289
      %2292 = vrot.lane.b32.xlu0 %v2060, 112
      %v2293 = vpop.permute.xlu0 %2292
      %2294 = vrot.lane.b32.xlu0 %v2061, 112
      %v2295 = vpop.permute.xlu0 %2294
      %v2297 = vsel %vm1287, %v2293, 0
      %v2300 = vsel %vm1287, %v2295, 0
      %2302 = vmatprep.subr.bf16.mxu0 0
      %2303 = vmatpush1.bf16.xpose.msra.mxu0 %v2300
      %2304 = vmatprep.subr.bf16.mxu0 0
      %2305 = vmatpush1.bf16.xpose.msra.mxu0 0
      %2306 = vmatprep.subr.bf16.mxu0 0
      %2307 = vmatpush1.bf16.xpose.msra.mxu0 0
      %2308 = vmatprep.subr.bf16.mxu0 0
      %2309 = vmatpush1.bf16.xpose.msra.mxu0 0
      %2310 = vmatprep.subr.bf16.mxu0 0
      %2311 = vmatpush1.bf16.xpose.msra.mxu0 0
      %2312 = vmatprep.subr.bf16.mxu0 0
      %2313 = vmatpush1.bf16.xpose.msra.mxu0 0
      %2314 = vmatprep.subr.bf16.mxu0 0
      %2315 = vmatpush1.bf16.xpose.msra.mxu0 0
      %2316 = vmatprep.subr.bf16.mxu0 0
      %2317 = vmatpush1.bf16.xpose.msra.mxu0 0
      %2318 = vmatprep.subr.bf16.mxu0 0
      %2319 = vmatpush1.bf16.xpose.msra.mxu0 0
      %2320 = vmatprep.subr.bf16.mxu0 0
      %2321 = vmatpush1.bf16.xpose.msra.mxu0 0
      %2322 = vmatprep.subr.bf16.mxu0 0
      %2323 = vmatpush1.bf16.xpose.msra.mxu0 0
      %2324 = vmatprep.subr.bf16.mxu0 0
      %2325 = vmatpush1.bf16.xpose.msra.mxu0 0
      %2326 = vmatprep.subr.bf16.mxu0 0
      %2327 = vmatpush1.bf16.xpose.msra.mxu0 0
      %2328 = vmatprep.subr.bf16.mxu0 0
      %2329 = vmatpush1.bf16.xpose.msra.mxu0 0
      %2330 = vmatprep.subr.bf16.mxu0 0
      %2331 = vmatpush1.bf16.xpose.msra.mxu0 0
      %2332 = vmatprep.subr.bf16.mxu0 0
      %2333 = vmatpush1.bf16.xpose.msra.mxu0 0
      %2334 = vmatprep.mubr.bf16.mxu0 0
      %2335 = vmatmul.mubr.bf16.gmra.mrb[0].mxu0 %v2297
      %v2336 = vpop.f32.mrb[0].mxu0
      %v2337 = vadd.f32 0.0, %v2336
      %v2338 = vpop.f32.mrb[0].mxu0
      %v2339 = vpop.f32.mrb[0].mxu0
      %v2340 = vpop.f32.mrb[0].mxu0
      %2341 = vdwg.mxu0
      %v2342 = vsel %vm2109, %v2337, -inf
      %2343 = vmax.xlane.f32.xlu0 %v2342
      %v2344 = vpop.xlane.xlu0 %2343
      %v2345 = vsub.f32 %v2337, %v2344
      %v2346 = vmul.f32 %v2345, 1.442695
      %v2347 = vpow.pop %v2346
      %v2348 = vsel %vm2109, %v2347, 0.0
      %2349 = vadd.xlane.f32.xlu0 %v2348
      %v2350 = vpop.xlane.xlu0 %2349
      %v2351 = vrcp.pop %v2350
      %v2352 = vpack.c.bf16 %v2347, %v2347
      %2353 = vrot.lane.b32.xlu0 %v2062, 112
      %v2354 = vpop.permute.xlu0 %2353
      %v2356 = vsel %vm2109, %v2352, 0
      %v2359 = vsel %vm2124, %v2354, 0
      %2361 = vmatprep.subr.bf16.mxu0 0
      %2362 = vmatpush1.bf16.msra.mxu0 %v2359
      %2363 = vmatprep.subr.bf16.mxu0 0
      %2364 = vmatpush1.bf16.msra.mxu0 0
      %2365 = vmatprep.subr.bf16.mxu0 0
      %2366 = vmatpush1.bf16.msra.mxu0 0
      %2367 = vmatprep.subr.bf16.mxu0 0
      %2368 = vmatpush1.bf16.msra.mxu0 0
      %2369 = vmatprep.subr.bf16.mxu0 0
      %2370 = vmatpush1.bf16.msra.mxu0 0
      %2371 = vmatprep.subr.bf16.mxu0 0
      %2372 = vmatpush1.bf16.msra.mxu0 0
      %2373 = vmatprep.subr.bf16.mxu0 0
      %2374 = vmatpush1.bf16.msra.mxu0 0
      %2375 = vmatprep.subr.bf16.mxu0 0
      %2376 = vmatpush1.bf16.msra.mxu0 0
      %2377 = vmatprep.subr.bf16.mxu0 0
      %2378 = vmatpush1.bf16.msra.mxu0 0
      %2379 = vmatprep.subr.bf16.mxu0 0
      %2380 = vmatpush1.bf16.msra.mxu0 0
      %2381 = vmatprep.subr.bf16.mxu0 0
      %2382 = vmatpush1.bf16.msra.mxu0 0
      %2383 = vmatprep.subr.bf16.mxu0 0
      %2384 = vmatpush1.bf16.msra.mxu0 0
      %2385 = vmatprep.subr.bf16.mxu0 0
      %2386 = vmatpush1.bf16.msra.mxu0 0
      %2387 = vmatprep.subr.bf16.mxu0 0
      %2388 = vmatpush1.bf16.msra.mxu0 0
      %2389 = vmatprep.subr.bf16.mxu0 0
      %2390 = vmatpush1.bf16.msra.mxu0 0
      %2391 = vmatprep.subr.bf16.mxu0 0
      %2392 = vmatpush1.bf16.msra.mxu0 0
      %2393 = vmatprep.mubr.bf16.mxu0 0
      %2394 = vmatmul.mubr.bf16.gmra.mrb[0].mxu0 %v2356
      %v2395 = vpop.f32.mrb[0].mxu0
      %v2396 = vadd.f32 0.0, %v2395
      %v2397 = vpop.f32.mrb[0].mxu0
      %v2398 = vpop.f32.mrb[0].mxu0
      %v2399 = vpop.f32.mrb[0].mxu0
      %2400 = vdwg.mxu0
      %v2401 = vmul.f32 %v2396, %v2351
      %v2402 = vpack.c.bf16 %v2401, %v2401
      %v2404 = vunpack.c.l.b16 %v2402
      %v2405 = vpack.c.b16 %v2404, %v2404
      %2406 = vrot.lane.b32.xlu0 %v2405, 16
      %v2407 = vpop.permute.xlu0 %2406
      %2409 = vst.msk [vmem:[#allocation2] sm:$0xf] %vm1635, %v2407
      %2410 = vrot.lane.b32.xlu0 %v2060, 104
      %v2411 = vpop.permute.xlu0 %2410
      %2412 = vrot.lane.b32.xlu0 %v2061, 104
      %v2413 = vpop.permute.xlu0 %2412
      %v2415 = vsel %vm1287, %v2411, 0
      %v2418 = vsel %vm1287, %v2413, 0
      %2420 = vmatprep.subr.bf16.mxu0 0
      %2421 = vmatpush1.bf16.xpose.msra.mxu0 %v2418
      %2422 = vmatprep.subr.bf16.mxu0 0
      %2423 = vmatpush1.bf16.xpose.msra.mxu0 0
      %2424 = vmatprep.subr.bf16.mxu0 0
      %2425 = vmatpush1.bf16.xpose.msra.mxu0 0
      %2426 = vmatprep.subr.bf16.mxu0 0
      %2427 = vmatpush1.bf16.xpose.msra.mxu0 0
      %2428 = vmatprep.subr.bf16.mxu0 0
      %2429 = vmatpush1.bf16.xpose.msra.mxu0 0
      %2430 = vmatprep.subr.bf16.mxu0 0
      %2431 = vmatpush1.bf16.xpose.msra.mxu0 0
      %2432 = vmatprep.subr.bf16.mxu0 0
      %2433 = vmatpush1.bf16.xpose.msra.mxu0 0
      %2434 = vmatprep.subr.bf16.mxu0 0
      %2435 = vmatpush1.bf16.xpose.msra.mxu0 0
      %2436 = vmatprep.subr.bf16.mxu0 0
      %2437 = vmatpush1.bf16.xpose.msra.mxu0 0
      %2438 = vmatprep.subr.bf16.mxu0 0
      %2439 = vmatpush1.bf16.xpose.msra.mxu0 0
      %2440 = vmatprep.subr.bf16.mxu0 0
      %2441 = vmatpush1.bf16.xpose.msra.mxu0 0
      %2442 = vmatprep.subr.bf16.mxu0 0
      %2443 = vmatpush1.bf16.xpose.msra.mxu0 0
      %2444 = vmatprep.subr.bf16.mxu0 0
      %2445 = vmatpush1.bf16.xpose.msra.mxu0 0
      %2446 = vmatprep.subr.bf16.mxu0 0
      %2447 = vmatpush1.bf16.xpose.msra.mxu0 0
      %2448 = vmatprep.subr.bf16.mxu0 0
      %2449 = vmatpush1.bf16.xpose.msra.mxu0 0
      %2450 = vmatprep.subr.bf16.mxu0 0
      %2451 = vmatpush1.bf16.xpose.msra.mxu0 0
      %2452 = vmatprep.mubr.bf16.mxu0 0
      %2453 = vmatmul.mubr.bf16.gmra.mrb[0].mxu0 %v2415
      %v2454 = vpop.f32.mrb[0].mxu0
      %v2455 = vadd.f32 0.0, %v2454
      %v2456 = vpop.f32.mrb[0].mxu0
      %v2457 = vpop.f32.mrb[0].mxu0
      %v2458 = vpop.f32.mrb[0].mxu0
      %2459 = vdwg.mxu0
      %v2460 = vsel %vm2109, %v2455, -inf
      %2461 = vmax.xlane.f32.xlu0 %v2460
      %v2462 = vpop.xlane.xlu0 %2461
      %v2463 = vsub.f32 %v2455, %v2462
      %v2464 = vmul.f32 %v2463, 1.442695
      %v2465 = vpow.pop %v2464
      %v2466 = vsel %vm2109, %v2465, 0.0
      %2467 = vadd.xlane.f32.xlu0 %v2466
      %v2468 = vpop.xlane.xlu0 %2467
      %v2469 = vrcp.pop %v2468
      %v2470 = vpack.c.bf16 %v2465, %v2465
      %2471 = vrot.lane.b32.xlu0 %v2062, 104
      %v2472 = vpop.permute.xlu0 %2471
      %v2474 = vsel %vm2109, %v2470, 0
      %v2477 = vsel %vm2124, %v2472, 0
      %2479 = vmatprep.subr.bf16.mxu0 0
      %2480 = vmatpush1.bf16.msra.mxu0 %v2477
      %2481 = vmatprep.subr.bf16.mxu0 0
      %2482 = vmatpush1.bf16.msra.mxu0 0
      %2483 = vmatprep.subr.bf16.mxu0 0
      %2484 = vmatpush1.bf16.msra.mxu0 0
      %2485 = vmatprep.subr.bf16.mxu0 0
      %2486 = vmatpush1.bf16.msra.mxu0 0
      %2487 = vmatprep.subr.bf16.mxu0 0
      %2488 = vmatpush1.bf16.msra.mxu0 0
      %2489 = vmatprep.subr.bf16.mxu0 0
      %2490 = vmatpush1.bf16.msra.mxu0 0
      %2491 = vmatprep.subr.bf16.mxu0 0
      %2492 = vmatpush1.bf16.msra.mxu0 0
      %2493 = vmatprep.subr.bf16.mxu0 0
      %2494 = vmatpush1.bf16.msra.mxu0 0
      %2495 = vmatprep.subr.bf16.mxu0 0
      %2496 = vmatpush1.bf16.msra.mxu0 0
      %2497 = vmatprep.subr.bf16.mxu0 0
      %2498 = vmatpush1.bf16.msra.mxu0 0
      %2499 = vmatprep.subr.bf16.mxu0 0
      %2500 = vmatpush1.bf16.msra.mxu0 0
      %2501 = vmatprep.subr.bf16.mxu0 0
      %2502 = vmatpush1.bf16.msra.mxu0 0
      %2503 = vmatprep.subr.bf16.mxu0 0
      %2504 = vmatpush1.bf16.msra.mxu0 0
      %2505 = vmatprep.subr.bf16.mxu0 0
      %2506 = vmatpush1.bf16.msra.mxu0 0
      %2507 = vmatprep.subr.bf16.mxu0 0
      %2508 = vmatpush1.bf16.msra.mxu0 0
      %2509 = vmatprep.subr.bf16.mxu0 0
      %2510 = vmatpush1.bf16.msra.mxu0 0
      %2511 = vmatprep.mubr.bf16.mxu0 0
      %2512 = vmatmul.mubr.bf16.gmra.mrb[0].mxu0 %v2474
      %v2513 = vpop.f32.mrb[0].mxu0
      %v2514 = vadd.f32 0.0, %v2513
      %v2515 = vpop.f32.mrb[0].mxu0
      %v2516 = vpop.f32.mrb[0].mxu0
      %v2517 = vpop.f32.mrb[0].mxu0
      %2518 = vdwg.mxu0
      %v2519 = vmul.f32 %v2514, %v2469
      %v2520 = vpack.c.bf16 %v2519, %v2519
      %v2522 = vunpack.c.l.b16 %v2520
      %v2523 = vpack.c.b16 %v2522, %v2522
      %2524 = vrot.lane.b32.xlu0 %v2523, 24
      %v2525 = vpop.permute.xlu0 %2524
      %2527 = vst.msk [vmem:[#allocation2] sm:$0xf] %vm1754, %v2525
      %v2528 = vld [vmem:[#allocation2] sm:$0xf]
      %v2529 = vld [vmem:[%s41] sm:$0xf]
      %v2530 = vld [vmem:[%s41 + $0x4] sm:$0xf]
      %v2531 = vld [vmem:[%s41 + $0x8] sm:$0xf]
      %v2532 = vld [vmem:[%s41 + $0xc] sm:$0xf]
      %v2533 = vld [vmem:[%s43] sm:$0x1]
      %v2535 = vlaneseq
      %v2536 = vshrl.u32 %v2535, 7
      %v2537 = vsub.s32 0, %v2536
      %v2538 = vrot.slane %v2533, %v2537
      %v2544 = vunpack.c.l.b16 %v2529
      %v2545 = vunpack.c.l.b16 %v2530
      %v2546 = vunpack.c.l.b16 %v2531
      %v2547 = vunpack.c.l.b16 %v2532
      %v2548 = vpack.c.b16 %v2545, %v2544
      %v2549 = vpack.c.b16 %v2547, %v2546
      %v2553 = vsel %vm1111, %v2528, 0
      %2555 = vmatprep.subr.bf16.mxu0 0
      %2556 = vmatpush1.bf16.msra.mxu0 %v2548
      %2557 = vmatprep.subr.bf16.mxu0 0
      %2558 = vmatpush1.bf16.msra.mxu0 %v2549
      %2559 = vmatprep.subr.bf16.mxu0 0
      %2560 = vmatpush1.bf16.msra.mxu0 0
      %2561 = vmatprep.subr.bf16.mxu0 0
      %2562 = vmatpush1.bf16.msra.mxu0 0
      %2563 = vmatprep.subr.bf16.mxu0 0
      %2564 = vmatpush1.bf16.msra.mxu0 0
      %2565 = vmatprep.subr.bf16.mxu0 0
      %2566 = vmatpush1.bf16.msra.mxu0 0
      %2567 = vmatprep.subr.bf16.mxu0 0
      %2568 = vmatpush1.bf16.msra.mxu0 0
      %2569 = vmatprep.subr.bf16.mxu0 0
      %2570 = vmatpush1.bf16.msra.mxu0 0
      %2571 = vmatprep.subr.bf16.mxu0 0
      %2572 = vmatpush1.bf16.msra.mxu0 0
      %2573 = vmatprep.subr.bf16.mxu0 0
      %2574 = vmatpush1.bf16.msra.mxu0 0
      %2575 = vmatprep.subr.bf16.mxu0 0
      %2576 = vmatpush1.bf16.msra.mxu0 0
      %2577 = vmatprep.subr.bf16.mxu0 0
      %2578 = vmatpush1.bf16.msra.mxu0 0
      %2579 = vmatprep.subr.bf16.mxu0 0
      %2580 = vmatpush1.bf16.msra.mxu0 0
      %2581 = vmatprep.subr.bf16.mxu0 0
      %2582 = vmatpush1.bf16.msra.mxu0 0
      %2583 = vmatprep.subr.bf16.mxu0 0
      %2584 = vmatpush1.bf16.msra.mxu0 0
      %2585 = vmatprep.subr.bf16.mxu0 0
      %2586 = vmatpush1.bf16.msra.mxu0 0
      %2587 = vmatprep.mubr.bf16.mxu0 0
      %2588 = vmatmul.mubr.bf16.gmra.mrb[0].mxu0 %v2553
      %v2589 = vpop.f32.mrb[0].mxu0
      %v2590 = vadd.f32 %v2538, %v2589
      %v2591 = vpop.f32.mrb[0].mxu0
      %v2592 = vpop.f32.mrb[0].mxu0
      %v2593 = vpop.f32.mrb[0].mxu0
      %2594 = vdwg.mxu0
      %v2595 = vadd.f32 %v1853, %v2590
      %v2596 = vld [vmem:[%s45] sm:$0x1]
      %v2597 = vld [vmem:[%s47] sm:$0x1]
      %v2598 = vsel %vm1111, %v2595, 0.0
      %2599 = vadd.xlane.f32.xlu0 %v2598
      %v2600 = vpop.xlane.xlu0 %2599
      %v2601 = vmul.f32 %v2600, %v1829
      %v2602 = vsub.f32 %v2595, %v2601
      %v2603 = vmul.f32 %v2602, %v2602
      %v2604 = vsel %vm1111, %v2603, 0.0
      %2605 = vadd.xlane.f32.xlu0 %v2604
      %v2606 = vpop.xlane.xlu0 %2605
      %v2607 = vmul.f32 %v2606, %v1829
      %v2608 = vadd.f32 %v2607, 1e-05
      %v2609 = vrsqrt.pop %v2608
      %v2610 = vmul.f32 %v2602, %v2609
      %v2612 = vlaneseq
      %v2613 = vshrl.u32 %v2612, 7
      %v2614 = vsub.s32 0, %v2613
      %v2615 = vrot.slane %v2596, %v2614
      %v2617 = vmul.f32 %v2610, %v2615
      %v2619 = vlaneseq
      %v2620 = vshrl.u32 %v2619, 7
      %v2621 = vsub.s32 0, %v2620
      %v2622 = vrot.slane %v2597, %v2621
      %v2624 = vadd.f32 %v2617, %v2622
      %v2625 = vpack.c.bf16 %v2624, %v2624
      %v2626 = vld [vmem:[%s49] sm:$0xf]
      %v2627 = vld [vmem:[%s49 + $0x4] sm:$0xf]
      %v2628 = vld [vmem:[%s49 + $0x8] sm:$0xf]
      %v2629 = vld [vmem:[%s49 + $0xc] sm:$0xf]
      %v2630 = vld [vmem:[%s51] sm:$0x1]
      %v2632 = vlaneseq
      %v2633 = vshrl.u32 %v2632, 7
      %v2634 = vsub.s32 0, %v2633
      %v2635 = vrot.slane %v2630, %v2634
      %v2641 = vunpack.c.l.b16 %v2626
      %v2642 = vunpack.c.l.b16 %v2627
      %v2643 = vunpack.c.l.b16 %v2628
      %v2644 = vunpack.c.l.b16 %v2629
      %v2645 = vpack.c.b16 %v2642, %v2641
      %v2646 = vpack.c.b16 %v2644, %v2643
      %v2650 = vsel %vm1111, %v2625, 0
      %2652 = vmatprep.subr.bf16.mxu0 0
      %2653 = vmatpush1.bf16.msra.mxu0 %v2645
      %2654 = vmatprep.subr.bf16.mxu0 0
      %2655 = vmatpush1.bf16.msra.mxu0 %v2646
      %2656 = vmatprep.subr.bf16.mxu0 0
      %2657 = vmatpush1.bf16.msra.mxu0 0
      %2658 = vmatprep.subr.bf16.mxu0 0
      %2659 = vmatpush1.bf16.msra.mxu0 0
      %2660 = vmatprep.subr.bf16.mxu0 0
      %2661 = vmatpush1.bf16.msra.mxu0 0
      %2662 = vmatprep.subr.bf16.mxu0 0
      %2663 = vmatpush1.bf16.msra.mxu0 0
      %2664 = vmatprep.subr.bf16.mxu0 0
      %2665 = vmatpush1.bf16.msra.mxu0 0
      %2666 = vmatprep.subr.bf16.mxu0 0
      %2667 = vmatpush1.bf16.msra.mxu0 0
      %2668 = vmatprep.subr.bf16.mxu0 0
      %2669 = vmatpush1.bf16.msra.mxu0 0
      %2670 = vmatprep.subr.bf16.mxu0 0
      %2671 = vmatpush1.bf16.msra.mxu0 0
      %2672 = vmatprep.subr.bf16.mxu0 0
      %2673 = vmatpush1.bf16.msra.mxu0 0
      %2674 = vmatprep.subr.bf16.mxu0 0
      %2675 = vmatpush1.bf16.msra.mxu0 0
      %2676 = vmatprep.subr.bf16.mxu0 0
      %2677 = vmatpush1.bf16.msra.mxu0 0
      %2678 = vmatprep.subr.bf16.mxu0 0
      %2679 = vmatpush1.bf16.msra.mxu0 0
      %2680 = vmatprep.subr.bf16.mxu0 0
      %2681 = vmatpush1.bf16.msra.mxu0 0
      %2682 = vmatprep.subr.bf16.mxu0 0
      %2683 = vmatpush1.bf16.msra.mxu0 0
      %2684 = vmatprep.mubr.bf16.mxu0 0
      %2685 = vmatmul.mubr.bf16.gmra.mrb[0].mxu0 %v2650
      %v2686 = vpop.f32.mrb[0].mxu0
      %v2687 = vadd.f32 %v2635, %v2686
      %v2688 = vpop.f32.mrb[0].mxu0
      %v2689 = vpop.f32.mrb[0].mxu0
      %v2690 = vpop.f32.mrb[0].mxu0
      %2691 = vdwg.mxu0
      %v2692 = vmax.f32 %v2687, 0.0
      %v2693 = vpack.c.bf16 %v2692, %v2692
      %v2694 = vld [vmem:[%s53] sm:$0xf]
      %v2695 = vld [vmem:[%s53 + $0x4] sm:$0xf]
      %v2696 = vld [vmem:[%s53 + $0x8] sm:$0xf]
      %v2697 = vld [vmem:[%s53 + $0xc] sm:$0xf]
      %v2698 = vld [vmem:[%s53 + $0x10] sm:$0xf]
      %v2699 = vld [vmem:[%s53 + $0x14] sm:$0xf]
      %v2700 = vld [vmem:[%s53 + $0x18] sm:$0xf]
      %v2701 = vld [vmem:[%s53 + $0x1c] sm:$0xf]
      %v2710 = vunpack.c.l.b16 %v2694
      %v2711 = vunpack.c.l.b16 %v2695
      %v2712 = vunpack.c.l.b16 %v2696
      %v2713 = vunpack.c.l.b16 %v2697
      %v2714 = vunpack.c.l.b16 %v2698
      %v2715 = vunpack.c.l.b16 %v2699
      %v2716 = vunpack.c.l.b16 %v2700
      %v2717 = vunpack.c.l.b16 %v2701
      %v2718 = vpack.c.b16 %v2711, %v2710
      %v2719 = vpack.c.b16 %v2713, %v2712
      %v2720 = vpack.c.b16 %v2715, %v2714
      %v2721 = vpack.c.b16 %v2717, %v2716
      %vm2726 = vcmask 523264
      %v2728 = vsel %vm2726, %v2693, 0
      %2730 = vmatprep.subr.bf16.mxu0 0
      %2731 = vmatpush1.bf16.msra.mxu0 %v2718
      %2732 = vmatprep.subr.bf16.mxu0 0
      %2733 = vmatpush1.bf16.msra.mxu0 %v2719
      %2734 = vmatprep.subr.bf16.mxu0 0
      %2735 = vmatpush1.bf16.msra.mxu0 %v2720
      %2736 = vmatprep.subr.bf16.mxu0 0
      %2737 = vmatpush1.bf16.msra.mxu0 %v2721
      %2738 = vmatprep.subr.bf16.mxu0 0
      %2739 = vmatpush1.bf16.msra.mxu0 0
      %2740 = vmatprep.subr.bf16.mxu0 0
      %2741 = vmatpush1.bf16.msra.mxu0 0
      %2742 = vmatprep.subr.bf16.mxu0 0
      %2743 = vmatpush1.bf16.msra.mxu0 0
      %2744 = vmatprep.subr.bf16.mxu0 0
      %2745 = vmatpush1.bf16.msra.mxu0 0
      %2746 = vmatprep.subr.bf16.mxu0 0
      %2747 = vmatpush1.bf16.msra.mxu0 0
      %2748 = vmatprep.subr.bf16.mxu0 0
      %2749 = vmatpush1.bf16.msra.mxu0 0
      %2750 = vmatprep.subr.bf16.mxu0 0
      %2751 = vmatpush1.bf16.msra.mxu0 0
      %2752 = vmatprep.subr.bf16.mxu0 0
      %2753 = vmatpush1.bf16.msra.mxu0 0
      %2754 = vmatprep.subr.bf16.mxu0 0
      %2755 = vmatpush1.bf16.msra.mxu0 0
      %2756 = vmatprep.subr.bf16.mxu0 0
      %2757 = vmatpush1.bf16.msra.mxu0 0
      %2758 = vmatprep.subr.bf16.mxu0 0
      %2759 = vmatpush1.bf16.msra.mxu0 0
      %2760 = vmatprep.subr.bf16.mxu0 0
      %2761 = vmatpush1.bf16.msra.mxu0 0
      %2762 = vmatprep.mubr.bf16.mxu0 0
      %2763 = vmatmul.mubr.bf16.gmra.mrb[0].mxu0 %v2728
      %v2764 = vpop.f32.mrb[0].mxu0
      %v2765 = vadd.f32 0.0, %v2764
      %v2766 = vpop.f32.mrb[0].mxu0
      %v2767 = vpop.f32.mrb[0].mxu0
      %v2768 = vpop.f32.mrb[0].mxu0
      %2769 = vdwg.mxu0
      %v2770 = vadd.f32 %v2624, %v2765
      %v2771 = vld [vmem:[%s55] sm:$0x1]
      %v2773 = vlaneseq
      %v2774 = vshrl.u32 %v2773, 7
      %v2775 = vsub.s32 0, %v2774
      %v2776 = vrot.slane %v2771, %v2775
      %v2778 = vadd.f32 %v2770, %v2776
      %v2779 = vld [vmem:[%s57] sm:$0x1]
      %v2780 = vld [vmem:[%s59] sm:$0x1]
      %v2781 = vsel %vm1111, %v2778, 0.0
      %2782 = vadd.xlane.f32.xlu0 %v2781
      %v2783 = vpop.xlane.xlu0 %2782
      %v2784 = vmul.f32 %v2783, %v1829
      %v2785 = vsub.f32 %v2778, %v2784
      %v2786 = vmul.f32 %v2785, %v2785
      %v2787 = vsel %vm1111, %v2786, 0.0
      %2788 = vadd.xlane.f32.xlu0 %v2787
      %v2789 = vpop.xlane.xlu0 %2788
      %v2790 = vmul.f32 %v2789, %v1829
      %v2791 = vadd.f32 %v2790, 1e-05
      %v2792 = vrsqrt.pop %v2791
      %v2793 = vmul.f32 %v2785, %v2792
      %v2795 = vlaneseq
      %v2796 = vshrl.u32 %v2795, 7
      %v2797 = vsub.s32 0, %v2796
      %v2798 = vrot.slane %v2779, %v2797
      %v2800 = vmul.f32 %v2793, %v2798
      %v2802 = vlaneseq
      %v2803 = vshrl.u32 %v2802, 7
      %v2804 = vsub.s32 0, %v2803
      %v2805 = vrot.slane %v2780, %v2804
      %v2807 = vadd.f32 %v2800, %v2805
      %2808 = vst.msk [vmem:[%s1073] sm:$0xff] %vm1111, %v2807
      %v2809 = vld [vmem:[%s61] sm:$0x1]
      %v2810 = vld [vmem:[%s63] sm:$0x1]
      %v2811 = vsel %vm1111, %v2807, 0.0
      %2812 = vadd.xlane.f32.xlu0 %v2811
      %v2813 = vpop.xlane.xlu0 %2812
      %v2814 = vmul.f32 %v2813, %v1829
      %v2815 = vsub.f32 %v2807, %v2814
      %v2816 = vmul.f32 %v2815, %v2815
      %v2817 = vsel %vm1111, %v2816, 0.0
      %2818 = vadd.xlane.f32.xlu0 %v2817
      %v2819 = vpop.xlane.xlu0 %2818
      %v2820 = vmul.f32 %v2819, %v1829
      %v2821 = vadd.f32 %v2820, 1e-05
      %v2822 = vrsqrt.pop %v2821
      %v2823 = vmul.f32 %v2815, %v2822
      %v2825 = vlaneseq
      %v2826 = vshrl.u32 %v2825, 7
      %v2827 = vsub.s32 0, %v2826
      %v2828 = vrot.slane %v2809, %v2827
      %v2830 = vmul.f32 %v2823, %v2828
      %v2832 = vlaneseq
      %v2833 = vshrl.u32 %v2832, 7
      %v2834 = vsub.s32 0, %v2833
      %v2835 = vrot.slane %v2810, %v2834
      %v2837 = vadd.f32 %v2830, %v2835
      %2838 = vst.msk [vmem:[%s1077] sm:$0xff] %vm1111, %v2837
      %p2839 = scmp.lt.s32.totalorder %s79, 1
      %s2840 = scalar_select %p2839, %s79, 1
      %s2841 = smul.addr %s2840, 8
      %s2842 = scalar_lea.vmem %s65, %s2841
      %p2843 = scmp.lt.s32.totalorder %s79, 1
      %s2844 = scalar_select %p2843, %s79, 1
      %s2845 = smul.addr %s2844, 8
      %s2846 = scalar_lea.vmem %s67, %s2845
      // Predicated region
      $region149: #{transformer_decoder_forward.2} parent=147 // pred_check
        %p2847 = pneg %p789
      $region150: #{transformer_decoder_forward.2} parent=147 // pred_check_branch
        %2849 = sbr.rel (%p2847) target = $region152
      $region151: #{transformer_decoder_forward.2} parent=147 // pred_region
        _
      $region152: #{transformer_decoder_forward.2} parent=147 // pred_fallthru
        _
      // Predicated region
      $region153: #{transformer_decoder_forward.2} parent=147 // pred_check
        %p2850 = pneg %p815
      $region154: #{transformer_decoder_forward.2} parent=147 // pred_check_branch
        %2852 = sbr.rel (%p2850) target = $region156
      $region155: #{transformer_decoder_forward.2} parent=147 // pred_region
        _
      $region156: #{transformer_decoder_forward.2} parent=147 // pred_fallthru
        _
    $region148: #{transformer_decoder_forward.2} parent=5 // pred_fallthru
      _
    %p2853 = scmp.le.s32.totalorder 2, %s74
    // Predicated region
    $region157: #{transformer_decoder_forward.2} parent=5 // pred_check
      %p2854 = pneg %p2853
    $region158: #{transformer_decoder_forward.2} parent=5 // pred_check_branch
      %2856 = sbr.rel (%p2854) target = $region160
    $region159: #{transformer_decoder_forward.2} parent=5 // pred_region
      %s2857 = ssub.s32 %s74, 2
      // Predicated region
      $region161: #{transformer_decoder_forward.2} parent=159 // pred_check
        %p2858 = pneg %p795
      $region162: #{transformer_decoder_forward.2} parent=159 // pred_check_branch
        %2860 = sbr.rel (%p2858) target = $region164
      $region163: #{transformer_decoder_forward.2} parent=159 // pred_region
        %p2861 = scmp.lt.s32.totalorder %s80, 1
        %s2862 = scalar_select %p2861, %s80, 1
        %s2863 = smul.addr %s2862, 8
        %s2864 = scalar_lea.vmem %s65, %s2863
      $region164: #{transformer_decoder_forward.2} parent=159 // pred_fallthru
        _
      // Predicated region
      $region165: #{transformer_decoder_forward.2} parent=159 // pred_check
        %p2865 = pneg %p821
      $region166: #{transformer_decoder_forward.2} parent=159 // pred_check_branch
        %2867 = sbr.rel (%p2865) target = $region168
      $region167: #{transformer_decoder_forward.2} parent=159 // pred_region
        %p2868 = scmp.lt.s32.totalorder %s80, 1
        %s2869 = scalar_select %p2868, %s80, 1
        %s2870 = smul.addr %s2869, 8
        %s2871 = scalar_lea.vmem %s67, %s2870
      $region168: #{transformer_decoder_forward.2} parent=159 // pred_fallthru
        _
    $region160: #{transformer_decoder_forward.2} parent=5 // pred_fallthru
      _
  $region6: #{transformer_decoder_forward.2} parent=0 // loop_footer
    %s78 = sadd.s32 1, %s74
  $region7: #{transformer_decoder_forward.2} parent=0 // loop_footer_branch
    %73 = sbr.rel target = $region3
  $region8: #{transformer_decoder_forward.2} parent=0 // loop_exit
    _

// kernel: transformer_decoder_forward.3
$region0: #{transformer_decoder_forward.3}
  #allocation0 [shape = 'u32[]', space=smem, size = 0x4, offset = 0x4, fixed_abs, tag = 'smem constant byte address 0x4 - core index']
  #allocation1 [shape = 'u32[144,128]{1,0:T(1,128)}', space=vmem, size = 0x12000, scoped, tag = 'internal scratch']
  #allocation2 [shape = 'bf16[8,32]{1,0:T(8,128)(2,1)}', space=vmem, size = 0x800, scoped, tag = 'scratch operand']
  %s0 = inlined_call_operand.smem [shape: u32[34], index: -1, kind: input, shape index: {}]
  %s1 = sld [smem:[%s0]]
  %s2 = scalar_lea.smem %s0, 1
  %s3 = sld [smem:[%s2]]
  %s4 = scalar_lea.smem %s0, 2
  %s5 = sld [smem:[%s4]]
  %s6 = scalar_lea.smem %s0, 3
  %s7 = sld [smem:[%s6]]
  %s8 = scalar_lea.smem %s0, 4
  %s9 = sld [smem:[%s8]]
  %s10 = scalar_lea.smem %s0, 5
  %s11 = sld [smem:[%s10]]
  %s12 = scalar_lea.smem %s0, 6
  %s13 = sld [smem:[%s12]]
  %s14 = scalar_lea.smem %s0, 7
  %s15 = sld [smem:[%s14]]
  %s16 = scalar_lea.smem %s0, 8
  %s17 = sld [smem:[%s16]]
  %s18 = scalar_lea.smem %s0, 9
  %s19 = sld [smem:[%s18]]
  %s20 = scalar_lea.smem %s0, 10
  %s21 = sld [smem:[%s20]]
  %s22 = scalar_lea.smem %s0, 11
  %s23 = sld [smem:[%s22]]
  %s24 = scalar_lea.smem %s0, 12
  %s25 = sld [smem:[%s24]]
  %s26 = scalar_lea.smem %s0, 13
  %s27 = sld [smem:[%s26]]
  %s28 = scalar_lea.smem %s0, 14
  %s29 = sld [smem:[%s28]]
  %s30 = scalar_lea.smem %s0, 15
  %s31 = sld [smem:[%s30]]
  %s32 = scalar_lea.smem %s0, 16
  %s33 = sld [smem:[%s32]]
  %s34 = scalar_lea.smem %s0, 17
  %s35 = sld [smem:[%s34]]
  %s36 = scalar_lea.smem %s0, 18
  %s37 = sld [smem:[%s36]]
  %s38 = scalar_lea.smem %s0, 19
  %s39 = sld [smem:[%s38]]
  %s40 = scalar_lea.smem %s0, 20
  %s41 = sld [smem:[%s40]]
  %s42 = scalar_lea.smem %s0, 21
  %s43 = sld [smem:[%s42]]
  %s44 = scalar_lea.smem %s0, 22
  %s45 = sld [smem:[%s44]]
  %s46 = scalar_lea.smem %s0, 23
  %s47 = sld [smem:[%s46]]
  %s48 = scalar_lea.smem %s0, 24
  %s49 = sld [smem:[%s48]]
  %s50 = scalar_lea.smem %s0, 25
  %s51 = sld [smem:[%s50]]
  %s52 = scalar_lea.smem %s0, 26
  %s53 = sld [smem:[%s52]]
  %s54 = scalar_lea.smem %s0, 27
  %s55 = sld [smem:[%s54]]
  %s56 = scalar_lea.smem %s0, 28
  %s57 = sld [smem:[%s56]]
  %s58 = scalar_lea.smem %s0, 29
  %s59 = sld [smem:[%s58]]
  %s60 = scalar_lea.smem %s0, 30
  %s61 = sld [smem:[%s60]]
  %s62 = scalar_lea.smem %s0, 31
  %s63 = sld [smem:[%s62]]
  %s64 = scalar_lea.smem %s0, 32
  %s65 = sld [smem:[%s64]]
  %s66 = scalar_lea.smem %s0, 33
  %s67 = sld [smem:[%s66]]
  %68 = xla_tuple %s65, %s67
  %s69 = sld [smem:[#allocation0]]
  $region225: #{transformer_decoder_forward.3} parent=0
    _
  %s71 = ssub.s32 1, %s69
  %s72 = scalar_select 0, %s71, %s69
  $region1: #{transformer_decoder_forward.3} parent=0
    #allocation3 [shape = 'u8[512]{0}', space=vmem, size = 0x400, scoped, tag = 'input window, operand 9, single buffered']
    #allocation4 [shape = 's32[2]{0}', space=sflag, size = 0x8, scoped, tag = 'scoped memory for transformer_decoder_forward.3']
    #allocation5 [shape = 's32[2]{0}', space=sflag, size = 0x8, scoped, tag = 'scoped memory for transformer_decoder_forward.3']
    #allocation6 [shape = 'u8[512]{0}', space=vmem, size = 0x400, scoped, tag = 'input window, operand 11, single buffered']
    #allocation7 [shape = 's32[1]{0}', space=sflag, size = 0x4, scoped, tag = 'scoped memory for transformer_decoder_forward.3']
    #allocation8 [shape = 'u8[512]{0}', space=vmem, size = 0x400, scoped, tag = 'input window, operand 12, single buffered']
    #allocation9 [shape = 'u8[512]{0}', space=vmem, size = 0x400, scoped, tag = 'input window, operand 13, single buffered']
    #allocation10 [shape = 's32[1]{0}', space=sflag, size = 0x4, scoped, tag = 'scoped memory for transformer_decoder_forward.3']
    #allocation11 [shape = 'u8[512]{0}', space=vmem, size = 0x400, scoped, tag = 'input window, operand 15, single buffered']
    #allocation12 [shape = 'u8[512]{0}', space=vmem, size = 0x400, scoped, tag = 'input window, operand 17, single buffered']
    #allocation13 [shape = 's32[1]{0}', space=sflag, size = 0x4, scoped, tag = 'scoped memory for transformer_decoder_forward.3']
    #allocation14 [shape = 'u8[512]{0}', space=vmem, size = 0x400, scoped, tag = 'input window, operand 19, single buffered']
    #allocation15 [shape = 'u8[512]{0}', space=vmem, size = 0x400, scoped, tag = 'input window, operand 21, single buffered']
    #allocation16 [shape = 's32[1]{0}', space=sflag, size = 0x4, scoped, tag = 'scoped memory for transformer_decoder_forward.3']
    #allocation17 [shape = 'u8[512]{0}', space=vmem, size = 0x400, scoped, tag = 'input window, operand 22, single buffered']
    #allocation18 [shape = 'u8[512]{0}', space=vmem, size = 0x400, scoped, tag = 'input window, operand 23, single buffered']
    #allocation19 [shape = 's32[1]{0}', space=sflag, size = 0x4, scoped, tag = 'scoped memory for transformer_decoder_forward.3']
    #allocation20 [shape = 'u8[512]{0}', space=vmem, size = 0x400, scoped, tag = 'input window, operand 25, single buffered']
    #allocation21 [shape = 'u8[512]{0}', space=vmem, size = 0x400, scoped, tag = 'input window, operand 27, single buffered']
    #allocation22 [shape = 's32[1]{0}', space=sflag, size = 0x4, scoped, tag = 'scoped memory for transformer_decoder_forward.3']
    #allocation23 [shape = 'u8[512]{0}', space=vmem, size = 0x400, scoped, tag = 'input window, operand 28, single buffered']
    #allocation24 [shape = 'u8[512]{0}', space=vmem, size = 0x400, scoped, tag = 'input window, operand 29, single buffered']
    #allocation25 [shape = 's32[1]{0}', space=sflag, size = 0x4, scoped, tag = 'scoped memory for transformer_decoder_forward.3']
    #allocation26 [shape = 'u8[8192]{0}', space=vmem, size = 0x2000, scoped, tag = 'output window, operand 0']
    %73 = vsyncpa [#allocation4], 0
    %74 = vsyncpa [#allocation7], 0
    %75 = vsyncpa [#allocation10], 0
    %76 = vsyncpa [#allocation13], 0
    %77 = vsyncpa [#allocation16], 0
    %78 = vsyncpa [#allocation19], 0
    %79 = vsyncpa [#allocation22], 0
    %80 = vsyncpa [#allocation25], 0
    %81 = vsyncpa [#allocation5], 0
    %s82 = scalar_lea.sflag [#allocation5], 1
    %83 = vsyncpa %s82, 0
    loop: start=0, step=1, limit=4
    $region2: #{transformer_decoder_forward.3} parent=1 // loop_pre_header
      _
    $region3: #{transformer_decoder_forward.3} parent=1 // loop_header
      %s85 = sphi 0, %s89
      %p86 = scmp.ge.s32.totalorder %s85, 4
      %s95 = sphi 0, %s97
      %s98 = sphi 0, %s95
      %s99 = sphi 0, %s98
      %s115 = sphi 0, %s99
      %s121 = sphi 0, %s123
      %s124 = sphi 0, %s121
      %s125 = sphi 0, %s124
      %s141 = sphi 0, %s125
      %s147 = sphi 0, %s149
      %s150 = sphi 0, %s147
      %s151 = sphi 0, %s150
      %s167 = sphi 0, %s151
      %s173 = sphi 0, %s175
      %s176 = sphi 0, %s173
      %s177 = sphi 0, %s176
      %s193 = sphi 0, %s177
      %s197 = sphi 0, %s197
      %s199 = sphi 0, %s197
      %s200 = sphi 0, %s199
      %s214 = sphi 0, %s200
      %s218 = sphi 0, %s218
      %s220 = sphi 0, %s218
      %s221 = sphi 0, %s220
      %s235 = sphi 0, %s221
      %s239 = sphi 0, %s239
      %s241 = sphi 0, %s239
      %s242 = sphi 0, %s241
      %s256 = sphi 0, %s242
      %s260 = sphi 0, %s260
      %s262 = sphi 0, %s260
      %s263 = sphi 0, %s262
      %s277 = sphi 0, %s263
      %s281 = sphi 0, %s281
      %s283 = sphi 0, %s281
      %s284 = sphi 0, %s283
      %s298 = sphi 0, %s284
      %s302 = sphi 0, %s302
      %s304 = sphi 0, %s302
      %s305 = sphi 0, %s304
      %s319 = sphi 0, %s305
      %s323 = sphi 0, %s323
      %s325 = sphi 0, %s323
      %s326 = sphi 0, %s325
      %s340 = sphi 0, %s326
      %s344 = sphi 0, %s344
      %s346 = sphi 0, %s344
      %s347 = sphi 0, %s346
      %s361 = sphi 0, %s347
      %s365 = sphi 0, %s365
      %s367 = sphi 0, %s365
      %s368 = sphi 0, %s367
      %s382 = sphi 0, %s368
      %s386 = sphi 0, %s386
      %s388 = sphi 0, %s386
      %s389 = sphi 0, %s388
      %s403 = sphi 0, %s389
      %s407 = sphi 0, %s407
      %s409 = sphi 0, %s407
      %s410 = sphi 0, %s409
      %s424 = sphi 0, %s410
      %s428 = sphi 0, %s428
      %s430 = sphi 0, %s428
      %s431 = sphi 0, %s430
      %s445 = sphi 0, %s431
      %s449 = sphi 0, %s449
      %s451 = sphi 0, %s449
      %s452 = sphi 0, %s451
      %s466 = sphi 0, %s452
      %s470 = sphi 0, %s470
      %s472 = sphi 0, %s470
      %s473 = sphi 0, %s472
      %s487 = sphi 0, %s473
      %s491 = sphi 0, %s491
      %s493 = sphi 0, %s491
      %s494 = sphi 0, %s493
      %s508 = sphi 0, %s494
      %s512 = sphi 0, %s512
      %s514 = sphi 0, %s512
      %s515 = sphi 0, %s514
      %s529 = sphi 0, %s515
      %s533 = sphi 0, %s533
      %s535 = sphi 0, %s533
      %s536 = sphi 0, %s535
      %s550 = sphi 0, %s536
      %s554 = sphi 0, %s554
      %s556 = sphi 0, %s554
      %s557 = sphi 0, %s556
      %s571 = sphi 0, %s557
      %s575 = sphi 0, %s575
      %s577 = sphi 0, %s575
      %s578 = sphi 0, %s577
      %s592 = sphi 0, %s578
      %s596 = sphi 0, %s596
      %s598 = sphi 0, %s596
      %s599 = sphi 0, %s598
      %s613 = sphi 0, %s599
      %s617 = sphi 0, %s617
      %s619 = sphi 0, %s617
      %s620 = sphi 0, %s619
      %s634 = sphi 0, %s620
      %s638 = sphi 0, %s638
      %s640 = sphi 0, %s638
      %s641 = sphi 0, %s640
      %s655 = sphi 0, %s641
      %s659 = sphi 0, %s659
      %s661 = sphi 0, %s659
      %s662 = sphi 0, %s661
      %s676 = sphi 0, %s662
      %s680 = sphi 0, %s680
      %s682 = sphi 0, %s680
      %s683 = sphi 0, %s682
      %s697 = sphi 0, %s683
      %s701 = sphi 0, %s701
      %s703 = sphi 0, %s701
      %s704 = sphi 0, %s703
      %s718 = sphi 0, %s704
      %s722 = sphi 0, %s722
      %s724 = sphi 0, %s722
      %s725 = sphi 0, %s724
      %s739 = sphi 0, %s725
      %s743 = sphi 0, %s743
      %s745 = sphi 0, %s743
      %s746 = sphi 0, %s745
      %s760 = sphi 0, %s746
      %s764 = sphi 0, %s764
      %s766 = sphi 0, %s764
      %s767 = sphi 0, %s766
      %s781 = sphi 0, %s767
      %s787 = sphi 0, %s789
      %s790 = sphi 0, %s787
      %s791 = sphi 0, %s790
      %s807 = sphi 0, %s791
      %s813 = sphi 0, %s815
      %s816 = sphi 0, %s813
      %s817 = sphi 0, %s816
      %s833 = sphi 0, %s817
    $region4: #{transformer_decoder_forward.3} parent=1 // loop_header_branch
      %88 = sbr.rel (%p86) target = $region8
    $region5: #{transformer_decoder_forward.3} parent=1 // loop_body
      %s90 = ssub.s32 %s85, 1
      %s91 = ssub.s32 %s85, 2
      %s92 = sadd.s32 %s85, 1
      %s93 = ssub.s32 %s85, %s92
      %p94 = scmp.eq.s32.totalorder %s93, 0
      %s96 = sadd.s32 %s95, 1
      %s97 = scalar_select %p94, %s95, %s96
      %p100 = pneg %p94
      %p101 = scmp.eq.s32.totalorder %s85, 1
      %p102 = por %p100, %p101
      %p103 = scmp.ne.s32.totalorder %s95, %s98
      %p104 = scmp.eq.s32.totalorder %s85, 0
      %p105 = por %p103, %p104
      %p106 = scmp.ne.s32.totalorder %s95, %s98
      %p107 = scmp.eq.s32.totalorder %s90, 1
      %p108 = por %p106, %p107
      %p109 = scmp.ne.s32.totalorder %s98, %s99
      %p110 = scmp.eq.s32.totalorder %s90, 0
      %p111 = por %p109, %p110
      %p112 = scmp.ne.s32.totalorder %s98, %s99
      %p113 = scmp.eq.s32.totalorder %s91, 1
      %p114 = por %p112, %p113
      %p116 = scmp.ne.s32.totalorder %s99, %s115
      %p117 = scmp.eq.s32.totalorder %s91, 0
      %p118 = por %p116, %p117
      %s119 = ssub.s32 %s85, %s92
      %p120 = scmp.eq.s32.totalorder %s119, 0
      %s122 = sadd.s32 %s121, 1
      %s123 = scalar_select %p120, %s121, %s122
      %p126 = pneg %p120
      %p127 = scmp.eq.s32.totalorder %s85, 1
      %p128 = por %p126, %p127
      %p129 = scmp.ne.s32.totalorder %s121, %s124
      %p130 = scmp.eq.s32.totalorder %s85, 0
      %p131 = por %p129, %p130
      %p132 = scmp.ne.s32.totalorder %s121, %s124
      %p133 = scmp.eq.s32.totalorder %s90, 1
      %p134 = por %p132, %p133
      %p135 = scmp.ne.s32.totalorder %s124, %s125
      %p136 = scmp.eq.s32.totalorder %s90, 0
      %p137 = por %p135, %p136
      %p138 = scmp.ne.s32.totalorder %s124, %s125
      %p139 = scmp.eq.s32.totalorder %s91, 1
      %p140 = por %p138, %p139
      %p142 = scmp.ne.s32.totalorder %s125, %s141
      %p143 = scmp.eq.s32.totalorder %s91, 0
      %p144 = por %p142, %p143
      %s145 = ssub.s32 %s85, %s92
      %p146 = scmp.eq.s32.totalorder %s145, 0
      %s148 = sadd.s32 %s147, 1
      %s149 = scalar_select %p146, %s147, %s148
      %p152 = pneg %p146
      %p153 = scmp.eq.s32.totalorder %s85, 1
      %p154 = por %p152, %p153
      %p155 = scmp.ne.s32.totalorder %s147, %s150
      %p156 = scmp.eq.s32.totalorder %s85, 0
      %p157 = por %p155, %p156
      %p158 = scmp.ne.s32.totalorder %s147, %s150
      %p159 = scmp.eq.s32.totalorder %s90, 1
      %p160 = por %p158, %p159
      %p161 = scmp.ne.s32.totalorder %s150, %s151
      %p162 = scmp.eq.s32.totalorder %s90, 0
      %p163 = por %p161, %p162
      %p164 = scmp.ne.s32.totalorder %s150, %s151
      %p165 = scmp.eq.s32.totalorder %s91, 1
      %p166 = por %p164, %p165
      %p168 = scmp.ne.s32.totalorder %s151, %s167
      %p169 = scmp.eq.s32.totalorder %s91, 0
      %p170 = por %p168, %p169
      %s171 = ssub.s32 %s85, %s92
      %p172 = scmp.eq.s32.totalorder %s171, 0
      %s174 = sadd.s32 %s173, 1
      %s175 = scalar_select %p172, %s173, %s174
      %p178 = pneg %p172
      %p179 = scmp.eq.s32.totalorder %s85, 1
      %p180 = por %p178, %p179
      %p181 = scmp.ne.s32.totalorder %s173, %s176
      %p182 = scmp.eq.s32.totalorder %s85, 0
      %p183 = por %p181, %p182
      %p184 = scmp.ne.s32.totalorder %s173, %s176
      %p185 = scmp.eq.s32.totalorder %s90, 1
      %p186 = por %p184, %p185
      %p187 = scmp.ne.s32.totalorder %s176, %s177
      %p188 = scmp.eq.s32.totalorder %s90, 0
      %p189 = por %p187, %p188
      %p190 = scmp.ne.s32.totalorder %s176, %s177
      %p191 = scmp.eq.s32.totalorder %s91, 1
      %p192 = por %p190, %p191
      %p194 = scmp.ne.s32.totalorder %s177, %s193
      %p195 = scmp.eq.s32.totalorder %s91, 0
      %p196 = por %p194, %p195
      %s198 = sadd.s32 %s197, 1
      %p201 = scmp.eq.s32.totalorder %s85, 1
      %p202 = scmp.ne.s32.totalorder %s197, %s199
      %p203 = scmp.eq.s32.totalorder %s85, 0
      %p204 = por %p202, %p203
      %p205 = scmp.ne.s32.totalorder %s197, %s199
      %p206 = scmp.eq.s32.totalorder %s90, 1
      %p207 = por %p205, %p206
      %p208 = scmp.ne.s32.totalorder %s199, %s200
      %p209 = scmp.eq.s32.totalorder %s90, 0
      %p210 = por %p208, %p209
      %p211 = scmp.ne.s32.totalorder %s199, %s200
      %p212 = scmp.eq.s32.totalorder %s91, 1
      %p213 = por %p211, %p212
      %p215 = scmp.ne.s32.totalorder %s200, %s214
      %p216 = scmp.eq.s32.totalorder %s91, 0
      %p217 = por %p215, %p216
      %s219 = sadd.s32 %s218, 1
      %p222 = scmp.eq.s32.totalorder %s85, 1
      %p223 = scmp.ne.s32.totalorder %s218, %s220
      %p224 = scmp.eq.s32.totalorder %s85, 0
      %p225 = por %p223, %p224
      %p226 = scmp.ne.s32.totalorder %s218, %s220
      %p227 = scmp.eq.s32.totalorder %s90, 1
      %p228 = por %p226, %p227
      %p229 = scmp.ne.s32.totalorder %s220, %s221
      %p230 = scmp.eq.s32.totalorder %s90, 0
      %p231 = por %p229, %p230
      %p232 = scmp.ne.s32.totalorder %s220, %s221
      %p233 = scmp.eq.s32.totalorder %s91, 1
      %p234 = por %p232, %p233
      %p236 = scmp.ne.s32.totalorder %s221, %s235
      %p237 = scmp.eq.s32.totalorder %s91, 0
      %p238 = por %p236, %p237
      %s240 = sadd.s32 %s239, 1
      %p243 = scmp.eq.s32.totalorder %s85, 1
      %p244 = scmp.ne.s32.totalorder %s239, %s241
      %p245 = scmp.eq.s32.totalorder %s85, 0
      %p246 = por %p244, %p245
      %p247 = scmp.ne.s32.totalorder %s239, %s241
      %p248 = scmp.eq.s32.totalorder %s90, 1
      %p249 = por %p247, %p248
      %p250 = scmp.ne.s32.totalorder %s241, %s242
      %p251 = scmp.eq.s32.totalorder %s90, 0
      %p252 = por %p250, %p251
      %p253 = scmp.ne.s32.totalorder %s241, %s242
      %p254 = scmp.eq.s32.totalorder %s91, 1
      %p255 = por %p253, %p254
      %p257 = scmp.ne.s32.totalorder %s242, %s256
      %p258 = scmp.eq.s32.totalorder %s91, 0
      %p259 = por %p257, %p258
      %s261 = sadd.s32 %s260, 1
      %p264 = scmp.eq.s32.totalorder %s85, 1
      %p265 = scmp.ne.s32.totalorder %s260, %s262
      %p266 = scmp.eq.s32.totalorder %s85, 0
      %p267 = por %p265, %p266
      %p268 = scmp.ne.s32.totalorder %s260, %s262
      %p269 = scmp.eq.s32.totalorder %s90, 1
      %p270 = por %p268, %p269
      %p271 = scmp.ne.s32.totalorder %s262, %s263
      %p272 = scmp.eq.s32.totalorder %s90, 0
      %p273 = por %p271, %p272
      %p274 = scmp.ne.s32.totalorder %s262, %s263
      %p275 = scmp.eq.s32.totalorder %s91, 1
      %p276 = por %p274, %p275
      %p278 = scmp.ne.s32.totalorder %s263, %s277
      %p279 = scmp.eq.s32.totalorder %s91, 0
      %p280 = por %p278, %p279
      %s282 = sadd.s32 %s281, 1
      %p285 = scmp.eq.s32.totalorder %s85, 1
      %p286 = scmp.ne.s32.totalorder %s281, %s283
      %p287 = scmp.eq.s32.totalorder %s85, 0
      %p288 = por %p286, %p287
      %p289 = scmp.ne.s32.totalorder %s281, %s283
      %p290 = scmp.eq.s32.totalorder %s90, 1
      %p291 = por %p289, %p290
      %p292 = scmp.ne.s32.totalorder %s283, %s284
      %p293 = scmp.eq.s32.totalorder %s90, 0
      %p294 = por %p292, %p293
      %p295 = scmp.ne.s32.totalorder %s283, %s284
      %p296 = scmp.eq.s32.totalorder %s91, 1
      %p297 = por %p295, %p296
      %p299 = scmp.ne.s32.totalorder %s284, %s298
      %p300 = scmp.eq.s32.totalorder %s91, 0
      %p301 = por %p299, %p300
      %s303 = sadd.s32 %s302, 1
      %p306 = scmp.eq.s32.totalorder %s85, 1
      %p307 = scmp.ne.s32.totalorder %s302, %s304
      %p308 = scmp.eq.s32.totalorder %s85, 0
      %p309 = por %p307, %p308
      %p310 = scmp.ne.s32.totalorder %s302, %s304
      %p311 = scmp.eq.s32.totalorder %s90, 1
      %p312 = por %p310, %p311
      %p313 = scmp.ne.s32.totalorder %s304, %s305
      %p314 = scmp.eq.s32.totalorder %s90, 0
      %p315 = por %p313, %p314
      %p316 = scmp.ne.s32.totalorder %s304, %s305
      %p317 = scmp.eq.s32.totalorder %s91, 1
      %p318 = por %p316, %p317
      %p320 = scmp.ne.s32.totalorder %s305, %s319
      %p321 = scmp.eq.s32.totalorder %s91, 0
      %p322 = por %p320, %p321
      %s324 = sadd.s32 %s323, 1
      %p327 = scmp.eq.s32.totalorder %s85, 1
      %p328 = scmp.ne.s32.totalorder %s323, %s325
      %p329 = scmp.eq.s32.totalorder %s85, 0
      %p330 = por %p328, %p329
      %p331 = scmp.ne.s32.totalorder %s323, %s325
      %p332 = scmp.eq.s32.totalorder %s90, 1
      %p333 = por %p331, %p332
      %p334 = scmp.ne.s32.totalorder %s325, %s326
      %p335 = scmp.eq.s32.totalorder %s90, 0
      %p336 = por %p334, %p335
      %p337 = scmp.ne.s32.totalorder %s325, %s326
      %p338 = scmp.eq.s32.totalorder %s91, 1
      %p339 = por %p337, %p338
      %p341 = scmp.ne.s32.totalorder %s326, %s340
      %p342 = scmp.eq.s32.totalorder %s91, 0
      %p343 = por %p341, %p342
      %s345 = sadd.s32 %s344, 1
      %p348 = scmp.eq.s32.totalorder %s85, 1
      %p349 = scmp.ne.s32.totalorder %s344, %s346
      %p350 = scmp.eq.s32.totalorder %s85, 0
      %p351 = por %p349, %p350
      %p352 = scmp.ne.s32.totalorder %s344, %s346
      %p353 = scmp.eq.s32.totalorder %s90, 1
      %p354 = por %p352, %p353
      %p355 = scmp.ne.s32.totalorder %s346, %s347
      %p356 = scmp.eq.s32.totalorder %s90, 0
      %p357 = por %p355, %p356
      %p358 = scmp.ne.s32.totalorder %s346, %s347
      %p359 = scmp.eq.s32.totalorder %s91, 1
      %p360 = por %p358, %p359
      %p362 = scmp.ne.s32.totalorder %s347, %s361
      %p363 = scmp.eq.s32.totalorder %s91, 0
      %p364 = por %p362, %p363
      %s366 = sadd.s32 %s365, 1
      %p369 = scmp.eq.s32.totalorder %s85, 1
      %p370 = scmp.ne.s32.totalorder %s365, %s367
      %p371 = scmp.eq.s32.totalorder %s85, 0
      %p372 = por %p370, %p371
      %p373 = scmp.ne.s32.totalorder %s365, %s367
      %p374 = scmp.eq.s32.totalorder %s90, 1
      %p375 = por %p373, %p374
      %p376 = scmp.ne.s32.totalorder %s367, %s368
      %p377 = scmp.eq.s32.totalorder %s90, 0
      %p378 = por %p376, %p377
      %p379 = scmp.ne.s32.totalorder %s367, %s368
      %p380 = scmp.eq.s32.totalorder %s91, 1
      %p381 = por %p379, %p380
      %p383 = scmp.ne.s32.totalorder %s368, %s382
      %p384 = scmp.eq.s32.totalorder %s91, 0
      %p385 = por %p383, %p384
      %s387 = sadd.s32 %s386, 1
      %p390 = scmp.eq.s32.totalorder %s85, 1
      %p391 = scmp.ne.s32.totalorder %s386, %s388
      %p392 = scmp.eq.s32.totalorder %s85, 0
      %p393 = por %p391, %p392
      %p394 = scmp.ne.s32.totalorder %s386, %s388
      %p395 = scmp.eq.s32.totalorder %s90, 1
      %p396 = por %p394, %p395
      %p397 = scmp.ne.s32.totalorder %s388, %s389
      %p398 = scmp.eq.s32.totalorder %s90, 0
      %p399 = por %p397, %p398
      %p400 = scmp.ne.s32.totalorder %s388, %s389
      %p401 = scmp.eq.s32.totalorder %s91, 1
      %p402 = por %p400, %p401
      %p404 = scmp.ne.s32.totalorder %s389, %s403
      %p405 = scmp.eq.s32.totalorder %s91, 0
      %p406 = por %p404, %p405
      %s408 = sadd.s32 %s407, 1
      %p411 = scmp.eq.s32.totalorder %s85, 1
      %p412 = scmp.ne.s32.totalorder %s407, %s409
      %p413 = scmp.eq.s32.totalorder %s85, 0
      %p414 = por %p412, %p413
      %p415 = scmp.ne.s32.totalorder %s407, %s409
      %p416 = scmp.eq.s32.totalorder %s90, 1
      %p417 = por %p415, %p416
      %p418 = scmp.ne.s32.totalorder %s409, %s410
      %p419 = scmp.eq.s32.totalorder %s90, 0
      %p420 = por %p418, %p419
      %p421 = scmp.ne.s32.totalorder %s409, %s410
      %p422 = scmp.eq.s32.totalorder %s91, 1
      %p423 = por %p421, %p422
      %p425 = scmp.ne.s32.totalorder %s410, %s424
      %p426 = scmp.eq.s32.totalorder %s91, 0
      %p427 = por %p425, %p426
      %s429 = sadd.s32 %s428, 1
      %p432 = scmp.eq.s32.totalorder %s85, 1
      %p433 = scmp.ne.s32.totalorder %s428, %s430
      %p434 = scmp.eq.s32.totalorder %s85, 0
      %p435 = por %p433, %p434
      %p436 = scmp.ne.s32.totalorder %s428, %s430
      %p437 = scmp.eq.s32.totalorder %s90, 1
      %p438 = por %p436, %p437
      %p439 = scmp.ne.s32.totalorder %s430, %s431
      %p440 = scmp.eq.s32.totalorder %s90, 0
      %p441 = por %p439, %p440
      %p442 = scmp.ne.s32.totalorder %s430, %s431
      %p443 = scmp.eq.s32.totalorder %s91, 1
      %p444 = por %p442, %p443
      %p446 = scmp.ne.s32.totalorder %s431, %s445
      %p447 = scmp.eq.s32.totalorder %s91, 0
      %p448 = por %p446, %p447
      %s450 = sadd.s32 %s449, 1
      %p453 = scmp.eq.s32.totalorder %s85, 1
      %p454 = scmp.ne.s32.totalorder %s449, %s451
      %p455 = scmp.eq.s32.totalorder %s85, 0
      %p456 = por %p454, %p455
      %p457 = scmp.ne.s32.totalorder %s449, %s451
      %p458 = scmp.eq.s32.totalorder %s90, 1
      %p459 = por %p457, %p458
      %p460 = scmp.ne.s32.totalorder %s451, %s452
      %p461 = scmp.eq.s32.totalorder %s90, 0
      %p462 = por %p460, %p461
      %p463 = scmp.ne.s32.totalorder %s451, %s452
      %p464 = scmp.eq.s32.totalorder %s91, 1
      %p465 = por %p463, %p464
      %p467 = scmp.ne.s32.totalorder %s452, %s466
      %p468 = scmp.eq.s32.totalorder %s91, 0
      %p469 = por %p467, %p468
      %s471 = sadd.s32 %s470, 1
      %p474 = scmp.eq.s32.totalorder %s85, 1
      %p475 = scmp.ne.s32.totalorder %s470, %s472
      %p476 = scmp.eq.s32.totalorder %s85, 0
      %p477 = por %p475, %p476
      %p478 = scmp.ne.s32.totalorder %s470, %s472
      %p479 = scmp.eq.s32.totalorder %s90, 1
      %p480 = por %p478, %p479
      %p481 = scmp.ne.s32.totalorder %s472, %s473
      %p482 = scmp.eq.s32.totalorder %s90, 0
      %p483 = por %p481, %p482
      %p484 = scmp.ne.s32.totalorder %s472, %s473
      %p485 = scmp.eq.s32.totalorder %s91, 1
      %p486 = por %p484, %p485
      %p488 = scmp.ne.s32.totalorder %s473, %s487
      %p489 = scmp.eq.s32.totalorder %s91, 0
      %p490 = por %p488, %p489
      %s492 = sadd.s32 %s491, 1
      %p495 = scmp.eq.s32.totalorder %s85, 1
      %p496 = scmp.ne.s32.totalorder %s491, %s493
      %p497 = scmp.eq.s32.totalorder %s85, 0
      %p498 = por %p496, %p497
      %p499 = scmp.ne.s32.totalorder %s491, %s493
      %p500 = scmp.eq.s32.totalorder %s90, 1
      %p501 = por %p499, %p500
      %p502 = scmp.ne.s32.totalorder %s493, %s494
      %p503 = scmp.eq.s32.totalorder %s90, 0
      %p504 = por %p502, %p503
      %p505 = scmp.ne.s32.totalorder %s493, %s494
      %p506 = scmp.eq.s32.totalorder %s91, 1
      %p507 = por %p505, %p506
      %p509 = scmp.ne.s32.totalorder %s494, %s508
      %p510 = scmp.eq.s32.totalorder %s91, 0
      %p511 = por %p509, %p510
      %s513 = sadd.s32 %s512, 1
      %p516 = scmp.eq.s32.totalorder %s85, 1
      %p517 = scmp.ne.s32.totalorder %s512, %s514
      %p518 = scmp.eq.s32.totalorder %s85, 0
      %p519 = por %p517, %p518
      %p520 = scmp.ne.s32.totalorder %s512, %s514
      %p521 = scmp.eq.s32.totalorder %s90, 1
      %p522 = por %p520, %p521
      %p523 = scmp.ne.s32.totalorder %s514, %s515
      %p524 = scmp.eq.s32.totalorder %s90, 0
      %p525 = por %p523, %p524
      %p526 = scmp.ne.s32.totalorder %s514, %s515
      %p527 = scmp.eq.s32.totalorder %s91, 1
      %p528 = por %p526, %p527
      %p530 = scmp.ne.s32.totalorder %s515, %s529
      %p531 = scmp.eq.s32.totalorder %s91, 0
      %p532 = por %p530, %p531
      %s534 = sadd.s32 %s533, 1
      %p537 = scmp.eq.s32.totalorder %s85, 1
      %p538 = scmp.ne.s32.totalorder %s533, %s535
      %p539 = scmp.eq.s32.totalorder %s85, 0
      %p540 = por %p538, %p539
      %p541 = scmp.ne.s32.totalorder %s533, %s535
      %p542 = scmp.eq.s32.totalorder %s90, 1
      %p543 = por %p541, %p542
      %p544 = scmp.ne.s32.totalorder %s535, %s536
      %p545 = scmp.eq.s32.totalorder %s90, 0
      %p546 = por %p544, %p545
      %p547 = scmp.ne.s32.totalorder %s535, %s536
      %p548 = scmp.eq.s32.totalorder %s91, 1
      %p549 = por %p547, %p548
      %p551 = scmp.ne.s32.totalorder %s536, %s550
      %p552 = scmp.eq.s32.totalorder %s91, 0
      %p553 = por %p551, %p552
      %s555 = sadd.s32 %s554, 1
      %p558 = scmp.eq.s32.totalorder %s85, 1
      %p559 = scmp.ne.s32.totalorder %s554, %s556
      %p560 = scmp.eq.s32.totalorder %s85, 0
      %p561 = por %p559, %p560
      %p562 = scmp.ne.s32.totalorder %s554, %s556
      %p563 = scmp.eq.s32.totalorder %s90, 1
      %p564 = por %p562, %p563
      %p565 = scmp.ne.s32.totalorder %s556, %s557
      %p566 = scmp.eq.s32.totalorder %s90, 0
      %p567 = por %p565, %p566
      %p568 = scmp.ne.s32.totalorder %s556, %s557
      %p569 = scmp.eq.s32.totalorder %s91, 1
      %p570 = por %p568, %p569
      %p572 = scmp.ne.s32.totalorder %s557, %s571
      %p573 = scmp.eq.s32.totalorder %s91, 0
      %p574 = por %p572, %p573
      %s576 = sadd.s32 %s575, 1
      %p579 = scmp.eq.s32.totalorder %s85, 1
      %p580 = scmp.ne.s32.totalorder %s575, %s577
      %p581 = scmp.eq.s32.totalorder %s85, 0
      %p582 = por %p580, %p581
      %p583 = scmp.ne.s32.totalorder %s575, %s577
      %p584 = scmp.eq.s32.totalorder %s90, 1
      %p585 = por %p583, %p584
      %p586 = scmp.ne.s32.totalorder %s577, %s578
      %p587 = scmp.eq.s32.totalorder %s90, 0
      %p588 = por %p586, %p587
      %p589 = scmp.ne.s32.totalorder %s577, %s578
      %p590 = scmp.eq.s32.totalorder %s91, 1
      %p591 = por %p589, %p590
      %p593 = scmp.ne.s32.totalorder %s578, %s592
      %p594 = scmp.eq.s32.totalorder %s91, 0
      %p595 = por %p593, %p594
      %s597 = sadd.s32 %s596, 1
      %p600 = scmp.eq.s32.totalorder %s85, 1
      %p601 = scmp.ne.s32.totalorder %s596, %s598
      %p602 = scmp.eq.s32.totalorder %s85, 0
      %p603 = por %p601, %p602
      %p604 = scmp.ne.s32.totalorder %s596, %s598
      %p605 = scmp.eq.s32.totalorder %s90, 1
      %p606 = por %p604, %p605
      %p607 = scmp.ne.s32.totalorder %s598, %s599
      %p608 = scmp.eq.s32.totalorder %s90, 0
      %p609 = por %p607, %p608
      %p610 = scmp.ne.s32.totalorder %s598, %s599
      %p611 = scmp.eq.s32.totalorder %s91, 1
      %p612 = por %p610, %p611
      %p614 = scmp.ne.s32.totalorder %s599, %s613
      %p615 = scmp.eq.s32.totalorder %s91, 0
      %p616 = por %p614, %p615
      %s618 = sadd.s32 %s617, 1
      %p621 = scmp.eq.s32.totalorder %s85, 1
      %p622 = scmp.ne.s32.totalorder %s617, %s619
      %p623 = scmp.eq.s32.totalorder %s85, 0
      %p624 = por %p622, %p623
      %p625 = scmp.ne.s32.totalorder %s617, %s619
      %p626 = scmp.eq.s32.totalorder %s90, 1
      %p627 = por %p625, %p626
      %p628 = scmp.ne.s32.totalorder %s619, %s620
      %p629 = scmp.eq.s32.totalorder %s90, 0
      %p630 = por %p628, %p629
      %p631 = scmp.ne.s32.totalorder %s619, %s620
      %p632 = scmp.eq.s32.totalorder %s91, 1
      %p633 = por %p631, %p632
      %p635 = scmp.ne.s32.totalorder %s620, %s634
      %p636 = scmp.eq.s32.totalorder %s91, 0
      %p637 = por %p635, %p636
      %s639 = sadd.s32 %s638, 1
      %p642 = scmp.eq.s32.totalorder %s85, 1
      %p643 = scmp.ne.s32.totalorder %s638, %s640
      %p644 = scmp.eq.s32.totalorder %s85, 0
      %p645 = por %p643, %p644
      %p646 = scmp.ne.s32.totalorder %s638, %s640
      %p647 = scmp.eq.s32.totalorder %s90, 1
      %p648 = por %p646, %p647
      %p649 = scmp.ne.s32.totalorder %s640, %s641
      %p650 = scmp.eq.s32.totalorder %s90, 0
      %p651 = por %p649, %p650
      %p652 = scmp.ne.s32.totalorder %s640, %s641
      %p653 = scmp.eq.s32.totalorder %s91, 1
      %p654 = por %p652, %p653
      %p656 = scmp.ne.s32.totalorder %s641, %s655
      %p657 = scmp.eq.s32.totalorder %s91, 0
      %p658 = por %p656, %p657
      %s660 = sadd.s32 %s659, 1
      %p663 = scmp.eq.s32.totalorder %s85, 1
      %p664 = scmp.ne.s32.totalorder %s659, %s661
      %p665 = scmp.eq.s32.totalorder %s85, 0
      %p666 = por %p664, %p665
      %p667 = scmp.ne.s32.totalorder %s659, %s661
      %p668 = scmp.eq.s32.totalorder %s90, 1
      %p669 = por %p667, %p668
      %p670 = scmp.ne.s32.totalorder %s661, %s662
      %p671 = scmp.eq.s32.totalorder %s90, 0
      %p672 = por %p670, %p671
      %p673 = scmp.ne.s32.totalorder %s661, %s662
      %p674 = scmp.eq.s32.totalorder %s91, 1
      %p675 = por %p673, %p674
      %p677 = scmp.ne.s32.totalorder %s662, %s676
      %p678 = scmp.eq.s32.totalorder %s91, 0
      %p679 = por %p677, %p678
      %s681 = sadd.s32 %s680, 1
      %p684 = scmp.eq.s32.totalorder %s85, 1
      %p685 = scmp.ne.s32.totalorder %s680, %s682
      %p686 = scmp.eq.s32.totalorder %s85, 0
      %p687 = por %p685, %p686
      %p688 = scmp.ne.s32.totalorder %s680, %s682
      %p689 = scmp.eq.s32.totalorder %s90, 1
      %p690 = por %p688, %p689
      %p691 = scmp.ne.s32.totalorder %s682, %s683
      %p692 = scmp.eq.s32.totalorder %s90, 0
      %p693 = por %p691, %p692
      %p694 = scmp.ne.s32.totalorder %s682, %s683
      %p695 = scmp.eq.s32.totalorder %s91, 1
      %p696 = por %p694, %p695
      %p698 = scmp.ne.s32.totalorder %s683, %s697
      %p699 = scmp.eq.s32.totalorder %s91, 0
      %p700 = por %p698, %p699
      %s702 = sadd.s32 %s701, 1
      %p705 = scmp.eq.s32.totalorder %s85, 1
      %p706 = scmp.ne.s32.totalorder %s701, %s703
      %p707 = scmp.eq.s32.totalorder %s85, 0
      %p708 = por %p706, %p707
      %p709 = scmp.ne.s32.totalorder %s701, %s703
      %p710 = scmp.eq.s32.totalorder %s90, 1
      %p711 = por %p709, %p710
      %p712 = scmp.ne.s32.totalorder %s703, %s704
      %p713 = scmp.eq.s32.totalorder %s90, 0
      %p714 = por %p712, %p713
      %p715 = scmp.ne.s32.totalorder %s703, %s704
      %p716 = scmp.eq.s32.totalorder %s91, 1
      %p717 = por %p715, %p716
      %p719 = scmp.ne.s32.totalorder %s704, %s718
      %p720 = scmp.eq.s32.totalorder %s91, 0
      %p721 = por %p719, %p720
      %s723 = sadd.s32 %s722, 1
      %p726 = scmp.eq.s32.totalorder %s85, 1
      %p727 = scmp.ne.s32.totalorder %s722, %s724
      %p728 = scmp.eq.s32.totalorder %s85, 0
      %p729 = por %p727, %p728
      %p730 = scmp.ne.s32.totalorder %s722, %s724
      %p731 = scmp.eq.s32.totalorder %s90, 1
      %p732 = por %p730, %p731
      %p733 = scmp.ne.s32.totalorder %s724, %s725
      %p734 = scmp.eq.s32.totalorder %s90, 0
      %p735 = por %p733, %p734
      %p736 = scmp.ne.s32.totalorder %s724, %s725
      %p737 = scmp.eq.s32.totalorder %s91, 1
      %p738 = por %p736, %p737
      %p740 = scmp.ne.s32.totalorder %s725, %s739
      %p741 = scmp.eq.s32.totalorder %s91, 0
      %p742 = por %p740, %p741
      %s744 = sadd.s32 %s743, 1
      %p747 = scmp.eq.s32.totalorder %s85, 1
      %p748 = scmp.ne.s32.totalorder %s743, %s745
      %p749 = scmp.eq.s32.totalorder %s85, 0
      %p750 = por %p748, %p749
      %p751 = scmp.ne.s32.totalorder %s743, %s745
      %p752 = scmp.eq.s32.totalorder %s90, 1
      %p753 = por %p751, %p752
      %p754 = scmp.ne.s32.totalorder %s745, %s746
      %p755 = scmp.eq.s32.totalorder %s90, 0
      %p756 = por %p754, %p755
      %p757 = scmp.ne.s32.totalorder %s745, %s746
      %p758 = scmp.eq.s32.totalorder %s91, 1
      %p759 = por %p757, %p758
      %p761 = scmp.ne.s32.totalorder %s746, %s760
      %p762 = scmp.eq.s32.totalorder %s91, 0
      %p763 = por %p761, %p762
      %s765 = sadd.s32 %s764, 1
      %p768 = scmp.eq.s32.totalorder %s85, 1
      %p769 = scmp.ne.s32.totalorder %s764, %s766
      %p770 = scmp.eq.s32.totalorder %s85, 0
      %p771 = por %p769, %p770
      %p772 = scmp.ne.s32.totalorder %s764, %s766
      %p773 = scmp.eq.s32.totalorder %s90, 1
      %p774 = por %p772, %p773
      %p775 = scmp.ne.s32.totalorder %s766, %s767
      %p776 = scmp.eq.s32.totalorder %s90, 0
      %p777 = por %p775, %p776
      %p778 = scmp.ne.s32.totalorder %s766, %s767
      %p779 = scmp.eq.s32.totalorder %s91, 1
      %p780 = por %p778, %p779
      %p782 = scmp.ne.s32.totalorder %s767, %s781
      %p783 = scmp.eq.s32.totalorder %s91, 0
      %p784 = por %p782, %p783
      %s785 = ssub.s32 %s85, %s92
      %p786 = scmp.eq.s32.totalorder %s785, 0
      %s788 = sadd.s32 %s787, 1
      %s789 = scalar_select %p786, %s787, %s788
      %p792 = pneg %p786
      %p793 = scmp.eq.s32.totalorder %s85, 1
      %p794 = por %p792, %p793
      %p795 = scmp.ne.s32.totalorder %s787, %s790
      %p796 = scmp.eq.s32.totalorder %s85, 0
      %p797 = por %p795, %p796
      %p798 = scmp.ne.s32.totalorder %s787, %s790
      %p799 = scmp.eq.s32.totalorder %s90, 1
      %p800 = por %p798, %p799
      %p801 = scmp.ne.s32.totalorder %s790, %s791
      %p802 = scmp.eq.s32.totalorder %s90, 0
      %p803 = por %p801, %p802
      %p804 = scmp.ne.s32.totalorder %s790, %s791
      %p805 = scmp.eq.s32.totalorder %s91, 1
      %p806 = por %p804, %p805
      %p808 = scmp.ne.s32.totalorder %s791, %s807
      %p809 = scmp.eq.s32.totalorder %s91, 0
      %p810 = por %p808, %p809
      %s811 = ssub.s32 %s85, %s92
      %p812 = scmp.eq.s32.totalorder %s811, 0
      %s814 = sadd.s32 %s813, 1
      %s815 = scalar_select %p812, %s813, %s814
      %p818 = pneg %p812
      %p819 = scmp.eq.s32.totalorder %s85, 1
      %p820 = por %p818, %p819
      %p821 = scmp.ne.s32.totalorder %s813, %s816
      %p822 = scmp.eq.s32.totalorder %s85, 0
      %p823 = por %p821, %p822
      %p824 = scmp.ne.s32.totalorder %s813, %s816
      %p825 = scmp.eq.s32.totalorder %s90, 1
      %p826 = por %p824, %p825
      %p827 = scmp.ne.s32.totalorder %s816, %s817
      %p828 = scmp.eq.s32.totalorder %s90, 0
      %p829 = por %p827, %p828
      %p830 = scmp.ne.s32.totalorder %s816, %s817
      %p831 = scmp.eq.s32.totalorder %s91, 1
      %p832 = por %p830, %p831
      %p834 = scmp.ne.s32.totalorder %s817, %s833
      %p835 = scmp.eq.s32.totalorder %s91, 0
      %p836 = por %p834, %p835
      %p837 = scmp.le.s32.totalorder 1, %s85
      %p838 = scmp.lt.s32.totalorder %s85, 3
      %p839 = pnand %p837, %p838
      %p840 = pneg %p839
      // Predicated region
      $region9: #{transformer_decoder_forward.3} parent=5 // pred_check
        _
      $region10: #{transformer_decoder_forward.3} parent=5 // pred_check_branch
        %842 = sbr.rel (%p839) target = $region12
      $region11: #{transformer_decoder_forward.3} parent=5 // pred_region
        %s843 = ssub.s32 %s85, 1
        // Predicated region
        $region13: #{transformer_decoder_forward.3} parent=11 // pred_check
          %p844 = pneg %p210
        $region14: #{transformer_decoder_forward.3} parent=11 // pred_check_branch
          %846 = sbr.rel (%p844) target = $region16
        $region15: #{transformer_decoder_forward.3} parent=11 // pred_region
          _
        $region16: #{transformer_decoder_forward.3} parent=11 // pred_fallthru
          _
        // Predicated region
        $region17: #{transformer_decoder_forward.3} parent=11 // pred_check
          %p847 = pneg %p231
        $region18: #{transformer_decoder_forward.3} parent=11 // pred_check_branch
          %849 = sbr.rel (%p847) target = $region20
        $region19: #{transformer_decoder_forward.3} parent=11 // pred_region
          _
        $region20: #{transformer_decoder_forward.3} parent=11 // pred_fallthru
          _
        // Predicated region
        $region21: #{transformer_decoder_forward.3} parent=11 // pred_check
          %p850 = pneg %p252
        $region22: #{transformer_decoder_forward.3} parent=11 // pred_check_branch
          %852 = sbr.rel (%p850) target = $region24
        $region23: #{transformer_decoder_forward.3} parent=11 // pred_region
          _
        $region24: #{transformer_decoder_forward.3} parent=11 // pred_fallthru
          _
        // Predicated region
        $region25: #{transformer_decoder_forward.3} parent=11 // pred_check
          %p853 = pneg %p273
        $region26: #{transformer_decoder_forward.3} parent=11 // pred_check_branch
          %855 = sbr.rel (%p853) target = $region28
        $region27: #{transformer_decoder_forward.3} parent=11 // pred_region
          _
        $region28: #{transformer_decoder_forward.3} parent=11 // pred_fallthru
          _
        // Predicated region
        $region29: #{transformer_decoder_forward.3} parent=11 // pred_check
          %p856 = pneg %p294
        $region30: #{transformer_decoder_forward.3} parent=11 // pred_check_branch
          %858 = sbr.rel (%p856) target = $region32
        $region31: #{transformer_decoder_forward.3} parent=11 // pred_region
          _
        $region32: #{transformer_decoder_forward.3} parent=11 // pred_fallthru
          _
        // Predicated region
        $region33: #{transformer_decoder_forward.3} parent=11 // pred_check
          %p859 = pneg %p315
        $region34: #{transformer_decoder_forward.3} parent=11 // pred_check_branch
          %861 = sbr.rel (%p859) target = $region36
        $region35: #{transformer_decoder_forward.3} parent=11 // pred_region
          %s863 = ssub.s32 16, 16
          %864 = vsyncadd [#allocation4], %s863
          %s866 = sshll.u32 [#allocation3], 4
          %s867 = int_to_ptr.vmem [resolvable:$true] %s866
          %869 = dma.hbm_to_vmem [thread:$0]  %s19, 16, %s867, [#allocation4]
        $region36: #{transformer_decoder_forward.3} parent=11 // pred_fallthru
          _
        // Predicated region
        $region37: #{transformer_decoder_forward.3} parent=11 // pred_check
          %p870 = pneg %p336
        $region38: #{transformer_decoder_forward.3} parent=11 // pred_check_branch
          %872 = sbr.rel (%p870) target = $region40
        $region39: #{transformer_decoder_forward.3} parent=11 // pred_region
          _
        $region40: #{transformer_decoder_forward.3} parent=11 // pred_fallthru
          _
        // Predicated region
        $region41: #{transformer_decoder_forward.3} parent=11 // pred_check
          %p873 = pneg %p357
        $region42: #{transformer_decoder_forward.3} parent=11 // pred_check_branch
          %875 = sbr.rel (%p873) target = $region44
        $region43: #{transformer_decoder_forward.3} parent=11 // pred_region
          %s877 = ssub.s32 16, 16
          %878 = vsyncadd [#allocation7], %s877
          %s880 = sshll.u32 [#allocation6], 4
          %s881 = int_to_ptr.vmem [resolvable:$true] %s880
          %883 = dma.hbm_to_vmem [thread:$0]  %s23, 16, %s881, [#allocation7]
        $region44: #{transformer_decoder_forward.3} parent=11 // pred_fallthru
          _
        // Predicated region
        $region45: #{transformer_decoder_forward.3} parent=11 // pred_check
          %p884 = pneg %p378
        $region46: #{transformer_decoder_forward.3} parent=11 // pred_check_branch
          %886 = sbr.rel (%p884) target = $region48
        $region47: #{transformer_decoder_forward.3} parent=11 // pred_region
          %s888 = ssub.s32 16, 16
          %889 = vsyncadd [#allocation7], %s888
          %s891 = sshll.u32 [#allocation8], 4
          %s892 = int_to_ptr.vmem [resolvable:$true] %s891
          %894 = dma.hbm_to_vmem [thread:$0]  %s25, 16, %s892, [#allocation7]
        $region48: #{transformer_decoder_forward.3} parent=11 // pred_fallthru
          _
        // Predicated region
        $region49: #{transformer_decoder_forward.3} parent=11 // pred_check
          %p895 = pneg %p399
        $region50: #{transformer_decoder_forward.3} parent=11 // pred_check_branch
          %897 = sbr.rel (%p895) target = $region52
        $region51: #{transformer_decoder_forward.3} parent=11 // pred_region
          %s899 = ssub.s32 16, 16
          %900 = vsyncadd [#allocation10], %s899
          %s902 = sshll.u32 [#allocation9], 4
          %s903 = int_to_ptr.vmem [resolvable:$true] %s902
          %905 = dma.hbm_to_vmem [thread:$0]  %s27, 16, %s903, [#allocation10]
        $region52: #{transformer_decoder_forward.3} parent=11 // pred_fallthru
          _
        // Predicated region
        $region53: #{transformer_decoder_forward.3} parent=11 // pred_check
          %p906 = pneg %p420
        $region54: #{transformer_decoder_forward.3} parent=11 // pred_check_branch
          %908 = sbr.rel (%p906) target = $region56
        $region55: #{transformer_decoder_forward.3} parent=11 // pred_region
          _
        $region56: #{transformer_decoder_forward.3} parent=11 // pred_fallthru
          _
        // Predicated region
        $region57: #{transformer_decoder_forward.3} parent=11 // pred_check
          %p909 = pneg %p441
        $region58: #{transformer_decoder_forward.3} parent=11 // pred_check_branch
          %911 = sbr.rel (%p909) target = $region60
        $region59: #{transformer_decoder_forward.3} parent=11 // pred_region
          %s913 = ssub.s32 16, 16
          %914 = vsyncadd [#allocation10], %s913
          %s916 = sshll.u32 [#allocation11], 4
          %s917 = int_to_ptr.vmem [resolvable:$true] %s916
          %919 = dma.hbm_to_vmem [thread:$0]  %s31, 16, %s917, [#allocation10]
        $region60: #{transformer_decoder_forward.3} parent=11 // pred_fallthru
          _
        // Predicated region
        $region61: #{transformer_decoder_forward.3} parent=11 // pred_check
          %p920 = pneg %p462
        $region62: #{transformer_decoder_forward.3} parent=11 // pred_check_branch
          %922 = sbr.rel (%p920) target = $region64
        $region63: #{transformer_decoder_forward.3} parent=11 // pred_region
          _
        $region64: #{transformer_decoder_forward.3} parent=11 // pred_fallthru
          _
        // Predicated region
        $region65: #{transformer_decoder_forward.3} parent=11 // pred_check
          %p923 = pneg %p483
        $region66: #{transformer_decoder_forward.3} parent=11 // pred_check_branch
          %925 = sbr.rel (%p923) target = $region68
        $region67: #{transformer_decoder_forward.3} parent=11 // pred_region
          %s927 = ssub.s32 16, 16
          %928 = vsyncadd [#allocation13], %s927
          %s930 = sshll.u32 [#allocation12], 4
          %s931 = int_to_ptr.vmem [resolvable:$true] %s930
          %933 = dma.hbm_to_vmem [thread:$0]  %s35, 16, %s931, [#allocation13]
        $region68: #{transformer_decoder_forward.3} parent=11 // pred_fallthru
          _
        // Predicated region
        $region69: #{transformer_decoder_forward.3} parent=11 // pred_check
          %p934 = pneg %p504
        $region70: #{transformer_decoder_forward.3} parent=11 // pred_check_branch
          %936 = sbr.rel (%p934) target = $region72
        $region71: #{transformer_decoder_forward.3} parent=11 // pred_region
          _
        $region72: #{transformer_decoder_forward.3} parent=11 // pred_fallthru
          _
        // Predicated region
        $region73: #{transformer_decoder_forward.3} parent=11 // pred_check
          %p937 = pneg %p525
        $region74: #{transformer_decoder_forward.3} parent=11 // pred_check_branch
          %939 = sbr.rel (%p937) target = $region76
        $region75: #{transformer_decoder_forward.3} parent=11 // pred_region
          %s941 = ssub.s32 16, 16
          %942 = vsyncadd [#allocation13], %s941
          %s944 = sshll.u32 [#allocation14], 4
          %s945 = int_to_ptr.vmem [resolvable:$true] %s944
          %947 = dma.hbm_to_vmem [thread:$0]  %s39, 16, %s945, [#allocation13]
        $region76: #{transformer_decoder_forward.3} parent=11 // pred_fallthru
          _
        // Predicated region
        $region77: #{transformer_decoder_forward.3} parent=11 // pred_check
          %p948 = pneg %p546
        $region78: #{transformer_decoder_forward.3} parent=11 // pred_check_branch
          %950 = sbr.rel (%p948) target = $region80
        $region79: #{transformer_decoder_forward.3} parent=11 // pred_region
          _
        $region80: #{transformer_decoder_forward.3} parent=11 // pred_fallthru
          _
        // Predicated region
        $region81: #{transformer_decoder_forward.3} parent=11 // pred_check
          %p951 = pneg %p567
        $region82: #{transformer_decoder_forward.3} parent=11 // pred_check_branch
          %953 = sbr.rel (%p951) target = $region84
        $region83: #{transformer_decoder_forward.3} parent=11 // pred_region
          %s955 = ssub.s32 16, 16
          %956 = vsyncadd [#allocation16], %s955
          %s958 = sshll.u32 [#allocation15], 4
          %s959 = int_to_ptr.vmem [resolvable:$true] %s958
          %961 = dma.hbm_to_vmem [thread:$0]  %s43, 16, %s959, [#allocation16]
        $region84: #{transformer_decoder_forward.3} parent=11 // pred_fallthru
          _
        // Predicated region
        $region85: #{transformer_decoder_forward.3} parent=11 // pred_check
          %p962 = pneg %p588
        $region86: #{transformer_decoder_forward.3} parent=11 // pred_check_branch
          %964 = sbr.rel (%p962) target = $region88
        $region87: #{transformer_decoder_forward.3} parent=11 // pred_region
          %s966 = ssub.s32 16, 16
          %967 = vsyncadd [#allocation16], %s966
          %s969 = sshll.u32 [#allocation17], 4
          %s970 = int_to_ptr.vmem [resolvable:$true] %s969
          %972 = dma.hbm_to_vmem [thread:$0]  %s45, 16, %s970, [#allocation16]
        $region88: #{transformer_decoder_forward.3} parent=11 // pred_fallthru
          _
        // Predicated region
        $region89: #{transformer_decoder_forward.3} parent=11 // pred_check
          %p973 = pneg %p609
        $region90: #{transformer_decoder_forward.3} parent=11 // pred_check_branch
          %975 = sbr.rel (%p973) target = $region92
        $region91: #{transformer_decoder_forward.3} parent=11 // pred_region
          %s977 = ssub.s32 16, 16
          %978 = vsyncadd [#allocation19], %s977
          %s980 = sshll.u32 [#allocation18], 4
          %s981 = int_to_ptr.vmem [resolvable:$true] %s980
          %983 = dma.hbm_to_vmem [thread:$0]  %s47, 16, %s981, [#allocation19]
        $region92: #{transformer_decoder_forward.3} parent=11 // pred_fallthru
          _
        // Predicated region
        $region93: #{transformer_decoder_forward.3} parent=11 // pred_check
          %p984 = pneg %p630
        $region94: #{transformer_decoder_forward.3} parent=11 // pred_check_branch
          %986 = sbr.rel (%p984) target = $region96
        $region95: #{transformer_decoder_forward.3} parent=11 // pred_region
          _
        $region96: #{transformer_decoder_forward.3} parent=11 // pred_fallthru
          _
        // Predicated region
        $region97: #{transformer_decoder_forward.3} parent=11 // pred_check
          %p987 = pneg %p651
        $region98: #{transformer_decoder_forward.3} parent=11 // pred_check_branch
          %989 = sbr.rel (%p987) target = $region100
        $region99: #{transformer_decoder_forward.3} parent=11 // pred_region
          %s991 = ssub.s32 16, 16
          %992 = vsyncadd [#allocation19], %s991
          %s994 = sshll.u32 [#allocation20], 4
          %s995 = int_to_ptr.vmem [resolvable:$true] %s994
          %997 = dma.hbm_to_vmem [thread:$0]  %s51, 16, %s995, [#allocation19]
        $region100: #{transformer_decoder_forward.3} parent=11 // pred_fallthru
          _
        // Predicated region
        $region101: #{transformer_decoder_forward.3} parent=11 // pred_check
          %p998 = pneg %p672
        $region102: #{transformer_decoder_forward.3} parent=11 // pred_check_branch
          %1000 = sbr.rel (%p998) target = $region104
        $region103: #{transformer_decoder_forward.3} parent=11 // pred_region
          _
        $region104: #{transformer_decoder_forward.3} parent=11 // pred_fallthru
          _
        // Predicated region
        $region105: #{transformer_decoder_forward.3} parent=11 // pred_check
          %p1001 = pneg %p693
        $region106: #{transformer_decoder_forward.3} parent=11 // pred_check_branch
          %1003 = sbr.rel (%p1001) target = $region108
        $region107: #{transformer_decoder_forward.3} parent=11 // pred_region
          %s1005 = ssub.s32 16, 16
          %1006 = vsyncadd [#allocation22], %s1005
          %s1008 = sshll.u32 [#allocation21], 4
          %s1009 = int_to_ptr.vmem [resolvable:$true] %s1008
          %1011 = dma.hbm_to_vmem [thread:$0]  %s55, 16, %s1009, [#allocation22]
        $region108: #{transformer_decoder_forward.3} parent=11 // pred_fallthru
          _
        // Predicated region
        $region109: #{transformer_decoder_forward.3} parent=11 // pred_check
          %p1012 = pneg %p714
        $region110: #{transformer_decoder_forward.3} parent=11 // pred_check_branch
          %1014 = sbr.rel (%p1012) target = $region112
        $region111: #{transformer_decoder_forward.3} parent=11 // pred_region
          %s1016 = ssub.s32 16, 16
          %1017 = vsyncadd [#allocation22], %s1016
          %s1019 = sshll.u32 [#allocation23], 4
          %s1020 = int_to_ptr.vmem [resolvable:$true] %s1019
          %1022 = dma.hbm_to_vmem [thread:$0]  %s57, 16, %s1020, [#allocation22]
        $region112: #{transformer_decoder_forward.3} parent=11 // pred_fallthru
          _
        // Predicated region
        $region113: #{transformer_decoder_forward.3} parent=11 // pred_check
          %p1023 = pneg %p735
        $region114: #{transformer_decoder_forward.3} parent=11 // pred_check_branch
          %1025 = sbr.rel (%p1023) target = $region116
        $region115: #{transformer_decoder_forward.3} parent=11 // pred_region
          %s1027 = ssub.s32 16, 16
          %1028 = vsyncadd [#allocation25], %s1027
          %s1030 = sshll.u32 [#allocation24], 4
          %s1031 = int_to_ptr.vmem [resolvable:$true] %s1030
          %1033 = dma.hbm_to_vmem [thread:$0]  %s59, 16, %s1031, [#allocation25]
        $region116: #{transformer_decoder_forward.3} parent=11 // pred_fallthru
          _
        // Predicated region
        $region117: #{transformer_decoder_forward.3} parent=11 // pred_check
          %p1034 = pneg %p756
        $region118: #{transformer_decoder_forward.3} parent=11 // pred_check_branch
          %1036 = sbr.rel (%p1034) target = $region120
        $region119: #{transformer_decoder_forward.3} parent=11 // pred_region
          _
        $region120: #{transformer_decoder_forward.3} parent=11 // pred_fallthru
          _
        // Predicated region
        $region121: #{transformer_decoder_forward.3} parent=11 // pred_check
          %p1037 = pneg %p777
        $region122: #{transformer_decoder_forward.3} parent=11 // pred_check_branch
          %1039 = sbr.rel (%p1037) target = $region124
        $region123: #{transformer_decoder_forward.3} parent=11 // pred_region
          _
        $region124: #{transformer_decoder_forward.3} parent=11 // pred_fallthru
          _
      $region12: #{transformer_decoder_forward.3} parent=5 // pred_fallthru
        _
      %p1040 = scmp.lt.s32.totalorder %s85, 2
      // Predicated region
      $region125: #{transformer_decoder_forward.3} parent=5 // pred_check
        %p1041 = pneg %p1040
      $region126: #{transformer_decoder_forward.3} parent=5 // pred_check_branch
        %1043 = sbr.rel (%p1041) target = $region128
      $region127: #{transformer_decoder_forward.3} parent=5 // pred_region
        // Predicated region
        $region129: #{transformer_decoder_forward.3} parent=127 // pred_check
          %p1044 = pneg %p105
        $region130: #{transformer_decoder_forward.3} parent=127 // pred_check_branch
          %1046 = sbr.rel (%p1044) target = $region132
        $region131: #{transformer_decoder_forward.3} parent=127 // pred_region
          %p1047 = scmp.lt.s32.totalorder %s85, 1
          %s1048 = scalar_select %p1047, %s85, 1
          %s1049 = smul.addr %s1048, 8
          %s1050 = scalar_lea.vmem %s1, %s1049
        $region132: #{transformer_decoder_forward.3} parent=127 // pred_fallthru
          _
        // Predicated region
        $region133: #{transformer_decoder_forward.3} parent=127 // pred_check
          %p1051 = pneg %p131
        $region134: #{transformer_decoder_forward.3} parent=127 // pred_check_branch
          %1053 = sbr.rel (%p1051) target = $region136
        $region135: #{transformer_decoder_forward.3} parent=127 // pred_region
          %p1054 = scmp.lt.s32.totalorder %s85, 1
          %s1055 = scalar_select %p1054, %s85, 1
          %s1056 = smul.addr %s1055, 8
          %s1057 = scalar_lea.vmem %s3, %s1056
        $region136: #{transformer_decoder_forward.3} parent=127 // pred_fallthru
          _
        // Predicated region
        $region137: #{transformer_decoder_forward.3} parent=127 // pred_check
          %p1058 = pneg %p157
        $region138: #{transformer_decoder_forward.3} parent=127 // pred_check_branch
          %1060 = sbr.rel (%p1058) target = $region140
        $region139: #{transformer_decoder_forward.3} parent=127 // pred_region
          %p1061 = scmp.lt.s32.totalorder %s85, 1
          %s1062 = scalar_select %p1061, %s85, 1
          %s1063 = smul.addr %s1062, 2
          %s1064 = smul.addr %s1063, 8
          %s1065 = scalar_lea.vmem %s5, %s1064
        $region140: #{transformer_decoder_forward.3} parent=127 // pred_fallthru
          _
        // Predicated region
        $region141: #{transformer_decoder_forward.3} parent=127 // pred_check
          %p1066 = pneg %p183
        $region142: #{transformer_decoder_forward.3} parent=127 // pred_check_branch
          %1068 = sbr.rel (%p1066) target = $region144
        $region143: #{transformer_decoder_forward.3} parent=127 // pred_region
          %p1069 = scmp.lt.s32.totalorder %s85, 1
          %s1070 = scalar_select %p1069, %s85, 1
          %s1071 = smul.addr %s1070, 2
          %s1072 = smul.addr %s1071, 8
          %s1073 = scalar_lea.vmem %s7, %s1072
        $region144: #{transformer_decoder_forward.3} parent=127 // pred_fallthru
          _
      $region128: #{transformer_decoder_forward.3} parent=5 // pred_fallthru
        _
      %p1074 = scmp.le.s32.totalorder 1, %s85
      %p1075 = scmp.lt.s32.totalorder %s85, 3
      %p1076 = pnand %p1074, %p1075
      %p1077 = pneg %p1076
      // Predicated region
      $region145: #{transformer_decoder_forward.3} parent=5 // pred_check
        _
      $region146: #{transformer_decoder_forward.3} parent=5 // pred_check_branch
        %1079 = sbr.rel (%p1076) target = $region148
      $region147: #{transformer_decoder_forward.3} parent=5 // pred_region
        %s1080 = ssub.s32 %s85, 1
        // Predicated region
        $region149: #{transformer_decoder_forward.3} parent=147 // pred_check
          %p1081 = pneg %p315
        $region150: #{transformer_decoder_forward.3} parent=147 // pred_check_branch
          %1083 = sbr.rel (%p1081) target = $region152
        $region151: #{transformer_decoder_forward.3} parent=147 // pred_region
          %1084 = dma.done [#allocation4], 16
        $region152: #{transformer_decoder_forward.3} parent=147 // pred_fallthru
          _
        // Predicated region
        $region153: #{transformer_decoder_forward.3} parent=147 // pred_check
          %p1085 = pneg %p357
        $region154: #{transformer_decoder_forward.3} parent=147 // pred_check_branch
          %1087 = sbr.rel (%p1085) target = $region156
        $region155: #{transformer_decoder_forward.3} parent=147 // pred_region
          %1088 = dma.done [#allocation7], 16
        $region156: #{transformer_decoder_forward.3} parent=147 // pred_fallthru
          _
        // Predicated region
        $region157: #{transformer_decoder_forward.3} parent=147 // pred_check
          %p1089 = pneg %p378
        $region158: #{transformer_decoder_forward.3} parent=147 // pred_check_branch
          %1091 = sbr.rel (%p1089) target = $region160
        $region159: #{transformer_decoder_forward.3} parent=147 // pred_region
          %1092 = dma.done [#allocation7], 16
        $region160: #{transformer_decoder_forward.3} parent=147 // pred_fallthru
          _
        // Predicated region
        $region161: #{transformer_decoder_forward.3} parent=147 // pred_check
          %p1093 = pneg %p399
        $region162: #{transformer_decoder_forward.3} parent=147 // pred_check_branch
          %1095 = sbr.rel (%p1093) target = $region164
        $region163: #{transformer_decoder_forward.3} parent=147 // pred_region
          %1096 = dma.done [#allocation10], 16
        $region164: #{transformer_decoder_forward.3} parent=147 // pred_fallthru
          _
        // Predicated region
        $region165: #{transformer_decoder_forward.3} parent=147 // pred_check
          %p1097 = pneg %p441
        $region166: #{transformer_decoder_forward.3} parent=147 // pred_check_branch
          %1099 = sbr.rel (%p1097) target = $region168
        $region167: #{transformer_decoder_forward.3} parent=147 // pred_region
          %1100 = dma.done [#allocation10], 16
        $region168: #{transformer_decoder_forward.3} parent=147 // pred_fallthru
          _
        // Predicated region
        $region169: #{transformer_decoder_forward.3} parent=147 // pred_check
          %p1101 = pneg %p483
        $region170: #{transformer_decoder_forward.3} parent=147 // pred_check_branch
          %1103 = sbr.rel (%p1101) target = $region172
        $region171: #{transformer_decoder_forward.3} parent=147 // pred_region
          %1104 = dma.done [#allocation13], 16
        $region172: #{transformer_decoder_forward.3} parent=147 // pred_fallthru
          _
        // Predicated region
        $region173: #{transformer_decoder_forward.3} parent=147 // pred_check
          %p1105 = pneg %p525
        $region174: #{transformer_decoder_forward.3} parent=147 // pred_check_branch
          %1107 = sbr.rel (%p1105) target = $region176
        $region175: #{transformer_decoder_forward.3} parent=147 // pred_region
          %1108 = dma.done [#allocation13], 16
        $region176: #{transformer_decoder_forward.3} parent=147 // pred_fallthru
          _
        // Predicated region
        $region177: #{transformer_decoder_forward.3} parent=147 // pred_check
          %p1109 = pneg %p567
        $region178: #{transformer_decoder_forward.3} parent=147 // pred_check_branch
          %1111 = sbr.rel (%p1109) target = $region180
        $region179: #{transformer_decoder_forward.3} parent=147 // pred_region
          %1112 = dma.done [#allocation16], 16
        $region180: #{transformer_decoder_forward.3} parent=147 // pred_fallthru
          _
        // Predicated region
        $region181: #{transformer_decoder_forward.3} parent=147 // pred_check
          %p1113 = pneg %p588
        $region182: #{transformer_decoder_forward.3} parent=147 // pred_check_branch
          %1115 = sbr.rel (%p1113) target = $region184
        $region183: #{transformer_decoder_forward.3} parent=147 // pred_region
          %1116 = dma.done [#allocation16], 16
        $region184: #{transformer_decoder_forward.3} parent=147 // pred_fallthru
          _
        // Predicated region
        $region185: #{transformer_decoder_forward.3} parent=147 // pred_check
          %p1117 = pneg %p609
        $region186: #{transformer_decoder_forward.3} parent=147 // pred_check_branch
          %1119 = sbr.rel (%p1117) target = $region188
        $region187: #{transformer_decoder_forward.3} parent=147 // pred_region
          %1120 = dma.done [#allocation19], 16
        $region188: #{transformer_decoder_forward.3} parent=147 // pred_fallthru
          _
        // Predicated region
        $region189: #{transformer_decoder_forward.3} parent=147 // pred_check
          %p1121 = pneg %p651
        $region190: #{transformer_decoder_forward.3} parent=147 // pred_check_branch
          %1123 = sbr.rel (%p1121) target = $region192
        $region191: #{transformer_decoder_forward.3} parent=147 // pred_region
          %1124 = dma.done [#allocation19], 16
        $region192: #{transformer_decoder_forward.3} parent=147 // pred_fallthru
          _
        // Predicated region
        $region193: #{transformer_decoder_forward.3} parent=147 // pred_check
          %p1125 = pneg %p693
        $region194: #{transformer_decoder_forward.3} parent=147 // pred_check_branch
          %1127 = sbr.rel (%p1125) target = $region196
        $region195: #{transformer_decoder_forward.3} parent=147 // pred_region
          %1128 = dma.done [#allocation22], 16
        $region196: #{transformer_decoder_forward.3} parent=147 // pred_fallthru
          _
        // Predicated region
        $region197: #{transformer_decoder_forward.3} parent=147 // pred_check
          %p1129 = pneg %p714
        $region198: #{transformer_decoder_forward.3} parent=147 // pred_check_branch
          %1131 = sbr.rel (%p1129) target = $region200
        $region199: #{transformer_decoder_forward.3} parent=147 // pred_region
          %1132 = dma.done [#allocation22], 16
        $region200: #{transformer_decoder_forward.3} parent=147 // pred_fallthru
          _
        // Predicated region
        $region201: #{transformer_decoder_forward.3} parent=147 // pred_check
          %p1133 = pneg %p735
        $region202: #{transformer_decoder_forward.3} parent=147 // pred_check_branch
          %1135 = sbr.rel (%p1133) target = $region204
        $region203: #{transformer_decoder_forward.3} parent=147 // pred_region
          %1136 = dma.done [#allocation25], 16
        $region204: #{transformer_decoder_forward.3} parent=147 // pred_fallthru
          _
        %p1137 = scmp.lt.s32.totalorder %s90, 1
        %s1138 = scalar_select %p1137, %s90, 1
        %s1139 = smul.addr %s1138, 8
        %s1140 = scalar_lea.vmem %s1, %s1139
        %p1141 = pneg %p111
        %p1142 = pneg %p108
        %p1143 = scmp.lt.s32.totalorder %s90, 1
        %s1144 = scalar_select %p1143, %s90, 1
        %s1145 = smul.addr %s1144, 8
        %s1146 = scalar_lea.vmem %s3, %s1145
        %p1147 = pneg %p137
        %p1148 = pneg %p134
        %p1149 = scmp.lt.s32.totalorder %s90, 1
        %s1150 = scalar_select %p1149, %s90, 1
        %s1151 = smul.addr %s1150, 2
        %s1152 = smul.addr %s1151, 8
        %s1153 = scalar_lea.vmem %s5, %s1152
        %p1154 = pneg %p163
        %p1155 = pneg %p160
        %p1156 = scmp.lt.s32.totalorder %s90, 1
        %s1157 = scalar_select %p1156, %s90, 1
        %s1158 = smul.addr %s1157, 2
        %s1159 = smul.addr %s1158, 8
        %s1160 = scalar_lea.vmem %s7, %s1159
        %p1161 = pneg %p189
        %p1162 = pneg %p186
        %p1163 = pneg %p210
        %p1164 = pneg %p207
        %p1165 = pneg %p231
        %p1166 = pneg %p228
        %p1167 = pneg %p252
        %p1168 = pneg %p249
        %p1169 = pneg %p273
        %p1170 = pneg %p270
        %p1171 = pneg %p294
        %p1172 = pneg %p291
        %p1173 = pneg %p315
        %p1174 = pneg %p312
        %p1175 = pneg %p336
        %p1176 = pneg %p333
        %p1177 = pneg %p357
        %p1178 = pneg %p354
        %p1179 = pneg %p378
        %p1180 = pneg %p375
        %p1181 = pneg %p399
        %p1182 = pneg %p396
        %p1183 = pneg %p420
        %p1184 = pneg %p417
        %p1185 = pneg %p441
        %p1186 = pneg %p438
        %p1187 = pneg %p462
        %p1188 = pneg %p459
        %p1189 = pneg %p483
        %p1190 = pneg %p480
        %p1191 = pneg %p504
        %p1192 = pneg %p501
        %p1193 = pneg %p525
        %p1194 = pneg %p522
        %p1195 = pneg %p546
        %p1196 = pneg %p543
        %p1197 = pneg %p567
        %p1198 = pneg %p564
        %p1199 = pneg %p588
        %p1200 = pneg %p585
        %p1201 = pneg %p609
        %p1202 = pneg %p606
        %p1203 = pneg %p630
        %p1204 = pneg %p627
        %p1205 = pneg %p651
        %p1206 = pneg %p648
        %p1207 = pneg %p672
        %p1208 = pneg %p669
        %p1209 = pneg %p693
        %p1210 = pneg %p690
        %p1211 = pneg %p714
        %p1212 = pneg %p711
        %p1213 = pneg %p735
        %p1214 = pneg %p732
        %p1215 = pneg %p756
        %p1216 = pneg %p753
        %p1217 = pneg %p777
        %p1218 = pneg %p774
        %p1219 = pneg %p803
        %p1220 = pneg %p800
        %s1221 = sand.u32 %s790, 1
        %s1222 = scalar_lea.sflag [#allocation5], %s1221
        %s1223 = sand.u32 %s790, 1
        %s1224 = smul.addr %s1223, 8
        %s1225 = scalar_lea.vmem [#allocation26], %s1224
        %p1226 = pneg %p829
        %p1227 = pneg %p826
        %p1228 = scmp.lt.s32.totalorder %s90, 1
        %s1229 = scalar_select %p1228, %s90, 1
        %s1230 = smul.addr %s1229, 8
        %s1231 = scalar_lea.vmem %s67, %s1230
        %p1232 = scmp.lt.s32.totalorder %s90, 1
        %s1233 = scalar_select %p1232, %s90, 1
        %s1234 = smul.addr %s1233, 8
        %s1235 = scalar_lea.vmem %s1, %s1234
        %p1236 = scmp.lt.s32.totalorder %s90, 1
        %s1237 = scalar_select %p1236, %s90, 1
        %s1238 = smul.addr %s1237, 8
        %s1239 = scalar_lea.vmem %s3, %s1238
        %p1240 = scmp.lt.s32.totalorder %s90, 1
        %s1241 = scalar_select %p1240, %s90, 1
        %s1242 = smul.addr %s1241, 2
        %s1243 = smul.addr %s1242, 8
        %s1244 = scalar_lea.vmem %s5, %s1243
        %p1245 = scmp.lt.s32.totalorder %s90, 1
        %s1246 = scalar_select %p1245, %s90, 1
        %s1247 = smul.addr %s1246, 2
        %s1248 = smul.addr %s1247, 8
        %s1249 = scalar_lea.vmem %s7, %s1248
        %p1250 = scmp.lt.s32.totalorder %s90, 1
        %s1251 = scalar_select %p1250, %s90, 1
        %s1252 = smul.addr %s1251, 8
        %s1253 = scalar_lea.vmem %s67, %s1252
        %v1255 = vld [vmem:[%s1235] sm:$0xff]
        %v1256 = vld [vmem:[%s1239] sm:$0xff]
        %v1257 = vld [vmem:[%s1244] sm:$0xff]
        %v1258 = vld [vmem:[%s1244 + $0x8] sm:$0xf]
        %v1259 = vld [vmem:[%s1249] sm:$0xff]
        %v1260 = vld [vmem:[%s1249 + $0x8] sm:$0xf]
        %v1261 = vadd.f32 %v1255, %v1256
        %v1262 = vpack.c.bf16 %v1261, %v1261
        %v1263 = vpack.c.bf16 %v1255, %v1255
        %v1264 = vld [vmem:[%s9] sm:$0xf]
        %v1265 = vld [vmem:[%s9 + $0x4] sm:$0xf]
        %v1266 = vld [vmem:[%s9 + $0x8] sm:$0xf]
        %v1267 = vld [vmem:[%s9 + $0xc] sm:$0xf]
        %v1268 = vld [vmem:[%s11] sm:$0x1]
        %v1270 = vlaneseq
        %v1271 = vshrl.u32 %v1270, 7
        %v1272 = vsub.s32 0, %v1271
        %v1273 = vrot.slane %v1268, %v1272
        %v1279 = vunpack.c.l.b16 %v1264
        %v1280 = vunpack.c.l.b16 %v1265
        %v1281 = vunpack.c.l.b16 %v1266
        %v1282 = vunpack.c.l.b16 %v1267
        %v1283 = vpack.c.b16 %v1280, %v1279
        %v1284 = vpack.c.b16 %v1282, %v1281
        %vm1287 = vcmask 261120
        %v1289 = vsel %vm1287, %v1262, 0
        %1291 = vmatprep.subr.bf16.mxu0 0
        %1292 = vmatpush1.bf16.msra.mxu0 %v1283
        %1293 = vmatprep.subr.bf16.mxu0 0
        %1294 = vmatpush1.bf16.msra.mxu0 %v1284
        %1295 = vmatprep.subr.bf16.mxu0 0
        %1296 = vmatpush1.bf16.msra.mxu0 0
        %1297 = vmatprep.subr.bf16.mxu0 0
        %1298 = vmatpush1.bf16.msra.mxu0 0
        %1299 = vmatprep.subr.bf16.mxu0 0
        %1300 = vmatpush1.bf16.msra.mxu0 0
        %1301 = vmatprep.subr.bf16.mxu0 0
        %1302 = vmatpush1.bf16.msra.mxu0 0
        %1303 = vmatprep.subr.bf16.mxu0 0
        %1304 = vmatpush1.bf16.msra.mxu0 0
        %1305 = vmatprep.subr.bf16.mxu0 0
        %1306 = vmatpush1.bf16.msra.mxu0 0
        %1307 = vmatprep.subr.bf16.mxu0 0
        %1308 = vmatpush1.bf16.msra.mxu0 0
        %1309 = vmatprep.subr.bf16.mxu0 0
        %1310 = vmatpush1.bf16.msra.mxu0 0
        %1311 = vmatprep.subr.bf16.mxu0 0
        %1312 = vmatpush1.bf16.msra.mxu0 0
        %1313 = vmatprep.subr.bf16.mxu0 0
        %1314 = vmatpush1.bf16.msra.mxu0 0
        %1315 = vmatprep.subr.bf16.mxu0 0
        %1316 = vmatpush1.bf16.msra.mxu0 0
        %1317 = vmatprep.subr.bf16.mxu0 0
        %1318 = vmatpush1.bf16.msra.mxu0 0
        %1319 = vmatprep.subr.bf16.mxu0 0
        %1320 = vmatpush1.bf16.msra.mxu0 0
        %1321 = vmatprep.subr.bf16.mxu0 0
        %1322 = vmatpush1.bf16.msra.mxu0 0
        %1323 = vmatprep.mubr.bf16.mxu0 0
        %1324 = vmatmul.mubr.bf16.gmra.mrb[0].mxu0 %v1289
        %v1325 = vpop.f32.mrb[0].mxu0
        %v1326 = vadd.f32 %v1273, %v1325
        %v1327 = vpop.f32.mrb[0].mxu0
        %v1328 = vpop.f32.mrb[0].mxu0
        %v1329 = vpop.f32.mrb[0].mxu0
        %1330 = vdwg.mxu0
        %v1331 = vld [vmem:[%s13] sm:$0xf]
        %v1332 = vld [vmem:[%s13 + $0x4] sm:$0xf]
        %v1333 = vld [vmem:[%s13 + $0x8] sm:$0xf]
        %v1334 = vld [vmem:[%s13 + $0xc] sm:$0xf]
        %v1335 = vld [vmem:[%s15] sm:$0x1]
        %v1337 = vlaneseq
        %v1338 = vshrl.u32 %v1337, 7
        %v1339 = vsub.s32 0, %v1338
        %v1340 = vrot.slane %v1335, %v1339
        %v1346 = vunpack.c.l.b16 %v1331
        %v1347 = vunpack.c.l.b16 %v1332
        %v1348 = vunpack.c.l.b16 %v1333
        %v1349 = vunpack.c.l.b16 %v1334
        %v1350 = vpack.c.b16 %v1347, %v1346
        %v1351 = vpack.c.b16 %v1349, %v1348
        %1354 = vmatprep.subr.bf16.mxu0 0
        %1355 = vmatpush1.bf16.msra.mxu0 %v1350
        %1356 = vmatprep.subr.bf16.mxu0 0
        %1357 = vmatpush1.bf16.msra.mxu0 %v1351
        %1358 = vmatprep.subr.bf16.mxu0 0
        %1359 = vmatpush1.bf16.msra.mxu0 0
        %1360 = vmatprep.subr.bf16.mxu0 0
        %1361 = vmatpush1.bf16.msra.mxu0 0
        %1362 = vmatprep.subr.bf16.mxu0 0
        %1363 = vmatpush1.bf16.msra.mxu0 0
        %1364 = vmatprep.subr.bf16.mxu0 0
        %1365 = vmatpush1.bf16.msra.mxu0 0
        %1366 = vmatprep.subr.bf16.mxu0 0
        %1367 = vmatpush1.bf16.msra.mxu0 0
        %1368 = vmatprep.subr.bf16.mxu0 0
        %1369 = vmatpush1.bf16.msra.mxu0 0
        %1370 = vmatprep.subr.bf16.mxu0 0
        %1371 = vmatpush1.bf16.msra.mxu0 0
        %1372 = vmatprep.subr.bf16.mxu0 0
        %1373 = vmatpush1.bf16.msra.mxu0 0
        %1374 = vmatprep.subr.bf16.mxu0 0
        %1375 = vmatpush1.bf16.msra.mxu0 0
        %1376 = vmatprep.subr.bf16.mxu0 0
        %1377 = vmatpush1.bf16.msra.mxu0 0
        %1378 = vmatprep.subr.bf16.mxu0 0
        %1379 = vmatpush1.bf16.msra.mxu0 0
        %1380 = vmatprep.subr.bf16.mxu0 0
        %1381 = vmatpush1.bf16.msra.mxu0 0
        %1382 = vmatprep.subr.bf16.mxu0 0
        %1383 = vmatpush1.bf16.msra.mxu0 0
        %1384 = vmatprep.subr.bf16.mxu0 0
        %1385 = vmatpush1.bf16.msra.mxu0 0
        %1386 = vmatprep.mubr.bf16.mxu0 0
        %1387 = vmatmul.mubr.bf16.gmra.mrb[0].mxu0 %v1289
        %v1388 = vpop.f32.mrb[0].mxu0
        %v1389 = vadd.f32 %v1340, %v1388
        %v1390 = vpop.f32.mrb[0].mxu0
        %v1391 = vpop.f32.mrb[0].mxu0
        %v1392 = vpop.f32.mrb[0].mxu0
        %1393 = vdwg.mxu0
        %v1394 = vld [vmem:[%s17] sm:$0xf]
        %v1395 = vld [vmem:[%s17 + $0x4] sm:$0xf]
        %v1396 = vld [vmem:[%s17 + $0x8] sm:$0xf]
        %v1397 = vld [vmem:[%s17 + $0xc] sm:$0xf]
        %v1398 = vld [vmem:[#allocation3] sm:$0x1]
        %v1400 = vlaneseq
        %v1401 = vshrl.u32 %v1400, 7
        %v1402 = vsub.s32 0, %v1401
        %v1403 = vrot.slane %v1398, %v1402
        %v1409 = vunpack.c.l.b16 %v1394
        %v1410 = vunpack.c.l.b16 %v1395
        %v1411 = vunpack.c.l.b16 %v1396
        %v1412 = vunpack.c.l.b16 %v1397
        %v1413 = vpack.c.b16 %v1410, %v1409
        %v1414 = vpack.c.b16 %v1412, %v1411
        %v1418 = vsel %vm1287, %v1263, 0
        %1420 = vmatprep.subr.bf16.mxu0 0
        %1421 = vmatpush1.bf16.msra.mxu0 %v1413
        %1422 = vmatprep.subr.bf16.mxu0 0
        %1423 = vmatpush1.bf16.msra.mxu0 %v1414
        %1424 = vmatprep.subr.bf16.mxu0 0
        %1425 = vmatpush1.bf16.msra.mxu0 0
        %1426 = vmatprep.subr.bf16.mxu0 0
        %1427 = vmatpush1.bf16.msra.mxu0 0
        %1428 = vmatprep.subr.bf16.mxu0 0
        %1429 = vmatpush1.bf16.msra.mxu0 0
        %1430 = vmatprep.subr.bf16.mxu0 0
        %1431 = vmatpush1.bf16.msra.mxu0 0
        %1432 = vmatprep.subr.bf16.mxu0 0
        %1433 = vmatpush1.bf16.msra.mxu0 0
        %1434 = vmatprep.subr.bf16.mxu0 0
        %1435 = vmatpush1.bf16.msra.mxu0 0
        %1436 = vmatprep.subr.bf16.mxu0 0
        %1437 = vmatpush1.bf16.msra.mxu0 0
        %1438 = vmatprep.subr.bf16.mxu0 0
        %1439 = vmatpush1.bf16.msra.mxu0 0
        %1440 = vmatprep.subr.bf16.mxu0 0
        %1441 = vmatpush1.bf16.msra.mxu0 0
        %1442 = vmatprep.subr.bf16.mxu0 0
        %1443 = vmatpush1.bf16.msra.mxu0 0
        %1444 = vmatprep.subr.bf16.mxu0 0
        %1445 = vmatpush1.bf16.msra.mxu0 0
        %1446 = vmatprep.subr.bf16.mxu0 0
        %1447 = vmatpush1.bf16.msra.mxu0 0
        %1448 = vmatprep.subr.bf16.mxu0 0
        %1449 = vmatpush1.bf16.msra.mxu0 0
        %1450 = vmatprep.subr.bf16.mxu0 0
        %1451 = vmatpush1.bf16.msra.mxu0 0
        %1452 = vmatprep.mubr.bf16.mxu0 0
        %1453 = vmatmul.mubr.bf16.gmra.mrb[0].mxu0 %v1418
        %v1454 = vpop.f32.mrb[0].mxu0
        %v1455 = vadd.f32 %v1403, %v1454
        %v1456 = vpop.f32.mrb[0].mxu0
        %v1457 = vpop.f32.mrb[0].mxu0
        %v1458 = vpop.f32.mrb[0].mxu0
        %1459 = vdwg.mxu0
        %v1460 = vpack.c.bf16 %v1326, %v1326
        %v1461 = vpack.c.bf16 %v1389, %v1389
        %v1462 = vpack.c.bf16 %v1455, %v1455
        %vm1463 = vcmask 64512
        %v1465 = vsel %vm1463, %v1460, 0
        %v1468 = vsel %vm1463, %v1461, 0
        %1470 = vmatprep.subr.bf16.mxu0 0
        %1471 = vmatpush1.bf16.xpose.msra.mxu0 %v1468
        %1472 = vmatprep.subr.bf16.mxu0 0
        %1473 = vmatpush1.bf16.xpose.msra.mxu0 0
        %1474 = vmatprep.subr.bf16.mxu0 0
        %1475 = vmatpush1.bf16.xpose.msra.mxu0 0
        %1476 = vmatprep.subr.bf16.mxu0 0
        %1477 = vmatpush1.bf16.xpose.msra.mxu0 0
        %1478 = vmatprep.subr.bf16.mxu0 0
        %1479 = vmatpush1.bf16.xpose.msra.mxu0 0
        %1480 = vmatprep.subr.bf16.mxu0 0
        %1481 = vmatpush1.bf16.xpose.msra.mxu0 0
        %1482 = vmatprep.subr.bf16.mxu0 0
        %1483 = vmatpush1.bf16.xpose.msra.mxu0 0
        %1484 = vmatprep.subr.bf16.mxu0 0
        %1485 = vmatpush1.bf16.xpose.msra.mxu0 0
        %1486 = vmatprep.subr.bf16.mxu0 0
        %1487 = vmatpush1.bf16.xpose.msra.mxu0 0
        %1488 = vmatprep.subr.bf16.mxu0 0
        %1489 = vmatpush1.bf16.xpose.msra.mxu0 0
        %1490 = vmatprep.subr.bf16.mxu0 0
        %1491 = vmatpush1.bf16.xpose.msra.mxu0 0
        %1492 = vmatprep.subr.bf16.mxu0 0
        %1493 = vmatpush1.bf16.xpose.msra.mxu0 0
        %1494 = vmatprep.subr.bf16.mxu0 0
        %1495 = vmatpush1.bf16.xpose.msra.mxu0 0
        %1496 = vmatprep.subr.bf16.mxu0 0
        %1497 = vmatpush1.bf16.xpose.msra.mxu0 0
        %1498 = vmatprep.subr.bf16.mxu0 0
        %1499 = vmatpush1.bf16.xpose.msra.mxu0 0
        %1500 = vmatprep.subr.bf16.mxu0 0
        %1501 = vmatpush1.bf16.xpose.msra.mxu0 0
        %1502 = vmatprep.mubr.bf16.mxu0 0
        %1503 = vmatmul.mubr.bf16.gmra.mrb[0].mxu0 %v1465
        %v1504 = vpop.f32.mrb[0].mxu0
        %v1505 = vadd.f32 0.0, %v1504
        %v1506 = vpop.f32.mrb[0].mxu0
        %v1507 = vpop.f32.mrb[0].mxu0
        %v1508 = vpop.f32.mrb[0].mxu0
        %1509 = vdwg.mxu0
        %v1510 = vsel %vm1463, %v1505, -inf
        %1511 = vmax.xlane.f32.xlu0 %v1510
        %v1512 = vpop.xlane.xlu0 %1511
        %v1513 = vsub.f32 %v1505, %v1512
        %v1514 = vmul.f32 %v1513, 1.442695
        %v1515 = vpow.pop %v1514
        %v1516 = vsel %vm1463, %v1515, 0.0
        %1517 = vadd.xlane.f32.xlu0 %v1516
        %v1518 = vpop.xlane.xlu0 %1517
        %v1519 = vrcp.pop %v1518
        %v1520 = vpack.c.bf16 %v1515, %v1515
        %v1522 = vsel %vm1463, %v1520, 0
        %vm1524 = vcmask 1043456
        %v1526 = vsel %vm1524, %v1462, 0
        %1528 = vmatprep.subr.bf16.mxu0 0
        %1529 = vmatpush1.bf16.msra.mxu0 %v1526
        %1530 = vmatprep.subr.bf16.mxu0 0
        %1531 = vmatpush1.bf16.msra.mxu0 0
        %1532 = vmatprep.subr.bf16.mxu0 0
        %1533 = vmatpush1.bf16.msra.mxu0 0
        %1534 = vmatprep.subr.bf16.mxu0 0
        %1535 = vmatpush1.bf16.msra.mxu0 0
        %1536 = vmatprep.subr.bf16.mxu0 0
        %1537 = vmatpush1.bf16.msra.mxu0 0
        %1538 = vmatprep.subr.bf16.mxu0 0
        %1539 = vmatpush1.bf16.msra.mxu0 0
        %1540 = vmatprep.subr.bf16.mxu0 0
        %1541 = vmatpush1.bf16.msra.mxu0 0
        %1542 = vmatprep.subr.bf16.mxu0 0
        %1543 = vmatpush1.bf16.msra.mxu0 0
        %1544 = vmatprep.subr.bf16.mxu0 0
        %1545 = vmatpush1.bf16.msra.mxu0 0
        %1546 = vmatprep.subr.bf16.mxu0 0
        %1547 = vmatpush1.bf16.msra.mxu0 0
        %1548 = vmatprep.subr.bf16.mxu0 0
        %1549 = vmatpush1.bf16.msra.mxu0 0
        %1550 = vmatprep.subr.bf16.mxu0 0
        %1551 = vmatpush1.bf16.msra.mxu0 0
        %1552 = vmatprep.subr.bf16.mxu0 0
        %1553 = vmatpush1.bf16.msra.mxu0 0
        %1554 = vmatprep.subr.bf16.mxu0 0
        %1555 = vmatpush1.bf16.msra.mxu0 0
        %1556 = vmatprep.subr.bf16.mxu0 0
        %1557 = vmatpush1.bf16.msra.mxu0 0
        %1558 = vmatprep.subr.bf16.mxu0 0
        %1559 = vmatpush1.bf16.msra.mxu0 0
        %1560 = vmatprep.mubr.bf16.mxu0 0
        %1561 = vmatmul.mubr.bf16.gmra.mrb[0].mxu0 %v1522
        %v1562 = vpop.f32.mrb[0].mxu0
        %v1563 = vadd.f32 0.0, %v1562
        %v1564 = vpop.f32.mrb[0].mxu0
        %v1565 = vpop.f32.mrb[0].mxu0
        %v1566 = vpop.f32.mrb[0].mxu0
        %1567 = vdwg.mxu0
        %v1568 = vmul.f32 %v1563, %v1519
        %v1569 = vpack.c.bf16 %v1568, %v1568
        %vm1570 = vcmask 60416
        %1571 = vst.msk [vmem:[#allocation2] sm:$0xf] %vm1570, %v1569
        %1573 = vrot.lane.b32.xlu0 %v1460, 120
        %v1574 = vpop.permute.xlu0 %1573
        %1576 = vrot.lane.b32.xlu0 %v1461, 120
        %v1577 = vpop.permute.xlu0 %1576
        %v1579 = vsel %vm1463, %v1574, 0
        %v1582 = vsel %vm1463, %v1577, 0
        %1584 = vmatprep.subr.bf16.mxu0 0
        %1585 = vmatpush1.bf16.xpose.msra.mxu0 %v1582
        %1586 = vmatprep.subr.bf16.mxu0 0
        %1587 = vmatpush1.bf16.xpose.msra.mxu0 0
        %1588 = vmatprep.subr.bf16.mxu0 0
        %1589 = vmatpush1.bf16.xpose.msra.mxu0 0
        %1590 = vmatprep.subr.bf16.mxu0 0
        %1591 = vmatpush1.bf16.xpose.msra.mxu0 0
        %1592 = vmatprep.subr.bf16.mxu0 0
        %1593 = vmatpush1.bf16.xpose.msra.mxu0 0
        %1594 = vmatprep.subr.bf16.mxu0 0
        %1595 = vmatpush1.bf16.xpose.msra.mxu0 0
        %1596 = vmatprep.subr.bf16.mxu0 0
        %1597 = vmatpush1.bf16.xpose.msra.mxu0 0
        %1598 = vmatprep.subr.bf16.mxu0 0
        %1599 = vmatpush1.bf16.xpose.msra.mxu0 0
        %1600 = vmatprep.subr.bf16.mxu0 0
        %1601 = vmatpush1.bf16.xpose.msra.mxu0 0
        %1602 = vmatprep.subr.bf16.mxu0 0
        %1603 = vmatpush1.bf16.xpose.msra.mxu0 0
        %1604 = vmatprep.subr.bf16.mxu0 0
        %1605 = vmatpush1.bf16.xpose.msra.mxu0 0
        %1606 = vmatprep.subr.bf16.mxu0 0
        %1607 = vmatpush1.bf16.xpose.msra.mxu0 0
        %1608 = vmatprep.subr.bf16.mxu0 0
        %1609 = vmatpush1.bf16.xpose.msra.mxu0 0
        %1610 = vmatprep.subr.bf16.mxu0 0
        %1611 = vmatpush1.bf16.xpose.msra.mxu0 0
        %1612 = vmatprep.subr.bf16.mxu0 0
        %1613 = vmatpush1.bf16.xpose.msra.mxu0 0
        %1614 = vmatprep.subr.bf16.mxu0 0
        %1615 = vmatpush1.bf16.xpose.msra.mxu0 0
        %1616 = vmatprep.mubr.bf16.mxu0 0
        %1617 = vmatmul.mubr.bf16.gmra.mrb[0].mxu0 %v1579
        %v1618 = vpop.f32.mrb[0].mxu0
        %v1619 = vadd.f32 0.0, %v1618
        %v1620 = vpop.f32.mrb[0].mxu0
        %v1621 = vpop.f32.mrb[0].mxu0
        %v1622 = vpop.f32.mrb[0].mxu0
        %1623 = vdwg.mxu0
        %v1624 = vsel %vm1463, %v1619, -inf
        %1625 = vmax.xlane.f32.xlu0 %v1624
        %v1626 = vpop.xlane.xlu0 %1625
        %v1627 = vsub.f32 %v1619, %v1626
        %v1628 = vmul.f32 %v1627, 1.442695
        %v1629 = vpow.pop %v1628
        %v1630 = vsel %vm1463, %v1629, 0.0
        %1631 = vadd.xlane.f32.xlu0 %v1630
        %v1632 = vpop.xlane.xlu0 %1631
        %v1633 = vrcp.pop %v1632
        %v1634 = vpack.c.bf16 %v1629, %v1629
        %1636 = vrot.lane.b32.xlu0 %v1462, 120
        %v1637 = vpop.permute.xlu0 %1636
        %v1639 = vsel %vm1463, %v1634, 0
        %v1642 = vsel %vm1524, %v1637, 0
        %1644 = vmatprep.subr.bf16.mxu0 0
        %1645 = vmatpush1.bf16.msra.mxu0 %v1642
        %1646 = vmatprep.subr.bf16.mxu0 0
        %1647 = vmatpush1.bf16.msra.mxu0 0
        %1648 = vmatprep.subr.bf16.mxu0 0
        %1649 = vmatpush1.bf16.msra.mxu0 0
        %1650 = vmatprep.subr.bf16.mxu0 0
        %1651 = vmatpush1.bf16.msra.mxu0 0
        %1652 = vmatprep.subr.bf16.mxu0 0
        %1653 = vmatpush1.bf16.msra.mxu0 0
        %1654 = vmatprep.subr.bf16.mxu0 0
        %1655 = vmatpush1.bf16.msra.mxu0 0
        %1656 = vmatprep.subr.bf16.mxu0 0
        %1657 = vmatpush1.bf16.msra.mxu0 0
        %1658 = vmatprep.subr.bf16.mxu0 0
        %1659 = vmatpush1.bf16.msra.mxu0 0
        %1660 = vmatprep.subr.bf16.mxu0 0
        %1661 = vmatpush1.bf16.msra.mxu0 0
        %1662 = vmatprep.subr.bf16.mxu0 0
        %1663 = vmatpush1.bf16.msra.mxu0 0
        %1664 = vmatprep.subr.bf16.mxu0 0
        %1665 = vmatpush1.bf16.msra.mxu0 0
        %1666 = vmatprep.subr.bf16.mxu0 0
        %1667 = vmatpush1.bf16.msra.mxu0 0
        %1668 = vmatprep.subr.bf16.mxu0 0
        %1669 = vmatpush1.bf16.msra.mxu0 0
        %1670 = vmatprep.subr.bf16.mxu0 0
        %1671 = vmatpush1.bf16.msra.mxu0 0
        %1672 = vmatprep.subr.bf16.mxu0 0
        %1673 = vmatpush1.bf16.msra.mxu0 0
        %1674 = vmatprep.subr.bf16.mxu0 0
        %1675 = vmatpush1.bf16.msra.mxu0 0
        %1676 = vmatprep.mubr.bf16.mxu0 0
        %1677 = vmatmul.mubr.bf16.gmra.mrb[0].mxu0 %v1639
        %v1678 = vpop.f32.mrb[0].mxu0
        %v1679 = vadd.f32 0.0, %v1678
        %v1680 = vpop.f32.mrb[0].mxu0
        %v1681 = vpop.f32.mrb[0].mxu0
        %v1682 = vpop.f32.mrb[0].mxu0
        %1683 = vdwg.mxu0
        %v1684 = vmul.f32 %v1679, %v1633
        %v1685 = vpack.c.bf16 %v1684, %v1684
        %v1687 = vunpack.c.l.b16 %v1685
        %v1688 = vpack.c.b16 %v1687, %v1687
        %1689 = vrot.lane.b32.xlu0 %v1688, 8
        %v1690 = vpop.permute.xlu0 %1689
        %vm1692 = vcmask 126016
        %1693 = vst.msk [vmem:[#allocation2] sm:$0xf] %vm1692, %v1690
        %1694 = vrot.lane.b32.xlu0 %v1460, 112
        %v1695 = vpop.permute.xlu0 %1694
        %1696 = vrot.lane.b32.xlu0 %v1461, 112
        %v1697 = vpop.permute.xlu0 %1696
        %v1699 = vsel %vm1463, %v1695, 0
        %v1702 = vsel %vm1463, %v1697, 0
        %1704 = vmatprep.subr.bf16.mxu0 0
        %1705 = vmatpush1.bf16.xpose.msra.mxu0 %v1702
        %1706 = vmatprep.subr.bf16.mxu0 0
        %1707 = vmatpush1.bf16.xpose.msra.mxu0 0
        %1708 = vmatprep.subr.bf16.mxu0 0
        %1709 = vmatpush1.bf16.xpose.msra.mxu0 0
        %1710 = vmatprep.subr.bf16.mxu0 0
        %1711 = vmatpush1.bf16.xpose.msra.mxu0 0
        %1712 = vmatprep.subr.bf16.mxu0 0
        %1713 = vmatpush1.bf16.xpose.msra.mxu0 0
        %1714 = vmatprep.subr.bf16.mxu0 0
        %1715 = vmatpush1.bf16.xpose.msra.mxu0 0
        %1716 = vmatprep.subr.bf16.mxu0 0
        %1717 = vmatpush1.bf16.xpose.msra.mxu0 0
        %1718 = vmatprep.subr.bf16.mxu0 0
        %1719 = vmatpush1.bf16.xpose.msra.mxu0 0
        %1720 = vmatprep.subr.bf16.mxu0 0
        %1721 = vmatpush1.bf16.xpose.msra.mxu0 0
        %1722 = vmatprep.subr.bf16.mxu0 0
        %1723 = vmatpush1.bf16.xpose.msra.mxu0 0
        %1724 = vmatprep.subr.bf16.mxu0 0
        %1725 = vmatpush1.bf16.xpose.msra.mxu0 0
        %1726 = vmatprep.subr.bf16.mxu0 0
        %1727 = vmatpush1.bf16.xpose.msra.mxu0 0
        %1728 = vmatprep.subr.bf16.mxu0 0
        %1729 = vmatpush1.bf16.xpose.msra.mxu0 0
        %1730 = vmatprep.subr.bf16.mxu0 0
        %1731 = vmatpush1.bf16.xpose.msra.mxu0 0
        %1732 = vmatprep.subr.bf16.mxu0 0
        %1733 = vmatpush1.bf16.xpose.msra.mxu0 0
        %1734 = vmatprep.subr.bf16.mxu0 0
        %1735 = vmatpush1.bf16.xpose.msra.mxu0 0
        %1736 = vmatprep.mubr.bf16.mxu0 0
        %1737 = vmatmul.mubr.bf16.gmra.mrb[0].mxu0 %v1699
        %v1738 = vpop.f32.mrb[0].mxu0
        %v1739 = vadd.f32 0.0, %v1738
        %v1740 = vpop.f32.mrb[0].mxu0
        %v1741 = vpop.f32.mrb[0].mxu0
        %v1742 = vpop.f32.mrb[0].mxu0
        %1743 = vdwg.mxu0
        %v1744 = vsel %vm1463, %v1739, -inf
        %1745 = vmax.xlane.f32.xlu0 %v1744
        %v1746 = vpop.xlane.xlu0 %1745
        %v1747 = vsub.f32 %v1739, %v1746
        %v1748 = vmul.f32 %v1747, 1.442695
        %v1749 = vpow.pop %v1748
        %v1750 = vsel %vm1463, %v1749, 0.0
        %1751 = vadd.xlane.f32.xlu0 %v1750
        %v1752 = vpop.xlane.xlu0 %1751
        %v1753 = vrcp.pop %v1752
        %v1754 = vpack.c.bf16 %v1749, %v1749
        %1755 = vrot.lane.b32.xlu0 %v1462, 112
        %v1756 = vpop.permute.xlu0 %1755
        %v1758 = vsel %vm1463, %v1754, 0
        %v1761 = vsel %vm1524, %v1756, 0
        %1763 = vmatprep.subr.bf16.mxu0 0
        %1764 = vmatpush1.bf16.msra.mxu0 %v1761
        %1765 = vmatprep.subr.bf16.mxu0 0
        %1766 = vmatpush1.bf16.msra.mxu0 0
        %1767 = vmatprep.subr.bf16.mxu0 0
        %1768 = vmatpush1.bf16.msra.mxu0 0
        %1769 = vmatprep.subr.bf16.mxu0 0
        %1770 = vmatpush1.bf16.msra.mxu0 0
        %1771 = vmatprep.subr.bf16.mxu0 0
        %1772 = vmatpush1.bf16.msra.mxu0 0
        %1773 = vmatprep.subr.bf16.mxu0 0
        %1774 = vmatpush1.bf16.msra.mxu0 0
        %1775 = vmatprep.subr.bf16.mxu0 0
        %1776 = vmatpush1.bf16.msra.mxu0 0
        %1777 = vmatprep.subr.bf16.mxu0 0
        %1778 = vmatpush1.bf16.msra.mxu0 0
        %1779 = vmatprep.subr.bf16.mxu0 0
        %1780 = vmatpush1.bf16.msra.mxu0 0
        %1781 = vmatprep.subr.bf16.mxu0 0
        %1782 = vmatpush1.bf16.msra.mxu0 0
        %1783 = vmatprep.subr.bf16.mxu0 0
        %1784 = vmatpush1.bf16.msra.mxu0 0
        %1785 = vmatprep.subr.bf16.mxu0 0
        %1786 = vmatpush1.bf16.msra.mxu0 0
        %1787 = vmatprep.subr.bf16.mxu0 0
        %1788 = vmatpush1.bf16.msra.mxu0 0
        %1789 = vmatprep.subr.bf16.mxu0 0
        %1790 = vmatpush1.bf16.msra.mxu0 0
        %1791 = vmatprep.subr.bf16.mxu0 0
        %1792 = vmatpush1.bf16.msra.mxu0 0
        %1793 = vmatprep.subr.bf16.mxu0 0
        %1794 = vmatpush1.bf16.msra.mxu0 0
        %1795 = vmatprep.mubr.bf16.mxu0 0
        %1796 = vmatmul.mubr.bf16.gmra.mrb[0].mxu0 %v1758
        %v1797 = vpop.f32.mrb[0].mxu0
        %v1798 = vadd.f32 0.0, %v1797
        %v1799 = vpop.f32.mrb[0].mxu0
        %v1800 = vpop.f32.mrb[0].mxu0
        %v1801 = vpop.f32.mrb[0].mxu0
        %1802 = vdwg.mxu0
        %v1803 = vmul.f32 %v1798, %v1753
        %v1804 = vpack.c.bf16 %v1803, %v1803
        %v1806 = vunpack.c.l.b16 %v1804
        %v1807 = vpack.c.b16 %v1806, %v1806
        %1808 = vrot.lane.b32.xlu0 %v1807, 16
        %v1809 = vpop.permute.xlu0 %1808
        %vm1811 = vcmask 191616
        %1812 = vst.msk [vmem:[#allocation2] sm:$0xf] %vm1811, %v1809
        %1813 = vrot.lane.b32.xlu0 %v1460, 104
        %v1814 = vpop.permute.xlu0 %1813
        %1815 = vrot.lane.b32.xlu0 %v1461, 104
        %v1816 = vpop.permute.xlu0 %1815
        %v1818 = vsel %vm1463, %v1814, 0
        %v1821 = vsel %vm1463, %v1816, 0
        %1823 = vmatprep.subr.bf16.mxu0 0
        %1824 = vmatpush1.bf16.xpose.msra.mxu0 %v1821
        %1825 = vmatprep.subr.bf16.mxu0 0
        %1826 = vmatpush1.bf16.xpose.msra.mxu0 0
        %1827 = vmatprep.subr.bf16.mxu0 0
        %1828 = vmatpush1.bf16.xpose.msra.mxu0 0
        %1829 = vmatprep.subr.bf16.mxu0 0
        %1830 = vmatpush1.bf16.xpose.msra.mxu0 0
        %1831 = vmatprep.subr.bf16.mxu0 0
        %1832 = vmatpush1.bf16.xpose.msra.mxu0 0
        %1833 = vmatprep.subr.bf16.mxu0 0
        %1834 = vmatpush1.bf16.xpose.msra.mxu0 0
        %1835 = vmatprep.subr.bf16.mxu0 0
        %1836 = vmatpush1.bf16.xpose.msra.mxu0 0
        %1837 = vmatprep.subr.bf16.mxu0 0
        %1838 = vmatpush1.bf16.xpose.msra.mxu0 0
        %1839 = vmatprep.subr.bf16.mxu0 0
        %1840 = vmatpush1.bf16.xpose.msra.mxu0 0
        %1841 = vmatprep.subr.bf16.mxu0 0
        %1842 = vmatpush1.bf16.xpose.msra.mxu0 0
        %1843 = vmatprep.subr.bf16.mxu0 0
        %1844 = vmatpush1.bf16.xpose.msra.mxu0 0
        %1845 = vmatprep.subr.bf16.mxu0 0
        %1846 = vmatpush1.bf16.xpose.msra.mxu0 0
        %1847 = vmatprep.subr.bf16.mxu0 0
        %1848 = vmatpush1.bf16.xpose.msra.mxu0 0
        %1849 = vmatprep.subr.bf16.mxu0 0
        %1850 = vmatpush1.bf16.xpose.msra.mxu0 0
        %1851 = vmatprep.subr.bf16.mxu0 0
        %1852 = vmatpush1.bf16.xpose.msra.mxu0 0
        %1853 = vmatprep.subr.bf16.mxu0 0
        %1854 = vmatpush1.bf16.xpose.msra.mxu0 0
        %1855 = vmatprep.mubr.bf16.mxu0 0
        %1856 = vmatmul.mubr.bf16.gmra.mrb[0].mxu0 %v1818
        %v1857 = vpop.f32.mrb[0].mxu0
        %v1858 = vadd.f32 0.0, %v1857
        %v1859 = vpop.f32.mrb[0].mxu0
        %v1860 = vpop.f32.mrb[0].mxu0
        %v1861 = vpop.f32.mrb[0].mxu0
        %1862 = vdwg.mxu0
        %v1863 = vsel %vm1463, %v1858, -inf
        %1864 = vmax.xlane.f32.xlu0 %v1863
        %v1865 = vpop.xlane.xlu0 %1864
        %v1866 = vsub.f32 %v1858, %v1865
        %v1867 = vmul.f32 %v1866, 1.442695
        %v1868 = vpow.pop %v1867
        %v1869 = vsel %vm1463, %v1868, 0.0
        %1870 = vadd.xlane.f32.xlu0 %v1869
        %v1871 = vpop.xlane.xlu0 %1870
        %v1872 = vrcp.pop %v1871
        %v1873 = vpack.c.bf16 %v1868, %v1868
        %1874 = vrot.lane.b32.xlu0 %v1462, 104
        %v1875 = vpop.permute.xlu0 %1874
        %v1877 = vsel %vm1463, %v1873, 0
        %v1880 = vsel %vm1524, %v1875, 0
        %1882 = vmatprep.subr.bf16.mxu0 0
        %1883 = vmatpush1.bf16.msra.mxu0 %v1880
        %1884 = vmatprep.subr.bf16.mxu0 0
        %1885 = vmatpush1.bf16.msra.mxu0 0
        %1886 = vmatprep.subr.bf16.mxu0 0
        %1887 = vmatpush1.bf16.msra.mxu0 0
        %1888 = vmatprep.subr.bf16.mxu0 0
        %1889 = vmatpush1.bf16.msra.mxu0 0
        %1890 = vmatprep.subr.bf16.mxu0 0
        %1891 = vmatpush1.bf16.msra.mxu0 0
        %1892 = vmatprep.subr.bf16.mxu0 0
        %1893 = vmatpush1.bf16.msra.mxu0 0
        %1894 = vmatprep.subr.bf16.mxu0 0
        %1895 = vmatpush1.bf16.msra.mxu0 0
        %1896 = vmatprep.subr.bf16.mxu0 0
        %1897 = vmatpush1.bf16.msra.mxu0 0
        %1898 = vmatprep.subr.bf16.mxu0 0
        %1899 = vmatpush1.bf16.msra.mxu0 0
        %1900 = vmatprep.subr.bf16.mxu0 0
        %1901 = vmatpush1.bf16.msra.mxu0 0
        %1902 = vmatprep.subr.bf16.mxu0 0
        %1903 = vmatpush1.bf16.msra.mxu0 0
        %1904 = vmatprep.subr.bf16.mxu0 0
        %1905 = vmatpush1.bf16.msra.mxu0 0
        %1906 = vmatprep.subr.bf16.mxu0 0
        %1907 = vmatpush1.bf16.msra.mxu0 0
        %1908 = vmatprep.subr.bf16.mxu0 0
        %1909 = vmatpush1.bf16.msra.mxu0 0
        %1910 = vmatprep.subr.bf16.mxu0 0
        %1911 = vmatpush1.bf16.msra.mxu0 0
        %1912 = vmatprep.subr.bf16.mxu0 0
        %1913 = vmatpush1.bf16.msra.mxu0 0
        %1914 = vmatprep.mubr.bf16.mxu0 0
        %1915 = vmatmul.mubr.bf16.gmra.mrb[0].mxu0 %v1877
        %v1916 = vpop.f32.mrb[0].mxu0
        %v1917 = vadd.f32 0.0, %v1916
        %v1918 = vpop.f32.mrb[0].mxu0
        %v1919 = vpop.f32.mrb[0].mxu0
        %v1920 = vpop.f32.mrb[0].mxu0
        %1921 = vdwg.mxu0
        %v1922 = vmul.f32 %v1917, %v1872
        %v1923 = vpack.c.bf16 %v1922, %v1922
        %v1925 = vunpack.c.l.b16 %v1923
        %v1926 = vpack.c.b16 %v1925, %v1925
        %1927 = vrot.lane.b32.xlu0 %v1926, 24
        %v1928 = vpop.permute.xlu0 %1927
        %vm1930 = vcmask 257216
        %1931 = vst.msk [vmem:[#allocation2] sm:$0xf] %vm1930, %v1928
        %v1932 = vld [vmem:[#allocation2] sm:$0xf]
        %v1933 = vld [vmem:[%s21] sm:$0xf]
        %v1934 = vld [vmem:[%s21 + $0x4] sm:$0xf]
        %v1935 = vld [vmem:[%s21 + $0x8] sm:$0xf]
        %v1936 = vld [vmem:[%s21 + $0xc] sm:$0xf]
        %v1937 = vld [vmem:[#allocation6] sm:$0x1]
        %v1939 = vlaneseq
        %v1940 = vshrl.u32 %v1939, 7
        %v1941 = vsub.s32 0, %v1940
        %v1942 = vrot.slane %v1937, %v1941
        %v1948 = vunpack.c.l.b16 %v1933
        %v1949 = vunpack.c.l.b16 %v1934
        %v1950 = vunpack.c.l.b16 %v1935
        %v1951 = vunpack.c.l.b16 %v1936
        %v1952 = vpack.c.b16 %v1949, %v1948
        %v1953 = vpack.c.b16 %v1951, %v1950
        %v1957 = vsel %vm1287, %v1932, 0
        %1959 = vmatprep.subr.bf16.mxu0 0
        %1960 = vmatpush1.bf16.msra.mxu0 %v1952
        %1961 = vmatprep.subr.bf16.mxu0 0
        %1962 = vmatpush1.bf16.msra.mxu0 %v1953
        %1963 = vmatprep.subr.bf16.mxu0 0
        %1964 = vmatpush1.bf16.msra.mxu0 0
        %1965 = vmatprep.subr.bf16.mxu0 0
        %1966 = vmatpush1.bf16.msra.mxu0 0
        %1967 = vmatprep.subr.bf16.mxu0 0
        %1968 = vmatpush1.bf16.msra.mxu0 0
        %1969 = vmatprep.subr.bf16.mxu0 0
        %1970 = vmatpush1.bf16.msra.mxu0 0
        %1971 = vmatprep.subr.bf16.mxu0 0
        %1972 = vmatpush1.bf16.msra.mxu0 0
        %1973 = vmatprep.subr.bf16.mxu0 0
        %1974 = vmatpush1.bf16.msra.mxu0 0
        %1975 = vmatprep.subr.bf16.mxu0 0
        %1976 = vmatpush1.bf16.msra.mxu0 0
        %1977 = vmatprep.subr.bf16.mxu0 0
        %1978 = vmatpush1.bf16.msra.mxu0 0
        %1979 = vmatprep.subr.bf16.mxu0 0
        %1980 = vmatpush1.bf16.msra.mxu0 0
        %1981 = vmatprep.subr.bf16.mxu0 0
        %1982 = vmatpush1.bf16.msra.mxu0 0
        %1983 = vmatprep.subr.bf16.mxu0 0
        %1984 = vmatpush1.bf16.msra.mxu0 0
        %1985 = vmatprep.subr.bf16.mxu0 0
        %1986 = vmatpush1.bf16.msra.mxu0 0
        %1987 = vmatprep.subr.bf16.mxu0 0
        %1988 = vmatpush1.bf16.msra.mxu0 0
        %1989 = vmatprep.subr.bf16.mxu0 0
        %1990 = vmatpush1.bf16.msra.mxu0 0
        %1991 = vmatprep.mubr.bf16.mxu0 0
        %1992 = vmatmul.mubr.bf16.gmra.mrb[0].mxu0 %v1957
        %v1993 = vpop.f32.mrb[0].mxu0
        %v1994 = vadd.f32 %v1942, %v1993
        %v1995 = vpop.f32.mrb[0].mxu0
        %v1996 = vpop.f32.mrb[0].mxu0
        %v1997 = vpop.f32.mrb[0].mxu0
        %1998 = vdwg.mxu0
        %v1999 = vadd.f32 %v1255, %v1994
        %v2000 = vld [vmem:[#allocation8] sm:$0x1]
        %v2001 = vld [vmem:[#allocation9] sm:$0x1]
        %v2002 = vsel %vm1287, %v1999, 0.0
        %2003 = vadd.xlane.f32.xlu0 %v2002
        %v2004 = vpop.xlane.xlu0 %2003
        %v2005 = vrcp.pop 32.0
        %v2006 = vmul.f32 %v2004, %v2005
        %v2007 = vsub.f32 %v1999, %v2006
        %v2008 = vmul.f32 %v2007, %v2007
        %v2009 = vsel %vm1287, %v2008, 0.0
        %2010 = vadd.xlane.f32.xlu0 %v2009
        %v2011 = vpop.xlane.xlu0 %2010
        %v2012 = vmul.f32 %v2011, %v2005
        %v2013 = vadd.f32 %v2012, 1e-05
        %v2014 = vrsqrt.pop %v2013
        %v2015 = vmul.f32 %v2007, %v2014
        %v2017 = vlaneseq
        %v2018 = vshrl.u32 %v2017, 7
        %v2019 = vsub.s32 0, %v2018
        %v2020 = vrot.slane %v2000, %v2019
        %v2022 = vmul.f32 %v2015, %v2020
        %v2024 = vlaneseq
        %v2025 = vshrl.u32 %v2024, 7
        %v2026 = vsub.s32 0, %v2025
        %v2027 = vrot.slane %v2001, %v2026
        %v2029 = vadd.f32 %v2022, %v2027
        %v2030 = vadd.f32 %v2029, %v1256
        %v2031 = vpack.c.bf16 %v2030, %v2030
        %v2032 = vadd.f32 %v1257, %v1259
        %v2033 = vadd.f32 %v1258, %v1260
        %v2034 = vpack.c.bf16 %v2033, %v2032
        %v2035 = vpack.c.bf16 %v1258, %v1257
        %v2036 = vld [vmem:[%s29] sm:$0xf]
        %v2037 = vld [vmem:[%s29 + $0x4] sm:$0xf]
        %v2038 = vld [vmem:[%s29 + $0x8] sm:$0xf]
        %v2039 = vld [vmem:[%s29 + $0xc] sm:$0xf]
        %v2040 = vld [vmem:[#allocation11] sm:$0x1]
        %v2042 = vlaneseq
        %v2043 = vshrl.u32 %v2042, 7
        %v2044 = vsub.s32 0, %v2043
        %v2045 = vrot.slane %v2040, %v2044
        %v2051 = vunpack.c.l.b16 %v2036
        %v2052 = vunpack.c.l.b16 %v2037
        %v2053 = vunpack.c.l.b16 %v2038
        %v2054 = vunpack.c.l.b16 %v2039
        %v2055 = vpack.c.b16 %v2052, %v2051
        %v2056 = vpack.c.b16 %v2054, %v2053
        %v2060 = vsel %vm1287, %v2031, 0
        %2062 = vmatprep.subr.bf16.mxu0 0
        %2063 = vmatpush1.bf16.msra.mxu0 %v2055
        %2064 = vmatprep.subr.bf16.mxu0 0
        %2065 = vmatpush1.bf16.msra.mxu0 %v2056
        %2066 = vmatprep.subr.bf16.mxu0 0
        %2067 = vmatpush1.bf16.msra.mxu0 0
        %2068 = vmatprep.subr.bf16.mxu0 0
        %2069 = vmatpush1.bf16.msra.mxu0 0
        %2070 = vmatprep.subr.bf16.mxu0 0
        %2071 = vmatpush1.bf16.msra.mxu0 0
        %2072 = vmatprep.subr.bf16.mxu0 0
        %2073 = vmatpush1.bf16.msra.mxu0 0
        %2074 = vmatprep.subr.bf16.mxu0 0
        %2075 = vmatpush1.bf16.msra.mxu0 0
        %2076 = vmatprep.subr.bf16.mxu0 0
        %2077 = vmatpush1.bf16.msra.mxu0 0
        %2078 = vmatprep.subr.bf16.mxu0 0
        %2079 = vmatpush1.bf16.msra.mxu0 0
        %2080 = vmatprep.subr.bf16.mxu0 0
        %2081 = vmatpush1.bf16.msra.mxu0 0
        %2082 = vmatprep.subr.bf16.mxu0 0
        %2083 = vmatpush1.bf16.msra.mxu0 0
        %2084 = vmatprep.subr.bf16.mxu0 0
        %2085 = vmatpush1.bf16.msra.mxu0 0
        %2086 = vmatprep.subr.bf16.mxu0 0
        %2087 = vmatpush1.bf16.msra.mxu0 0
        %2088 = vmatprep.subr.bf16.mxu0 0
        %2089 = vmatpush1.bf16.msra.mxu0 0
        %2090 = vmatprep.subr.bf16.mxu0 0
        %2091 = vmatpush1.bf16.msra.mxu0 0
        %2092 = vmatprep.subr.bf16.mxu0 0
        %2093 = vmatpush1.bf16.msra.mxu0 0
        %2094 = vmatprep.mubr.bf16.mxu0 0
        %2095 = vmatmul.mubr.bf16.gmra.mrb[0].mxu0 %v2060
        %v2096 = vpop.f32.mrb[0].mxu0
        %v2097 = vadd.f32 %v2045, %v2096
        %v2098 = vpop.f32.mrb[0].mxu0
        %v2099 = vpop.f32.mrb[0].mxu0
        %v2100 = vpop.f32.mrb[0].mxu0
        %2101 = vdwg.mxu0
        %v2102 = vld [vmem:[%s33] sm:$0xf]
        %v2103 = vld [vmem:[%s33 + $0x4] sm:$0xf]
        %v2104 = vld [vmem:[%s33 + $0x8] sm:$0xf]
        %v2105 = vld [vmem:[%s33 + $0xc] sm:$0xf]
        %v2106 = vld [vmem:[#allocation12] sm:$0x1]
        %v2108 = vlaneseq
        %v2109 = vshrl.u32 %v2108, 7
        %v2110 = vsub.s32 0, %v2109
        %v2111 = vrot.slane %v2106, %v2110
        %v2117 = vunpack.c.l.b16 %v2102
        %v2118 = vunpack.c.l.b16 %v2103
        %v2119 = vunpack.c.l.b16 %v2104
        %v2120 = vunpack.c.l.b16 %v2105
        %v2121 = vpack.c.b16 %v2118, %v2117
        %v2122 = vpack.c.b16 %v2120, %v2119
        %v2126 = vsel %vm1287, %v2034, 0
        %2128 = vmatprep.subr.bf16.mxu0 0
        %2129 = vmatpush1.bf16.msra.mxu0 %v2121
        %2130 = vmatprep.subr.bf16.mxu0 0
        %2131 = vmatpush1.bf16.msra.mxu0 %v2122
        %2132 = vmatprep.subr.bf16.mxu0 0
        %2133 = vmatpush1.bf16.msra.mxu0 0
        %2134 = vmatprep.subr.bf16.mxu0 0
        %2135 = vmatpush1.bf16.msra.mxu0 0
        %2136 = vmatprep.subr.bf16.mxu0 0
        %2137 = vmatpush1.bf16.msra.mxu0 0
        %2138 = vmatprep.subr.bf16.mxu0 0
        %2139 = vmatpush1.bf16.msra.mxu0 0
        %2140 = vmatprep.subr.bf16.mxu0 0
        %2141 = vmatpush1.bf16.msra.mxu0 0
        %2142 = vmatprep.subr.bf16.mxu0 0
        %2143 = vmatpush1.bf16.msra.mxu0 0
        %2144 = vmatprep.subr.bf16.mxu0 0
        %2145 = vmatpush1.bf16.msra.mxu0 0
        %2146 = vmatprep.subr.bf16.mxu0 0
        %2147 = vmatpush1.bf16.msra.mxu0 0
        %2148 = vmatprep.subr.bf16.mxu0 0
        %2149 = vmatpush1.bf16.msra.mxu0 0
        %2150 = vmatprep.subr.bf16.mxu0 0
        %2151 = vmatpush1.bf16.msra.mxu0 0
        %2152 = vmatprep.subr.bf16.mxu0 0
        %2153 = vmatpush1.bf16.msra.mxu0 0
        %2154 = vmatprep.subr.bf16.mxu0 0
        %2155 = vmatpush1.bf16.msra.mxu0 0
        %2156 = vmatprep.subr.bf16.mxu0 0
        %2157 = vmatpush1.bf16.msra.mxu0 0
        %2158 = vmatprep.subr.bf16.mxu0 0
        %2159 = vmatpush1.bf16.msra.mxu0 0
        %2160 = vmatprep.mubr.bf16.mxu0 0
        %2161 = vmatmul.mubr.bf16.gmra.mrb[0].mxu0 %v2126
        %v2162 = vpop.f32.mrb[0].mxu0
        %v2163 = vadd.f32 %v2111, %v2162
        %v2164 = vpop.f32.mrb[0].mxu0
        %v2165 = vpop.f32.mrb[0].mxu0
        %v2166 = vadd.f32 %v2111, %v2165
        %v2167 = vpop.f32.mrb[0].mxu0
        %2168 = vdwg.mxu0
        %v2169 = vld [vmem:[%s37] sm:$0xf]
        %v2170 = vld [vmem:[%s37 + $0x4] sm:$0xf]
        %v2171 = vld [vmem:[%s37 + $0x8] sm:$0xf]
        %v2172 = vld [vmem:[%s37 + $0xc] sm:$0xf]
        %v2173 = vld [vmem:[#allocation14] sm:$0x1]
        %v2175 = vlaneseq
        %v2176 = vshrl.u32 %v2175, 7
        %v2177 = vsub.s32 0, %v2176
        %v2178 = vrot.slane %v2173, %v2177
        %v2184 = vunpack.c.l.b16 %v2169
        %v2185 = vunpack.c.l.b16 %v2170
        %v2186 = vunpack.c.l.b16 %v2171
        %v2187 = vunpack.c.l.b16 %v2172
        %v2188 = vpack.c.b16 %v2185, %v2184
        %v2189 = vpack.c.b16 %v2187, %v2186
        %v2193 = vsel %vm1287, %v2035, 0
        %2195 = vmatprep.subr.bf16.mxu0 0
        %2196 = vmatpush1.bf16.msra.mxu0 %v2188
        %2197 = vmatprep.subr.bf16.mxu0 0
        %2198 = vmatpush1.bf16.msra.mxu0 %v2189
        %2199 = vmatprep.subr.bf16.mxu0 0
        %2200 = vmatpush1.bf16.msra.mxu0 0
        %2201 = vmatprep.subr.bf16.mxu0 0
        %2202 = vmatpush1.bf16.msra.mxu0 0
        %2203 = vmatprep.subr.bf16.mxu0 0
        %2204 = vmatpush1.bf16.msra.mxu0 0
        %2205 = vmatprep.subr.bf16.mxu0 0
        %2206 = vmatpush1.bf16.msra.mxu0 0
        %2207 = vmatprep.subr.bf16.mxu0 0
        %2208 = vmatpush1.bf16.msra.mxu0 0
        %2209 = vmatprep.subr.bf16.mxu0 0
        %2210 = vmatpush1.bf16.msra.mxu0 0
        %2211 = vmatprep.subr.bf16.mxu0 0
        %2212 = vmatpush1.bf16.msra.mxu0 0
        %2213 = vmatprep.subr.bf16.mxu0 0
        %2214 = vmatpush1.bf16.msra.mxu0 0
        %2215 = vmatprep.subr.bf16.mxu0 0
        %2216 = vmatpush1.bf16.msra.mxu0 0
        %2217 = vmatprep.subr.bf16.mxu0 0
        %2218 = vmatpush1.bf16.msra.mxu0 0
        %2219 = vmatprep.subr.bf16.mxu0 0
        %2220 = vmatpush1.bf16.msra.mxu0 0
        %2221 = vmatprep.subr.bf16.mxu0 0
        %2222 = vmatpush1.bf16.msra.mxu0 0
        %2223 = vmatprep.subr.bf16.mxu0 0
        %2224 = vmatpush1.bf16.msra.mxu0 0
        %2225 = vmatprep.subr.bf16.mxu0 0
        %2226 = vmatpush1.bf16.msra.mxu0 0
        %2227 = vmatprep.mubr.bf16.mxu0 0
        %2228 = vmatmul.mubr.bf16.gmra.mrb[0].mxu0 %v2193
        %v2229 = vpop.f32.mrb[0].mxu0
        %v2230 = vadd.f32 %v2178, %v2229
        %v2231 = vpop.f32.mrb[0].mxu0
        %v2232 = vpop.f32.mrb[0].mxu0
        %v2233 = vadd.f32 %v2178, %v2232
        %v2234 = vpop.f32.mrb[0].mxu0
        %2235 = vdwg.mxu0
        %v2236 = vpack.c.bf16 %v2097, %v2097
        %v2237 = vpack.c.bf16 %v2166, %v2163
        %v2238 = vpack.c.bf16 %v2233, %v2230
        %v2240 = vsel %vm1463, %v2236, 0
        %v2243 = vsel %vm1463, %v2237, 0
        %2245 = vmatprep.subr.bf16.mxu0 0
        %2246 = vmatpush1.bf16.xpose.msra.mxu0 %v2243
        %2247 = vmatprep.subr.bf16.mxu0 0
        %2248 = vmatpush1.bf16.xpose.msra.mxu0 0
        %2249 = vmatprep.subr.bf16.mxu0 0
        %2250 = vmatpush1.bf16.xpose.msra.mxu0 0
        %2251 = vmatprep.subr.bf16.mxu0 0
        %2252 = vmatpush1.bf16.xpose.msra.mxu0 0
        %2253 = vmatprep.subr.bf16.mxu0 0
        %2254 = vmatpush1.bf16.xpose.msra.mxu0 0
        %2255 = vmatprep.subr.bf16.mxu0 0
        %2256 = vmatpush1.bf16.xpose.msra.mxu0 0
        %2257 = vmatprep.subr.bf16.mxu0 0
        %2258 = vmatpush1.bf16.xpose.msra.mxu0 0
        %2259 = vmatprep.subr.bf16.mxu0 0
        %2260 = vmatpush1.bf16.xpose.msra.mxu0 0
        %2261 = vmatprep.subr.bf16.mxu0 0
        %2262 = vmatpush1.bf16.xpose.msra.mxu0 0
        %2263 = vmatprep.subr.bf16.mxu0 0
        %2264 = vmatpush1.bf16.xpose.msra.mxu0 0
        %2265 = vmatprep.subr.bf16.mxu0 0
        %2266 = vmatpush1.bf16.xpose.msra.mxu0 0
        %2267 = vmatprep.subr.bf16.mxu0 0
        %2268 = vmatpush1.bf16.xpose.msra.mxu0 0
        %2269 = vmatprep.subr.bf16.mxu0 0
        %2270 = vmatpush1.bf16.xpose.msra.mxu0 0
        %2271 = vmatprep.subr.bf16.mxu0 0
        %2272 = vmatpush1.bf16.xpose.msra.mxu0 0
        %2273 = vmatprep.subr.bf16.mxu0 0
        %2274 = vmatpush1.bf16.xpose.msra.mxu0 0
        %2275 = vmatprep.subr.bf16.mxu0 0
        %2276 = vmatpush1.bf16.xpose.msra.mxu0 0
        %2277 = vmatprep.mubr.bf16.mxu0 0
        %2278 = vmatmul.mubr.bf16.gmra.mrb[0].mxu0 %v2240
        %v2279 = vpop.f32.mrb[0].mxu0
        %v2280 = vadd.f32 0.0, %v2279
        %v2281 = vpop.f32.mrb[0].mxu0
        %v2282 = vpop.f32.mrb[0].mxu0
        %v2283 = vpop.f32.mrb[0].mxu0
        %2284 = vdwg.mxu0
        %vm2285 = vcmask 97280
        %v2286 = vsel %vm2285, %v2280, -inf
        %2287 = vmax.xlane.f32.xlu0 %v2286
        %v2288 = vpop.xlane.xlu0 %2287
        %v2289 = vsub.f32 %v2280, %v2288
        %v2290 = vmul.f32 %v2289, 1.442695
        %v2291 = vpow.pop %v2290
        %v2292 = vsel %vm2285, %v2291, 0.0
        %2293 = vadd.xlane.f32.xlu0 %v2292
        %v2294 = vpop.xlane.xlu0 %2293
        %v2295 = vrcp.pop %v2294
        %v2296 = vpack.c.bf16 %v2291, %v2291
        %v2298 = vsel %vm2285, %v2296, 0
        %vm2300 = vcmask 1045504
        %v2302 = vsel %vm2300, %v2238, 0
        %2304 = vmatprep.subr.bf16.mxu0 0
        %2305 = vmatpush1.bf16.msra.mxu0 %v2302
        %2306 = vmatprep.subr.bf16.mxu0 0
        %2307 = vmatpush1.bf16.msra.mxu0 0
        %2308 = vmatprep.subr.bf16.mxu0 0
        %2309 = vmatpush1.bf16.msra.mxu0 0
        %2310 = vmatprep.subr.bf16.mxu0 0
        %2311 = vmatpush1.bf16.msra.mxu0 0
        %2312 = vmatprep.subr.bf16.mxu0 0
        %2313 = vmatpush1.bf16.msra.mxu0 0
        %2314 = vmatprep.subr.bf16.mxu0 0
        %2315 = vmatpush1.bf16.msra.mxu0 0
        %2316 = vmatprep.subr.bf16.mxu0 0
        %2317 = vmatpush1.bf16.msra.mxu0 0
        %2318 = vmatprep.subr.bf16.mxu0 0
        %2319 = vmatpush1.bf16.msra.mxu0 0
        %2320 = vmatprep.subr.bf16.mxu0 0
        %2321 = vmatpush1.bf16.msra.mxu0 0
        %2322 = vmatprep.subr.bf16.mxu0 0
        %2323 = vmatpush1.bf16.msra.mxu0 0
        %2324 = vmatprep.subr.bf16.mxu0 0
        %2325 = vmatpush1.bf16.msra.mxu0 0
        %2326 = vmatprep.subr.bf16.mxu0 0
        %2327 = vmatpush1.bf16.msra.mxu0 0
        %2328 = vmatprep.subr.bf16.mxu0 0
        %2329 = vmatpush1.bf16.msra.mxu0 0
        %2330 = vmatprep.subr.bf16.mxu0 0
        %2331 = vmatpush1.bf16.msra.mxu0 0
        %2332 = vmatprep.subr.bf16.mxu0 0
        %2333 = vmatpush1.bf16.msra.mxu0 0
        %2334 = vmatprep.subr.bf16.mxu0 0
        %2335 = vmatpush1.bf16.msra.mxu0 0
        %2336 = vmatprep.mubr.bf16.mxu0 0
        %2337 = vmatmul.mubr.bf16.gmra.mrb[0].mxu0 %v2298
        %v2338 = vpop.f32.mrb[0].mxu0
        %v2339 = vadd.f32 0.0, %v2338
        %v2340 = vpop.f32.mrb[0].mxu0
        %v2341 = vpop.f32.mrb[0].mxu0
        %v2342 = vpop.f32.mrb[0].mxu0
        %2343 = vdwg.mxu0
        %v2344 = vmul.f32 %v2339, %v2295
        %v2345 = vpack.c.bf16 %v2344, %v2344
        %2346 = vst.msk [vmem:[#allocation2] sm:$0xf] %vm1570, %v2345
        %2348 = vrot.lane.b32.xlu0 %v2236, 120
        %v2349 = vpop.permute.xlu0 %2348
        %2351 = vrot.lane.b32.xlu0 %v2237, 120
        %v2352 = vpop.permute.xlu0 %2351
        %v2354 = vsel %vm1463, %v2349, 0
        %v2357 = vsel %vm1463, %v2352, 0
        %2359 = vmatprep.subr.bf16.mxu0 0
        %2360 = vmatpush1.bf16.xpose.msra.mxu0 %v2357
        %2361 = vmatprep.subr.bf16.mxu0 0
        %2362 = vmatpush1.bf16.xpose.msra.mxu0 0
        %2363 = vmatprep.subr.bf16.mxu0 0
        %2364 = vmatpush1.bf16.xpose.msra.mxu0 0
        %2365 = vmatprep.subr.bf16.mxu0 0
        %2366 = vmatpush1.bf16.xpose.msra.mxu0 0
        %2367 = vmatprep.subr.bf16.mxu0 0
        %2368 = vmatpush1.bf16.xpose.msra.mxu0 0
        %2369 = vmatprep.subr.bf16.mxu0 0
        %2370 = vmatpush1.bf16.xpose.msra.mxu0 0
        %2371 = vmatprep.subr.bf16.mxu0 0
        %2372 = vmatpush1.bf16.xpose.msra.mxu0 0
        %2373 = vmatprep.subr.bf16.mxu0 0
        %2374 = vmatpush1.bf16.xpose.msra.mxu0 0
        %2375 = vmatprep.subr.bf16.mxu0 0
        %2376 = vmatpush1.bf16.xpose.msra.mxu0 0
        %2377 = vmatprep.subr.bf16.mxu0 0
        %2378 = vmatpush1.bf16.xpose.msra.mxu0 0
        %2379 = vmatprep.subr.bf16.mxu0 0
        %2380 = vmatpush1.bf16.xpose.msra.mxu0 0
        %2381 = vmatprep.subr.bf16.mxu0 0
        %2382 = vmatpush1.bf16.xpose.msra.mxu0 0
        %2383 = vmatprep.subr.bf16.mxu0 0
        %2384 = vmatpush1.bf16.xpose.msra.mxu0 0
        %2385 = vmatprep.subr.bf16.mxu0 0
        %2386 = vmatpush1.bf16.xpose.msra.mxu0 0
        %2387 = vmatprep.subr.bf16.mxu0 0
        %2388 = vmatpush1.bf16.xpose.msra.mxu0 0
        %2389 = vmatprep.subr.bf16.mxu0 0
        %2390 = vmatpush1.bf16.xpose.msra.mxu0 0
        %2391 = vmatprep.mubr.bf16.mxu0 0
        %2392 = vmatmul.mubr.bf16.gmra.mrb[0].mxu0 %v2354
        %v2393 = vpop.f32.mrb[0].mxu0
        %v2394 = vadd.f32 0.0, %v2393
        %v2395 = vpop.f32.mrb[0].mxu0
        %v2396 = vpop.f32.mrb[0].mxu0
        %v2397 = vpop.f32.mrb[0].mxu0
        %2398 = vdwg.mxu0
        %v2399 = vsel %vm2285, %v2394, -inf
        %2400 = vmax.xlane.f32.xlu0 %v2399
        %v2401 = vpop.xlane.xlu0 %2400
        %v2402 = vsub.f32 %v2394, %v2401
        %v2403 = vmul.f32 %v2402, 1.442695
        %v2404 = vpow.pop %v2403
        %v2405 = vsel %vm2285, %v2404, 0.0
        %2406 = vadd.xlane.f32.xlu0 %v2405
        %v2407 = vpop.xlane.xlu0 %2406
        %v2408 = vrcp.pop %v2407
        %v2409 = vpack.c.bf16 %v2404, %v2404
        %2411 = vrot.lane.b32.xlu0 %v2238, 120
        %v2412 = vpop.permute.xlu0 %2411
        %v2414 = vsel %vm2285, %v2409, 0
        %v2417 = vsel %vm2300, %v2412, 0
        %2419 = vmatprep.subr.bf16.mxu0 0
        %2420 = vmatpush1.bf16.msra.mxu0 %v2417
        %2421 = vmatprep.subr.bf16.mxu0 0
        %2422 = vmatpush1.bf16.msra.mxu0 0
        %2423 = vmatprep.subr.bf16.mxu0 0
        %2424 = vmatpush1.bf16.msra.mxu0 0
        %2425 = vmatprep.subr.bf16.mxu0 0
        %2426 = vmatpush1.bf16.msra.mxu0 0
        %2427 = vmatprep.subr.bf16.mxu0 0
        %2428 = vmatpush1.bf16.msra.mxu0 0
        %2429 = vmatprep.subr.bf16.mxu0 0
        %2430 = vmatpush1.bf16.msra.mxu0 0
        %2431 = vmatprep.subr.bf16.mxu0 0
        %2432 = vmatpush1.bf16.msra.mxu0 0
        %2433 = vmatprep.subr.bf16.mxu0 0
        %2434 = vmatpush1.bf16.msra.mxu0 0
        %2435 = vmatprep.subr.bf16.mxu0 0
        %2436 = vmatpush1.bf16.msra.mxu0 0
        %2437 = vmatprep.subr.bf16.mxu0 0
        %2438 = vmatpush1.bf16.msra.mxu0 0
        %2439 = vmatprep.subr.bf16.mxu0 0
        %2440 = vmatpush1.bf16.msra.mxu0 0
        %2441 = vmatprep.subr.bf16.mxu0 0
        %2442 = vmatpush1.bf16.msra.mxu0 0
        %2443 = vmatprep.subr.bf16.mxu0 0
        %2444 = vmatpush1.bf16.msra.mxu0 0
        %2445 = vmatprep.subr.bf16.mxu0 0
        %2446 = vmatpush1.bf16.msra.mxu0 0
        %2447 = vmatprep.subr.bf16.mxu0 0
        %2448 = vmatpush1.bf16.msra.mxu0 0
        %2449 = vmatprep.subr.bf16.mxu0 0
        %2450 = vmatpush1.bf16.msra.mxu0 0
        %2451 = vmatprep.mubr.bf16.mxu0 0
        %2452 = vmatmul.mubr.bf16.gmra.mrb[0].mxu0 %v2414
        %v2453 = vpop.f32.mrb[0].mxu0
        %v2454 = vadd.f32 0.0, %v2453
        %v2455 = vpop.f32.mrb[0].mxu0
        %v2456 = vpop.f32.mrb[0].mxu0
        %v2457 = vpop.f32.mrb[0].mxu0
        %2458 = vdwg.mxu0
        %v2459 = vmul.f32 %v2454, %v2408
        %v2460 = vpack.c.bf16 %v2459, %v2459
        %v2462 = vunpack.c.l.b16 %v2460
        %v2463 = vpack.c.b16 %v2462, %v2462
        %2464 = vrot.lane.b32.xlu0 %v2463, 8
        %v2465 = vpop.permute.xlu0 %2464
        %2467 = vst.msk [vmem:[#allocation2] sm:$0xf] %vm1692, %v2465
        %2468 = vrot.lane.b32.xlu0 %v2236, 112
        %v2469 = vpop.permute.xlu0 %2468
        %2470 = vrot.lane.b32.xlu0 %v2237, 112
        %v2471 = vpop.permute.xlu0 %2470
        %v2473 = vsel %vm1463, %v2469, 0
        %v2476 = vsel %vm1463, %v2471, 0
        %2478 = vmatprep.subr.bf16.mxu0 0
        %2479 = vmatpush1.bf16.xpose.msra.mxu0 %v2476
        %2480 = vmatprep.subr.bf16.mxu0 0
        %2481 = vmatpush1.bf16.xpose.msra.mxu0 0
        %2482 = vmatprep.subr.bf16.mxu0 0
        %2483 = vmatpush1.bf16.xpose.msra.mxu0 0
        %2484 = vmatprep.subr.bf16.mxu0 0
        %2485 = vmatpush1.bf16.xpose.msra.mxu0 0
        %2486 = vmatprep.subr.bf16.mxu0 0
        %2487 = vmatpush1.bf16.xpose.msra.mxu0 0
        %2488 = vmatprep.subr.bf16.mxu0 0
        %2489 = vmatpush1.bf16.xpose.msra.mxu0 0
        %2490 = vmatprep.subr.bf16.mxu0 0
        %2491 = vmatpush1.bf16.xpose.msra.mxu0 0
        %2492 = vmatprep.subr.bf16.mxu0 0
        %2493 = vmatpush1.bf16.xpose.msra.mxu0 0
        %2494 = vmatprep.subr.bf16.mxu0 0
        %2495 = vmatpush1.bf16.xpose.msra.mxu0 0
        %2496 = vmatprep.subr.bf16.mxu0 0
        %2497 = vmatpush1.bf16.xpose.msra.mxu0 0
        %2498 = vmatprep.subr.bf16.mxu0 0
        %2499 = vmatpush1.bf16.xpose.msra.mxu0 0
        %2500 = vmatprep.subr.bf16.mxu0 0
        %2501 = vmatpush1.bf16.xpose.msra.mxu0 0
        %2502 = vmatprep.subr.bf16.mxu0 0
        %2503 = vmatpush1.bf16.xpose.msra.mxu0 0
        %2504 = vmatprep.subr.bf16.mxu0 0
        %2505 = vmatpush1.bf16.xpose.msra.mxu0 0
        %2506 = vmatprep.subr.bf16.mxu0 0
        %2507 = vmatpush1.bf16.xpose.msra.mxu0 0
        %2508 = vmatprep.subr.bf16.mxu0 0
        %2509 = vmatpush1.bf16.xpose.msra.mxu0 0
        %2510 = vmatprep.mubr.bf16.mxu0 0
        %2511 = vmatmul.mubr.bf16.gmra.mrb[0].mxu0 %v2473
        %v2512 = vpop.f32.mrb[0].mxu0
        %v2513 = vadd.f32 0.0, %v2512
        %v2514 = vpop.f32.mrb[0].mxu0
        %v2515 = vpop.f32.mrb[0].mxu0
        %v2516 = vpop.f32.mrb[0].mxu0
        %2517 = vdwg.mxu0
        %v2518 = vsel %vm2285, %v2513, -inf
        %2519 = vmax.xlane.f32.xlu0 %v2518
        %v2520 = vpop.xlane.xlu0 %2519
        %v2521 = vsub.f32 %v2513, %v2520
        %v2522 = vmul.f32 %v2521, 1.442695
        %v2523 = vpow.pop %v2522
        %v2524 = vsel %vm2285, %v2523, 0.0
        %2525 = vadd.xlane.f32.xlu0 %v2524
        %v2526 = vpop.xlane.xlu0 %2525
        %v2527 = vrcp.pop %v2526
        %v2528 = vpack.c.bf16 %v2523, %v2523
        %2529 = vrot.lane.b32.xlu0 %v2238, 112
        %v2530 = vpop.permute.xlu0 %2529
        %v2532 = vsel %vm2285, %v2528, 0
        %v2535 = vsel %vm2300, %v2530, 0
        %2537 = vmatprep.subr.bf16.mxu0 0
        %2538 = vmatpush1.bf16.msra.mxu0 %v2535
        %2539 = vmatprep.subr.bf16.mxu0 0
        %2540 = vmatpush1.bf16.msra.mxu0 0
        %2541 = vmatprep.subr.bf16.mxu0 0
        %2542 = vmatpush1.bf16.msra.mxu0 0
        %2543 = vmatprep.subr.bf16.mxu0 0
        %2544 = vmatpush1.bf16.msra.mxu0 0
        %2545 = vmatprep.subr.bf16.mxu0 0
        %2546 = vmatpush1.bf16.msra.mxu0 0
        %2547 = vmatprep.subr.bf16.mxu0 0
        %2548 = vmatpush1.bf16.msra.mxu0 0
        %2549 = vmatprep.subr.bf16.mxu0 0
        %2550 = vmatpush1.bf16.msra.mxu0 0
        %2551 = vmatprep.subr.bf16.mxu0 0
        %2552 = vmatpush1.bf16.msra.mxu0 0
        %2553 = vmatprep.subr.bf16.mxu0 0
        %2554 = vmatpush1.bf16.msra.mxu0 0
        %2555 = vmatprep.subr.bf16.mxu0 0
        %2556 = vmatpush1.bf16.msra.mxu0 0
        %2557 = vmatprep.subr.bf16.mxu0 0
        %2558 = vmatpush1.bf16.msra.mxu0 0
        %2559 = vmatprep.subr.bf16.mxu0 0
        %2560 = vmatpush1.bf16.msra.mxu0 0
        %2561 = vmatprep.subr.bf16.mxu0 0
        %2562 = vmatpush1.bf16.msra.mxu0 0
        %2563 = vmatprep.subr.bf16.mxu0 0
        %2564 = vmatpush1.bf16.msra.mxu0 0
        %2565 = vmatprep.subr.bf16.mxu0 0
        %2566 = vmatpush1.bf16.msra.mxu0 0
        %2567 = vmatprep.subr.bf16.mxu0 0
        %2568 = vmatpush1.bf16.msra.mxu0 0
        %2569 = vmatprep.mubr.bf16.mxu0 0
        %2570 = vmatmul.mubr.bf16.gmra.mrb[0].mxu0 %v2532
        %v2571 = vpop.f32.mrb[0].mxu0
        %v2572 = vadd.f32 0.0, %v2571
        %v2573 = vpop.f32.mrb[0].mxu0
        %v2574 = vpop.f32.mrb[0].mxu0
        %v2575 = vpop.f32.mrb[0].mxu0
        %2576 = vdwg.mxu0
        %v2577 = vmul.f32 %v2572, %v2527
        %v2578 = vpack.c.bf16 %v2577, %v2577
        %v2580 = vunpack.c.l.b16 %v2578
        %v2581 = vpack.c.b16 %v2580, %v2580
        %2582 = vrot.lane.b32.xlu0 %v2581, 16
        %v2583 = vpop.permute.xlu0 %2582
        %2585 = vst.msk [vmem:[#allocation2] sm:$0xf] %vm1811, %v2583
        %2586 = vrot.lane.b32.xlu0 %v2236, 104
        %v2587 = vpop.permute.xlu0 %2586
        %2588 = vrot.lane.b32.xlu0 %v2237, 104
        %v2589 = vpop.permute.xlu0 %2588
        %v2591 = vsel %vm1463, %v2587, 0
        %v2594 = vsel %vm1463, %v2589, 0
        %2596 = vmatprep.subr.bf16.mxu0 0
        %2597 = vmatpush1.bf16.xpose.msra.mxu0 %v2594
        %2598 = vmatprep.subr.bf16.mxu0 0
        %2599 = vmatpush1.bf16.xpose.msra.mxu0 0
        %2600 = vmatprep.subr.bf16.mxu0 0
        %2601 = vmatpush1.bf16.xpose.msra.mxu0 0
        %2602 = vmatprep.subr.bf16.mxu0 0
        %2603 = vmatpush1.bf16.xpose.msra.mxu0 0
        %2604 = vmatprep.subr.bf16.mxu0 0
        %2605 = vmatpush1.bf16.xpose.msra.mxu0 0
        %2606 = vmatprep.subr.bf16.mxu0 0
        %2607 = vmatpush1.bf16.xpose.msra.mxu0 0
        %2608 = vmatprep.subr.bf16.mxu0 0
        %2609 = vmatpush1.bf16.xpose.msra.mxu0 0
        %2610 = vmatprep.subr.bf16.mxu0 0
        %2611 = vmatpush1.bf16.xpose.msra.mxu0 0
        %2612 = vmatprep.subr.bf16.mxu0 0
        %2613 = vmatpush1.bf16.xpose.msra.mxu0 0
        %2614 = vmatprep.subr.bf16.mxu0 0
        %2615 = vmatpush1.bf16.xpose.msra.mxu0 0
        %2616 = vmatprep.subr.bf16.mxu0 0
        %2617 = vmatpush1.bf16.xpose.msra.mxu0 0
        %2618 = vmatprep.subr.bf16.mxu0 0
        %2619 = vmatpush1.bf16.xpose.msra.mxu0 0
        %2620 = vmatprep.subr.bf16.mxu0 0
        %2621 = vmatpush1.bf16.xpose.msra.mxu0 0
        %2622 = vmatprep.subr.bf16.mxu0 0
        %2623 = vmatpush1.bf16.xpose.msra.mxu0 0
        %2624 = vmatprep.subr.bf16.mxu0 0
        %2625 = vmatpush1.bf16.xpose.msra.mxu0 0
        %2626 = vmatprep.subr.bf16.mxu0 0
        %2627 = vmatpush1.bf16.xpose.msra.mxu0 0
        %2628 = vmatprep.mubr.bf16.mxu0 0
        %2629 = vmatmul.mubr.bf16.gmra.mrb[0].mxu0 %v2591
        %v2630 = vpop.f32.mrb[0].mxu0
        %v2631 = vadd.f32 0.0, %v2630
        %v2632 = vpop.f32.mrb[0].mxu0
        %v2633 = vpop.f32.mrb[0].mxu0
        %v2634 = vpop.f32.mrb[0].mxu0
        %2635 = vdwg.mxu0
        %v2636 = vsel %vm2285, %v2631, -inf
        %2637 = vmax.xlane.f32.xlu0 %v2636
        %v2638 = vpop.xlane.xlu0 %2637
        %v2639 = vsub.f32 %v2631, %v2638
        %v2640 = vmul.f32 %v2639, 1.442695
        %v2641 = vpow.pop %v2640
        %v2642 = vsel %vm2285, %v2641, 0.0
        %2643 = vadd.xlane.f32.xlu0 %v2642
        %v2644 = vpop.xlane.xlu0 %2643
        %v2645 = vrcp.pop %v2644
        %v2646 = vpack.c.bf16 %v2641, %v2641
        %2647 = vrot.lane.b32.xlu0 %v2238, 104
        %v2648 = vpop.permute.xlu0 %2647
        %v2650 = vsel %vm2285, %v2646, 0
        %v2653 = vsel %vm2300, %v2648, 0
        %2655 = vmatprep.subr.bf16.mxu0 0
        %2656 = vmatpush1.bf16.msra.mxu0 %v2653
        %2657 = vmatprep.subr.bf16.mxu0 0
        %2658 = vmatpush1.bf16.msra.mxu0 0
        %2659 = vmatprep.subr.bf16.mxu0 0
        %2660 = vmatpush1.bf16.msra.mxu0 0
        %2661 = vmatprep.subr.bf16.mxu0 0
        %2662 = vmatpush1.bf16.msra.mxu0 0
        %2663 = vmatprep.subr.bf16.mxu0 0
        %2664 = vmatpush1.bf16.msra.mxu0 0
        %2665 = vmatprep.subr.bf16.mxu0 0
        %2666 = vmatpush1.bf16.msra.mxu0 0
        %2667 = vmatprep.subr.bf16.mxu0 0
        %2668 = vmatpush1.bf16.msra.mxu0 0
        %2669 = vmatprep.subr.bf16.mxu0 0
        %2670 = vmatpush1.bf16.msra.mxu0 0
        %2671 = vmatprep.subr.bf16.mxu0 0
        %2672 = vmatpush1.bf16.msra.mxu0 0
        %2673 = vmatprep.subr.bf16.mxu0 0
        %2674 = vmatpush1.bf16.msra.mxu0 0
        %2675 = vmatprep.subr.bf16.mxu0 0
        %2676 = vmatpush1.bf16.msra.mxu0 0
        %2677 = vmatprep.subr.bf16.mxu0 0
        %2678 = vmatpush1.bf16.msra.mxu0 0
        %2679 = vmatprep.subr.bf16.mxu0 0
        %2680 = vmatpush1.bf16.msra.mxu0 0
        %2681 = vmatprep.subr.bf16.mxu0 0
        %2682 = vmatpush1.bf16.msra.mxu0 0
        %2683 = vmatprep.subr.bf16.mxu0 0
        %2684 = vmatpush1.bf16.msra.mxu0 0
        %2685 = vmatprep.subr.bf16.mxu0 0
        %2686 = vmatpush1.bf16.msra.mxu0 0
        %2687 = vmatprep.mubr.bf16.mxu0 0
        %2688 = vmatmul.mubr.bf16.gmra.mrb[0].mxu0 %v2650
        %v2689 = vpop.f32.mrb[0].mxu0
        %v2690 = vadd.f32 0.0, %v2689
        %v2691 = vpop.f32.mrb[0].mxu0
        %v2692 = vpop.f32.mrb[0].mxu0
        %v2693 = vpop.f32.mrb[0].mxu0
        %2694 = vdwg.mxu0
        %v2695 = vmul.f32 %v2690, %v2645
        %v2696 = vpack.c.bf16 %v2695, %v2695
        %v2698 = vunpack.c.l.b16 %v2696
        %v2699 = vpack.c.b16 %v2698, %v2698
        %2700 = vrot.lane.b32.xlu0 %v2699, 24
        %v2701 = vpop.permute.xlu0 %2700
        %2703 = vst.msk [vmem:[#allocation2] sm:$0xf] %vm1930, %v2701
        %v2704 = vld [vmem:[#allocation2] sm:$0xf]
        %v2705 = vld [vmem:[%s41] sm:$0xf]
        %v2706 = vld [vmem:[%s41 + $0x4] sm:$0xf]
        %v2707 = vld [vmem:[%s41 + $0x8] sm:$0xf]
        %v2708 = vld [vmem:[%s41 + $0xc] sm:$0xf]
        %v2709 = vld [vmem:[#allocation15] sm:$0x1]
        %v2711 = vlaneseq
        %v2712 = vshrl.u32 %v2711, 7
        %v2713 = vsub.s32 0, %v2712
        %v2714 = vrot.slane %v2709, %v2713
        %v2720 = vunpack.c.l.b16 %v2705
        %v2721 = vunpack.c.l.b16 %v2706
        %v2722 = vunpack.c.l.b16 %v2707
        %v2723 = vunpack.c.l.b16 %v2708
        %v2724 = vpack.c.b16 %v2721, %v2720
        %v2725 = vpack.c.b16 %v2723, %v2722
        %v2729 = vsel %vm1287, %v2704, 0
        %2731 = vmatprep.subr.bf16.mxu0 0
        %2732 = vmatpush1.bf16.msra.mxu0 %v2724
        %2733 = vmatprep.subr.bf16.mxu0 0
        %2734 = vmatpush1.bf16.msra.mxu0 %v2725
        %2735 = vmatprep.subr.bf16.mxu0 0
        %2736 = vmatpush1.bf16.msra.mxu0 0
        %2737 = vmatprep.subr.bf16.mxu0 0
        %2738 = vmatpush1.bf16.msra.mxu0 0
        %2739 = vmatprep.subr.bf16.mxu0 0
        %2740 = vmatpush1.bf16.msra.mxu0 0
        %2741 = vmatprep.subr.bf16.mxu0 0
        %2742 = vmatpush1.bf16.msra.mxu0 0
        %2743 = vmatprep.subr.bf16.mxu0 0
        %2744 = vmatpush1.bf16.msra.mxu0 0
        %2745 = vmatprep.subr.bf16.mxu0 0
        %2746 = vmatpush1.bf16.msra.mxu0 0
        %2747 = vmatprep.subr.bf16.mxu0 0
        %2748 = vmatpush1.bf16.msra.mxu0 0
        %2749 = vmatprep.subr.bf16.mxu0 0
        %2750 = vmatpush1.bf16.msra.mxu0 0
        %2751 = vmatprep.subr.bf16.mxu0 0
        %2752 = vmatpush1.bf16.msra.mxu0 0
        %2753 = vmatprep.subr.bf16.mxu0 0
        %2754 = vmatpush1.bf16.msra.mxu0 0
        %2755 = vmatprep.subr.bf16.mxu0 0
        %2756 = vmatpush1.bf16.msra.mxu0 0
        %2757 = vmatprep.subr.bf16.mxu0 0
        %2758 = vmatpush1.bf16.msra.mxu0 0
        %2759 = vmatprep.subr.bf16.mxu0 0
        %2760 = vmatpush1.bf16.msra.mxu0 0
        %2761 = vmatprep.subr.bf16.mxu0 0
        %2762 = vmatpush1.bf16.msra.mxu0 0
        %2763 = vmatprep.mubr.bf16.mxu0 0
        %2764 = vmatmul.mubr.bf16.gmra.mrb[0].mxu0 %v2729
        %v2765 = vpop.f32.mrb[0].mxu0
        %v2766 = vadd.f32 %v2714, %v2765
        %v2767 = vpop.f32.mrb[0].mxu0
        %v2768 = vpop.f32.mrb[0].mxu0
        %v2769 = vpop.f32.mrb[0].mxu0
        %2770 = vdwg.mxu0
        %v2771 = vadd.f32 %v2029, %v2766
        %v2772 = vld [vmem:[#allocation17] sm:$0x1]
        %v2773 = vld [vmem:[#allocation18] sm:$0x1]
        %v2774 = vsel %vm1287, %v2771, 0.0
        %2775 = vadd.xlane.f32.xlu0 %v2774
        %v2776 = vpop.xlane.xlu0 %2775
        %v2777 = vmul.f32 %v2776, %v2005
        %v2778 = vsub.f32 %v2771, %v2777
        %v2779 = vmul.f32 %v2778, %v2778
        %v2780 = vsel %vm1287, %v2779, 0.0
        %2781 = vadd.xlane.f32.xlu0 %v2780
        %v2782 = vpop.xlane.xlu0 %2781
        %v2783 = vmul.f32 %v2782, %v2005
        %v2784 = vadd.f32 %v2783, 1e-05
        %v2785 = vrsqrt.pop %v2784
        %v2786 = vmul.f32 %v2778, %v2785
        %v2788 = vlaneseq
        %v2789 = vshrl.u32 %v2788, 7
        %v2790 = vsub.s32 0, %v2789
        %v2791 = vrot.slane %v2772, %v2790
        %v2793 = vmul.f32 %v2786, %v2791
        %v2795 = vlaneseq
        %v2796 = vshrl.u32 %v2795, 7
        %v2797 = vsub.s32 0, %v2796
        %v2798 = vrot.slane %v2773, %v2797
        %v2800 = vadd.f32 %v2793, %v2798
        %v2801 = vpack.c.bf16 %v2800, %v2800
        %v2802 = vld [vmem:[%s49] sm:$0xf]
        %v2803 = vld [vmem:[%s49 + $0x4] sm:$0xf]
        %v2804 = vld [vmem:[%s49 + $0x8] sm:$0xf]
        %v2805 = vld [vmem:[%s49 + $0xc] sm:$0xf]
        %v2806 = vld [vmem:[#allocation20] sm:$0x1]
        %v2808 = vlaneseq
        %v2809 = vshrl.u32 %v2808, 7
        %v2810 = vsub.s32 0, %v2809
        %v2811 = vrot.slane %v2806, %v2810
        %v2817 = vunpack.c.l.b16 %v2802
        %v2818 = vunpack.c.l.b16 %v2803
        %v2819 = vunpack.c.l.b16 %v2804
        %v2820 = vunpack.c.l.b16 %v2805
        %v2821 = vpack.c.b16 %v2818, %v2817
        %v2822 = vpack.c.b16 %v2820, %v2819
        %v2826 = vsel %vm1287, %v2801, 0
        %2828 = vmatprep.subr.bf16.mxu0 0
        %2829 = vmatpush1.bf16.msra.mxu0 %v2821
        %2830 = vmatprep.subr.bf16.mxu0 0
        %2831 = vmatpush1.bf16.msra.mxu0 %v2822
        %2832 = vmatprep.subr.bf16.mxu0 0
        %2833 = vmatpush1.bf16.msra.mxu0 0
        %2834 = vmatprep.subr.bf16.mxu0 0
        %2835 = vmatpush1.bf16.msra.mxu0 0
        %2836 = vmatprep.subr.bf16.mxu0 0
        %2837 = vmatpush1.bf16.msra.mxu0 0
        %2838 = vmatprep.subr.bf16.mxu0 0
        %2839 = vmatpush1.bf16.msra.mxu0 0
        %2840 = vmatprep.subr.bf16.mxu0 0
        %2841 = vmatpush1.bf16.msra.mxu0 0
        %2842 = vmatprep.subr.bf16.mxu0 0
        %2843 = vmatpush1.bf16.msra.mxu0 0
        %2844 = vmatprep.subr.bf16.mxu0 0
        %2845 = vmatpush1.bf16.msra.mxu0 0
        %2846 = vmatprep.subr.bf16.mxu0 0
        %2847 = vmatpush1.bf16.msra.mxu0 0
        %2848 = vmatprep.subr.bf16.mxu0 0
        %2849 = vmatpush1.bf16.msra.mxu0 0
        %2850 = vmatprep.subr.bf16.mxu0 0
        %2851 = vmatpush1.bf16.msra.mxu0 0
        %2852 = vmatprep.subr.bf16.mxu0 0
        %2853 = vmatpush1.bf16.msra.mxu0 0
        %2854 = vmatprep.subr.bf16.mxu0 0
        %2855 = vmatpush1.bf16.msra.mxu0 0
        %2856 = vmatprep.subr.bf16.mxu0 0
        %2857 = vmatpush1.bf16.msra.mxu0 0
        %2858 = vmatprep.subr.bf16.mxu0 0
        %2859 = vmatpush1.bf16.msra.mxu0 0
        %2860 = vmatprep.mubr.bf16.mxu0 0
        %2861 = vmatmul.mubr.bf16.gmra.mrb[0].mxu0 %v2826
        %v2862 = vpop.f32.mrb[0].mxu0
        %v2863 = vadd.f32 %v2811, %v2862
        %v2864 = vpop.f32.mrb[0].mxu0
        %v2865 = vpop.f32.mrb[0].mxu0
        %v2866 = vpop.f32.mrb[0].mxu0
        %2867 = vdwg.mxu0
        %v2868 = vmax.f32 %v2863, 0.0
        %v2869 = vpack.c.bf16 %v2868, %v2868
        %v2870 = vld [vmem:[%s53] sm:$0xf]
        %v2871 = vld [vmem:[%s53 + $0x4] sm:$0xf]
        %v2872 = vld [vmem:[%s53 + $0x8] sm:$0xf]
        %v2873 = vld [vmem:[%s53 + $0xc] sm:$0xf]
        %v2874 = vld [vmem:[%s53 + $0x10] sm:$0xf]
        %v2875 = vld [vmem:[%s53 + $0x14] sm:$0xf]
        %v2876 = vld [vmem:[%s53 + $0x18] sm:$0xf]
        %v2877 = vld [vmem:[%s53 + $0x1c] sm:$0xf]
        %v2886 = vunpack.c.l.b16 %v2870
        %v2887 = vunpack.c.l.b16 %v2871
        %v2888 = vunpack.c.l.b16 %v2872
        %v2889 = vunpack.c.l.b16 %v2873
        %v2890 = vunpack.c.l.b16 %v2874
        %v2891 = vunpack.c.l.b16 %v2875
        %v2892 = vunpack.c.l.b16 %v2876
        %v2893 = vunpack.c.l.b16 %v2877
        %v2894 = vpack.c.b16 %v2887, %v2886
        %v2895 = vpack.c.b16 %v2889, %v2888
        %v2896 = vpack.c.b16 %v2891, %v2890
        %v2897 = vpack.c.b16 %v2893, %v2892
        %vm2902 = vcmask 523264
        %v2904 = vsel %vm2902, %v2869, 0
        %2906 = vmatprep.subr.bf16.mxu0 0
        %2907 = vmatpush1.bf16.msra.mxu0 %v2894
        %2908 = vmatprep.subr.bf16.mxu0 0
        %2909 = vmatpush1.bf16.msra.mxu0 %v2895
        %2910 = vmatprep.subr.bf16.mxu0 0
        %2911 = vmatpush1.bf16.msra.mxu0 %v2896
        %2912 = vmatprep.subr.bf16.mxu0 0
        %2913 = vmatpush1.bf16.msra.mxu0 %v2897
        %2914 = vmatprep.subr.bf16.mxu0 0
        %2915 = vmatpush1.bf16.msra.mxu0 0
        %2916 = vmatprep.subr.bf16.mxu0 0
        %2917 = vmatpush1.bf16.msra.mxu0 0
        %2918 = vmatprep.subr.bf16.mxu0 0
        %2919 = vmatpush1.bf16.msra.mxu0 0
        %2920 = vmatprep.subr.bf16.mxu0 0
        %2921 = vmatpush1.bf16.msra.mxu0 0
        %2922 = vmatprep.subr.bf16.mxu0 0
        %2923 = vmatpush1.bf16.msra.mxu0 0
        %2924 = vmatprep.subr.bf16.mxu0 0
        %2925 = vmatpush1.bf16.msra.mxu0 0
        %2926 = vmatprep.subr.bf16.mxu0 0
        %2927 = vmatpush1.bf16.msra.mxu0 0
        %2928 = vmatprep.subr.bf16.mxu0 0
        %2929 = vmatpush1.bf16.msra.mxu0 0
        %2930 = vmatprep.subr.bf16.mxu0 0
        %2931 = vmatpush1.bf16.msra.mxu0 0
        %2932 = vmatprep.subr.bf16.mxu0 0
        %2933 = vmatpush1.bf16.msra.mxu0 0
        %2934 = vmatprep.subr.bf16.mxu0 0
        %2935 = vmatpush1.bf16.msra.mxu0 0
        %2936 = vmatprep.subr.bf16.mxu0 0
        %2937 = vmatpush1.bf16.msra.mxu0 0
        %2938 = vmatprep.mubr.bf16.mxu0 0
        %2939 = vmatmul.mubr.bf16.gmra.mrb[0].mxu0 %v2904
        %v2940 = vpop.f32.mrb[0].mxu0
        %v2941 = vadd.f32 0.0, %v2940
        %v2942 = vpop.f32.mrb[0].mxu0
        %v2943 = vpop.f32.mrb[0].mxu0
        %v2944 = vpop.f32.mrb[0].mxu0
        %2945 = vdwg.mxu0
        %v2946 = vadd.f32 %v2800, %v2941
        %v2947 = vld [vmem:[#allocation21] sm:$0x1]
        %v2949 = vlaneseq
        %v2950 = vshrl.u32 %v2949, 7
        %v2951 = vsub.s32 0, %v2950
        %v2952 = vrot.slane %v2947, %v2951
        %v2954 = vadd.f32 %v2946, %v2952
        %v2955 = vld [vmem:[#allocation23] sm:$0x1]
        %v2956 = vld [vmem:[#allocation24] sm:$0x1]
        %v2957 = vsel %vm1287, %v2954, 0.0
        %2958 = vadd.xlane.f32.xlu0 %v2957
        %v2959 = vpop.xlane.xlu0 %2958
        %v2960 = vmul.f32 %v2959, %v2005
        %v2961 = vsub.f32 %v2954, %v2960
        %v2962 = vmul.f32 %v2961, %v2961
        %v2963 = vsel %vm1287, %v2962, 0.0
        %2964 = vadd.xlane.f32.xlu0 %v2963
        %v2965 = vpop.xlane.xlu0 %2964
        %v2966 = vmul.f32 %v2965, %v2005
        %v2967 = vadd.f32 %v2966, 1e-05
        %v2968 = vrsqrt.pop %v2967
        %v2969 = vmul.f32 %v2961, %v2968
        %v2971 = vlaneseq
        %v2972 = vshrl.u32 %v2971, 7
        %v2973 = vsub.s32 0, %v2972
        %v2974 = vrot.slane %v2955, %v2973
        %v2976 = vmul.f32 %v2969, %v2974
        %v2978 = vlaneseq
        %v2979 = vshrl.u32 %v2978, 7
        %v2980 = vsub.s32 0, %v2979
        %v2981 = vrot.slane %v2956, %v2980
        %v2983 = vadd.f32 %v2976, %v2981
        %2984 = vst.msk [vmem:[%s1225] sm:$0xff] %vm1287, %v2983
        %v2985 = vld [vmem:[%s61] sm:$0x1]
        %v2986 = vld [vmem:[%s63] sm:$0x1]
        %v2987 = vsel %vm1287, %v2983, 0.0
        %2988 = vadd.xlane.f32.xlu0 %v2987
        %v2989 = vpop.xlane.xlu0 %2988
        %v2990 = vmul.f32 %v2989, %v2005
        %v2991 = vsub.f32 %v2983, %v2990
        %v2992 = vmul.f32 %v2991, %v2991
        %v2993 = vsel %vm1287, %v2992, 0.0
        %2994 = vadd.xlane.f32.xlu0 %v2993
        %v2995 = vpop.xlane.xlu0 %2994
        %v2996 = vmul.f32 %v2995, %v2005
        %v2997 = vadd.f32 %v2996, 1e-05
        %v2998 = vrsqrt.pop %v2997
        %v2999 = vmul.f32 %v2991, %v2998
        %v3001 = vlaneseq
        %v3002 = vshrl.u32 %v3001, 7
        %v3003 = vsub.s32 0, %v3002
        %v3004 = vrot.slane %v2985, %v3003
        %v3006 = vmul.f32 %v2999, %v3004
        %v3008 = vlaneseq
        %v3009 = vshrl.u32 %v3008, 7
        %v3010 = vsub.s32 0, %v3009
        %v3011 = vrot.slane %v2986, %v3010
        %v3013 = vadd.f32 %v3006, %v3011
        %3014 = vst.msk [vmem:[%s1253] sm:$0xff] %vm1287, %v3013
        %s3015 = sand.u32 %s790, 1
        %s3016 = scalar_lea.sflag [#allocation5], %s3015
        %s3017 = sand.u32 %s790, 1
        %s3018 = smul.addr %s3017, 8
        %s3019 = scalar_lea.vmem [#allocation26], %s3018
        %p3020 = scmp.lt.s32.totalorder %s90, 1
        %s3021 = scalar_select %p3020, %s90, 1
        %s3022 = smul.addr %s3021, 8
        %s3023 = scalar_lea.vmem %s67, %s3022
        // Predicated region
        $region205: #{transformer_decoder_forward.3} parent=147 // pred_check
          %p3024 = pneg %p800
        $region206: #{transformer_decoder_forward.3} parent=147 // pred_check_branch
          %3026 = sbr.rel (%p3024) target = $region208
        $region207: #{transformer_decoder_forward.3} parent=147 // pred_region
          %s3028 = ssub.s32 128, 128
          %3029 = vsyncadd %s3016, %s3028
          %s3030 = smul.addr %s90, 128
          %s3031 = scalar_lea.hbm %s65, %s3030
          %s3033 = sshll.u32 %s3019, 4
          %s3034 = int_to_ptr.vmem [resolvable:$true] %s3033
          %3036 = dma.vmem_to_hbm [thread:$0]  %s3034, 128, %s3031, %s3016
        $region208: #{transformer_decoder_forward.3} parent=147 // pred_fallthru
          _
        // Predicated region
        $region209: #{transformer_decoder_forward.3} parent=147 // pred_check
          %p3037 = pneg %p826
        $region210: #{transformer_decoder_forward.3} parent=147 // pred_check_branch
          %3039 = sbr.rel (%p3037) target = $region212
        $region211: #{transformer_decoder_forward.3} parent=147 // pred_region
          _
        $region212: #{transformer_decoder_forward.3} parent=147 // pred_fallthru
          _
      $region148: #{transformer_decoder_forward.3} parent=5 // pred_fallthru
        _
      %p3040 = scmp.le.s32.totalorder 2, %s85
      // Predicated region
      $region213: #{transformer_decoder_forward.3} parent=5 // pred_check
        %p3041 = pneg %p3040
      $region214: #{transformer_decoder_forward.3} parent=5 // pred_check_branch
        %3043 = sbr.rel (%p3041) target = $region216
      $region215: #{transformer_decoder_forward.3} parent=5 // pred_region
        %s3044 = ssub.s32 %s85, 2
        // Predicated region
        $region217: #{transformer_decoder_forward.3} parent=215 // pred_check
          %p3045 = pneg %p806
        $region218: #{transformer_decoder_forward.3} parent=215 // pred_check_branch
          %3047 = sbr.rel (%p3045) target = $region220
        $region219: #{transformer_decoder_forward.3} parent=215 // pred_region
          %s3048 = sand.u32 %s791, 1
          %s3049 = scalar_lea.sflag [#allocation5], %s3048
          %s3050 = sand.u32 %s791, 1
          %s3051 = smul.addr %s3050, 8
          %s3052 = scalar_lea.vmem [#allocation26], %s3051
          %3053 = dma.done %s3049, 128
        $region220: #{transformer_decoder_forward.3} parent=215 // pred_fallthru
          _
        // Predicated region
        $region221: #{transformer_decoder_forward.3} parent=215 // pred_check
          %p3054 = pneg %p832
        $region222: #{transformer_decoder_forward.3} parent=215 // pred_check_branch
          %3056 = sbr.rel (%p3054) target = $region224
        $region223: #{transformer_decoder_forward.3} parent=215 // pred_region
          %p3057 = scmp.lt.s32.totalorder %s91, 1
          %s3058 = scalar_select %p3057, %s91, 1
          %s3059 = smul.addr %s3058, 8
          %s3060 = scalar_lea.vmem %s67, %s3059
        $region224: #{transformer_decoder_forward.3} parent=215 // pred_fallthru
          _
      $region216: #{transformer_decoder_forward.3} parent=5 // pred_fallthru
        _
    $region6: #{transformer_decoder_forward.3} parent=1 // loop_footer
      %s89 = sadd.s32 1, %s85
    $region7: #{transformer_decoder_forward.3} parent=1 // loop_footer_branch
      %84 = sbr.rel target = $region3
    $region8: #{transformer_decoder_forward.3} parent=1 // loop_exit
      _
    %3061 = vsyncpa [#allocation4], 1
    %s3062 = scalar_lea.sflag [#allocation4], 1
    %3063 = vsyncpa %s3062, 1
    %3064 = vsyncpa [#allocation7], 1
    %3065 = vsyncpa [#allocation10], 1
    %3066 = vsyncpa [#allocation13], 1
    %3067 = vsyncpa [#allocation16], 1
    %3068 = vsyncpa [#allocation19], 1
    %3069 = vsyncpa [#allocation22], 1
    %3070 = vsyncpa [#allocation25], 1
    %3071 = vsyncpa [#allocation5], 1
    %s3072 = scalar_lea.sflag [#allocation5], 1
    %3073 = vsyncpa %s3072, 1

</llo_original>
